<compile_context>
chip_gen: v6e
topology: v6e:2x2x1
jax: 0.10.0
libtpu: 0.0.40
codegen_flags: <defaults>
</compile_context>

<pallas_src>
import jax
import jax.numpy as jnp
from jax.experimental import pallas as pl
from jax.experimental.pallas import tpu as pltpu

# ----------------------------- configuration --------------------------------
HIDDEN = 32
PROJ = 256
USE_NODES = ("P", "A", "F", "V")
N_NODES = {"P": 16, "A": 12, "F": 10, "V": 6}
FEAT_DIMS = {"P": 24, "A": 20, "F": 16, "V": 12}
SCHEMA = (("A", "P"), ("F", "P"), ("V", "P"))   # data.schema_dict (assumed order)
SRC_ORDER = ("A", "F", "V")                      # packing order for GAT / SAGE params
B_COEF = 0.5                                     # module hyper-param `b`
NEG_SLOPE = 0.01                                 # F.leaky_relu default
BN_EPS = 1e-5
N_P = N_NODES["P"]

# ------------------------------ blob layouts ---------------------------------


def _round8(n):
    return -(-n // 8) * 8


def _build_layout(entries):
    lay, off = {}, 0
    for name, rows, cols in entries:
        lay[name] = (off, rows, cols)
        off += _round8(rows)
    return lay, off


# Graph blob (width 32): features + row-normalized adjacencies (both orientations).
_G_LAYOUT, _G_ROWS = _build_layout([
    ("xP", N_NODES["P"], FEAT_DIMS["P"]),
    ("xA", N_NODES["A"], FEAT_DIMS["A"]),
    ("xF", N_NODES["F"], FEAT_DIMS["F"]),
    ("xV", N_NODES["V"], FEAT_DIMS["V"]),
    ("adjS_A", N_P, N_NODES["A"]),   # schema src->P, row-normalized, [N_P, N_s]
    ("adjS_F", N_P, N_NODES["F"]),
    ("adjS_V", N_P, N_NODES["V"]),
    ("adjM_A", N_NODES["A"], N_P),   # metapath P->src hop, row-normalized, [N_s, N_P]
    ("adjM_F", N_NODES["F"], N_P),
    ("adjM_V", N_NODES["V"], N_P),
])

# Param blob, trailing dim 32.
_P32_LAYOUT, _P32_ROWS = _build_layout([
    ("wP", FEAT_DIMS["P"], HIDDEN),
    ("wA", FEAT_DIMS["A"], HIDDEN),
    ("wF", FEAT_DIMS["F"], HIDDEN),
    ("wV", FEAT_DIMS["V"], HIDDEN),
    ("enc_b", 4, HIDDEN),
    ("enc_alpha", 4, HIDDEN),        # PReLU alphas broadcast to 32 lanes
    ("gat_src", 3, HIDDEN),
    ("gat_dst", 3, HIDDEN),
    ("gat_bias", 3, HIDDEN),
    ("gat_alpha", 3, HIDDEN),
    ("sage_W", 12 * HIDDEN, HIDDEN),  # slot s at rows [32s:32s+32]
    ("sage_b", 12, HIDDEN),
    ("sage_alpha", 12, HIDDEN),
    ("agg_fcW", 2 * HIDDEN, HIDDEN),  # aggregator i at rows [32i:32i+32]
    ("agg_fcb", 2, HIDDEN),
    ("agg_att", 2, HIDDEN),
    ("p2W", 4 * PROJ, HIDDEN),        # proj head i second layer at rows [256i:256i+256]
    ("p2b", 4, HIDDEN),
])

# Param blob, trailing dim 1024 (fused projection first layer + fused SAGE first lin).
_PW_LAYOUT, _PW_ROWS = _build_layout([
    ("p1W_all", HIDDEN, 4 * PROJ),     # [32, 1024], head i in cols [256i:256i+256]
    ("p1b_all", 1, 4 * PROJ),
    ("sageF_W", HIDDEN, 3 * HIDDEN),   # [32, 96], relation r in cols [32r:32r+32]
    ("sageF_b", 1, 3 * HIDDEN),
    ("sageF_alpha", 1, 3 * HIDDEN),
])

# ------------------------------- fused kernel --------------------------------


def _cg_kernel(g_ref, p32_ref, pw_ref, loss_ref):
    f32 = jnp.float32

    def gsl(name):
        o, r, c = _G_LAYOUT[name]
        return g_ref[o:o + r, 0:c]

    def psl(name):
        o, r, c = _P32_LAYOUT[name]
        return p32_ref[o:o + r, 0:c]

    def wsl(name):
        o, r, c = _PW_LAYOUT[name]
        return pw_ref[o:o + r, 0:c]

    def prelu(x, a):               # a is a broadcastable [1, C] row of the scalar alpha
        return jnp.where(x >= 0.0, x, a * x)

    def bn(x):
        # training-mode BatchNorm1d (weight=1, bias=0, biased var) via E[x^2]-E[x]^2
        inv_n = 1.0 / x.shape[0]
        m = jnp.sum(x, axis=0, keepdims=True) * inv_n
        m2 = jnp.sum(x * x, axis=0, keepdims=True) * inv_n
        v = jnp.maximum(m2 - m * m, 0.0)
        return (x - m) * jax.lax.rsqrt(v + BN_EPS)

    def relu(x):
        return jnp.maximum(x, 0.0)

    # ---- 1) node-type encoders: h = PReLU(x @ W + b) ----
    feats = {"P": gsl("xP"), "A": gsl("xA"), "F": gsl("xF"), "V": gsl("xV")}
    encW = {"P": psl("wP"), "A": psl("wA"), "F": psl("wF"), "V": psl("wV")}
    enc_b = psl("enc_b")
    enc_a = psl("enc_alpha")
    h = {}
    for t, n in enumerate(USE_NODES):
        z = jnp.dot(feats[n], encW[n], preferred_element_type=f32) + enc_b[t:t + 1, :]
        h[n] = prelu(z, enc_a[t:t + 1, :])

    adjSn = {"A": gsl("adjS_A"), "F": gsl("adjS_F"), "V": gsl("adjS_V")}   # [16, N_s]
    adjMn = {"A": gsl("adjM_A"), "F": gsl("adjM_F"), "V": gsl("adjM_V")}   # [N_s, 16]

    # ---- 2) metapath (SAGE) branch ----
    sageW = psl("sage_W")
    sageB = psl("sage_b")
    sageA = psl("sage_alpha")

    def sW(slot):
        return sageW[32 * slot:32 * slot + 32, :]

    def sB(slot):
        return sageB[slot:slot + 1, :]

    def sA(slot):
        return sageA[slot:slot + 1, :]

    # fused first linear (slots 0,4,8) over the shared input h['P']: one [16,32]x[32,96]
    xsP = jnp.dot(h["P"], wsl("sageF_W"), preferred_element_type=f32) + wsl("sageF_b")
    xsP = prelu(bn(xsP), wsl("sageF_alpha"))                               # [16, 96]

    h2 = []
    for r, s in enumerate(SRC_ORDER):
        base = 4 * r
        xs = xsP[:, 32 * r:32 * r + 32]                                    # [16, 32]
        # hop 1 (intra_mp): mean-aggregate P onto src nodes (adjacency pre-normalized)
        agg = jnp.dot(adjMn[s], xs, preferred_element_type=f32)            # [N_s, 32]
        e1 = jnp.dot(agg, sW(base + 1), preferred_element_type=f32) + sB(base + 1)
        e1 = prelu(bn(e1), sA(base + 1))
        # hop 2 (intra_mp1, flipped edges): back onto P nodes
        ys = jnp.dot(e1, sW(base + 2), preferred_element_type=f32) + sB(base + 2)
        ys = prelu(bn(ys), sA(base + 2))
        agg2 = jnp.dot(adjSn[s], ys, preferred_element_type=f32)           # [16, 32]
        e2 = jnp.dot(agg2, sW(base + 3), preferred_element_type=f32) + sB(base + 3)
        e2 = prelu(bn(e2), sA(base + 3))
        h2.append(e2)

    # ---- semantic aggregator (one fc matmul, one score matvec, exact softmax) ----
    aggW = psl("agg_fcW")
    aggB = psl("agg_fcb")
    aggT = psl("agg_att")

    def aggregator(views, i):
        K = len(views)
        stacked = jnp.concatenate(views, axis=0)                           # [K*16, 32]
        t = jnp.tanh(jnp.dot(stacked, aggW[32 * i:32 * i + 32, :],
                             preferred_element_type=f32) + aggB[i:i + 1, :])
        sp = jnp.concatenate(
            [jnp.mean(t[16 * k:16 * (k + 1), :], axis=0, keepdims=True) for k in range(K)],
            axis=0)                                                        # [K, 32]
        sc = jnp.einsum("kh,oh->ko", sp, aggT[i:i + 1, :],
                        preferred_element_type=f32)                        # [K, 1]
        m = jnp.max(sc, axis=0, keepdims=True)
        e = jnp.exp(sc - m)
        beta = e / jnp.sum(e, axis=0, keepdims=True)                       # exact softmax
        z = beta[0:1, 0:1] * views[0]
        for k in range(1, K):
            z = z + beta[k:k + 1, 0:1] * views[k]
        return z

    embeds1 = aggregator(h2, 0)                                            # inter1

    # ---- 3) schema (GAT) branch — each relation computed ONCE and reused ----
    gat_src = psl("gat_src")
    gat_dst = psl("gat_dst")
    gat_b = psl("gat_bias")
    gat_a = psl("gat_alpha")

    # all three destination scores in one matmul: [16,32] x [3,32]^T -> [16,3]
    dst_sc = jnp.einsum("nh,rh->nr", h["P"], gat_dst, preferred_element_type=f32)

    g_out = {}
    for r, s in enumerate(SRC_ORDER):
        adjn = adjSn[s]                                                    # >0 iff edge
        a_src = jnp.einsum("oh,sh->os", gat_src[r:r + 1, :], h[s],
                           preferred_element_type=f32)                     # [1, N_s]
        logit = dst_sc[:, r:r + 1] + a_src                                 # [16, N_s]
        logit = jnp.where(logit >= 0.0, logit, NEG_SLOPE * logit)          # leaky_relu(0.01)
        masked = jnp.where(adjn > 0.0, logit, -1e30)
        mx = jnp.max(masked, axis=1, keepdims=True)
        e = jnp.where(adjn > 0.0, jnp.exp(masked - mx), 0.0)
        ssum = jnp.sum(e, axis=1, keepdims=True)
        p = e / jnp.where(ssum > 0.0, ssum, 1.0)                           # exact softmax
        out = jnp.dot(p, h[s], preferred_element_type=f32) + gat_b[r:r + 1, :]
        g_out[s] = prelu(bn(out), gat_a[r:r + 1, :])

    embeds2 = aggregator([g_out["A"], g_out["F"], g_out["V"]], 1)          # inter

    # ---- 4) projection heads (fused first layer) + sce losses ----
    # rows 0-15: embeds2 (head0) | 16-31: embeds1 (head0) | 32-47: g_F (head1)
    # 48-63: g_A (head2) | 64-79: g_V (head3)
    X = jnp.concatenate([embeds2, embeds1, g_out["F"], g_out["A"], g_out["V"]], axis=0)
    Z = jnp.dot(X, wsl("p1W_all"), preferred_element_type=f32) + wsl("p1b_all")  # [80,1024]

    p2W = psl("p2W")
    p2b = psl("p2b")

    def proj2(i, act):
        return jnp.dot(act, p2W[256 * i:256 * i + 256, :],
                       preferred_element_type=f32) + p2b[i:i + 1, :]

    # head 0: two 16-row call segments -> BatchNorm per segment (matches reference)
    z0 = Z[0:32, 0:256]
    a0 = jnp.concatenate([relu(bn(z0[0:16, :])), relu(bn(z0[16:32, :]))], axis=0)
    y0 = proj2(0, a0)                                                      # [32, 32]
    p_e2 = y0[0:16, :]
    p_e1 = y0[16:32, :]

    p_F = proj2(1, relu(bn(Z[32:48, 256:512])))                            # proj_head2(g_F)
    p_A = proj2(2, relu(bn(Z[48:64, 512:768])))                            # proj_head3(g_A)
    p_V = proj2(3, relu(bn(Z[64:80, 768:1024])))                           # proj_head4(g_V)

    def sce(x, y):
        xn = x * jax.lax.rsqrt(jnp.maximum(jnp.sum(x * x, axis=-1, keepdims=True), 1e-24))
        yn = y * jax.lax.rsqrt(jnp.maximum(jnp.sum(y * y, axis=-1, keepdims=True), 1e-24))
        cos = jnp.sum(xn * yn, axis=-1, keepdims=True)
        return jnp.sum(1.0 - cos, axis=0, keepdims=True) * (1.0 / x.shape[0])  # alpha=1

    loss1 = sce(p_e2, embeds1)
    loss5 = sce(p_e1, embeds2)
    loss2 = sce(p_F, g_out["A"] + g_out["V"])    # schema_dict1 = {(A,P),(V,P)}
    loss3 = sce(p_A, g_out["F"] + g_out["V"])    # schema_dict2 = {(F,P),(V,P)}
    loss4 = sce(p_V, g_out["A"] + g_out["F"])    # schema_dict3 = {(A,P),(F,P)}

    loss_ref[...] = loss1 + B_COEF * (loss2 + loss3 + loss4) + loss5


# ------------------------------ wrapper / forward ------------------------------


def cg_forward(gblob, p32, pwide):
    bytes_accessed = int(sum(int(a.size) * 4 for a in (gblob, p32, pwide)) + 4)
    out = pl.pallas_call(
        _cg_kernel,
        out_shape=jax.ShapeDtypeStruct((1, 1), jnp.float32),
        compiler_params=pltpu.CompilerParams(vmem_limit_bytes=8 * 1024 * 1024),
        cost_estimate=pl.CostEstimate(flops=8_000_000, transcendentals=8_000,
                                      bytes_accessed=bytes_accessed),
    )(gblob, p32, pwide)
    return out[0, 0]


# -------------------------------- packing ----------------------------------


def _pack(layout, total_rows, width, items):
    blob = jnp.zeros((total_rows, width), jnp.float32)
    for name, arr in items.items():
        off, r, c = layout[name]
        blob = blob.at[off:off + r, 0:c].set(jnp.asarray(arr, jnp.float32).reshape(r, c))
    return blob


def pack_params(params):
    hid = HIDDEN
    p32_items = {
        "wP": params["encW"]["P"], "wA": params["encW"]["A"],
        "wF": params["encW"]["F"], "wV": params["encW"]["V"],
        "enc_b": params["enc_b"],
        "enc_alpha": jnp.broadcast_to(params["act_alpha"], (4, hid)),
        "gat_src": params["gat_att_src"], "gat_dst": params["gat_att_dst"],
        "gat_bias": params["gat_bias"],
        "gat_alpha": jnp.broadcast_to(params["action_alpha"], (3, hid)),
        "sage_W": params["sage_W"].reshape(12 * hid, hid),
        "sage_b": params["sage_b"],
        "sage_alpha": jnp.broadcast_to(params["sage_alpha"], (12, hid)),
        "agg_fcW": params["agg_fcW"].reshape(2 * hid, hid),
        "agg_fcb": params["agg_fcb"],
        "agg_att": params["agg_att"],
        "p2W": params["proj_l2W"].reshape(4 * PROJ, hid),
        "p2b": params["proj_l2b"],
    }
    pw_items = {
        "p1W_all": jnp.concatenate([params["proj_l1W"][i] for i in range(4)], axis=1),
        "p1b_all": jnp.concatenate([params["proj_l1b"][i:i + 1] for i in range(4)], axis=1),
        "sageF_W": jnp.concatenate([params["sage_W"][4 * r] for r in range(3)], axis=1),
        "sageF_b": jnp.concatenate([params["sage_b"][4 * r:4 * r + 1] for r in range(3)], axis=1),
        "sageF_alpha": jnp.concatenate(
            [jnp.broadcast_to(params["sage_alpha"][4 * r:4 * r + 1], (1, hid)) for r in range(3)],
            axis=1),
    }
    return (_pack(_P32_LAYOUT, _P32_ROWS, 32, p32_items),
            _pack(_PW_LAYOUT, _PW_ROWS, 4 * PROJ, pw_items))


def pack_graph(feats, adj_schema):
    items = {"xP": feats["P"], "xA": feats["A"], "xF": feats["F"], "xV": feats["V"]}
    for s in SRC_ORDER:
        adj = adj_schema[(s, "P")].astype(jnp.float32)           # [N_P, N_s]
        deg = jnp.sum(adj, axis=1, keepdims=True)
        items["adjS_" + s] = adj / jnp.maximum(deg, 1.0)         # mean-agg pre-normalized
        adj_t = adj.T                                            # [N_s, N_P]
        deg_t = jnp.sum(adj_t, axis=1, keepdims=True)
        items["adjM_" + s] = adj_t / jnp.maximum(deg_t, 1.0)
    return _pack(_G_LAYOUT, _G_ROWS, 32, items)


# -------------------------------- parameters ----------------------------------


def init_params(key):
    hid = HIDDEN
    keys = iter(jax.random.split(key, 64))

    def w(shape, scale=0.1):
        return jax.random.normal(next(keys), shape, jnp.float32) * scale

    return {
        # encoders: weights stored pre-transposed as [in, out]
        "encW": {n: w((FEAT_DIMS[n], hid)) for n in USE_NODES},
        "enc_b": w((len(USE_NODES), hid), 0.01),
        "act_alpha": jnp.full((len(USE_NODES), 1), 0.25, jnp.float32),
        # GAT (schema) params packed per relation (A,F,V order)
        "gat_att_src": w((len(SCHEMA), hid)),
        "gat_att_dst": w((len(SCHEMA), hid)),
        "gat_bias": jnp.zeros((len(SCHEMA), hid), jnp.float32),
        "action_alpha": jnp.full((len(SCHEMA), 1), 0.25, jnp.float32),
        # SAGE stacks: per rel r -> slots [4r..4r+3] = (mp.lin, mp.lin2, mp1.lin, mp1.lin2)
        "sage_W": w((4 * len(SRC_ORDER), hid, hid)),
        "sage_b": w((4 * len(SRC_ORDER), hid), 0.01),
        "sage_alpha": jnp.full((4 * len(SRC_ORDER), 1), 0.25, jnp.float32),
        # Aggregators: idx 0 = inter1 (metapath branch), 1 = inter (schema branch)
        "agg_fcW": w((2, hid, hid)),
        "agg_fcb": w((2, hid), 0.01),
        "agg_att": w((2, hid)),
        # Projection heads 1..4 (pre-transposed)
        "proj_l1W": w((4, hid, PROJ)),
        "proj_l1b": w((4, PROJ), 0.01),
        "proj_l2W": w((4, PROJ, hid)),
        "proj_l2b": w((4, hid), 0.01),
    }


# ----------------------------------- main --------------------------------------

if __name__ == "__main__":
    key = jax.random.PRNGKey(0)
    kp, kf, ke = jax.random.split(key, 3)

    params = init_params(kp)

    fkeys = jax.random.split(kf, len(USE_NODES))
    feats = {
        n: jax.random.normal(k, (N_NODES[n], FEAT_DIMS[n]), jnp.float32)
        for n, k in zip(USE_NODES, fkeys)
    }

    ekeys = jax.random.split(ke, len(SCHEMA))
    adj_schema = {
        rel: (jax.random.uniform(k, (N_NODES["P"], N_NODES[rel[0]])) < 0.4).astype(jnp.float32)
        for rel, k in zip(SCHEMA, ekeys)
    }

    # one-time packing (init-time work): 3 DMA-able blobs replace ~30 tiny inputs
    gblob = pack_graph(feats, adj_schema)
    p32, pwide = pack_params(params)

    loss = jax.jit(cg_forward)(gblob, p32, pwide)
    loss = jax.block_until_ready(loss)
    assert loss.shape == () and bool(jnp.isfinite(loss))
    print("KERNEL_OK")
</pallas_src>

<mosaic_0001>
module attributes {stable_mosaic.version = 11 : i64} {
  func.func @_cg_kernel(%arg0: memref<144x32xf32, #tpu.memory_space<vmem>>, %arg1: memref<1656x32xf32, #tpu.memory_space<vmem>>, %arg2: memref<88x1024xf32, #tpu.memory_space<vmem>>, %arg3: memref<1x1xf32, #tpu.memory_space<vmem>>) attributes {dimension_semantics = [], scalar_prefetch = 0 : i64, scratch_operands = 0 : i64, tpu.core_type = #tpu.core_type<tc>} {
    %c0 = arith.constant 0 : index
    %c0_0 = arith.constant 0 : index
    %0 = vector.load %arg0[%c0, %c0_0] : memref<144x32xf32, #tpu.memory_space<vmem>>, vector<16x24xf32>
    %c16 = arith.constant 16 : index
    %c0_1 = arith.constant 0 : index
    %1 = vector.load %arg0[%c16, %c0_1] : memref<144x32xf32, #tpu.memory_space<vmem>>, vector<12x20xf32>
    %c32 = arith.constant 32 : index
    %c0_2 = arith.constant 0 : index
    %2 = vector.load %arg0[%c32, %c0_2] : memref<144x32xf32, #tpu.memory_space<vmem>>, vector<10x16xf32>
    %c48 = arith.constant 48 : index
    %c0_3 = arith.constant 0 : index
    %3 = vector.load %arg0[%c48, %c0_3] : memref<144x32xf32, #tpu.memory_space<vmem>>, vector<6x12xf32>
    %c0_4 = arith.constant 0 : index
    %c0_5 = arith.constant 0 : index
    %4 = vector.load %arg1[%c0_4, %c0_5] : memref<1656x32xf32, #tpu.memory_space<vmem>>, vector<24x32xf32>
    %c24 = arith.constant 24 : index
    %c0_6 = arith.constant 0 : index
    %5 = vector.load %arg1[%c24, %c0_6] : memref<1656x32xf32, #tpu.memory_space<vmem>>, vector<20x32xf32>
    %c48_7 = arith.constant 48 : index
    %c0_8 = arith.constant 0 : index
    %6 = vector.load %arg1[%c48_7, %c0_8] : memref<1656x32xf32, #tpu.memory_space<vmem>>, vector<16x32xf32>
    %c64 = arith.constant 64 : index
    %c0_9 = arith.constant 0 : index
    %7 = vector.load %arg1[%c64, %c0_9] : memref<1656x32xf32, #tpu.memory_space<vmem>>, vector<12x32xf32>
    %c80 = arith.constant 80 : index
    %c0_10 = arith.constant 0 : index
    %8 = vector.load %arg1[%c80, %c0_10] : memref<1656x32xf32, #tpu.memory_space<vmem>>, vector<4x32xf32>
    %c88 = arith.constant 88 : index
    %c0_11 = arith.constant 0 : index
    %9 = vector.load %arg1[%c88, %c0_11] : memref<1656x32xf32, #tpu.memory_space<vmem>>, vector<4x32xf32>
    %cst = arith.constant dense<0.000000e+00> : vector<16x32xf32>
    %10 = tpu.matmul %0, %4, %cst {dimension_numbers = #tpu.dot_dimension_numbers<[1], [0], [0], [1], [0, 0, 1, 1], [], []>} : vector<16x24xf32>, vector<24x32xf32>, vector<16x32xf32> -> vector<16x32xf32>
    %11 = vector.extract_strided_slice %8 {offsets = [0, 0], sizes = [1, 32], strides = [1, 1]} : vector<4x32xf32> to vector<1x32xf32>
    %12 = vector.broadcast %11 : vector<1x32xf32> to vector<16x32xf32>
    %13 = arith.addf %10, %12 : vector<16x32xf32>
    %14 = vector.extract_strided_slice %9 {offsets = [0, 0], sizes = [1, 32], strides = [1, 1]} : vector<4x32xf32> to vector<1x32xf32>
    %cst_12 = arith.constant 0.000000e+00 : f32
    %15 = vector.broadcast %cst_12 : f32 to vector<16x32xf32>
    %16 = arith.cmpf oge, %13, %15 : vector<16x32xf32>
    %17 = vector.broadcast %14 : vector<1x32xf32> to vector<16x32xf32>
    %18 = arith.mulf %17, %13 : vector<16x32xf32>
    %19 = arith.select %16, %13, %18 : vector<16x32xi1>, vector<16x32xf32>
    %cst_13 = arith.constant dense<0.000000e+00> : vector<12x32xf32>
    %20 = tpu.matmul %1, %5, %cst_13 {dimension_numbers = #tpu.dot_dimension_numbers<[1], [0], [0], [1], [0, 0, 1, 1], [], []>} : vector<12x20xf32>, vector<20x32xf32>, vector<12x32xf32> -> vector<12x32xf32>
    %21 = vector.extract_strided_slice %8 {offsets = [1, 0], sizes = [1, 32], strides = [1, 1]} : vector<4x32xf32> to vector<1x32xf32>
    %22 = vector.broadcast %21 : vector<1x32xf32> to vector<12x32xf32>
    %23 = arith.addf %20, %22 : vector<12x32xf32>
    %24 = vector.extract_strided_slice %9 {offsets = [1, 0], sizes = [1, 32], strides = [1, 1]} : vector<4x32xf32> to vector<1x32xf32>
    %cst_14 = arith.constant 0.000000e+00 : f32
    %25 = vector.broadcast %cst_14 : f32 to vector<12x32xf32>
    %26 = arith.cmpf oge, %23, %25 : vector<12x32xf32>
    %27 = vector.broadcast %24 : vector<1x32xf32> to vector<12x32xf32>
    %28 = arith.mulf %27, %23 : vector<12x32xf32>
    %29 = arith.select %26, %23, %28 : vector<12x32xi1>, vector<12x32xf32>
    %cst_15 = arith.constant dense<0.000000e+00> : vector<10x32xf32>
    %30 = tpu.matmul %2, %6, %cst_15 {dimension_numbers = #tpu.dot_dimension_numbers<[1], [0], [0], [1], [0, 0, 1, 1], [], []>} : vector<10x16xf32>, vector<16x32xf32>, vector<10x32xf32> -> vector<10x32xf32>
    %31 = vector.extract_strided_slice %8 {offsets = [2, 0], sizes = [1, 32], strides = [1, 1]} : vector<4x32xf32> to vector<1x32xf32>
    %32 = vector.broadcast %31 : vector<1x32xf32> to vector<10x32xf32>
    %33 = arith.addf %30, %32 : vector<10x32xf32>
    %34 = vector.extract_strided_slice %9 {offsets = [2, 0], sizes = [1, 32], strides = [1, 1]} : vector<4x32xf32> to vector<1x32xf32>
    %cst_16 = arith.constant 0.000000e+00 : f32
    %35 = vector.broadcast %cst_16 : f32 to vector<10x32xf32>
    %36 = arith.cmpf oge, %33, %35 : vector<10x32xf32>
    %37 = vector.broadcast %34 : vector<1x32xf32> to vector<10x32xf32>
    %38 = arith.mulf %37, %33 : vector<10x32xf32>
    %39 = arith.select %36, %33, %38 : vector<10x32xi1>, vector<10x32xf32>
    %cst_17 = arith.constant dense<0.000000e+00> : vector<6x32xf32>
    %40 = tpu.matmul %3, %7, %cst_17 {dimension_numbers = #tpu.dot_dimension_numbers<[1], [0], [0], [1], [0, 0, 1, 1], [], []>} : vector<6x12xf32>, vector<12x32xf32>, vector<6x32xf32> -> vector<6x32xf32>
    %41 = vector.extract_strided_slice %8 {offsets = [3, 0], sizes = [1, 32], strides = [1, 1]} : vector<4x32xf32> to vector<1x32xf32>
    %42 = vector.broadcast %41 : vector<1x32xf32> to vector<6x32xf32>
    %43 = arith.addf %40, %42 : vector<6x32xf32>
    %44 = vector.extract_strided_slice %9 {offsets = [3, 0], sizes = [1, 32], strides = [1, 1]} : vector<4x32xf32> to vector<1x32xf32>
    %cst_18 = arith.constant 0.000000e+00 : f32
    %45 = vector.broadcast %cst_18 : f32 to vector<6x32xf32>
    %46 = arith.cmpf oge, %43, %45 : vector<6x32xf32>
    %47 = vector.broadcast %44 : vector<1x32xf32> to vector<6x32xf32>
    %48 = arith.mulf %47, %43 : vector<6x32xf32>
    %49 = arith.select %46, %43, %48 : vector<6x32xi1>, vector<6x32xf32>
    %c56 = arith.constant 56 : index
    %c0_19 = arith.constant 0 : index
    %50 = vector.load %arg0[%c56, %c0_19] : memref<144x32xf32, #tpu.memory_space<vmem>>, vector<16x12xf32>
    %c72 = arith.constant 72 : index
    %c0_20 = arith.constant 0 : index
    %51 = vector.load %arg0[%c72, %c0_20] : memref<144x32xf32, #tpu.memory_space<vmem>>, vector<16x10xf32>
    %c88_21 = arith.constant 88 : index
    %c0_22 = arith.constant 0 : index
    %52 = vector.load %arg0[%c88_21, %c0_22] : memref<144x32xf32, #tpu.memory_space<vmem>>, vector<16x6xf32>
    %c104 = arith.constant 104 : index
    %c0_23 = arith.constant 0 : index
    %53 = vector.load %arg0[%c104, %c0_23] : memref<144x32xf32, #tpu.memory_space<vmem>>, vector<12x16xf32>
    %c120 = arith.constant 120 : index
    %c0_24 = arith.constant 0 : index
    %54 = vector.load %arg0[%c120, %c0_24] : memref<144x32xf32, #tpu.memory_space<vmem>>, vector<10x16xf32>
    %c136 = arith.constant 136 : index
    %c0_25 = arith.constant 0 : index
    %55 = vector.load %arg0[%c136, %c0_25] : memref<144x32xf32, #tpu.memory_space<vmem>>, vector<6x16xf32>
    %c128 = arith.constant 128 : index
    %c0_26 = arith.constant 0 : index
    %56 = vector.load %arg1[%c128, %c0_26] : memref<1656x32xf32, #tpu.memory_space<vmem>>, vector<384x32xf32>
    %c512 = arith.constant 512 : index
    %c0_27 = arith.constant 0 : index
    %57 = vector.load %arg1[%c512, %c0_27] : memref<1656x32xf32, #tpu.memory_space<vmem>>, vector<12x32xf32>
    %c528 = arith.constant 528 : index
    %c0_28 = arith.constant 0 : index
    %58 = vector.load %arg1[%c528, %c0_28] : memref<1656x32xf32, #tpu.memory_space<vmem>>, vector<12x32xf32>
    %c40 = arith.constant 40 : index
    %c0_29 = arith.constant 0 : index
    %59 = vector.load %arg2[%c40, %c0_29] : memref<88x1024xf32, #tpu.memory_space<vmem>>, vector<32x96xf32>
    %cst_30 = arith.constant dense<0.000000e+00> : vector<16x96xf32>
    %60 = tpu.matmul %19, %59, %cst_30 {dimension_numbers = #tpu.dot_dimension_numbers<[1], [0], [0], [1], [0, 0, 1, 1], [], []>} : vector<16x32xf32>, vector<32x96xf32>, vector<16x96xf32> -> vector<16x96xf32>
    %c72_31 = arith.constant 72 : index
    %c0_32 = arith.constant 0 : index
    %61 = vector.load %arg2[%c72_31, %c0_32] : memref<88x1024xf32, #tpu.memory_space<vmem>>, vector<1x96xf32>
    %62 = vector.broadcast %61 : vector<1x96xf32> to vector<16x96xf32>
    %63 = arith.addf %60, %62 : vector<16x96xf32>
    %cst_33 = arith.constant dense<0.000000e+00> : vector<96xf32>
    %64 = vector.multi_reduction <add>, %63, %cst_33 [0] : vector<16x96xf32> to vector<96xf32>
    %65 = vector.shape_cast %64 : vector<96xf32> to vector<1x96xf32>
    %cst_34 = arith.constant 6.250000e-02 : f32
    %66 = vector.broadcast %cst_34 : f32 to vector<1x96xf32>
    %67 = arith.mulf %65, %66 : vector<1x96xf32>
    %68 = arith.mulf %63, %63 : vector<16x96xf32>
    %cst_35 = arith.constant dense<0.000000e+00> : vector<96xf32>
    %69 = vector.multi_reduction <add>, %68, %cst_35 [0] : vector<16x96xf32> to vector<96xf32>
    %70 = vector.shape_cast %69 : vector<96xf32> to vector<1x96xf32>
    %cst_36 = arith.constant 6.250000e-02 : f32
    %71 = vector.broadcast %cst_36 : f32 to vector<1x96xf32>
    %72 = arith.mulf %70, %71 : vector<1x96xf32>
    %73 = arith.mulf %67, %67 : vector<1x96xf32>
    %74 = arith.subf %72, %73 : vector<1x96xf32>
    %cst_37 = arith.constant 0.000000e+00 : f32
    %75 = vector.broadcast %cst_37 : f32 to vector<1x96xf32>
    %76 = arith.maximumf %74, %75 : vector<1x96xf32>
    %77 = vector.broadcast %67 : vector<1x96xf32> to vector<16x96xf32>
    %78 = arith.subf %63, %77 : vector<16x96xf32>
    %cst_38 = arith.constant 9.99999974E-6 : f32
    %79 = vector.broadcast %cst_38 : f32 to vector<1x96xf32>
    %80 = arith.addf %76, %79 : vector<1x96xf32>
    %81 = math.rsqrt %80 : vector<1x96xf32>
    %82 = vector.broadcast %81 : vector<1x96xf32> to vector<16x96xf32>
    %83 = arith.mulf %78, %82 : vector<16x96xf32>
    %c80_39 = arith.constant 80 : index
    %c0_40 = arith.constant 0 : index
    %84 = vector.load %arg2[%c80_39, %c0_40] : memref<88x1024xf32, #tpu.memory_space<vmem>>, vector<1x96xf32>
    %cst_41 = arith.constant 0.000000e+00 : f32
    %85 = vector.broadcast %cst_41 : f32 to vector<16x96xf32>
    %86 = arith.cmpf oge, %83, %85 : vector<16x96xf32>
    %87 = vector.broadcast %84 : vector<1x96xf32> to vector<16x96xf32>
    %88 = arith.mulf %87, %83 : vector<16x96xf32>
    %89 = arith.select %86, %83, %88 : vector<16x96xi1>, vector<16x96xf32>
    %90 = vector.extract_strided_slice %89 {offsets = [0, 0], sizes = [16, 32], strides = [1, 1]} : vector<16x96xf32> to vector<16x32xf32>
    %cst_42 = arith.constant dense<0.000000e+00> : vector<12x32xf32>
    %91 = tpu.matmul %53, %90, %cst_42 {dimension_numbers = #tpu.dot_dimension_numbers<[1], [0], [0], [1], [0, 0, 1, 1], [], []>} : vector<12x16xf32>, vector<16x32xf32>, vector<12x32xf32> -> vector<12x32xf32>
    %92 = vector.extract_strided_slice %56 {offsets = [32, 0], sizes = [32, 32], strides = [1, 1]} : vector<384x32xf32> to vector<32x32xf32>
    %cst_43 = arith.constant dense<0.000000e+00> : vector<12x32xf32>
    %93 = tpu.matmul %91, %92, %cst_43 {dimension_numbers = #tpu.dot_dimension_numbers<[1], [0], [0], [1], [0, 0, 1, 1], [], []>} : vector<12x32xf32>, vector<32x32xf32>, vector<12x32xf32> -> vector<12x32xf32>
    %94 = vector.extract_strided_slice %57 {offsets = [1, 0], sizes = [1, 32], strides = [1, 1]} : vector<12x32xf32> to vector<1x32xf32>
    %95 = vector.broadcast %94 : vector<1x32xf32> to vector<12x32xf32>
    %96 = arith.addf %93, %95 : vector<12x32xf32>
    %cst_44 = arith.constant dense<0.000000e+00> : vector<32xf32>
    %97 = vector.multi_reduction <add>, %96, %cst_44 [0] : vector<12x32xf32> to vector<32xf32>
    %98 = vector.shape_cast %97 : vector<32xf32> to vector<1x32xf32>
    %cst_45 = arith.constant 0.0833333358 : f32
    %99 = vector.broadcast %cst_45 : f32 to vector<1x32xf32>
    %100 = arith.mulf %98, %99 : vector<1x32xf32>
    %101 = arith.mulf %96, %96 : vector<12x32xf32>
    %cst_46 = arith.constant dense<0.000000e+00> : vector<32xf32>
    %102 = vector.multi_reduction <add>, %101, %cst_46 [0] : vector<12x32xf32> to vector<32xf32>
    %103 = vector.shape_cast %102 : vector<32xf32> to vector<1x32xf32>
    %cst_47 = arith.constant 0.0833333358 : f32
    %104 = vector.broadcast %cst_47 : f32 to vector<1x32xf32>
    %105 = arith.mulf %103, %104 : vector<1x32xf32>
    %106 = arith.mulf %100, %100 : vector<1x32xf32>
    %107 = arith.subf %105, %106 : vector<1x32xf32>
    %cst_48 = arith.constant 0.000000e+00 : f32
    %108 = vector.broadcast %cst_48 : f32 to vector<1x32xf32>
    %109 = arith.maximumf %107, %108 : vector<1x32xf32>
    %110 = vector.broadcast %100 : vector<1x32xf32> to vector<12x32xf32>
    %111 = arith.subf %96, %110 : vector<12x32xf32>
    %cst_49 = arith.constant 9.99999974E-6 : f32
    %112 = vector.broadcast %cst_49 : f32 to vector<1x32xf32>
    %113 = arith.addf %109, %112 : vector<1x32xf32>
    %114 = math.rsqrt %113 : vector<1x32xf32>
    %115 = vector.broadcast %114 : vector<1x32xf32> to vector<12x32xf32>
    %116 = arith.mulf %111, %115 : vector<12x32xf32>
    %117 = vector.extract_strided_slice %58 {offsets = [1, 0], sizes = [1, 32], strides = [1, 1]} : vector<12x32xf32> to vector<1x32xf32>
    %cst_50 = arith.constant 0.000000e+00 : f32
    %118 = vector.broadcast %cst_50 : f32 to vector<12x32xf32>
    %119 = arith.cmpf oge, %116, %118 : vector<12x32xf32>
    %120 = vector.broadcast %117 : vector<1x32xf32> to vector<12x32xf32>
    %121 = arith.mulf %120, %116 : vector<12x32xf32>
    %122 = arith.select %119, %116, %121 : vector<12x32xi1>, vector<12x32xf32>
    %123 = vector.extract_strided_slice %56 {offsets = [64, 0], sizes = [32, 32], strides = [1, 1]} : vector<384x32xf32> to vector<32x32xf32>
    %cst_51 = arith.constant dense<0.000000e+00> : vector<12x32xf32>
    %124 = tpu.matmul %122, %123, %cst_51 {dimension_numbers = #tpu.dot_dimension_numbers<[1], [0], [0], [1], [0, 0, 1, 1], [], []>} : vector<12x32xf32>, vector<32x32xf32>, vector<12x32xf32> -> vector<12x32xf32>
    %125 = vector.extract_strided_slice %57 {offsets = [2, 0], sizes = [1, 32], strides = [1, 1]} : vector<12x32xf32> to vector<1x32xf32>
    %126 = vector.broadcast %125 : vector<1x32xf32> to vector<12x32xf32>
    %127 = arith.addf %124, %126 : vector<12x32xf32>
    %cst_52 = arith.constant dense<0.000000e+00> : vector<32xf32>
    %128 = vector.multi_reduction <add>, %127, %cst_52 [0] : vector<12x32xf32> to vector<32xf32>
    %129 = vector.shape_cast %128 : vector<32xf32> to vector<1x32xf32>
    %cst_53 = arith.constant 0.0833333358 : f32
    %130 = vector.broadcast %cst_53 : f32 to vector<1x32xf32>
    %131 = arith.mulf %129, %130 : vector<1x32xf32>
    %132 = arith.mulf %127, %127 : vector<12x32xf32>
    %cst_54 = arith.constant dense<0.000000e+00> : vector<32xf32>
    %133 = vector.multi_reduction <add>, %132, %cst_54 [0] : vector<12x32xf32> to vector<32xf32>
    %134 = vector.shape_cast %133 : vector<32xf32> to vector<1x32xf32>
    %cst_55 = arith.constant 0.0833333358 : f32
    %135 = vector.broadcast %cst_55 : f32 to vector<1x32xf32>
    %136 = arith.mulf %134, %135 : vector<1x32xf32>
    %137 = arith.mulf %131, %131 : vector<1x32xf32>
    %138 = arith.subf %136, %137 : vector<1x32xf32>
    %cst_56 = arith.constant 0.000000e+00 : f32
    %139 = vector.broadcast %cst_56 : f32 to vector<1x32xf32>
    %140 = arith.maximumf %138, %139 : vector<1x32xf32>
    %141 = vector.broadcast %131 : vector<1x32xf32> to vector<12x32xf32>
    %142 = arith.subf %127, %141 : vector<12x32xf32>
    %cst_57 = arith.constant 9.99999974E-6 : f32
    %143 = vector.broadcast %cst_57 : f32 to vector<1x32xf32>
    %144 = arith.addf %140, %143 : vector<1x32xf32>
    %145 = math.rsqrt %144 : vector<1x32xf32>
    %146 = vector.broadcast %145 : vector<1x32xf32> to vector<12x32xf32>
    %147 = arith.mulf %142, %146 : vector<12x32xf32>
    %148 = vector.extract_strided_slice %58 {offsets = [2, 0], sizes = [1, 32], strides = [1, 1]} : vector<12x32xf32> to vector<1x32xf32>
    %cst_58 = arith.constant 0.000000e+00 : f32
    %149 = vector.broadcast %cst_58 : f32 to vector<12x32xf32>
    %150 = arith.cmpf oge, %147, %149 : vector<12x32xf32>
    %151 = vector.broadcast %148 : vector<1x32xf32> to vector<12x32xf32>
    %152 = arith.mulf %151, %147 : vector<12x32xf32>
    %153 = arith.select %150, %147, %152 : vector<12x32xi1>, vector<12x32xf32>
    %cst_59 = arith.constant dense<0.000000e+00> : vector<16x32xf32>
    %154 = tpu.matmul %50, %153, %cst_59 {dimension_numbers = #tpu.dot_dimension_numbers<[1], [0], [0], [1], [0, 0, 1, 1], [], []>} : vector<16x12xf32>, vector<12x32xf32>, vector<16x32xf32> -> vector<16x32xf32>
    %155 = vector.extract_strided_slice %56 {offsets = [96, 0], sizes = [32, 32], strides = [1, 1]} : vector<384x32xf32> to vector<32x32xf32>
    %cst_60 = arith.constant dense<0.000000e+00> : vector<16x32xf32>
    %156 = tpu.matmul %154, %155, %cst_60 {dimension_numbers = #tpu.dot_dimension_numbers<[1], [0], [0], [1], [0, 0, 1, 1], [], []>} : vector<16x32xf32>, vector<32x32xf32>, vector<16x32xf32> -> vector<16x32xf32>
    %157 = vector.extract_strided_slice %57 {offsets = [3, 0], sizes = [1, 32], strides = [1, 1]} : vector<12x32xf32> to vector<1x32xf32>
    %158 = vector.broadcast %157 : vector<1x32xf32> to vector<16x32xf32>
    %159 = arith.addf %156, %158 : vector<16x32xf32>
    %cst_61 = arith.constant dense<0.000000e+00> : vector<32xf32>
    %160 = vector.multi_reduction <add>, %159, %cst_61 [0] : vector<16x32xf32> to vector<32xf32>
    %161 = vector.shape_cast %160 : vector<32xf32> to vector<1x32xf32>
    %cst_62 = arith.constant 6.250000e-02 : f32
    %162 = vector.broadcast %cst_62 : f32 to vector<1x32xf32>
    %163 = arith.mulf %161, %162 : vector<1x32xf32>
    %164 = arith.mulf %159, %159 : vector<16x32xf32>
    %cst_63 = arith.constant dense<0.000000e+00> : vector<32xf32>
    %165 = vector.multi_reduction <add>, %164, %cst_63 [0] : vector<16x32xf32> to vector<32xf32>
    %166 = vector.shape_cast %165 : vector<32xf32> to vector<1x32xf32>
    %cst_64 = arith.constant 6.250000e-02 : f32
    %167 = vector.broadcast %cst_64 : f32 to vector<1x32xf32>
    %168 = arith.mulf %166, %167 : vector<1x32xf32>
    %169 = arith.mulf %163, %163 : vector<1x32xf32>
    %170 = arith.subf %168, %169 : vector<1x32xf32>
    %cst_65 = arith.constant 0.000000e+00 : f32
    %171 = vector.broadcast %cst_65 : f32 to vector<1x32xf32>
    %172 = arith.maximumf %170, %171 : vector<1x32xf32>
    %173 = vector.broadcast %163 : vector<1x32xf32> to vector<16x32xf32>
    %174 = arith.subf %159, %173 : vector<16x32xf32>
    %cst_66 = arith.constant 9.99999974E-6 : f32
    %175 = vector.broadcast %cst_66 : f32 to vector<1x32xf32>
    %176 = arith.addf %172, %175 : vector<1x32xf32>
    %177 = math.rsqrt %176 : vector<1x32xf32>
    %178 = vector.broadcast %177 : vector<1x32xf32> to vector<16x32xf32>
    %179 = arith.mulf %174, %178 : vector<16x32xf32>
    %180 = vector.extract_strided_slice %58 {offsets = [3, 0], sizes = [1, 32], strides = [1, 1]} : vector<12x32xf32> to vector<1x32xf32>
    %cst_67 = arith.constant 0.000000e+00 : f32
    %181 = vector.broadcast %cst_67 : f32 to vector<16x32xf32>
    %182 = arith.cmpf oge, %179, %181 : vector<16x32xf32>
    %183 = vector.broadcast %180 : vector<1x32xf32> to vector<16x32xf32>
    %184 = arith.mulf %183, %179 : vector<16x32xf32>
    %185 = arith.select %182, %179, %184 : vector<16x32xi1>, vector<16x32xf32>
    %186 = vector.extract_strided_slice %89 {offsets = [0, 32], sizes = [16, 32], strides = [1, 1]} : vector<16x96xf32> to vector<16x32xf32>
    %cst_68 = arith.constant dense<0.000000e+00> : vector<10x32xf32>
    %187 = tpu.matmul %54, %186, %cst_68 {dimension_numbers = #tpu.dot_dimension_numbers<[1], [0], [0], [1], [0, 0, 1, 1], [], []>} : vector<10x16xf32>, vector<16x32xf32>, vector<10x32xf32> -> vector<10x32xf32>
    %188 = vector.extract_strided_slice %56 {offsets = [160, 0], sizes = [32, 32], strides = [1, 1]} : vector<384x32xf32> to vector<32x32xf32>
    %cst_69 = arith.constant dense<0.000000e+00> : vector<10x32xf32>
    %189 = tpu.matmul %187, %188, %cst_69 {dimension_numbers = #tpu.dot_dimension_numbers<[1], [0], [0], [1], [0, 0, 1, 1], [], []>} : vector<10x32xf32>, vector<32x32xf32>, vector<10x32xf32> -> vector<10x32xf32>
    %190 = vector.extract_strided_slice %57 {offsets = [5, 0], sizes = [1, 32], strides = [1, 1]} : vector<12x32xf32> to vector<1x32xf32>
    %191 = vector.broadcast %190 : vector<1x32xf32> to vector<10x32xf32>
    %192 = arith.addf %189, %191 : vector<10x32xf32>
    %cst_70 = arith.constant dense<0.000000e+00> : vector<32xf32>
    %193 = vector.multi_reduction <add>, %192, %cst_70 [0] : vector<10x32xf32> to vector<32xf32>
    %194 = vector.shape_cast %193 : vector<32xf32> to vector<1x32xf32>
    %cst_71 = arith.constant 1.000000e-01 : f32
    %195 = vector.broadcast %cst_71 : f32 to vector<1x32xf32>
    %196 = arith.mulf %194, %195 : vector<1x32xf32>
    %197 = arith.mulf %192, %192 : vector<10x32xf32>
    %cst_72 = arith.constant dense<0.000000e+00> : vector<32xf32>
    %198 = vector.multi_reduction <add>, %197, %cst_72 [0] : vector<10x32xf32> to vector<32xf32>
    %199 = vector.shape_cast %198 : vector<32xf32> to vector<1x32xf32>
    %cst_73 = arith.constant 1.000000e-01 : f32
    %200 = vector.broadcast %cst_73 : f32 to vector<1x32xf32>
    %201 = arith.mulf %199, %200 : vector<1x32xf32>
    %202 = arith.mulf %196, %196 : vector<1x32xf32>
    %203 = arith.subf %201, %202 : vector<1x32xf32>
    %cst_74 = arith.constant 0.000000e+00 : f32
    %204 = vector.broadcast %cst_74 : f32 to vector<1x32xf32>
    %205 = arith.maximumf %203, %204 : vector<1x32xf32>
    %206 = vector.broadcast %196 : vector<1x32xf32> to vector<10x32xf32>
    %207 = arith.subf %192, %206 : vector<10x32xf32>
    %cst_75 = arith.constant 9.99999974E-6 : f32
    %208 = vector.broadcast %cst_75 : f32 to vector<1x32xf32>
    %209 = arith.addf %205, %208 : vector<1x32xf32>
    %210 = math.rsqrt %209 : vector<1x32xf32>
    %211 = vector.broadcast %210 : vector<1x32xf32> to vector<10x32xf32>
    %212 = arith.mulf %207, %211 : vector<10x32xf32>
    %213 = vector.extract_strided_slice %58 {offsets = [5, 0], sizes = [1, 32], strides = [1, 1]} : vector<12x32xf32> to vector<1x32xf32>
    %cst_76 = arith.constant 0.000000e+00 : f32
    %214 = vector.broadcast %cst_76 : f32 to vector<10x32xf32>
    %215 = arith.cmpf oge, %212, %214 : vector<10x32xf32>
    %216 = vector.broadcast %213 : vector<1x32xf32> to vector<10x32xf32>
    %217 = arith.mulf %216, %212 : vector<10x32xf32>
    %218 = arith.select %215, %212, %217 : vector<10x32xi1>, vector<10x32xf32>
    %219 = vector.extract_strided_slice %56 {offsets = [192, 0], sizes = [32, 32], strides = [1, 1]} : vector<384x32xf32> to vector<32x32xf32>
    %cst_77 = arith.constant dense<0.000000e+00> : vector<10x32xf32>
    %220 = tpu.matmul %218, %219, %cst_77 {dimension_numbers = #tpu.dot_dimension_numbers<[1], [0], [0], [1], [0, 0, 1, 1], [], []>} : vector<10x32xf32>, vector<32x32xf32>, vector<10x32xf32> -> vector<10x32xf32>
    %221 = vector.extract_strided_slice %57 {offsets = [6, 0], sizes = [1, 32], strides = [1, 1]} : vector<12x32xf32> to vector<1x32xf32>
    %222 = vector.broadcast %221 : vector<1x32xf32> to vector<10x32xf32>
    %223 = arith.addf %220, %222 : vector<10x32xf32>
    %cst_78 = arith.constant dense<0.000000e+00> : vector<32xf32>
    %224 = vector.multi_reduction <add>, %223, %cst_78 [0] : vector<10x32xf32> to vector<32xf32>
    %225 = vector.shape_cast %224 : vector<32xf32> to vector<1x32xf32>
    %cst_79 = arith.constant 1.000000e-01 : f32
    %226 = vector.broadcast %cst_79 : f32 to vector<1x32xf32>
    %227 = arith.mulf %225, %226 : vector<1x32xf32>
    %228 = arith.mulf %223, %223 : vector<10x32xf32>
    %cst_80 = arith.constant dense<0.000000e+00> : vector<32xf32>
    %229 = vector.multi_reduction <add>, %228, %cst_80 [0] : vector<10x32xf32> to vector<32xf32>
    %230 = vector.shape_cast %229 : vector<32xf32> to vector<1x32xf32>
    %cst_81 = arith.constant 1.000000e-01 : f32
    %231 = vector.broadcast %cst_81 : f32 to vector<1x32xf32>
    %232 = arith.mulf %230, %231 : vector<1x32xf32>
    %233 = arith.mulf %227, %227 : vector<1x32xf32>
    %234 = arith.subf %232, %233 : vector<1x32xf32>
    %cst_82 = arith.constant 0.000000e+00 : f32
    %235 = vector.broadcast %cst_82 : f32 to vector<1x32xf32>
    %236 = arith.maximumf %234, %235 : vector<1x32xf32>
    %237 = vector.broadcast %227 : vector<1x32xf32> to vector<10x32xf32>
    %238 = arith.subf %223, %237 : vector<10x32xf32>
    %cst_83 = arith.constant 9.99999974E-6 : f32
    %239 = vector.broadcast %cst_83 : f32 to vector<1x32xf32>
    %240 = arith.addf %236, %239 : vector<1x32xf32>
    %241 = math.rsqrt %240 : vector<1x32xf32>
    %242 = vector.broadcast %241 : vector<1x32xf32> to vector<10x32xf32>
    %243 = arith.mulf %238, %242 : vector<10x32xf32>
    %244 = vector.extract_strided_slice %58 {offsets = [6, 0], sizes = [1, 32], strides = [1, 1]} : vector<12x32xf32> to vector<1x32xf32>
    %cst_84 = arith.constant 0.000000e+00 : f32
    %245 = vector.broadcast %cst_84 : f32 to vector<10x32xf32>
    %246 = arith.cmpf oge, %243, %245 : vector<10x32xf32>
    %247 = vector.broadcast %244 : vector<1x32xf32> to vector<10x32xf32>
    %248 = arith.mulf %247, %243 : vector<10x32xf32>
    %249 = arith.select %246, %243, %248 : vector<10x32xi1>, vector<10x32xf32>
    %cst_85 = arith.constant dense<0.000000e+00> : vector<16x32xf32>
    %250 = tpu.matmul %51, %249, %cst_85 {dimension_numbers = #tpu.dot_dimension_numbers<[1], [0], [0], [1], [0, 0, 1, 1], [], []>} : vector<16x10xf32>, vector<10x32xf32>, vector<16x32xf32> -> vector<16x32xf32>
    %251 = vector.extract_strided_slice %56 {offsets = [224, 0], sizes = [32, 32], strides = [1, 1]} : vector<384x32xf32> to vector<32x32xf32>
    %cst_86 = arith.constant dense<0.000000e+00> : vector<16x32xf32>
    %252 = tpu.matmul %250, %251, %cst_86 {dimension_numbers = #tpu.dot_dimension_numbers<[1], [0], [0], [1], [0, 0, 1, 1], [], []>} : vector<16x32xf32>, vector<32x32xf32>, vector<16x32xf32> -> vector<16x32xf32>
    %253 = vector.extract_strided_slice %57 {offsets = [7, 0], sizes = [1, 32], strides = [1, 1]} : vector<12x32xf32> to vector<1x32xf32>
    %254 = vector.broadcast %253 : vector<1x32xf32> to vector<16x32xf32>
    %255 = arith.addf %252, %254 : vector<16x32xf32>
    %cst_87 = arith.constant dense<0.000000e+00> : vector<32xf32>
    %256 = vector.multi_reduction <add>, %255, %cst_87 [0] : vector<16x32xf32> to vector<32xf32>
    %257 = vector.shape_cast %256 : vector<32xf32> to vector<1x32xf32>
    %cst_88 = arith.constant 6.250000e-02 : f32
    %258 = vector.broadcast %cst_88 : f32 to vector<1x32xf32>
    %259 = arith.mulf %257, %258 : vector<1x32xf32>
    %260 = arith.mulf %255, %255 : vector<16x32xf32>
    %cst_89 = arith.constant dense<0.000000e+00> : vector<32xf32>
    %261 = vector.multi_reduction <add>, %260, %cst_89 [0] : vector<16x32xf32> to vector<32xf32>
    %262 = vector.shape_cast %261 : vector<32xf32> to vector<1x32xf32>
    %cst_90 = arith.constant 6.250000e-02 : f32
    %263 = vector.broadcast %cst_90 : f32 to vector<1x32xf32>
    %264 = arith.mulf %262, %263 : vector<1x32xf32>
    %265 = arith.mulf %259, %259 : vector<1x32xf32>
    %266 = arith.subf %264, %265 : vector<1x32xf32>
    %cst_91 = arith.constant 0.000000e+00 : f32
    %267 = vector.broadcast %cst_91 : f32 to vector<1x32xf32>
    %268 = arith.maximumf %266, %267 : vector<1x32xf32>
    %269 = vector.broadcast %259 : vector<1x32xf32> to vector<16x32xf32>
    %270 = arith.subf %255, %269 : vector<16x32xf32>
    %cst_92 = arith.constant 9.99999974E-6 : f32
    %271 = vector.broadcast %cst_92 : f32 to vector<1x32xf32>
    %272 = arith.addf %268, %271 : vector<1x32xf32>
    %273 = math.rsqrt %272 : vector<1x32xf32>
    %274 = vector.broadcast %273 : vector<1x32xf32> to vector<16x32xf32>
    %275 = arith.mulf %270, %274 : vector<16x32xf32>
    %276 = vector.extract_strided_slice %58 {offsets = [7, 0], sizes = [1, 32], strides = [1, 1]} : vector<12x32xf32> to vector<1x32xf32>
    %cst_93 = arith.constant 0.000000e+00 : f32
    %277 = vector.broadcast %cst_93 : f32 to vector<16x32xf32>
    %278 = arith.cmpf oge, %275, %277 : vector<16x32xf32>
    %279 = vector.broadcast %276 : vector<1x32xf32> to vector<16x32xf32>
    %280 = arith.mulf %279, %275 : vector<16x32xf32>
    %281 = arith.select %278, %275, %280 : vector<16x32xi1>, vector<16x32xf32>
    %282 = vector.extract_strided_slice %89 {offsets = [0, 64], sizes = [16, 32], strides = [1, 1]} : vector<16x96xf32> to vector<16x32xf32>
    %cst_94 = arith.constant dense<0.000000e+00> : vector<6x32xf32>
    %283 = tpu.matmul %55, %282, %cst_94 {dimension_numbers = #tpu.dot_dimension_numbers<[1], [0], [0], [1], [0, 0, 1, 1], [], []>} : vector<6x16xf32>, vector<16x32xf32>, vector<6x32xf32> -> vector<6x32xf32>
    %284 = vector.extract_strided_slice %56 {offsets = [288, 0], sizes = [32, 32], strides = [1, 1]} : vector<384x32xf32> to vector<32x32xf32>
    %cst_95 = arith.constant dense<0.000000e+00> : vector<6x32xf32>
    %285 = tpu.matmul %283, %284, %cst_95 {dimension_numbers = #tpu.dot_dimension_numbers<[1], [0], [0], [1], [0, 0, 1, 1], [], []>} : vector<6x32xf32>, vector<32x32xf32>, vector<6x32xf32> -> vector<6x32xf32>
    %286 = vector.extract_strided_slice %57 {offsets = [9, 0], sizes = [1, 32], strides = [1, 1]} : vector<12x32xf32> to vector<1x32xf32>
    %287 = vector.broadcast %286 : vector<1x32xf32> to vector<6x32xf32>
    %288 = arith.addf %285, %287 : vector<6x32xf32>
    %cst_96 = arith.constant dense<0.000000e+00> : vector<32xf32>
    %289 = vector.multi_reduction <add>, %288, %cst_96 [0] : vector<6x32xf32> to vector<32xf32>
    %290 = vector.shape_cast %289 : vector<32xf32> to vector<1x32xf32>
    %cst_97 = arith.constant 0.166666672 : f32
    %291 = vector.broadcast %cst_97 : f32 to vector<1x32xf32>
    %292 = arith.mulf %290, %291 : vector<1x32xf32>
    %293 = arith.mulf %288, %288 : vector<6x32xf32>
    %cst_98 = arith.constant dense<0.000000e+00> : vector<32xf32>
    %294 = vector.multi_reduction <add>, %293, %cst_98 [0] : vector<6x32xf32> to vector<32xf32>
    %295 = vector.shape_cast %294 : vector<32xf32> to vector<1x32xf32>
    %cst_99 = arith.constant 0.166666672 : f32
    %296 = vector.broadcast %cst_99 : f32 to vector<1x32xf32>
    %297 = arith.mulf %295, %296 : vector<1x32xf32>
    %298 = arith.mulf %292, %292 : vector<1x32xf32>
    %299 = arith.subf %297, %298 : vector<1x32xf32>
    %cst_100 = arith.constant 0.000000e+00 : f32
    %300 = vector.broadcast %cst_100 : f32 to vector<1x32xf32>
    %301 = arith.maximumf %299, %300 : vector<1x32xf32>
    %302 = vector.broadcast %292 : vector<1x32xf32> to vector<6x32xf32>
    %303 = arith.subf %288, %302 : vector<6x32xf32>
    %cst_101 = arith.constant 9.99999974E-6 : f32
    %304 = vector.broadcast %cst_101 : f32 to vector<1x32xf32>
    %305 = arith.addf %301, %304 : vector<1x32xf32>
    %306 = math.rsqrt %305 : vector<1x32xf32>
    %307 = vector.broadcast %306 : vector<1x32xf32> to vector<6x32xf32>
    %308 = arith.mulf %303, %307 : vector<6x32xf32>
    %309 = vector.extract_strided_slice %58 {offsets = [9, 0], sizes = [1, 32], strides = [1, 1]} : vector<12x32xf32> to vector<1x32xf32>
    %cst_102 = arith.constant 0.000000e+00 : f32
    %310 = vector.broadcast %cst_102 : f32 to vector<6x32xf32>
    %311 = arith.cmpf oge, %308, %310 : vector<6x32xf32>
    %312 = vector.broadcast %309 : vector<1x32xf32> to vector<6x32xf32>
    %313 = arith.mulf %312, %308 : vector<6x32xf32>
    %314 = arith.select %311, %308, %313 : vector<6x32xi1>, vector<6x32xf32>
    %315 = vector.extract_strided_slice %56 {offsets = [320, 0], sizes = [32, 32], strides = [1, 1]} : vector<384x32xf32> to vector<32x32xf32>
    %cst_103 = arith.constant dense<0.000000e+00> : vector<6x32xf32>
    %316 = tpu.matmul %314, %315, %cst_103 {dimension_numbers = #tpu.dot_dimension_numbers<[1], [0], [0], [1], [0, 0, 1, 1], [], []>} : vector<6x32xf32>, vector<32x32xf32>, vector<6x32xf32> -> vector<6x32xf32>
    %317 = vector.extract_strided_slice %57 {offsets = [10, 0], sizes = [1, 32], strides = [1, 1]} : vector<12x32xf32> to vector<1x32xf32>
    %318 = vector.broadcast %317 : vector<1x32xf32> to vector<6x32xf32>
    %319 = arith.addf %316, %318 : vector<6x32xf32>
    %cst_104 = arith.constant dense<0.000000e+00> : vector<32xf32>
    %320 = vector.multi_reduction <add>, %319, %cst_104 [0] : vector<6x32xf32> to vector<32xf32>
    %321 = vector.shape_cast %320 : vector<32xf32> to vector<1x32xf32>
    %cst_105 = arith.constant 0.166666672 : f32
    %322 = vector.broadcast %cst_105 : f32 to vector<1x32xf32>
    %323 = arith.mulf %321, %322 : vector<1x32xf32>
    %324 = arith.mulf %319, %319 : vector<6x32xf32>
    %cst_106 = arith.constant dense<0.000000e+00> : vector<32xf32>
    %325 = vector.multi_reduction <add>, %324, %cst_106 [0] : vector<6x32xf32> to vector<32xf32>
    %326 = vector.shape_cast %325 : vector<32xf32> to vector<1x32xf32>
    %cst_107 = arith.constant 0.166666672 : f32
    %327 = vector.broadcast %cst_107 : f32 to vector<1x32xf32>
    %328 = arith.mulf %326, %327 : vector<1x32xf32>
    %329 = arith.mulf %323, %323 : vector<1x32xf32>
    %330 = arith.subf %328, %329 : vector<1x32xf32>
    %cst_108 = arith.constant 0.000000e+00 : f32
    %331 = vector.broadcast %cst_108 : f32 to vector<1x32xf32>
    %332 = arith.maximumf %330, %331 : vector<1x32xf32>
    %333 = vector.broadcast %323 : vector<1x32xf32> to vector<6x32xf32>
    %334 = arith.subf %319, %333 : vector<6x32xf32>
    %cst_109 = arith.constant 9.99999974E-6 : f32
    %335 = vector.broadcast %cst_109 : f32 to vector<1x32xf32>
    %336 = arith.addf %332, %335 : vector<1x32xf32>
    %337 = math.rsqrt %336 : vector<1x32xf32>
    %338 = vector.broadcast %337 : vector<1x32xf32> to vector<6x32xf32>
    %339 = arith.mulf %334, %338 : vector<6x32xf32>
    %340 = vector.extract_strided_slice %58 {offsets = [10, 0], sizes = [1, 32], strides = [1, 1]} : vector<12x32xf32> to vector<1x32xf32>
    %cst_110 = arith.constant 0.000000e+00 : f32
    %341 = vector.broadcast %cst_110 : f32 to vector<6x32xf32>
    %342 = arith.cmpf oge, %339, %341 : vector<6x32xf32>
    %343 = vector.broadcast %340 : vector<1x32xf32> to vector<6x32xf32>
    %344 = arith.mulf %343, %339 : vector<6x32xf32>
    %345 = arith.select %342, %339, %344 : vector<6x32xi1>, vector<6x32xf32>
    %cst_111 = arith.constant dense<0.000000e+00> : vector<16x32xf32>
    %346 = tpu.matmul %52, %345, %cst_111 {dimension_numbers = #tpu.dot_dimension_numbers<[1], [0], [0], [1], [0, 0, 1, 1], [], []>} : vector<16x6xf32>, vector<6x32xf32>, vector<16x32xf32> -> vector<16x32xf32>
    %347 = vector.extract_strided_slice %56 {offsets = [352, 0], sizes = [32, 32], strides = [1, 1]} : vector<384x32xf32> to vector<32x32xf32>
    %cst_112 = arith.constant dense<0.000000e+00> : vector<16x32xf32>
    %348 = tpu.matmul %346, %347, %cst_112 {dimension_numbers = #tpu.dot_dimension_numbers<[1], [0], [0], [1], [0, 0, 1, 1], [], []>} : vector<16x32xf32>, vector<32x32xf32>, vector<16x32xf32> -> vector<16x32xf32>
    %349 = vector.extract_strided_slice %57 {offsets = [11, 0], sizes = [1, 32], strides = [1, 1]} : vector<12x32xf32> to vector<1x32xf32>
    %350 = vector.broadcast %349 : vector<1x32xf32> to vector<16x32xf32>
    %351 = arith.addf %348, %350 : vector<16x32xf32>
    %cst_113 = arith.constant dense<0.000000e+00> : vector<32xf32>
    %352 = vector.multi_reduction <add>, %351, %cst_113 [0] : vector<16x32xf32> to vector<32xf32>
    %353 = vector.shape_cast %352 : vector<32xf32> to vector<1x32xf32>
    %cst_114 = arith.constant 6.250000e-02 : f32
    %354 = vector.broadcast %cst_114 : f32 to vector<1x32xf32>
    %355 = arith.mulf %353, %354 : vector<1x32xf32>
    %356 = arith.mulf %351, %351 : vector<16x32xf32>
    %cst_115 = arith.constant dense<0.000000e+00> : vector<32xf32>
    %357 = vector.multi_reduction <add>, %356, %cst_115 [0] : vector<16x32xf32> to vector<32xf32>
    %358 = vector.shape_cast %357 : vector<32xf32> to vector<1x32xf32>
    %cst_116 = arith.constant 6.250000e-02 : f32
    %359 = vector.broadcast %cst_116 : f32 to vector<1x32xf32>
    %360 = arith.mulf %358, %359 : vector<1x32xf32>
    %361 = arith.mulf %355, %355 : vector<1x32xf32>
    %362 = arith.subf %360, %361 : vector<1x32xf32>
    %cst_117 = arith.constant 0.000000e+00 : f32
    %363 = vector.broadcast %cst_117 : f32 to vector<1x32xf32>
    %364 = arith.maximumf %362, %363 : vector<1x32xf32>
    %365 = vector.broadcast %355 : vector<1x32xf32> to vector<16x32xf32>
    %366 = arith.subf %351, %365 : vector<16x32xf32>
    %cst_118 = arith.constant 9.99999974E-6 : f32
    %367 = vector.broadcast %cst_118 : f32 to vector<1x32xf32>
    %368 = arith.addf %364, %367 : vector<1x32xf32>
    %369 = math.rsqrt %368 : vector<1x32xf32>
    %370 = vector.broadcast %369 : vector<1x32xf32> to vector<16x32xf32>
    %371 = arith.mulf %366, %370 : vector<16x32xf32>
    %372 = vector.extract_strided_slice %58 {offsets = [11, 0], sizes = [1, 32], strides = [1, 1]} : vector<12x32xf32> to vector<1x32xf32>
    %cst_119 = arith.constant 0.000000e+00 : f32
    %373 = vector.broadcast %cst_119 : f32 to vector<16x32xf32>
    %374 = arith.cmpf oge, %371, %373 : vector<16x32xf32>
    %375 = vector.broadcast %372 : vector<1x32xf32> to vector<16x32xf32>
    %376 = arith.mulf %375, %371 : vector<16x32xf32>
    %377 = arith.select %374, %371, %376 : vector<16x32xi1>, vector<16x32xf32>
    %c544 = arith.constant 544 : index
    %c0_120 = arith.constant 0 : index
    %378 = vector.load %arg1[%c544, %c0_120] : memref<1656x32xf32, #tpu.memory_space<vmem>>, vector<64x32xf32>
    %c608 = arith.constant 608 : index
    %c0_121 = arith.constant 0 : index
    %379 = vector.load %arg1[%c608, %c0_121] : memref<1656x32xf32, #tpu.memory_space<vmem>>, vector<2x32xf32>
    %c616 = arith.constant 616 : index
    %c0_122 = arith.constant 0 : index
    %380 = vector.load %arg1[%c616, %c0_122] : memref<1656x32xf32, #tpu.memory_space<vmem>>, vector<2x32xf32>
    %381 = tpu.concatenate %185, %281, %377 in 0 : vector<16x32xf32>, vector<16x32xf32>, vector<16x32xf32> -> vector<48x32xf32>
    %382 = vector.extract_strided_slice %378 {offsets = [0, 0], sizes = [32, 32], strides = [1, 1]} : vector<64x32xf32> to vector<32x32xf32>
    %cst_123 = arith.constant dense<0.000000e+00> : vector<48x32xf32>
    %383 = tpu.matmul %381, %382, %cst_123 {dimension_numbers = #tpu.dot_dimension_numbers<[1], [0], [0], [1], [0, 0, 1, 1], [], []>} : vector<48x32xf32>, vector<32x32xf32>, vector<48x32xf32> -> vector<48x32xf32>
    %384 = vector.extract_strided_slice %379 {offsets = [0, 0], sizes = [1, 32], strides = [1, 1]} : vector<2x32xf32> to vector<1x32xf32>
    %385 = vector.broadcast %384 : vector<1x32xf32> to vector<48x32xf32>
    %386 = arith.addf %383, %385 : vector<48x32xf32>
    %387 = math.tanh %386 : vector<48x32xf32>
    %388 = vector.extract_strided_slice %387 {offsets = [0, 0], sizes = [16, 32], strides = [1, 1]} : vector<48x32xf32> to vector<16x32xf32>
    %cst_124 = arith.constant dense<0.000000e+00> : vector<32xf32>
    %389 = vector.multi_reduction <add>, %388, %cst_124 [0] : vector<16x32xf32> to vector<32xf32>
    %390 = vector.shape_cast %389 : vector<32xf32> to vector<1x32xf32>
    %cst_125 = arith.constant 1.600000e+01 : f32
    %391 = vector.broadcast %cst_125 : f32 to vector<1x32xf32>
    %392 = arith.divf %390, %391 : vector<1x32xf32>
    %393 = vector.extract_strided_slice %387 {offsets = [16, 0], sizes = [16, 32], strides = [1, 1]} : vector<48x32xf32> to vector<16x32xf32>
    %cst_126 = arith.constant dense<0.000000e+00> : vector<32xf32>
    %394 = vector.multi_reduction <add>, %393, %cst_126 [0] : vector<16x32xf32> to vector<32xf32>
    %395 = vector.shape_cast %394 : vector<32xf32> to vector<1x32xf32>
    %cst_127 = arith.constant 1.600000e+01 : f32
    %396 = vector.broadcast %cst_127 : f32 to vector<1x32xf32>
    %397 = arith.divf %395, %396 : vector<1x32xf32>
    %398 = vector.extract_strided_slice %387 {offsets = [32, 0], sizes = [16, 32], strides = [1, 1]} : vector<48x32xf32> to vector<16x32xf32>
    %cst_128 = arith.constant dense<0.000000e+00> : vector<32xf32>
    %399 = vector.multi_reduction <add>, %398, %cst_128 [0] : vector<16x32xf32> to vector<32xf32>
    %400 = vector.shape_cast %399 : vector<32xf32> to vector<1x32xf32>
    %cst_129 = arith.constant 1.600000e+01 : f32
    %401 = vector.broadcast %cst_129 : f32 to vector<1x32xf32>
    %402 = arith.divf %400, %401 : vector<1x32xf32>
    %403 = tpu.concatenate %392, %397, %402 in 0 : vector<1x32xf32>, vector<1x32xf32>, vector<1x32xf32> -> vector<3x32xf32>
    %404 = vector.extract_strided_slice %380 {offsets = [0, 0], sizes = [1, 32], strides = [1, 1]} : vector<2x32xf32> to vector<1x32xf32>
    "tpu.trace_start"() <{level = 10 : i32, message = "kh,oh->ko"}> : () -> ()
    %cst_130 = arith.constant dense<0.000000e+00> : vector<3x1xf32>
    %405 = tpu.matmul %403, %404, %cst_130 {dimension_numbers = #tpu.dot_dimension_numbers<[1], [1], [0], [0], [0, 0, 1, 0], [], []>} : vector<3x32xf32>, vector<1x32xf32>, vector<3x1xf32> -> vector<3x1xf32>
    "tpu.trace_stop"() : () -> ()
    %cst_131 = arith.constant dense<0xFF800000> : vector<1xf32>
    %406 = vector.multi_reduction <maximumf>, %405, %cst_131 [0] : vector<3x1xf32> to vector<1xf32>
    %407 = vector.shape_cast %406 : vector<1xf32> to vector<1x1xf32>
    %408 = vector.broadcast %407 : vector<1x1xf32> to vector<3x1xf32>
    %409 = arith.subf %405, %408 : vector<3x1xf32>
    %410 = math.exp %409 : vector<3x1xf32>
    %cst_132 = arith.constant dense<0.000000e+00> : vector<1xf32>
    %411 = vector.multi_reduction <add>, %410, %cst_132 [0] : vector<3x1xf32> to vector<1xf32>
    %412 = vector.shape_cast %411 : vector<1xf32> to vector<1x1xf32>
    %413 = vector.broadcast %412 : vector<1x1xf32> to vector<3x1xf32>
    %414 = arith.divf %410, %413 : vector<3x1xf32>
    %415 = vector.extract_strided_slice %414 {offsets = [0, 0], sizes = [1, 1], strides = [1, 1]} : vector<3x1xf32> to vector<1x1xf32>
    %416 = vector.broadcast %415 : vector<1x1xf32> to vector<16x32xf32>
    %417 = arith.mulf %416, %185 : vector<16x32xf32>
    %418 = vector.extract_strided_slice %414 {offsets = [1, 0], sizes = [1, 1], strides = [1, 1]} : vector<3x1xf32> to vector<1x1xf32>
    %419 = vector.broadcast %418 : vector<1x1xf32> to vector<16x32xf32>
    %420 = arith.mulf %419, %281 : vector<16x32xf32>
    %421 = arith.addf %417, %420 : vector<16x32xf32>
    %422 = vector.extract_strided_slice %414 {offsets = [2, 0], sizes = [1, 1], strides = [1, 1]} : vector<3x1xf32> to vector<1x1xf32>
    %423 = vector.broadcast %422 : vector<1x1xf32> to vector<16x32xf32>
    %424 = arith.mulf %423, %377 : vector<16x32xf32>
    %425 = arith.addf %421, %424 : vector<16x32xf32>
    %c96 = arith.constant 96 : index
    %c0_133 = arith.constant 0 : index
    %426 = vector.load %arg1[%c96, %c0_133] : memref<1656x32xf32, #tpu.memory_space<vmem>>, vector<3x32xf32>
    %c104_134 = arith.constant 104 : index
    %c0_135 = arith.constant 0 : index
    %427 = vector.load %arg1[%c104_134, %c0_135] : memref<1656x32xf32, #tpu.memory_space<vmem>>, vector<3x32xf32>
    %c112 = arith.constant 112 : index
    %c0_136 = arith.constant 0 : index
    %428 = vector.load %arg1[%c112, %c0_136] : memref<1656x32xf32, #tpu.memory_space<vmem>>, vector<3x32xf32>
    %c120_137 = arith.constant 120 : index
    %c0_138 = arith.constant 0 : index
    %429 = vector.load %arg1[%c120_137, %c0_138] : memref<1656x32xf32, #tpu.memory_space<vmem>>, vector<3x32xf32>
    "tpu.trace_start"() <{level = 10 : i32, message = "nh,rh->nr"}> : () -> ()
    %cst_139 = arith.constant dense<0.000000e+00> : vector<16x3xf32>
    %430 = tpu.matmul %19, %427, %cst_139 {dimension_numbers = #tpu.dot_dimension_numbers<[1], [1], [0], [0], [0, 0, 1, 0], [], []>} : vector<16x32xf32>, vector<3x32xf32>, vector<16x3xf32> -> vector<16x3xf32>
    "tpu.trace_stop"() : () -> ()
    %431 = vector.extract_strided_slice %426 {offsets = [0, 0], sizes = [1, 32], strides = [1, 1]} : vector<3x32xf32> to vector<1x32xf32>
    "tpu.trace_start"() <{level = 10 : i32, message = "oh,sh->os"}> : () -> ()
    %cst_140 = arith.constant dense<0.000000e+00> : vector<1x12xf32>
    %432 = tpu.matmul %431, %29, %cst_140 {dimension_numbers = #tpu.dot_dimension_numbers<[1], [1], [0], [0], [0, 0, 1, 0], [], []>} : vector<1x32xf32>, vector<12x32xf32>, vector<1x12xf32> -> vector<1x12xf32>
    "tpu.trace_stop"() : () -> ()
    %433 = vector.extract_strided_slice %430 {offsets = [0, 0], sizes = [16, 1], strides = [1, 1]} : vector<16x3xf32> to vector<16x1xf32>
    %434 = vector.broadcast %433 : vector<16x1xf32> to vector<16x12xf32>
    %435 = vector.broadcast %432 : vector<1x12xf32> to vector<16x12xf32>
    %436 = arith.addf %434, %435 : vector<16x12xf32>
    %cst_141 = arith.constant 0.000000e+00 : f32
    %437 = vector.broadcast %cst_141 : f32 to vector<16x12xf32>
    %438 = arith.cmpf oge, %436, %437 : vector<16x12xf32>
    %cst_142 = arith.constant 0.00999999977 : f32
    %439 = vector.broadcast %cst_142 : f32 to vector<16x12xf32>
    %440 = arith.mulf %439, %436 : vector<16x12xf32>
    %441 = arith.select %438, %436, %440 : vector<16x12xi1>, vector<16x12xf32>
    %cst_143 = arith.constant 0.000000e+00 : f32
    %442 = vector.broadcast %cst_143 : f32 to vector<16x12xf32>
    %443 = arith.cmpf ogt, %50, %442 : vector<16x12xf32>
    %cst_144 = arith.constant -1.000000e+30 : f32
    %444 = vector.broadcast %cst_144 : f32 to vector<16x12xf32>
    %445 = arith.select %443, %441, %444 : vector<16x12xi1>, vector<16x12xf32>
    %cst_145 = arith.constant dense<0xFF800000> : vector<16xf32>
    %446 = vector.multi_reduction <maximumf>, %445, %cst_145 [1] : vector<16x12xf32> to vector<16xf32>
    %447 = vector.shape_cast %446 : vector<16xf32> to vector<16x1xf32>
    %cst_146 = arith.constant 0.000000e+00 : f32
    %448 = vector.broadcast %cst_146 : f32 to vector<16x12xf32>
    %449 = arith.cmpf ogt, %50, %448 : vector<16x12xf32>
    %450 = vector.broadcast %447 : vector<16x1xf32> to vector<16x12xf32>
    %451 = arith.subf %445, %450 : vector<16x12xf32>
    %452 = math.exp %451 : vector<16x12xf32>
    %cst_147 = arith.constant 0.000000e+00 : f32
    %453 = vector.broadcast %cst_147 : f32 to vector<16x12xf32>
    %454 = arith.select %449, %452, %453 : vector<16x12xi1>, vector<16x12xf32>
    %cst_148 = arith.constant dense<0.000000e+00> : vector<16xf32>
    %455 = vector.multi_reduction <add>, %454, %cst_148 [1] : vector<16x12xf32> to vector<16xf32>
    %456 = vector.shape_cast %455 : vector<16xf32> to vector<16x1xf32>
    %cst_149 = arith.constant 0.000000e+00 : f32
    %457 = vector.broadcast %cst_149 : f32 to vector<16x1xf32>
    %458 = arith.cmpf ogt, %456, %457 : vector<16x1xf32>
    %cst_150 = arith.constant 1.000000e+00 : f32
    %459 = vector.broadcast %cst_150 : f32 to vector<16x1xf32>
    %460 = arith.select %458, %456, %459 : vector<16x1xi1>, vector<16x1xf32>
    %461 = vector.broadcast %460 : vector<16x1xf32> to vector<16x12xf32>
    %462 = arith.divf %454, %461 : vector<16x12xf32>
    %cst_151 = arith.constant dense<0.000000e+00> : vector<16x32xf32>
    %463 = tpu.matmul %462, %29, %cst_151 {dimension_numbers = #tpu.dot_dimension_numbers<[1], [0], [0], [1], [0, 0, 1, 1], [], []>} : vector<16x12xf32>, vector<12x32xf32>, vector<16x32xf32> -> vector<16x32xf32>
    %464 = vector.extract_strided_slice %428 {offsets = [0, 0], sizes = [1, 32], strides = [1, 1]} : vector<3x32xf32> to vector<1x32xf32>
    %465 = vector.broadcast %464 : vector<1x32xf32> to vector<16x32xf32>
    %466 = arith.addf %463, %465 : vector<16x32xf32>
    %cst_152 = arith.constant dense<0.000000e+00> : vector<32xf32>
    %467 = vector.multi_reduction <add>, %466, %cst_152 [0] : vector<16x32xf32> to vector<32xf32>
    %468 = vector.shape_cast %467 : vector<32xf32> to vector<1x32xf32>
    %cst_153 = arith.constant 6.250000e-02 : f32
    %469 = vector.broadcast %cst_153 : f32 to vector<1x32xf32>
    %470 = arith.mulf %468, %469 : vector<1x32xf32>
    %471 = arith.mulf %466, %466 : vector<16x32xf32>
    %cst_154 = arith.constant dense<0.000000e+00> : vector<32xf32>
    %472 = vector.multi_reduction <add>, %471, %cst_154 [0] : vector<16x32xf32> to vector<32xf32>
    %473 = vector.shape_cast %472 : vector<32xf32> to vector<1x32xf32>
    %cst_155 = arith.constant 6.250000e-02 : f32
    %474 = vector.broadcast %cst_155 : f32 to vector<1x32xf32>
    %475 = arith.mulf %473, %474 : vector<1x32xf32>
    %476 = arith.mulf %470, %470 : vector<1x32xf32>
    %477 = arith.subf %475, %476 : vector<1x32xf32>
    %cst_156 = arith.constant 0.000000e+00 : f32
    %478 = vector.broadcast %cst_156 : f32 to vector<1x32xf32>
    %479 = arith.maximumf %477, %478 : vector<1x32xf32>
    %480 = vector.broadcast %470 : vector<1x32xf32> to vector<16x32xf32>
    %481 = arith.subf %466, %480 : vector<16x32xf32>
    %cst_157 = arith.constant 9.99999974E-6 : f32
    %482 = vector.broadcast %cst_157 : f32 to vector<1x32xf32>
    %483 = arith.addf %479, %482 : vector<1x32xf32>
    %484 = math.rsqrt %483 : vector<1x32xf32>
    %485 = vector.broadcast %484 : vector<1x32xf32> to vector<16x32xf32>
    %486 = arith.mulf %481, %485 : vector<16x32xf32>
    %487 = vector.extract_strided_slice %429 {offsets = [0, 0], sizes = [1, 32], strides = [1, 1]} : vector<3x32xf32> to vector<1x32xf32>
    %cst_158 = arith.constant 0.000000e+00 : f32
    %488 = vector.broadcast %cst_158 : f32 to vector<16x32xf32>
    %489 = arith.cmpf oge, %486, %488 : vector<16x32xf32>
    %490 = vector.broadcast %487 : vector<1x32xf32> to vector<16x32xf32>
    %491 = arith.mulf %490, %486 : vector<16x32xf32>
    %492 = arith.select %489, %486, %491 : vector<16x32xi1>, vector<16x32xf32>
    %493 = vector.extract_strided_slice %426 {offsets = [1, 0], sizes = [1, 32], strides = [1, 1]} : vector<3x32xf32> to vector<1x32xf32>
    "tpu.trace_start"() <{level = 10 : i32, message = "oh,sh->os"}> : () -> ()
    %cst_159 = arith.constant dense<0.000000e+00> : vector<1x10xf32>
    %494 = tpu.matmul %493, %39, %cst_159 {dimension_numbers = #tpu.dot_dimension_numbers<[1], [1], [0], [0], [0, 0, 1, 0], [], []>} : vector<1x32xf32>, vector<10x32xf32>, vector<1x10xf32> -> vector<1x10xf32>
    "tpu.trace_stop"() : () -> ()
    %495 = vector.extract_strided_slice %430 {offsets = [0, 1], sizes = [16, 1], strides = [1, 1]} : vector<16x3xf32> to vector<16x1xf32>
    %496 = vector.broadcast %495 : vector<16x1xf32> to vector<16x10xf32>
    %497 = vector.broadcast %494 : vector<1x10xf32> to vector<16x10xf32>
    %498 = arith.addf %496, %497 : vector<16x10xf32>
    %cst_160 = arith.constant 0.000000e+00 : f32
    %499 = vector.broadcast %cst_160 : f32 to vector<16x10xf32>
    %500 = arith.cmpf oge, %498, %499 : vector<16x10xf32>
    %cst_161 = arith.constant 0.00999999977 : f32
    %501 = vector.broadcast %cst_161 : f32 to vector<16x10xf32>
    %502 = arith.mulf %501, %498 : vector<16x10xf32>
    %503 = arith.select %500, %498, %502 : vector<16x10xi1>, vector<16x10xf32>
    %cst_162 = arith.constant 0.000000e+00 : f32
    %504 = vector.broadcast %cst_162 : f32 to vector<16x10xf32>
    %505 = arith.cmpf ogt, %51, %504 : vector<16x10xf32>
    %cst_163 = arith.constant -1.000000e+30 : f32
    %506 = vector.broadcast %cst_163 : f32 to vector<16x10xf32>
    %507 = arith.select %505, %503, %506 : vector<16x10xi1>, vector<16x10xf32>
    %cst_164 = arith.constant dense<0xFF800000> : vector<16xf32>
    %508 = vector.multi_reduction <maximumf>, %507, %cst_164 [1] : vector<16x10xf32> to vector<16xf32>
    %509 = vector.shape_cast %508 : vector<16xf32> to vector<16x1xf32>
    %cst_165 = arith.constant 0.000000e+00 : f32
    %510 = vector.broadcast %cst_165 : f32 to vector<16x10xf32>
    %511 = arith.cmpf ogt, %51, %510 : vector<16x10xf32>
    %512 = vector.broadcast %509 : vector<16x1xf32> to vector<16x10xf32>
    %513 = arith.subf %507, %512 : vector<16x10xf32>
    %514 = math.exp %513 : vector<16x10xf32>
    %cst_166 = arith.constant 0.000000e+00 : f32
    %515 = vector.broadcast %cst_166 : f32 to vector<16x10xf32>
    %516 = arith.select %511, %514, %515 : vector<16x10xi1>, vector<16x10xf32>
    %cst_167 = arith.constant dense<0.000000e+00> : vector<16xf32>
    %517 = vector.multi_reduction <add>, %516, %cst_167 [1] : vector<16x10xf32> to vector<16xf32>
    %518 = vector.shape_cast %517 : vector<16xf32> to vector<16x1xf32>
    %cst_168 = arith.constant 0.000000e+00 : f32
    %519 = vector.broadcast %cst_168 : f32 to vector<16x1xf32>
    %520 = arith.cmpf ogt, %518, %519 : vector<16x1xf32>
    %cst_169 = arith.constant 1.000000e+00 : f32
    %521 = vector.broadcast %cst_169 : f32 to vector<16x1xf32>
    %522 = arith.select %520, %518, %521 : vector<16x1xi1>, vector<16x1xf32>
    %523 = vector.broadcast %522 : vector<16x1xf32> to vector<16x10xf32>
    %524 = arith.divf %516, %523 : vector<16x10xf32>
    %cst_170 = arith.constant dense<0.000000e+00> : vector<16x32xf32>
    %525 = tpu.matmul %524, %39, %cst_170 {dimension_numbers = #tpu.dot_dimension_numbers<[1], [0], [0], [1], [0, 0, 1, 1], [], []>} : vector<16x10xf32>, vector<10x32xf32>, vector<16x32xf32> -> vector<16x32xf32>
    %526 = vector.extract_strided_slice %428 {offsets = [1, 0], sizes = [1, 32], strides = [1, 1]} : vector<3x32xf32> to vector<1x32xf32>
    %527 = vector.broadcast %526 : vector<1x32xf32> to vector<16x32xf32>
    %528 = arith.addf %525, %527 : vector<16x32xf32>
    %cst_171 = arith.constant dense<0.000000e+00> : vector<32xf32>
    %529 = vector.multi_reduction <add>, %528, %cst_171 [0] : vector<16x32xf32> to vector<32xf32>
    %530 = vector.shape_cast %529 : vector<32xf32> to vector<1x32xf32>
    %cst_172 = arith.constant 6.250000e-02 : f32
    %531 = vector.broadcast %cst_172 : f32 to vector<1x32xf32>
    %532 = arith.mulf %530, %531 : vector<1x32xf32>
    %533 = arith.mulf %528, %528 : vector<16x32xf32>
    %cst_173 = arith.constant dense<0.000000e+00> : vector<32xf32>
    %534 = vector.multi_reduction <add>, %533, %cst_173 [0] : vector<16x32xf32> to vector<32xf32>
    %535 = vector.shape_cast %534 : vector<32xf32> to vector<1x32xf32>
    %cst_174 = arith.constant 6.250000e-02 : f32
    %536 = vector.broadcast %cst_174 : f32 to vector<1x32xf32>
    %537 = arith.mulf %535, %536 : vector<1x32xf32>
    %538 = arith.mulf %532, %532 : vector<1x32xf32>
    %539 = arith.subf %537, %538 : vector<1x32xf32>
    %cst_175 = arith.constant 0.000000e+00 : f32
    %540 = vector.broadcast %cst_175 : f32 to vector<1x32xf32>
    %541 = arith.maximumf %539, %540 : vector<1x32xf32>
    %542 = vector.broadcast %532 : vector<1x32xf32> to vector<16x32xf32>
    %543 = arith.subf %528, %542 : vector<16x32xf32>
    %cst_176 = arith.constant 9.99999974E-6 : f32
    %544 = vector.broadcast %cst_176 : f32 to vector<1x32xf32>
    %545 = arith.addf %541, %544 : vector<1x32xf32>
    %546 = math.rsqrt %545 : vector<1x32xf32>
    %547 = vector.broadcast %546 : vector<1x32xf32> to vector<16x32xf32>
    %548 = arith.mulf %543, %547 : vector<16x32xf32>
    %549 = vector.extract_strided_slice %429 {offsets = [1, 0], sizes = [1, 32], strides = [1, 1]} : vector<3x32xf32> to vector<1x32xf32>
    %cst_177 = arith.constant 0.000000e+00 : f32
    %550 = vector.broadcast %cst_177 : f32 to vector<16x32xf32>
    %551 = arith.cmpf oge, %548, %550 : vector<16x32xf32>
    %552 = vector.broadcast %549 : vector<1x32xf32> to vector<16x32xf32>
    %553 = arith.mulf %552, %548 : vector<16x32xf32>
    %554 = arith.select %551, %548, %553 : vector<16x32xi1>, vector<16x32xf32>
    %555 = vector.extract_strided_slice %426 {offsets = [2, 0], sizes = [1, 32], strides = [1, 1]} : vector<3x32xf32> to vector<1x32xf32>
    "tpu.trace_start"() <{level = 10 : i32, message = "oh,sh->os"}> : () -> ()
    %cst_178 = arith.constant dense<0.000000e+00> : vector<1x6xf32>
    %556 = tpu.matmul %555, %49, %cst_178 {dimension_numbers = #tpu.dot_dimension_numbers<[1], [1], [0], [0], [0, 0, 1, 0], [], []>} : vector<1x32xf32>, vector<6x32xf32>, vector<1x6xf32> -> vector<1x6xf32>
    "tpu.trace_stop"() : () -> ()
    %557 = vector.extract_strided_slice %430 {offsets = [0, 2], sizes = [16, 1], strides = [1, 1]} : vector<16x3xf32> to vector<16x1xf32>
    %558 = vector.broadcast %557 : vector<16x1xf32> to vector<16x6xf32>
    %559 = vector.broadcast %556 : vector<1x6xf32> to vector<16x6xf32>
    %560 = arith.addf %558, %559 : vector<16x6xf32>
    %cst_179 = arith.constant 0.000000e+00 : f32
    %561 = vector.broadcast %cst_179 : f32 to vector<16x6xf32>
    %562 = arith.cmpf oge, %560, %561 : vector<16x6xf32>
    %cst_180 = arith.constant 0.00999999977 : f32
    %563 = vector.broadcast %cst_180 : f32 to vector<16x6xf32>
    %564 = arith.mulf %563, %560 : vector<16x6xf32>
    %565 = arith.select %562, %560, %564 : vector<16x6xi1>, vector<16x6xf32>
    %cst_181 = arith.constant 0.000000e+00 : f32
    %566 = vector.broadcast %cst_181 : f32 to vector<16x6xf32>
    %567 = arith.cmpf ogt, %52, %566 : vector<16x6xf32>
    %cst_182 = arith.constant -1.000000e+30 : f32
    %568 = vector.broadcast %cst_182 : f32 to vector<16x6xf32>
    %569 = arith.select %567, %565, %568 : vector<16x6xi1>, vector<16x6xf32>
    %cst_183 = arith.constant dense<0xFF800000> : vector<16xf32>
    %570 = vector.multi_reduction <maximumf>, %569, %cst_183 [1] : vector<16x6xf32> to vector<16xf32>
    %571 = vector.shape_cast %570 : vector<16xf32> to vector<16x1xf32>
    %cst_184 = arith.constant 0.000000e+00 : f32
    %572 = vector.broadcast %cst_184 : f32 to vector<16x6xf32>
    %573 = arith.cmpf ogt, %52, %572 : vector<16x6xf32>
    %574 = vector.broadcast %571 : vector<16x1xf32> to vector<16x6xf32>
    %575 = arith.subf %569, %574 : vector<16x6xf32>
    %576 = math.exp %575 : vector<16x6xf32>
    %cst_185 = arith.constant 0.000000e+00 : f32
    %577 = vector.broadcast %cst_185 : f32 to vector<16x6xf32>
    %578 = arith.select %573, %576, %577 : vector<16x6xi1>, vector<16x6xf32>
    %cst_186 = arith.constant dense<0.000000e+00> : vector<16xf32>
    %579 = vector.multi_reduction <add>, %578, %cst_186 [1] : vector<16x6xf32> to vector<16xf32>
    %580 = vector.shape_cast %579 : vector<16xf32> to vector<16x1xf32>
    %cst_187 = arith.constant 0.000000e+00 : f32
    %581 = vector.broadcast %cst_187 : f32 to vector<16x1xf32>
    %582 = arith.cmpf ogt, %580, %581 : vector<16x1xf32>
    %cst_188 = arith.constant 1.000000e+00 : f32
    %583 = vector.broadcast %cst_188 : f32 to vector<16x1xf32>
    %584 = arith.select %582, %580, %583 : vector<16x1xi1>, vector<16x1xf32>
    %585 = vector.broadcast %584 : vector<16x1xf32> to vector<16x6xf32>
    %586 = arith.divf %578, %585 : vector<16x6xf32>
    %cst_189 = arith.constant dense<0.000000e+00> : vector<16x32xf32>
    %587 = tpu.matmul %586, %49, %cst_189 {dimension_numbers = #tpu.dot_dimension_numbers<[1], [0], [0], [1], [0, 0, 1, 1], [], []>} : vector<16x6xf32>, vector<6x32xf32>, vector<16x32xf32> -> vector<16x32xf32>
    %588 = vector.extract_strided_slice %428 {offsets = [2, 0], sizes = [1, 32], strides = [1, 1]} : vector<3x32xf32> to vector<1x32xf32>
    %589 = vector.broadcast %588 : vector<1x32xf32> to vector<16x32xf32>
    %590 = arith.addf %587, %589 : vector<16x32xf32>
    %cst_190 = arith.constant dense<0.000000e+00> : vector<32xf32>
    %591 = vector.multi_reduction <add>, %590, %cst_190 [0] : vector<16x32xf32> to vector<32xf32>
    %592 = vector.shape_cast %591 : vector<32xf32> to vector<1x32xf32>
    %cst_191 = arith.constant 6.250000e-02 : f32
    %593 = vector.broadcast %cst_191 : f32 to vector<1x32xf32>
    %594 = arith.mulf %592, %593 : vector<1x32xf32>
    %595 = arith.mulf %590, %590 : vector<16x32xf32>
    %cst_192 = arith.constant dense<0.000000e+00> : vector<32xf32>
    %596 = vector.multi_reduction <add>, %595, %cst_192 [0] : vector<16x32xf32> to vector<32xf32>
    %597 = vector.shape_cast %596 : vector<32xf32> to vector<1x32xf32>
    %cst_193 = arith.constant 6.250000e-02 : f32
    %598 = vector.broadcast %cst_193 : f32 to vector<1x32xf32>
    %599 = arith.mulf %597, %598 : vector<1x32xf32>
    %600 = arith.mulf %594, %594 : vector<1x32xf32>
    %601 = arith.subf %599, %600 : vector<1x32xf32>
    %cst_194 = arith.constant 0.000000e+00 : f32
    %602 = vector.broadcast %cst_194 : f32 to vector<1x32xf32>
    %603 = arith.maximumf %601, %602 : vector<1x32xf32>
    %604 = vector.broadcast %594 : vector<1x32xf32> to vector<16x32xf32>
    %605 = arith.subf %590, %604 : vector<16x32xf32>
    %cst_195 = arith.constant 9.99999974E-6 : f32
    %606 = vector.broadcast %cst_195 : f32 to vector<1x32xf32>
    %607 = arith.addf %603, %606 : vector<1x32xf32>
    %608 = math.rsqrt %607 : vector<1x32xf32>
    %609 = vector.broadcast %608 : vector<1x32xf32> to vector<16x32xf32>
    %610 = arith.mulf %605, %609 : vector<16x32xf32>
    %611 = vector.extract_strided_slice %429 {offsets = [2, 0], sizes = [1, 32], strides = [1, 1]} : vector<3x32xf32> to vector<1x32xf32>
    %cst_196 = arith.constant 0.000000e+00 : f32
    %612 = vector.broadcast %cst_196 : f32 to vector<16x32xf32>
    %613 = arith.cmpf oge, %610, %612 : vector<16x32xf32>
    %614 = vector.broadcast %611 : vector<1x32xf32> to vector<16x32xf32>
    %615 = arith.mulf %614, %610 : vector<16x32xf32>
    %616 = arith.select %613, %610, %615 : vector<16x32xi1>, vector<16x32xf32>
    %617 = tpu.concatenate %492, %554, %616 in 0 : vector<16x32xf32>, vector<16x32xf32>, vector<16x32xf32> -> vector<48x32xf32>
    %618 = vector.extract_strided_slice %378 {offsets = [32, 0], sizes = [32, 32], strides = [1, 1]} : vector<64x32xf32> to vector<32x32xf32>
    %cst_197 = arith.constant dense<0.000000e+00> : vector<48x32xf32>
    %619 = tpu.matmul %617, %618, %cst_197 {dimension_numbers = #tpu.dot_dimension_numbers<[1], [0], [0], [1], [0, 0, 1, 1], [], []>} : vector<48x32xf32>, vector<32x32xf32>, vector<48x32xf32> -> vector<48x32xf32>
    %620 = vector.extract_strided_slice %379 {offsets = [1, 0], sizes = [1, 32], strides = [1, 1]} : vector<2x32xf32> to vector<1x32xf32>
    %621 = vector.broadcast %620 : vector<1x32xf32> to vector<48x32xf32>
    %622 = arith.addf %619, %621 : vector<48x32xf32>
    %623 = math.tanh %622 : vector<48x32xf32>
    %624 = vector.extract_strided_slice %623 {offsets = [0, 0], sizes = [16, 32], strides = [1, 1]} : vector<48x32xf32> to vector<16x32xf32>
    %cst_198 = arith.constant dense<0.000000e+00> : vector<32xf32>
    %625 = vector.multi_reduction <add>, %624, %cst_198 [0] : vector<16x32xf32> to vector<32xf32>
    %626 = vector.shape_cast %625 : vector<32xf32> to vector<1x32xf32>
    %cst_199 = arith.constant 1.600000e+01 : f32
    %627 = vector.broadcast %cst_199 : f32 to vector<1x32xf32>
    %628 = arith.divf %626, %627 : vector<1x32xf32>
    %629 = vector.extract_strided_slice %623 {offsets = [16, 0], sizes = [16, 32], strides = [1, 1]} : vector<48x32xf32> to vector<16x32xf32>
    %cst_200 = arith.constant dense<0.000000e+00> : vector<32xf32>
    %630 = vector.multi_reduction <add>, %629, %cst_200 [0] : vector<16x32xf32> to vector<32xf32>
    %631 = vector.shape_cast %630 : vector<32xf32> to vector<1x32xf32>
    %cst_201 = arith.constant 1.600000e+01 : f32
    %632 = vector.broadcast %cst_201 : f32 to vector<1x32xf32>
    %633 = arith.divf %631, %632 : vector<1x32xf32>
    %634 = vector.extract_strided_slice %623 {offsets = [32, 0], sizes = [16, 32], strides = [1, 1]} : vector<48x32xf32> to vector<16x32xf32>
    %cst_202 = arith.constant dense<0.000000e+00> : vector<32xf32>
    %635 = vector.multi_reduction <add>, %634, %cst_202 [0] : vector<16x32xf32> to vector<32xf32>
    %636 = vector.shape_cast %635 : vector<32xf32> to vector<1x32xf32>
    %cst_203 = arith.constant 1.600000e+01 : f32
    %637 = vector.broadcast %cst_203 : f32 to vector<1x32xf32>
    %638 = arith.divf %636, %637 : vector<1x32xf32>
    %639 = tpu.concatenate %628, %633, %638 in 0 : vector<1x32xf32>, vector<1x32xf32>, vector<1x32xf32> -> vector<3x32xf32>
    %640 = vector.extract_strided_slice %380 {offsets = [1, 0], sizes = [1, 32], strides = [1, 1]} : vector<2x32xf32> to vector<1x32xf32>
    "tpu.trace_start"() <{level = 10 : i32, message = "kh,oh->ko"}> : () -> ()
    %cst_204 = arith.constant dense<0.000000e+00> : vector<3x1xf32>
    %641 = tpu.matmul %639, %640, %cst_204 {dimension_numbers = #tpu.dot_dimension_numbers<[1], [1], [0], [0], [0, 0, 1, 0], [], []>} : vector<3x32xf32>, vector<1x32xf32>, vector<3x1xf32> -> vector<3x1xf32>
    "tpu.trace_stop"() : () -> ()
    %cst_205 = arith.constant dense<0xFF800000> : vector<1xf32>
    %642 = vector.multi_reduction <maximumf>, %641, %cst_205 [0] : vector<3x1xf32> to vector<1xf32>
    %643 = vector.shape_cast %642 : vector<1xf32> to vector<1x1xf32>
    %644 = vector.broadcast %643 : vector<1x1xf32> to vector<3x1xf32>
    %645 = arith.subf %641, %644 : vector<3x1xf32>
    %646 = math.exp %645 : vector<3x1xf32>
    %cst_206 = arith.constant dense<0.000000e+00> : vector<1xf32>
    %647 = vector.multi_reduction <add>, %646, %cst_206 [0] : vector<3x1xf32> to vector<1xf32>
    %648 = vector.shape_cast %647 : vector<1xf32> to vector<1x1xf32>
    %649 = vector.broadcast %648 : vector<1x1xf32> to vector<3x1xf32>
    %650 = arith.divf %646, %649 : vector<3x1xf32>
    %651 = vector.extract_strided_slice %650 {offsets = [0, 0], sizes = [1, 1], strides = [1, 1]} : vector<3x1xf32> to vector<1x1xf32>
    %652 = vector.broadcast %651 : vector<1x1xf32> to vector<16x32xf32>
    %653 = arith.mulf %652, %492 : vector<16x32xf32>
    %654 = vector.extract_strided_slice %650 {offsets = [1, 0], sizes = [1, 1], strides = [1, 1]} : vector<3x1xf32> to vector<1x1xf32>
    %655 = vector.broadcast %654 : vector<1x1xf32> to vector<16x32xf32>
    %656 = arith.mulf %655, %554 : vector<16x32xf32>
    %657 = arith.addf %653, %656 : vector<16x32xf32>
    %658 = vector.extract_strided_slice %650 {offsets = [2, 0], sizes = [1, 1], strides = [1, 1]} : vector<3x1xf32> to vector<1x1xf32>
    %659 = vector.broadcast %658 : vector<1x1xf32> to vector<16x32xf32>
    %660 = arith.mulf %659, %616 : vector<16x32xf32>
    %661 = arith.addf %657, %660 : vector<16x32xf32>
    %662 = tpu.concatenate %661, %425, %554, %492, %616 in 0 : vector<16x32xf32>, vector<16x32xf32>, vector<16x32xf32>, vector<16x32xf32>, vector<16x32xf32> -> vector<80x32xf32>
    %c0_207 = arith.constant 0 : index
    %c0_208 = arith.constant 0 : index
    %663 = vector.load %arg2[%c0_207, %c0_208] : memref<88x1024xf32, #tpu.memory_space<vmem>>, vector<32x1024xf32>
    %cst_209 = arith.constant dense<0.000000e+00> : vector<80x1024xf32>
    %664 = tpu.matmul %662, %663, %cst_209 {dimension_numbers = #tpu.dot_dimension_numbers<[1], [0], [0], [1], [0, 0, 1, 1], [], []>} : vector<80x32xf32>, vector<32x1024xf32>, vector<80x1024xf32> -> vector<80x1024xf32>
    %c32_210 = arith.constant 32 : index
    %c0_211 = arith.constant 0 : index
    %665 = vector.load %arg2[%c32_210, %c0_211] : memref<88x1024xf32, #tpu.memory_space<vmem>>, vector<1x1024xf32>
    %666 = vector.broadcast %665 : vector<1x1024xf32> to vector<80x1024xf32>
    %667 = arith.addf %664, %666 : vector<80x1024xf32>
    %c624 = arith.constant 624 : index
    %c0_212 = arith.constant 0 : index
    %668 = vector.load %arg1[%c624, %c0_212] : memref<1656x32xf32, #tpu.memory_space<vmem>>, vector<1024x32xf32>
    %c1648 = arith.constant 1648 : index
    %c0_213 = arith.constant 0 : index
    %669 = vector.load %arg1[%c1648, %c0_213] : memref<1656x32xf32, #tpu.memory_space<vmem>>, vector<4x32xf32>
    %670 = vector.extract_strided_slice %667 {offsets = [0, 0], sizes = [32, 256], strides = [1, 1]} : vector<80x1024xf32> to vector<32x256xf32>
    %671 = vector.extract_strided_slice %670 {offsets = [0, 0], sizes = [16, 256], strides = [1, 1]} : vector<32x256xf32> to vector<16x256xf32>
    %cst_214 = arith.constant dense<0.000000e+00> : vector<256xf32>
    %672 = vector.multi_reduction <add>, %671, %cst_214 [0] : vector<16x256xf32> to vector<256xf32>
    %673 = vector.shape_cast %672 : vector<256xf32> to vector<1x256xf32>
    %cst_215 = arith.constant 6.250000e-02 : f32
    %674 = vector.broadcast %cst_215 : f32 to vector<1x256xf32>
    %675 = arith.mulf %673, %674 : vector<1x256xf32>
    %676 = arith.mulf %671, %671 : vector<16x256xf32>
    %cst_216 = arith.constant dense<0.000000e+00> : vector<256xf32>
    %677 = vector.multi_reduction <add>, %676, %cst_216 [0] : vector<16x256xf32> to vector<256xf32>
    %678 = vector.shape_cast %677 : vector<256xf32> to vector<1x256xf32>
    %cst_217 = arith.constant 6.250000e-02 : f32
    %679 = vector.broadcast %cst_217 : f32 to vector<1x256xf32>
    %680 = arith.mulf %678, %679 : vector<1x256xf32>
    %681 = arith.mulf %675, %675 : vector<1x256xf32>
    %682 = arith.subf %680, %681 : vector<1x256xf32>
    %cst_218 = arith.constant 0.000000e+00 : f32
    %683 = vector.broadcast %cst_218 : f32 to vector<1x256xf32>
    %684 = arith.maximumf %682, %683 : vector<1x256xf32>
    %685 = vector.broadcast %675 : vector<1x256xf32> to vector<16x256xf32>
    %686 = arith.subf %671, %685 : vector<16x256xf32>
    %cst_219 = arith.constant 9.99999974E-6 : f32
    %687 = vector.broadcast %cst_219 : f32 to vector<1x256xf32>
    %688 = arith.addf %684, %687 : vector<1x256xf32>
    %689 = math.rsqrt %688 : vector<1x256xf32>
    %690 = vector.broadcast %689 : vector<1x256xf32> to vector<16x256xf32>
    %691 = arith.mulf %686, %690 : vector<16x256xf32>
    %cst_220 = arith.constant 0.000000e+00 : f32
    %692 = vector.broadcast %cst_220 : f32 to vector<16x256xf32>
    %693 = arith.maximumf %691, %692 : vector<16x256xf32>
    %694 = vector.extract_strided_slice %670 {offsets = [16, 0], sizes = [16, 256], strides = [1, 1]} : vector<32x256xf32> to vector<16x256xf32>
    %cst_221 = arith.constant dense<0.000000e+00> : vector<256xf32>
    %695 = vector.multi_reduction <add>, %694, %cst_221 [0] : vector<16x256xf32> to vector<256xf32>
    %696 = vector.shape_cast %695 : vector<256xf32> to vector<1x256xf32>
    %cst_222 = arith.constant 6.250000e-02 : f32
    %697 = vector.broadcast %cst_222 : f32 to vector<1x256xf32>
    %698 = arith.mulf %696, %697 : vector<1x256xf32>
    %699 = arith.mulf %694, %694 : vector<16x256xf32>
    %cst_223 = arith.constant dense<0.000000e+00> : vector<256xf32>
    %700 = vector.multi_reduction <add>, %699, %cst_223 [0] : vector<16x256xf32> to vector<256xf32>
    %701 = vector.shape_cast %700 : vector<256xf32> to vector<1x256xf32>
    %cst_224 = arith.constant 6.250000e-02 : f32
    %702 = vector.broadcast %cst_224 : f32 to vector<1x256xf32>
    %703 = arith.mulf %701, %702 : vector<1x256xf32>
    %704 = arith.mulf %698, %698 : vector<1x256xf32>
    %705 = arith.subf %703, %704 : vector<1x256xf32>
    %cst_225 = arith.constant 0.000000e+00 : f32
    %706 = vector.broadcast %cst_225 : f32 to vector<1x256xf32>
    %707 = arith.maximumf %705, %706 : vector<1x256xf32>
    %708 = vector.broadcast %698 : vector<1x256xf32> to vector<16x256xf32>
    %709 = arith.subf %694, %708 : vector<16x256xf32>
    %cst_226 = arith.constant 9.99999974E-6 : f32
    %710 = vector.broadcast %cst_226 : f32 to vector<1x256xf32>
    %711 = arith.addf %707, %710 : vector<1x256xf32>
    %712 = math.rsqrt %711 : vector<1x256xf32>
    %713 = vector.broadcast %712 : vector<1x256xf32> to vector<16x256xf32>
    %714 = arith.mulf %709, %713 : vector<16x256xf32>
    %cst_227 = arith.constant 0.000000e+00 : f32
    %715 = vector.broadcast %cst_227 : f32 to vector<16x256xf32>
    %716 = arith.maximumf %714, %715 : vector<16x256xf32>
    %717 = tpu.concatenate %693, %716 in 0 : vector<16x256xf32>, vector<16x256xf32> -> vector<32x256xf32>
    %718 = vector.extract_strided_slice %668 {offsets = [0, 0], sizes = [256, 32], strides = [1, 1]} : vector<1024x32xf32> to vector<256x32xf32>
    %cst_228 = arith.constant dense<0.000000e+00> : vector<32x32xf32>
    %719 = tpu.matmul %717, %718, %cst_228 {dimension_numbers = #tpu.dot_dimension_numbers<[1], [0], [0], [1], [0, 0, 1, 1], [], []>} : vector<32x256xf32>, vector<256x32xf32>, vector<32x32xf32> -> vector<32x32xf32>
    %720 = vector.extract_strided_slice %669 {offsets = [0, 0], sizes = [1, 32], strides = [1, 1]} : vector<4x32xf32> to vector<1x32xf32>
    %721 = vector.broadcast %720 : vector<1x32xf32> to vector<32x32xf32>
    %722 = arith.addf %719, %721 : vector<32x32xf32>
    %723 = vector.extract_strided_slice %722 {offsets = [0, 0], sizes = [16, 32], strides = [1, 1]} : vector<32x32xf32> to vector<16x32xf32>
    %724 = vector.extract_strided_slice %722 {offsets = [16, 0], sizes = [16, 32], strides = [1, 1]} : vector<32x32xf32> to vector<16x32xf32>
    %725 = vector.extract_strided_slice %667 {offsets = [32, 256], sizes = [16, 256], strides = [1, 1]} : vector<80x1024xf32> to vector<16x256xf32>
    %cst_229 = arith.constant dense<0.000000e+00> : vector<256xf32>
    %726 = vector.multi_reduction <add>, %725, %cst_229 [0] : vector<16x256xf32> to vector<256xf32>
    %727 = vector.shape_cast %726 : vector<256xf32> to vector<1x256xf32>
    %cst_230 = arith.constant 6.250000e-02 : f32
    %728 = vector.broadcast %cst_230 : f32 to vector<1x256xf32>
    %729 = arith.mulf %727, %728 : vector<1x256xf32>
    %730 = arith.mulf %725, %725 : vector<16x256xf32>
    %cst_231 = arith.constant dense<0.000000e+00> : vector<256xf32>
    %731 = vector.multi_reduction <add>, %730, %cst_231 [0] : vector<16x256xf32> to vector<256xf32>
    %732 = vector.shape_cast %731 : vector<256xf32> to vector<1x256xf32>
    %cst_232 = arith.constant 6.250000e-02 : f32
    %733 = vector.broadcast %cst_232 : f32 to vector<1x256xf32>
    %734 = arith.mulf %732, %733 : vector<1x256xf32>
    %735 = arith.mulf %729, %729 : vector<1x256xf32>
    %736 = arith.subf %734, %735 : vector<1x256xf32>
    %cst_233 = arith.constant 0.000000e+00 : f32
    %737 = vector.broadcast %cst_233 : f32 to vector<1x256xf32>
    %738 = arith.maximumf %736, %737 : vector<1x256xf32>
    %739 = vector.broadcast %729 : vector<1x256xf32> to vector<16x256xf32>
    %740 = arith.subf %725, %739 : vector<16x256xf32>
    %cst_234 = arith.constant 9.99999974E-6 : f32
    %741 = vector.broadcast %cst_234 : f32 to vector<1x256xf32>
    %742 = arith.addf %738, %741 : vector<1x256xf32>
    %743 = math.rsqrt %742 : vector<1x256xf32>
    %744 = vector.broadcast %743 : vector<1x256xf32> to vector<16x256xf32>
    %745 = arith.mulf %740, %744 : vector<16x256xf32>
    %cst_235 = arith.constant 0.000000e+00 : f32
    %746 = vector.broadcast %cst_235 : f32 to vector<16x256xf32>
    %747 = arith.maximumf %745, %746 : vector<16x256xf32>
    %748 = vector.extract_strided_slice %668 {offsets = [256, 0], sizes = [256, 32], strides = [1, 1]} : vector<1024x32xf32> to vector<256x32xf32>
    %cst_236 = arith.constant dense<0.000000e+00> : vector<16x32xf32>
    %749 = tpu.matmul %747, %748, %cst_236 {dimension_numbers = #tpu.dot_dimension_numbers<[1], [0], [0], [1], [0, 0, 1, 1], [], []>} : vector<16x256xf32>, vector<256x32xf32>, vector<16x32xf32> -> vector<16x32xf32>
    %750 = vector.extract_strided_slice %669 {offsets = [1, 0], sizes = [1, 32], strides = [1, 1]} : vector<4x32xf32> to vector<1x32xf32>
    %751 = vector.broadcast %750 : vector<1x32xf32> to vector<16x32xf32>
    %752 = arith.addf %749, %751 : vector<16x32xf32>
    %753 = vector.extract_strided_slice %667 {offsets = [48, 512], sizes = [16, 256], strides = [1, 1]} : vector<80x1024xf32> to vector<16x256xf32>
    %cst_237 = arith.constant dense<0.000000e+00> : vector<256xf32>
    %754 = vector.multi_reduction <add>, %753, %cst_237 [0] : vector<16x256xf32> to vector<256xf32>
    %755 = vector.shape_cast %754 : vector<256xf32> to vector<1x256xf32>
    %cst_238 = arith.constant 6.250000e-02 : f32
    %756 = vector.broadcast %cst_238 : f32 to vector<1x256xf32>
    %757 = arith.mulf %755, %756 : vector<1x256xf32>
    %758 = arith.mulf %753, %753 : vector<16x256xf32>
    %cst_239 = arith.constant dense<0.000000e+00> : vector<256xf32>
    %759 = vector.multi_reduction <add>, %758, %cst_239 [0] : vector<16x256xf32> to vector<256xf32>
    %760 = vector.shape_cast %759 : vector<256xf32> to vector<1x256xf32>
    %cst_240 = arith.constant 6.250000e-02 : f32
    %761 = vector.broadcast %cst_240 : f32 to vector<1x256xf32>
    %762 = arith.mulf %760, %761 : vector<1x256xf32>
    %763 = arith.mulf %757, %757 : vector<1x256xf32>
    %764 = arith.subf %762, %763 : vector<1x256xf32>
    %cst_241 = arith.constant 0.000000e+00 : f32
    %765 = vector.broadcast %cst_241 : f32 to vector<1x256xf32>
    %766 = arith.maximumf %764, %765 : vector<1x256xf32>
    %767 = vector.broadcast %757 : vector<1x256xf32> to vector<16x256xf32>
    %768 = arith.subf %753, %767 : vector<16x256xf32>
    %cst_242 = arith.constant 9.99999974E-6 : f32
    %769 = vector.broadcast %cst_242 : f32 to vector<1x256xf32>
    %770 = arith.addf %766, %769 : vector<1x256xf32>
    %771 = math.rsqrt %770 : vector<1x256xf32>
    %772 = vector.broadcast %771 : vector<1x256xf32> to vector<16x256xf32>
    %773 = arith.mulf %768, %772 : vector<16x256xf32>
    %cst_243 = arith.constant 0.000000e+00 : f32
    %774 = vector.broadcast %cst_243 : f32 to vector<16x256xf32>
    %775 = arith.maximumf %773, %774 : vector<16x256xf32>
    %776 = vector.extract_strided_slice %668 {offsets = [512, 0], sizes = [256, 32], strides = [1, 1]} : vector<1024x32xf32> to vector<256x32xf32>
    %cst_244 = arith.constant dense<0.000000e+00> : vector<16x32xf32>
    %777 = tpu.matmul %775, %776, %cst_244 {dimension_numbers = #tpu.dot_dimension_numbers<[1], [0], [0], [1], [0, 0, 1, 1], [], []>} : vector<16x256xf32>, vector<256x32xf32>, vector<16x32xf32> -> vector<16x32xf32>
    %778 = vector.extract_strided_slice %669 {offsets = [2, 0], sizes = [1, 32], strides = [1, 1]} : vector<4x32xf32> to vector<1x32xf32>
    %779 = vector.broadcast %778 : vector<1x32xf32> to vector<16x32xf32>
    %780 = arith.addf %777, %779 : vector<16x32xf32>
    %781 = vector.extract_strided_slice %667 {offsets = [64, 768], sizes = [16, 256], strides = [1, 1]} : vector<80x1024xf32> to vector<16x256xf32>
    %cst_245 = arith.constant dense<0.000000e+00> : vector<256xf32>
    %782 = vector.multi_reduction <add>, %781, %cst_245 [0] : vector<16x256xf32> to vector<256xf32>
    %783 = vector.shape_cast %782 : vector<256xf32> to vector<1x256xf32>
    %cst_246 = arith.constant 6.250000e-02 : f32
    %784 = vector.broadcast %cst_246 : f32 to vector<1x256xf32>
    %785 = arith.mulf %783, %784 : vector<1x256xf32>
    %786 = arith.mulf %781, %781 : vector<16x256xf32>
    %cst_247 = arith.constant dense<0.000000e+00> : vector<256xf32>
    %787 = vector.multi_reduction <add>, %786, %cst_247 [0] : vector<16x256xf32> to vector<256xf32>
    %788 = vector.shape_cast %787 : vector<256xf32> to vector<1x256xf32>
    %cst_248 = arith.constant 6.250000e-02 : f32
    %789 = vector.broadcast %cst_248 : f32 to vector<1x256xf32>
    %790 = arith.mulf %788, %789 : vector<1x256xf32>
    %791 = arith.mulf %785, %785 : vector<1x256xf32>
    %792 = arith.subf %790, %791 : vector<1x256xf32>
    %cst_249 = arith.constant 0.000000e+00 : f32
    %793 = vector.broadcast %cst_249 : f32 to vector<1x256xf32>
    %794 = arith.maximumf %792, %793 : vector<1x256xf32>
    %795 = vector.broadcast %785 : vector<1x256xf32> to vector<16x256xf32>
    %796 = arith.subf %781, %795 : vector<16x256xf32>
    %cst_250 = arith.constant 9.99999974E-6 : f32
    %797 = vector.broadcast %cst_250 : f32 to vector<1x256xf32>
    %798 = arith.addf %794, %797 : vector<1x256xf32>
    %799 = math.rsqrt %798 : vector<1x256xf32>
    %800 = vector.broadcast %799 : vector<1x256xf32> to vector<16x256xf32>
    %801 = arith.mulf %796, %800 : vector<16x256xf32>
    %cst_251 = arith.constant 0.000000e+00 : f32
    %802 = vector.broadcast %cst_251 : f32 to vector<16x256xf32>
    %803 = arith.maximumf %801, %802 : vector<16x256xf32>
    %804 = vector.extract_strided_slice %668 {offsets = [768, 0], sizes = [256, 32], strides = [1, 1]} : vector<1024x32xf32> to vector<256x32xf32>
    %cst_252 = arith.constant dense<0.000000e+00> : vector<16x32xf32>
    %805 = tpu.matmul %803, %804, %cst_252 {dimension_numbers = #tpu.dot_dimension_numbers<[1], [0], [0], [1], [0, 0, 1, 1], [], []>} : vector<16x256xf32>, vector<256x32xf32>, vector<16x32xf32> -> vector<16x32xf32>
    %806 = vector.extract_strided_slice %669 {offsets = [3, 0], sizes = [1, 32], strides = [1, 1]} : vector<4x32xf32> to vector<1x32xf32>
    %807 = vector.broadcast %806 : vector<1x32xf32> to vector<16x32xf32>
    %808 = arith.addf %805, %807 : vector<16x32xf32>
    %809 = arith.mulf %723, %723 : vector<16x32xf32>
    %cst_253 = arith.constant dense<0.000000e+00> : vector<16xf32>
    %810 = vector.multi_reduction <add>, %809, %cst_253 [1] : vector<16x32xf32> to vector<16xf32>
    %811 = vector.shape_cast %810 : vector<16xf32> to vector<16x1xf32>
    %cst_254 = arith.constant 1.000000e-24 : f32
    %812 = vector.broadcast %cst_254 : f32 to vector<16x1xf32>
    %813 = arith.maximumf %811, %812 : vector<16x1xf32>
    %814 = math.rsqrt %813 : vector<16x1xf32>
    %815 = vector.broadcast %814 : vector<16x1xf32> to vector<16x32xf32>
    %816 = arith.mulf %723, %815 : vector<16x32xf32>
    %817 = arith.mulf %425, %425 : vector<16x32xf32>
    %cst_255 = arith.constant dense<0.000000e+00> : vector<16xf32>
    %818 = vector.multi_reduction <add>, %817, %cst_255 [1] : vector<16x32xf32> to vector<16xf32>
    %819 = vector.shape_cast %818 : vector<16xf32> to vector<16x1xf32>
    %cst_256 = arith.constant 1.000000e-24 : f32
    %820 = vector.broadcast %cst_256 : f32 to vector<16x1xf32>
    %821 = arith.maximumf %819, %820 : vector<16x1xf32>
    %822 = math.rsqrt %821 : vector<16x1xf32>
    %823 = vector.broadcast %822 : vector<16x1xf32> to vector<16x32xf32>
    %824 = arith.mulf %425, %823 : vector<16x32xf32>
    %825 = arith.mulf %816, %824 : vector<16x32xf32>
    %cst_257 = arith.constant dense<0.000000e+00> : vector<16xf32>
    %826 = vector.multi_reduction <add>, %825, %cst_257 [1] : vector<16x32xf32> to vector<16xf32>
    %827 = vector.shape_cast %826 : vector<16xf32> to vector<16x1xf32>
    %cst_258 = arith.constant 1.000000e+00 : f32
    %828 = vector.broadcast %cst_258 : f32 to vector<16x1xf32>
    %829 = arith.subf %828, %827 : vector<16x1xf32>
    %cst_259 = arith.constant dense<0.000000e+00> : vector<1xf32>
    %830 = vector.multi_reduction <add>, %829, %cst_259 [0] : vector<16x1xf32> to vector<1xf32>
    %831 = vector.shape_cast %830 : vector<1xf32> to vector<1x1xf32>
    %cst_260 = arith.constant 6.250000e-02 : f32
    %832 = vector.broadcast %cst_260 : f32 to vector<1x1xf32>
    %833 = arith.mulf %831, %832 : vector<1x1xf32>
    %834 = arith.mulf %724, %724 : vector<16x32xf32>
    %cst_261 = arith.constant dense<0.000000e+00> : vector<16xf32>
    %835 = vector.multi_reduction <add>, %834, %cst_261 [1] : vector<16x32xf32> to vector<16xf32>
    %836 = vector.shape_cast %835 : vector<16xf32> to vector<16x1xf32>
    %cst_262 = arith.constant 1.000000e-24 : f32
    %837 = vector.broadcast %cst_262 : f32 to vector<16x1xf32>
    %838 = arith.maximumf %836, %837 : vector<16x1xf32>
    %839 = math.rsqrt %838 : vector<16x1xf32>
    %840 = vector.broadcast %839 : vector<16x1xf32> to vector<16x32xf32>
    %841 = arith.mulf %724, %840 : vector<16x32xf32>
    %842 = arith.mulf %661, %661 : vector<16x32xf32>
    %cst_263 = arith.constant dense<0.000000e+00> : vector<16xf32>
    %843 = vector.multi_reduction <add>, %842, %cst_263 [1] : vector<16x32xf32> to vector<16xf32>
    %844 = vector.shape_cast %843 : vector<16xf32> to vector<16x1xf32>
    %cst_264 = arith.constant 1.000000e-24 : f32
    %845 = vector.broadcast %cst_264 : f32 to vector<16x1xf32>
    %846 = arith.maximumf %844, %845 : vector<16x1xf32>
    %847 = math.rsqrt %846 : vector<16x1xf32>
    %848 = vector.broadcast %847 : vector<16x1xf32> to vector<16x32xf32>
    %849 = arith.mulf %661, %848 : vector<16x32xf32>
    %850 = arith.mulf %841, %849 : vector<16x32xf32>
    %cst_265 = arith.constant dense<0.000000e+00> : vector<16xf32>
    %851 = vector.multi_reduction <add>, %850, %cst_265 [1] : vector<16x32xf32> to vector<16xf32>
    %852 = vector.shape_cast %851 : vector<16xf32> to vector<16x1xf32>
    %cst_266 = arith.constant 1.000000e+00 : f32
    %853 = vector.broadcast %cst_266 : f32 to vector<16x1xf32>
    %854 = arith.subf %853, %852 : vector<16x1xf32>
    %cst_267 = arith.constant dense<0.000000e+00> : vector<1xf32>
    %855 = vector.multi_reduction <add>, %854, %cst_267 [0] : vector<16x1xf32> to vector<1xf32>
    %856 = vector.shape_cast %855 : vector<1xf32> to vector<1x1xf32>
    %cst_268 = arith.constant 6.250000e-02 : f32
    %857 = vector.broadcast %cst_268 : f32 to vector<1x1xf32>
    %858 = arith.mulf %856, %857 : vector<1x1xf32>
    %859 = arith.addf %492, %616 : vector<16x32xf32>
    %860 = arith.mulf %752, %752 : vector<16x32xf32>
    %cst_269 = arith.constant dense<0.000000e+00> : vector<16xf32>
    %861 = vector.multi_reduction <add>, %860, %cst_269 [1] : vector<16x32xf32> to vector<16xf32>
    %862 = vector.shape_cast %861 : vector<16xf32> to vector<16x1xf32>
    %cst_270 = arith.constant 1.000000e-24 : f32
    %863 = vector.broadcast %cst_270 : f32 to vector<16x1xf32>
    %864 = arith.maximumf %862, %863 : vector<16x1xf32>
    %865 = math.rsqrt %864 : vector<16x1xf32>
    %866 = vector.broadcast %865 : vector<16x1xf32> to vector<16x32xf32>
    %867 = arith.mulf %752, %866 : vector<16x32xf32>
    %868 = arith.mulf %859, %859 : vector<16x32xf32>
    %cst_271 = arith.constant dense<0.000000e+00> : vector<16xf32>
    %869 = vector.multi_reduction <add>, %868, %cst_271 [1] : vector<16x32xf32> to vector<16xf32>
    %870 = vector.shape_cast %869 : vector<16xf32> to vector<16x1xf32>
    %cst_272 = arith.constant 1.000000e-24 : f32
    %871 = vector.broadcast %cst_272 : f32 to vector<16x1xf32>
    %872 = arith.maximumf %870, %871 : vector<16x1xf32>
    %873 = math.rsqrt %872 : vector<16x1xf32>
    %874 = vector.broadcast %873 : vector<16x1xf32> to vector<16x32xf32>
    %875 = arith.mulf %859, %874 : vector<16x32xf32>
    %876 = arith.mulf %867, %875 : vector<16x32xf32>
    %cst_273 = arith.constant dense<0.000000e+00> : vector<16xf32>
    %877 = vector.multi_reduction <add>, %876, %cst_273 [1] : vector<16x32xf32> to vector<16xf32>
    %878 = vector.shape_cast %877 : vector<16xf32> to vector<16x1xf32>
    %cst_274 = arith.constant 1.000000e+00 : f32
    %879 = vector.broadcast %cst_274 : f32 to vector<16x1xf32>
    %880 = arith.subf %879, %878 : vector<16x1xf32>
    %cst_275 = arith.constant dense<0.000000e+00> : vector<1xf32>
    %881 = vector.multi_reduction <add>, %880, %cst_275 [0] : vector<16x1xf32> to vector<1xf32>
    %882 = vector.shape_cast %881 : vector<1xf32> to vector<1x1xf32>
    %cst_276 = arith.constant 6.250000e-02 : f32
    %883 = vector.broadcast %cst_276 : f32 to vector<1x1xf32>
    %884 = arith.mulf %882, %883 : vector<1x1xf32>
    %885 = arith.addf %554, %616 : vector<16x32xf32>
    %886 = arith.mulf %780, %780 : vector<16x32xf32>
    %cst_277 = arith.constant dense<0.000000e+00> : vector<16xf32>
    %887 = vector.multi_reduction <add>, %886, %cst_277 [1] : vector<16x32xf32> to vector<16xf32>
    %888 = vector.shape_cast %887 : vector<16xf32> to vector<16x1xf32>
    %cst_278 = arith.constant 1.000000e-24 : f32
    %889 = vector.broadcast %cst_278 : f32 to vector<16x1xf32>
    %890 = arith.maximumf %888, %889 : vector<16x1xf32>
    %891 = math.rsqrt %890 : vector<16x1xf32>
    %892 = vector.broadcast %891 : vector<16x1xf32> to vector<16x32xf32>
    %893 = arith.mulf %780, %892 : vector<16x32xf32>
    %894 = arith.mulf %885, %885 : vector<16x32xf32>
    %cst_279 = arith.constant dense<0.000000e+00> : vector<16xf32>
    %895 = vector.multi_reduction <add>, %894, %cst_279 [1] : vector<16x32xf32> to vector<16xf32>
    %896 = vector.shape_cast %895 : vector<16xf32> to vector<16x1xf32>
    %cst_280 = arith.constant 1.000000e-24 : f32
    %897 = vector.broadcast %cst_280 : f32 to vector<16x1xf32>
    %898 = arith.maximumf %896, %897 : vector<16x1xf32>
    %899 = math.rsqrt %898 : vector<16x1xf32>
    %900 = vector.broadcast %899 : vector<16x1xf32> to vector<16x32xf32>
    %901 = arith.mulf %885, %900 : vector<16x32xf32>
    %902 = arith.mulf %893, %901 : vector<16x32xf32>
    %cst_281 = arith.constant dense<0.000000e+00> : vector<16xf32>
    %903 = vector.multi_reduction <add>, %902, %cst_281 [1] : vector<16x32xf32> to vector<16xf32>
    %904 = vector.shape_cast %903 : vector<16xf32> to vector<16x1xf32>
    %cst_282 = arith.constant 1.000000e+00 : f32
    %905 = vector.broadcast %cst_282 : f32 to vector<16x1xf32>
    %906 = arith.subf %905, %904 : vector<16x1xf32>
    %cst_283 = arith.constant dense<0.000000e+00> : vector<1xf32>
    %907 = vector.multi_reduction <add>, %906, %cst_283 [0] : vector<16x1xf32> to vector<1xf32>
    %908 = vector.shape_cast %907 : vector<1xf32> to vector<1x1xf32>
    %cst_284 = arith.constant 6.250000e-02 : f32
    %909 = vector.broadcast %cst_284 : f32 to vector<1x1xf32>
    %910 = arith.mulf %908, %909 : vector<1x1xf32>
    %911 = arith.addf %492, %554 : vector<16x32xf32>
    %912 = arith.mulf %808, %808 : vector<16x32xf32>
    %cst_285 = arith.constant dense<0.000000e+00> : vector<16xf32>
    %913 = vector.multi_reduction <add>, %912, %cst_285 [1] : vector<16x32xf32> to vector<16xf32>
    %914 = vector.shape_cast %913 : vector<16xf32> to vector<16x1xf32>
    %cst_286 = arith.constant 1.000000e-24 : f32
    %915 = vector.broadcast %cst_286 : f32 to vector<16x1xf32>
    %916 = arith.maximumf %914, %915 : vector<16x1xf32>
    %917 = math.rsqrt %916 : vector<16x1xf32>
    %918 = vector.broadcast %917 : vector<16x1xf32> to vector<16x32xf32>
    %919 = arith.mulf %808, %918 : vector<16x32xf32>
    %920 = arith.mulf %911, %911 : vector<16x32xf32>
    %cst_287 = arith.constant dense<0.000000e+00> : vector<16xf32>
    %921 = vector.multi_reduction <add>, %920, %cst_287 [1] : vector<16x32xf32> to vector<16xf32>
    %922 = vector.shape_cast %921 : vector<16xf32> to vector<16x1xf32>
    %cst_288 = arith.constant 1.000000e-24 : f32
    %923 = vector.broadcast %cst_288 : f32 to vector<16x1xf32>
    %924 = arith.maximumf %922, %923 : vector<16x1xf32>
    %925 = math.rsqrt %924 : vector<16x1xf32>
    %926 = vector.broadcast %925 : vector<16x1xf32> to vector<16x32xf32>
    %927 = arith.mulf %911, %926 : vector<16x32xf32>
    %928 = arith.mulf %919, %927 : vector<16x32xf32>
    %cst_289 = arith.constant dense<0.000000e+00> : vector<16xf32>
    %929 = vector.multi_reduction <add>, %928, %cst_289 [1] : vector<16x32xf32> to vector<16xf32>
    %930 = vector.shape_cast %929 : vector<16xf32> to vector<16x1xf32>
    %cst_290 = arith.constant 1.000000e+00 : f32
    %931 = vector.broadcast %cst_290 : f32 to vector<16x1xf32>
    %932 = arith.subf %931, %930 : vector<16x1xf32>
    %cst_291 = arith.constant dense<0.000000e+00> : vector<1xf32>
    %933 = vector.multi_reduction <add>, %932, %cst_291 [0] : vector<16x1xf32> to vector<1xf32>
    %934 = vector.shape_cast %933 : vector<1xf32> to vector<1x1xf32>
    %cst_292 = arith.constant 6.250000e-02 : f32
    %935 = vector.broadcast %cst_292 : f32 to vector<1x1xf32>
    %936 = arith.mulf %934, %935 : vector<1x1xf32>
    %937 = arith.addf %884, %910 : vector<1x1xf32>
    %938 = arith.addf %937, %936 : vector<1x1xf32>
    %cst_293 = arith.constant 5.000000e-01 : f32
    %939 = vector.broadcast %cst_293 : f32 to vector<1x1xf32>
    %940 = arith.mulf %939, %938 : vector<1x1xf32>
    %941 = arith.addf %833, %940 : vector<1x1xf32>
    %942 = arith.addf %941, %858 : vector<1x1xf32>
    %c0_294 = arith.constant 0 : index
    %c0_295 = arith.constant 0 : index
    %943 = vector.load %arg3[%c0_294, %c0_295] : memref<1x1xf32, #tpu.memory_space<vmem>>, vector<1x1xf32>
    tpu.vector_store %arg3[%c0_294, %c0_295], %942 {strides = array<i32>} : memref<1x1xf32, #tpu.memory_space<vmem>>, vector<1x1xf32>,
    return
  }
}

</mosaic_0001>

<llo_original>
// kernel: cg_forward.1
$region0: #{cg_forward.1}
  #allocation0 [shape = 'u32[]', space=smem, size = 0x4, offset = 0x4, fixed_abs, tag = 'smem constant byte address 0x4 - core index']
  #allocation1 [shape = 'u32[144,128]{1,0:T(1,128)}', space=vmem, size = 0x12000, scoped, tag = 'internal scratch']
  %s0 = inlined_call_operand.vmem [shape: f32[144,32], index: 0, kind: input, shape index: {}]
  %s1 = inlined_call_operand.vmem [shape: f32[1656,32], index: 1, kind: input, shape index: {}]
  %s2 = inlined_call_operand.vmem [shape: f32[88,1024], index: 2, kind: input, shape index: {}]
  %s3 = inlined_call_operand.hbm [shape: f32[1,1], index: 3, kind: output, shape index: {}]
  %s4 = sld [smem:[#allocation0]]
  $region22: #{cg_forward.1} parent=0
    _
  %s6 = ssub.s32 1, %s4
  %s7 = scalar_select 0, %s6, %s4
  $region1: #{cg_forward.1} parent=0
    #allocation2 [shape = 'u8[512]{0}', space=vmem, size = 0x400, scoped, tag = 'output window, operand 0, single buffered']
    #allocation3 [shape = 's32[1]{0}', space=sflag, size = 0x4, scoped, tag = 'scoped memory for cg_forward.1']
    %8 = vsyncpa [#allocation3], 0
    // Predicated region
    $region2: #{cg_forward.1} parent=1 // pred_check
      _
    $region3: #{cg_forward.1} parent=1 // pred_check_branch
      %10 = sbr.rel (0) target = $region5
    $region4: #{cg_forward.1} parent=1 // pred_region
      _
    $region5: #{cg_forward.1} parent=1 // pred_fallthru
      _
    // Predicated region
    $region6: #{cg_forward.1} parent=1 // pred_check
      _
    $region7: #{cg_forward.1} parent=1 // pred_check_branch
      %12 = sbr.rel (0) target = $region9
    $region8: #{cg_forward.1} parent=1 // pred_region
      _
    $region9: #{cg_forward.1} parent=1 // pred_fallthru
      _
    // Predicated region
    $region10: #{cg_forward.1} parent=1 // pred_check
      _
    $region11: #{cg_forward.1} parent=1 // pred_check_branch
      %14 = sbr.rel (0) target = $region13
    $region12: #{cg_forward.1} parent=1 // pred_region
      _
    $region13: #{cg_forward.1} parent=1 // pred_fallthru
      _
    %v15 = vld [vmem:[%s0] sm:$0xff]
    %v16 = vld [vmem:[%s0 + $0x8] sm:$0xff]
    %v17 = vld [vmem:[%s0 + $0x10] sm:$0xff]
    %v18 = vld [vmem:[%s0 + $0x18] sm:$0xf]
    %v19 = vld [vmem:[%s0 + $0x20] sm:$0xff]
    %v20 = vld [vmem:[%s0 + $0x28] sm:$0x3]
    %v21 = vld [vmem:[%s0 + $0x30] sm:$0x3f]
    %v22 = vld [vmem:[%s1] sm:$0xff]
    %v23 = vld [vmem:[%s1 + $0x8] sm:$0xff]
    %v24 = vld [vmem:[%s1 + $0x10] sm:$0xff]
    %v25 = vld [vmem:[%s1 + $0x18] sm:$0xff]
    %v26 = vld [vmem:[%s1 + $0x20] sm:$0xff]
    %v27 = vld [vmem:[%s1 + $0x28] sm:$0xf]
    %v28 = vld [vmem:[%s1 + $0x30] sm:$0xff]
    %v29 = vld [vmem:[%s1 + $0x38] sm:$0xff]
    %v30 = vld [vmem:[%s1 + $0x40] sm:$0xff]
    %v31 = vld [vmem:[%s1 + $0x48] sm:$0xf]
    %v32 = vld [vmem:[%s1 + $0x50] sm:$0xf]
    %v33 = vld [vmem:[%s1 + $0x58] sm:$0xf]
    %v34 = vlaneseq
    %v35 = vshrl.u32 %v34, 7
    %v36 = vsub.s32 0, %v35
    %v37 = vrot.slane %v32, %v36
    %vm38 = vcmask 195584
    %v40 = vsel %vm38, %v15, 0
    %v43 = vsel %vm38, %v16, 0
    %45 = vmatprep.subr.mxu0 0.0
    %46 = vmatpush1.msra.mxu0 0.0
    %47 = vmatprep.subr.mxu0 0.0
    %48 = vmatpush1.msra.mxu0 0.0
    %49 = vmatprep.subr.mxu0 0.0
    %50 = vmatpush1.msra.mxu0 0.0
    %51 = vmatprep.subr.mxu0 0.0
    %52 = vmatpush1.msra.mxu0 0.0
    %53 = vmatprep.subr.mxu0 0.0
    %54 = vmatpush1.msra.mxu0 0.0
    %55 = vmatprep.subr.mxu0 0.0
    %56 = vmatpush1.msra.mxu0 0.0
    %57 = vmatprep.subr.mxu0 0.0
    %58 = vmatpush1.msra.mxu0 0.0
    %59 = vmatprep.subr.mxu0 0.0
    %60 = vmatpush1.msra.mxu0 0.0
    %61 = vmatprep.subr.mxu0 0.0
    %62 = vmatpush1.msra.mxu0 0.0
    %63 = vmatprep.subr.mxu0 0.0
    %64 = vmatpush1.msra.mxu0 0.0
    %65 = vmatprep.subr.mxu0 0.0
    %66 = vmatpush1.msra.mxu0 0.0
    %67 = vmatprep.subr.mxu0 0.0
    %68 = vmatpush1.msra.mxu0 0.0
    %69 = vmatprep.subr.mxu0 0.0
    %70 = vmatpush1.msra.mxu0 0.0
    %71 = vmatprep.subr.mxu0 0.0
    %72 = vmatpush1.msra.mxu0 %v24
    %73 = vmatprep.subr.mxu0 0.0
    %74 = vmatpush1.msra.mxu0 %v23
    %75 = vmatprep.subr.mxu0 0.0
    %76 = vmatpush1.msra.mxu0 %v22
    %77 = vmatprep.subr.mxu0 0.0
    %78 = vmatpush2.msra.mxu0 0.0
    %79 = vmatprep.subr.mxu0 0.0
    %80 = vmatpush2.msra.mxu0 0.0
    %81 = vmatprep.subr.mxu0 0.0
    %82 = vmatpush2.msra.mxu0 0.0
    %83 = vmatprep.subr.mxu0 0.0
    %84 = vmatpush2.msra.mxu0 0.0
    %85 = vmatprep.subr.mxu0 0.0
    %86 = vmatpush2.msra.mxu0 0.0
    %87 = vmatprep.subr.mxu0 0.0
    %88 = vmatpush2.msra.mxu0 0.0
    %89 = vmatprep.subr.mxu0 0.0
    %90 = vmatpush2.msra.mxu0 0.0
    %91 = vmatprep.subr.mxu0 0.0
    %92 = vmatpush2.msra.mxu0 0.0
    %93 = vmatprep.subr.mxu0 0.0
    %94 = vmatpush2.msra.mxu0 0.0
    %95 = vmatprep.subr.mxu0 0.0
    %96 = vmatpush2.msra.mxu0 0.0
    %97 = vmatprep.subr.mxu0 0.0
    %98 = vmatpush2.msra.mxu0 0.0
    %99 = vmatprep.subr.mxu0 0.0
    %100 = vmatpush2.msra.mxu0 0.0
    %101 = vmatprep.subr.mxu0 0.0
    %102 = vmatpush2.msra.mxu0 0.0
    %103 = vmatprep.subr.mxu0 0.0
    %104 = vmatpush2.msra.mxu0 0.0
    %105 = vmatprep.subr.mxu0 0.0
    %106 = vmatpush2.msra.mxu0 0.0
    %107 = vmatprep.subr.mxu0 0.0
    %108 = vmatpush2.msra.mxu0 0.0
    %109 = vmatprep.mubr.f32.mxu0 0.0
    %110 = vmatmul.mubr.f32.gmra.mxu0 %v40
    %v111 = vpop.f32.mrf.mxu0
    %v112 = vadd.f32 %v37, %v111
    %v113 = vpop.f32.mrf.mxu0
    %114 = vmatprep.mubr.f32.mxu0 0.0
    %115 = vmatmul.mubr.f32.gmra.mxu0 %v43
    %v116 = vpop.f32.mrf.mxu0
    %v117 = vadd.f32 %v37, %v116
    %v118 = vpop.f32.mrf.mxu0
    %119 = vdwg.mxu0
    %vm120 = vcmp.ge.f32.partialorder %v112, 0.0
    %vm121 = vcmp.ge.f32.partialorder %v117, 0.0
    %v122 = vlaneseq
    %v123 = vshrl.u32 %v122, 7
    %v124 = vsub.s32 0, %v123
    %v125 = vrot.slane %v33, %v124
    %v126 = vmul.f32 %v125, %v112
    %v127 = vmul.f32 %v125, %v117
    %v128 = vsel %vm120, %v112, %v126
    %v129 = vsel %vm121, %v117, %v127
    %v130 = vlaneseq
    %v131 = vshrl.u32 %v130, 7
    %v132 = vsub.s32 1, %v131
    %v133 = vrot.slane %v32, %v132
    %vm134 = vcmask 162816
    %v136 = vsel %vm134, %v17, 0
    %v139 = vsel %vm134, %v18, 0
    %vm141 = vcmask 1043456
    %v143 = vsel %vm141, %v27, 0
    %145 = vmatprep.subr.mxu0 0.0
    %146 = vmatpush1.msra.mxu0 0.0
    %147 = vmatprep.subr.mxu0 0.0
    %148 = vmatpush1.msra.mxu0 0.0
    %149 = vmatprep.subr.mxu0 0.0
    %150 = vmatpush1.msra.mxu0 0.0
    %151 = vmatprep.subr.mxu0 0.0
    %152 = vmatpush1.msra.mxu0 0.0
    %153 = vmatprep.subr.mxu0 0.0
    %154 = vmatpush1.msra.mxu0 0.0
    %155 = vmatprep.subr.mxu0 0.0
    %156 = vmatpush1.msra.mxu0 0.0
    %157 = vmatprep.subr.mxu0 0.0
    %158 = vmatpush1.msra.mxu0 0.0
    %159 = vmatprep.subr.mxu0 0.0
    %160 = vmatpush1.msra.mxu0 0.0
    %161 = vmatprep.subr.mxu0 0.0
    %162 = vmatpush1.msra.mxu0 0.0
    %163 = vmatprep.subr.mxu0 0.0
    %164 = vmatpush1.msra.mxu0 0.0
    %165 = vmatprep.subr.mxu0 0.0
    %166 = vmatpush1.msra.mxu0 0.0
    %167 = vmatprep.subr.mxu0 0.0
    %168 = vmatpush1.msra.mxu0 0.0
    %169 = vmatprep.subr.mxu0 0.0
    %170 = vmatpush1.msra.mxu0 0.0
    %171 = vmatprep.subr.mxu0 0.0
    %172 = vmatpush1.msra.mxu0 %v143
    %173 = vmatprep.subr.mxu0 0.0
    %174 = vmatpush1.msra.mxu0 %v26
    %175 = vmatprep.subr.mxu0 0.0
    %176 = vmatpush1.msra.mxu0 %v25
    %177 = vmatprep.subr.mxu0 0.0
    %178 = vmatpush2.msra.mxu0 0.0
    %179 = vmatprep.subr.mxu0 0.0
    %180 = vmatpush2.msra.mxu0 0.0
    %181 = vmatprep.subr.mxu0 0.0
    %182 = vmatpush2.msra.mxu0 0.0
    %183 = vmatprep.subr.mxu0 0.0
    %184 = vmatpush2.msra.mxu0 0.0
    %185 = vmatprep.subr.mxu0 0.0
    %186 = vmatpush2.msra.mxu0 0.0
    %187 = vmatprep.subr.mxu0 0.0
    %188 = vmatpush2.msra.mxu0 0.0
    %189 = vmatprep.subr.mxu0 0.0
    %190 = vmatpush2.msra.mxu0 0.0
    %191 = vmatprep.subr.mxu0 0.0
    %192 = vmatpush2.msra.mxu0 0.0
    %193 = vmatprep.subr.mxu0 0.0
    %194 = vmatpush2.msra.mxu0 0.0
    %195 = vmatprep.subr.mxu0 0.0
    %196 = vmatpush2.msra.mxu0 0.0
    %197 = vmatprep.subr.mxu0 0.0
    %198 = vmatpush2.msra.mxu0 0.0
    %199 = vmatprep.subr.mxu0 0.0
    %200 = vmatpush2.msra.mxu0 0.0
    %201 = vmatprep.subr.mxu0 0.0
    %202 = vmatpush2.msra.mxu0 0.0
    %203 = vmatprep.subr.mxu0 0.0
    %204 = vmatpush2.msra.mxu0 0.0
    %205 = vmatprep.subr.mxu0 0.0
    %206 = vmatpush2.msra.mxu0 0.0
    %207 = vmatprep.subr.mxu0 0.0
    %208 = vmatpush2.msra.mxu0 0.0
    %209 = vmatprep.mubr.f32.mxu0 0.0
    %210 = vmatmul.mubr.f32.gmra.mxu0 %v136
    %v211 = vpop.f32.mrf.mxu0
    %v212 = vadd.f32 %v133, %v211
    %v213 = vpop.f32.mrf.mxu0
    %214 = vmatprep.mubr.f32.mxu0 0.0
    %215 = vmatmul.mubr.f32.gmra.mxu0 %v139
    %v216 = vpop.f32.mrf.mxu0
    %v217 = vadd.f32 %v133, %v216
    %v218 = vpop.f32.mrf.mxu0
    %219 = vdwg.mxu0
    %vm220 = vcmp.ge.f32.partialorder %v212, 0.0
    %vm221 = vcmp.ge.f32.partialorder %v217, 0.0
    %v222 = vlaneseq
    %v223 = vshrl.u32 %v222, 7
    %v224 = vsub.s32 1, %v223
    %v225 = vrot.slane %v33, %v224
    %v226 = vmul.f32 %v225, %v212
    %v227 = vmul.f32 %v225, %v217
    %v228 = vsel %vm220, %v212, %v226
    %v229 = vsel %vm221, %v217, %v227
    %v230 = vlaneseq
    %v231 = vshrl.u32 %v230, 7
    %v232 = vsub.s32 2, %v231
    %v233 = vrot.slane %v32, %v232
    %vm234 = vcmask 130048
    %v236 = vsel %vm234, %v19, 0
    %v239 = vsel %vm234, %v20, 0
    %241 = vmatprep.subr.mxu0 0.0
    %242 = vmatpush1.msra.mxu0 0.0
    %243 = vmatprep.subr.mxu0 0.0
    %244 = vmatpush1.msra.mxu0 0.0
    %245 = vmatprep.subr.mxu0 0.0
    %246 = vmatpush1.msra.mxu0 0.0
    %247 = vmatprep.subr.mxu0 0.0
    %248 = vmatpush1.msra.mxu0 0.0
    %249 = vmatprep.subr.mxu0 0.0
    %250 = vmatpush1.msra.mxu0 0.0
    %251 = vmatprep.subr.mxu0 0.0
    %252 = vmatpush1.msra.mxu0 0.0
    %253 = vmatprep.subr.mxu0 0.0
    %254 = vmatpush1.msra.mxu0 0.0
    %255 = vmatprep.subr.mxu0 0.0
    %256 = vmatpush1.msra.mxu0 0.0
    %257 = vmatprep.subr.mxu0 0.0
    %258 = vmatpush1.msra.mxu0 0.0
    %259 = vmatprep.subr.mxu0 0.0
    %260 = vmatpush1.msra.mxu0 0.0
    %261 = vmatprep.subr.mxu0 0.0
    %262 = vmatpush1.msra.mxu0 0.0
    %263 = vmatprep.subr.mxu0 0.0
    %264 = vmatpush1.msra.mxu0 0.0
    %265 = vmatprep.subr.mxu0 0.0
    %266 = vmatpush1.msra.mxu0 0.0
    %267 = vmatprep.subr.mxu0 0.0
    %268 = vmatpush1.msra.mxu0 0.0
    %269 = vmatprep.subr.mxu0 0.0
    %270 = vmatpush1.msra.mxu0 %v29
    %271 = vmatprep.subr.mxu0 0.0
    %272 = vmatpush1.msra.mxu0 %v28
    %273 = vmatprep.subr.mxu0 0.0
    %274 = vmatpush2.msra.mxu0 0.0
    %275 = vmatprep.subr.mxu0 0.0
    %276 = vmatpush2.msra.mxu0 0.0
    %277 = vmatprep.subr.mxu0 0.0
    %278 = vmatpush2.msra.mxu0 0.0
    %279 = vmatprep.subr.mxu0 0.0
    %280 = vmatpush2.msra.mxu0 0.0
    %281 = vmatprep.subr.mxu0 0.0
    %282 = vmatpush2.msra.mxu0 0.0
    %283 = vmatprep.subr.mxu0 0.0
    %284 = vmatpush2.msra.mxu0 0.0
    %285 = vmatprep.subr.mxu0 0.0
    %286 = vmatpush2.msra.mxu0 0.0
    %287 = vmatprep.subr.mxu0 0.0
    %288 = vmatpush2.msra.mxu0 0.0
    %289 = vmatprep.subr.mxu0 0.0
    %290 = vmatpush2.msra.mxu0 0.0
    %291 = vmatprep.subr.mxu0 0.0
    %292 = vmatpush2.msra.mxu0 0.0
    %293 = vmatprep.subr.mxu0 0.0
    %294 = vmatpush2.msra.mxu0 0.0
    %295 = vmatprep.subr.mxu0 0.0
    %296 = vmatpush2.msra.mxu0 0.0
    %297 = vmatprep.subr.mxu0 0.0
    %298 = vmatpush2.msra.mxu0 0.0
    %299 = vmatprep.subr.mxu0 0.0
    %300 = vmatpush2.msra.mxu0 0.0
    %301 = vmatprep.subr.mxu0 0.0
    %302 = vmatpush2.msra.mxu0 0.0
    %303 = vmatprep.subr.mxu0 0.0
    %304 = vmatpush2.msra.mxu0 0.0
    %305 = vmatprep.mubr.f32.mxu0 0.0
    %306 = vmatmul.mubr.f32.gmra.mxu0 %v236
    %v307 = vpop.f32.mrf.mxu0
    %v308 = vadd.f32 %v233, %v307
    %v309 = vpop.f32.mrf.mxu0
    %310 = vmatprep.mubr.f32.mxu0 0.0
    %311 = vmatmul.mubr.f32.gmra.mxu0 %v239
    %v312 = vpop.f32.mrf.mxu0
    %v313 = vadd.f32 %v233, %v312
    %v314 = vpop.f32.mrf.mxu0
    %315 = vdwg.mxu0
    %vm316 = vcmp.ge.f32.partialorder %v308, 0.0
    %vm317 = vcmp.ge.f32.partialorder %v313, 0.0
    %v318 = vlaneseq
    %v319 = vshrl.u32 %v318, 7
    %v320 = vsub.s32 2, %v319
    %v321 = vrot.slane %v33, %v320
    %v322 = vmul.f32 %v321, %v308
    %v323 = vmul.f32 %v321, %v313
    %v324 = vsel %vm316, %v308, %v322
    %v325 = vsel %vm317, %v313, %v323
    %v326 = vlaneseq
    %v327 = vshrl.u32 %v326, 7
    %v328 = vsub.s32 3, %v327
    %v329 = vrot.slane %v32, %v328
    %vm330 = vcmask 97280
    %v332 = vsel %vm330, %v21, 0
    %v335 = vsel %vm141, %v31, 0
    %337 = vmatprep.subr.mxu0 0.0
    %338 = vmatpush1.msra.mxu0 0.0
    %339 = vmatprep.subr.mxu0 0.0
    %340 = vmatpush1.msra.mxu0 0.0
    %341 = vmatprep.subr.mxu0 0.0
    %342 = vmatpush1.msra.mxu0 0.0
    %343 = vmatprep.subr.mxu0 0.0
    %344 = vmatpush1.msra.mxu0 0.0
    %345 = vmatprep.subr.mxu0 0.0
    %346 = vmatpush1.msra.mxu0 0.0
    %347 = vmatprep.subr.mxu0 0.0
    %348 = vmatpush1.msra.mxu0 0.0
    %349 = vmatprep.subr.mxu0 0.0
    %350 = vmatpush1.msra.mxu0 0.0
    %351 = vmatprep.subr.mxu0 0.0
    %352 = vmatpush1.msra.mxu0 0.0
    %353 = vmatprep.subr.mxu0 0.0
    %354 = vmatpush1.msra.mxu0 0.0
    %355 = vmatprep.subr.mxu0 0.0
    %356 = vmatpush1.msra.mxu0 0.0
    %357 = vmatprep.subr.mxu0 0.0
    %358 = vmatpush1.msra.mxu0 0.0
    %359 = vmatprep.subr.mxu0 0.0
    %360 = vmatpush1.msra.mxu0 0.0
    %361 = vmatprep.subr.mxu0 0.0
    %362 = vmatpush1.msra.mxu0 0.0
    %363 = vmatprep.subr.mxu0 0.0
    %364 = vmatpush1.msra.mxu0 0.0
    %365 = vmatprep.subr.mxu0 0.0
    %366 = vmatpush1.msra.mxu0 %v335
    %367 = vmatprep.subr.mxu0 0.0
    %368 = vmatpush1.msra.mxu0 %v30
    %369 = vmatprep.subr.mxu0 0.0
    %370 = vmatpush2.msra.mxu0 0.0
    %371 = vmatprep.subr.mxu0 0.0
    %372 = vmatpush2.msra.mxu0 0.0
    %373 = vmatprep.subr.mxu0 0.0
    %374 = vmatpush2.msra.mxu0 0.0
    %375 = vmatprep.subr.mxu0 0.0
    %376 = vmatpush2.msra.mxu0 0.0
    %377 = vmatprep.subr.mxu0 0.0
    %378 = vmatpush2.msra.mxu0 0.0
    %379 = vmatprep.subr.mxu0 0.0
    %380 = vmatpush2.msra.mxu0 0.0
    %381 = vmatprep.subr.mxu0 0.0
    %382 = vmatpush2.msra.mxu0 0.0
    %383 = vmatprep.subr.mxu0 0.0
    %384 = vmatpush2.msra.mxu0 0.0
    %385 = vmatprep.subr.mxu0 0.0
    %386 = vmatpush2.msra.mxu0 0.0
    %387 = vmatprep.subr.mxu0 0.0
    %388 = vmatpush2.msra.mxu0 0.0
    %389 = vmatprep.subr.mxu0 0.0
    %390 = vmatpush2.msra.mxu0 0.0
    %391 = vmatprep.subr.mxu0 0.0
    %392 = vmatpush2.msra.mxu0 0.0
    %393 = vmatprep.subr.mxu0 0.0
    %394 = vmatpush2.msra.mxu0 0.0
    %395 = vmatprep.subr.mxu0 0.0
    %396 = vmatpush2.msra.mxu0 0.0
    %397 = vmatprep.subr.mxu0 0.0
    %398 = vmatpush2.msra.mxu0 0.0
    %399 = vmatprep.subr.mxu0 0.0
    %400 = vmatpush2.msra.mxu0 0.0
    %401 = vmatprep.mubr.f32.mxu0 0.0
    %402 = vmatmul.mubr.f32.gmra.mxu0 %v332
    %v403 = vpop.f32.mrf.mxu0
    %v404 = vadd.f32 %v329, %v403
    %v405 = vpop.f32.mrf.mxu0
    %406 = vdwg.mxu0
    %vm407 = vcmp.ge.f32.partialorder %v404, 0.0
    %v408 = vlaneseq
    %v409 = vshrl.u32 %v408, 7
    %v410 = vsub.s32 3, %v409
    %v411 = vrot.slane %v33, %v410
    %v412 = vmul.f32 %v411, %v404
    %v413 = vsel %vm407, %v404, %v412
    %v414 = vld [vmem:[%s0 + $0x38] sm:$0xff]
    %v415 = vld [vmem:[%s0 + $0x40] sm:$0xff]
    %v416 = vld [vmem:[%s0 + $0x48] sm:$0xff]
    %v417 = vld [vmem:[%s0 + $0x50] sm:$0xff]
    %v418 = vld [vmem:[%s0 + $0x58] sm:$0xff]
    %v419 = vld [vmem:[%s0 + $0x60] sm:$0xff]
    %v420 = vld [vmem:[%s0 + $0x68] sm:$0xff]
    %v421 = vld [vmem:[%s0 + $0x70] sm:$0xf]
    %v422 = vld [vmem:[%s0 + $0x78] sm:$0xff]
    %v423 = vld [vmem:[%s0 + $0x80] sm:$0x3]
    %v424 = vld [vmem:[%s0 + $0x88] sm:$0x3f]
    %v425 = vld [vmem:[%s1 + $0xa0] sm:$0xff]
    %v426 = vld [vmem:[%s1 + $0xa8] sm:$0xff]
    %v427 = vld [vmem:[%s1 + $0xb0] sm:$0xff]
    %v428 = vld [vmem:[%s1 + $0xb8] sm:$0xff]
    %v429 = vld [vmem:[%s1 + $0xc0] sm:$0xff]
    %v430 = vld [vmem:[%s1 + $0xc8] sm:$0xff]
    %v431 = vld [vmem:[%s1 + $0xd0] sm:$0xff]
    %v432 = vld [vmem:[%s1 + $0xd8] sm:$0xff]
    %v433 = vld [vmem:[%s1 + $0xe0] sm:$0xff]
    %v434 = vld [vmem:[%s1 + $0xe8] sm:$0xff]
    %v435 = vld [vmem:[%s1 + $0xf0] sm:$0xff]
    %v436 = vld [vmem:[%s1 + $0xf8] sm:$0xff]
    %v437 = vld [vmem:[%s1 + $0x120] sm:$0xff]
    %v438 = vld [vmem:[%s1 + $0x128] sm:$0xff]
    %v439 = vld [vmem:[%s1 + $0x130] sm:$0xff]
    %v440 = vld [vmem:[%s1 + $0x138] sm:$0xff]
    %v441 = vld [vmem:[%s1 + $0x140] sm:$0xff]
    %v442 = vld [vmem:[%s1 + $0x148] sm:$0xff]
    %v443 = vld [vmem:[%s1 + $0x150] sm:$0xff]
    %v444 = vld [vmem:[%s1 + $0x158] sm:$0xff]
    %v445 = vld [vmem:[%s1 + $0x160] sm:$0xff]
    %v446 = vld [vmem:[%s1 + $0x168] sm:$0xff]
    %v447 = vld [vmem:[%s1 + $0x170] sm:$0xff]
    %v448 = vld [vmem:[%s1 + $0x178] sm:$0xff]
    %v449 = vld [vmem:[%s1 + $0x1a0] sm:$0xff]
    %v450 = vld [vmem:[%s1 + $0x1a8] sm:$0xff]
    %v451 = vld [vmem:[%s1 + $0x1b0] sm:$0xff]
    %v452 = vld [vmem:[%s1 + $0x1b8] sm:$0xff]
    %v453 = vld [vmem:[%s1 + $0x1c0] sm:$0xff]
    %v454 = vld [vmem:[%s1 + $0x1c8] sm:$0xff]
    %v455 = vld [vmem:[%s1 + $0x1d0] sm:$0xff]
    %v456 = vld [vmem:[%s1 + $0x1d8] sm:$0xff]
    %v457 = vld [vmem:[%s1 + $0x1e0] sm:$0xff]
    %v458 = vld [vmem:[%s1 + $0x1e8] sm:$0xff]
    %v459 = vld [vmem:[%s1 + $0x1f0] sm:$0xff]
    %v460 = vld [vmem:[%s1 + $0x1f8] sm:$0xff]
    %v461 = vld [vmem:[%s1 + $0x200] sm:$0xff]
    %v462 = vld [vmem:[%s1 + $0x208] sm:$0xf]
    %v463 = vld [vmem:[%s1 + $0x210] sm:$0xff]
    %v464 = vld [vmem:[%s1 + $0x218] sm:$0xf]
    %v465 = vld [vmem:[%s2 + $0x140] sm:$0xff]
    %v466 = vld [vmem:[%s2 + $0x180] sm:$0xff]
    %v467 = vld [vmem:[%s2 + $0x1c0] sm:$0xff]
    %v468 = vld [vmem:[%s2 + $0x200] sm:$0xff]
    %v469 = vld [vmem:[%s2 + $0x240] ss:$0 sm:$0xff]
    %vm470 = vcmask 261120
    %v472 = vsel %vm470, %v128, 0
    %v475 = vsel %vm470, %v129, 0
    %477 = vmatprep.subr.mxu0 0.0
    %478 = vmatpush1.msra.mxu0 0.0
    %479 = vmatprep.subr.mxu0 0.0
    %480 = vmatpush1.msra.mxu0 0.0
    %481 = vmatprep.subr.mxu0 0.0
    %482 = vmatpush1.msra.mxu0 0.0
    %483 = vmatprep.subr.mxu0 0.0
    %484 = vmatpush1.msra.mxu0 0.0
    %485 = vmatprep.subr.mxu0 0.0
    %486 = vmatpush1.msra.mxu0 0.0
    %487 = vmatprep.subr.mxu0 0.0
    %488 = vmatpush1.msra.mxu0 0.0
    %489 = vmatprep.subr.mxu0 0.0
    %490 = vmatpush1.msra.mxu0 0.0
    %491 = vmatprep.subr.mxu0 0.0
    %492 = vmatpush1.msra.mxu0 0.0
    %493 = vmatprep.subr.mxu0 0.0
    %494 = vmatpush1.msra.mxu0 0.0
    %495 = vmatprep.subr.mxu0 0.0
    %496 = vmatpush1.msra.mxu0 0.0
    %497 = vmatprep.subr.mxu0 0.0
    %498 = vmatpush1.msra.mxu0 0.0
    %499 = vmatprep.subr.mxu0 0.0
    %500 = vmatpush1.msra.mxu0 0.0
    %501 = vmatprep.subr.mxu0 0.0
    %502 = vmatpush1.msra.mxu0 %v468
    %503 = vmatprep.subr.mxu0 0.0
    %504 = vmatpush1.msra.mxu0 %v467
    %505 = vmatprep.subr.mxu0 0.0
    %506 = vmatpush1.msra.mxu0 %v466
    %507 = vmatprep.subr.mxu0 0.0
    %508 = vmatpush1.msra.mxu0 %v465
    %509 = vmatprep.subr.mxu0 0.0
    %510 = vmatpush2.msra.mxu0 0.0
    %511 = vmatprep.subr.mxu0 0.0
    %512 = vmatpush2.msra.mxu0 0.0
    %513 = vmatprep.subr.mxu0 0.0
    %514 = vmatpush2.msra.mxu0 0.0
    %515 = vmatprep.subr.mxu0 0.0
    %516 = vmatpush2.msra.mxu0 0.0
    %517 = vmatprep.subr.mxu0 0.0
    %518 = vmatpush2.msra.mxu0 0.0
    %519 = vmatprep.subr.mxu0 0.0
    %520 = vmatpush2.msra.mxu0 0.0
    %521 = vmatprep.subr.mxu0 0.0
    %522 = vmatpush2.msra.mxu0 0.0
    %523 = vmatprep.subr.mxu0 0.0
    %524 = vmatpush2.msra.mxu0 0.0
    %525 = vmatprep.subr.mxu0 0.0
    %526 = vmatpush2.msra.mxu0 0.0
    %527 = vmatprep.subr.mxu0 0.0
    %528 = vmatpush2.msra.mxu0 0.0
    %529 = vmatprep.subr.mxu0 0.0
    %530 = vmatpush2.msra.mxu0 0.0
    %531 = vmatprep.subr.mxu0 0.0
    %532 = vmatpush2.msra.mxu0 0.0
    %533 = vmatprep.subr.mxu0 0.0
    %534 = vmatpush2.msra.mxu0 0.0
    %535 = vmatprep.subr.mxu0 0.0
    %536 = vmatpush2.msra.mxu0 0.0
    %537 = vmatprep.subr.mxu0 0.0
    %538 = vmatpush2.msra.mxu0 0.0
    %539 = vmatprep.subr.mxu0 0.0
    %540 = vmatpush2.msra.mxu0 0.0
    %541 = vmatprep.mubr.f32.mxu0 0.0
    %542 = vmatmul.mubr.f32.gmra.mxu0 %v472
    %v543 = vpop.f32.mrf.mxu0
    %v544 = vadd.f32 %v469, %v543
    %v545 = vpop.f32.mrf.mxu0
    %546 = vmatprep.mubr.f32.mxu0 0.0
    %547 = vmatmul.mubr.f32.gmra.mxu0 %v475
    %v548 = vpop.f32.mrf.mxu0
    %v549 = vadd.f32 %v469, %v548
    %v550 = vpop.f32.mrf.mxu0
    %551 = vdwg.mxu0
    %vm552 = vcmask 785408
    %v553 = vsel %vm552, %v544, 0.0
    %v554 = vsel %vm552, %v549, 0.0
    %v555 = vadd.f32 %v553, %v554
    %v556 = vrot.slane %v555, 4
    %v557 = vadd.f32 %v555, %v556
    %v558 = vrot.slane %v557, 2
    %v559 = vadd.f32 %v557, %v558
    %v560 = vrot.slane %v559, 1
    %v561 = vadd.f32 %v559, %v560
    %v562 = vmul.f32 %v561, 0.0625
    %v563 = vmul.f32 %v544, %v544
    %v564 = vmul.f32 %v549, %v549
    %v565 = vsel %vm552, %v563, 0.0
    %v566 = vsel %vm552, %v564, 0.0
    %v567 = vadd.f32 %v565, %v566
    %v568 = vrot.slane %v567, 4
    %v569 = vadd.f32 %v567, %v568
    %v570 = vrot.slane %v569, 2
    %v571 = vadd.f32 %v569, %v570
    %v572 = vrot.slane %v571, 1
    %v573 = vadd.f32 %v571, %v572
    %v574 = vmul.f32 %v573, 0.0625
    %v575 = vmul.f32 %v562, %v562
    %v576 = vsub.f32 %v574, %v575
    %v577 = vmax.f32 %v576, 0.0
    %v578 = vsub.f32 %v544, %v562
    %v579 = vsub.f32 %v549, %v562
    %v580 = vadd.f32 %v577, 1e-05
    %v581 = vrsqrt.pop %v580
    %v582 = vmul.f32 %v578, %v581
    %v583 = vmul.f32 %v579, %v581
    %v584 = vld [vmem:[%s2 + $0x280] ss:$0 sm:$0xff]
    %vm585 = vcmp.ge.f32.partialorder %v582, 0.0
    %vm586 = vcmp.ge.f32.partialorder %v583, 0.0
    %v587 = vmul.f32 %v584, %v582
    %v588 = vmul.f32 %v584, %v583
    %v589 = vsel %vm585, %v582, %v587
    %v590 = vsel %vm586, %v583, %v588
    %v592 = vsel %vm234, %v420, 0
    %v595 = vsel %vm234, %v421, 0
    %597 = vmatprep.subr.mxu0 0.0
    %598 = vmatpush1.msra.mxu0 0.0
    %599 = vmatprep.subr.mxu0 0.0
    %600 = vmatpush1.msra.mxu0 0.0
    %601 = vmatprep.subr.mxu0 0.0
    %602 = vmatpush1.msra.mxu0 0.0
    %603 = vmatprep.subr.mxu0 0.0
    %604 = vmatpush1.msra.mxu0 0.0
    %605 = vmatprep.subr.mxu0 0.0
    %606 = vmatpush1.msra.mxu0 0.0
    %607 = vmatprep.subr.mxu0 0.0
    %608 = vmatpush1.msra.mxu0 0.0
    %609 = vmatprep.subr.mxu0 0.0
    %610 = vmatpush1.msra.mxu0 0.0
    %611 = vmatprep.subr.mxu0 0.0
    %612 = vmatpush1.msra.mxu0 0.0
    %613 = vmatprep.subr.mxu0 0.0
    %614 = vmatpush1.msra.mxu0 0.0
    %615 = vmatprep.subr.mxu0 0.0
    %616 = vmatpush1.msra.mxu0 0.0
    %617 = vmatprep.subr.mxu0 0.0
    %618 = vmatpush1.msra.mxu0 0.0
    %619 = vmatprep.subr.mxu0 0.0
    %620 = vmatpush1.msra.mxu0 0.0
    %621 = vmatprep.subr.mxu0 0.0
    %622 = vmatpush1.msra.mxu0 0.0
    %623 = vmatprep.subr.mxu0 0.0
    %624 = vmatpush1.msra.mxu0 0.0
    %625 = vmatprep.subr.mxu0 0.0
    %626 = vmatpush1.msra.mxu0 %v590
    %627 = vmatprep.subr.mxu0 0.0
    %628 = vmatpush1.msra.mxu0 %v589
    %629 = vmatprep.subr.mxu0 0.0
    %630 = vmatpush2.msra.mxu0 0.0
    %631 = vmatprep.subr.mxu0 0.0
    %632 = vmatpush2.msra.mxu0 0.0
    %633 = vmatprep.subr.mxu0 0.0
    %634 = vmatpush2.msra.mxu0 0.0
    %635 = vmatprep.subr.mxu0 0.0
    %636 = vmatpush2.msra.mxu0 0.0
    %637 = vmatprep.subr.mxu0 0.0
    %638 = vmatpush2.msra.mxu0 0.0
    %639 = vmatprep.subr.mxu0 0.0
    %640 = vmatpush2.msra.mxu0 0.0
    %641 = vmatprep.subr.mxu0 0.0
    %642 = vmatpush2.msra.mxu0 0.0
    %643 = vmatprep.subr.mxu0 0.0
    %644 = vmatpush2.msra.mxu0 0.0
    %645 = vmatprep.subr.mxu0 0.0
    %646 = vmatpush2.msra.mxu0 0.0
    %647 = vmatprep.subr.mxu0 0.0
    %648 = vmatpush2.msra.mxu0 0.0
    %649 = vmatprep.subr.mxu0 0.0
    %650 = vmatpush2.msra.mxu0 0.0
    %651 = vmatprep.subr.mxu0 0.0
    %652 = vmatpush2.msra.mxu0 0.0
    %653 = vmatprep.subr.mxu0 0.0
    %654 = vmatpush2.msra.mxu0 0.0
    %655 = vmatprep.subr.mxu0 0.0
    %656 = vmatpush2.msra.mxu0 0.0
    %657 = vmatprep.subr.mxu0 0.0
    %658 = vmatpush2.msra.mxu0 0.0
    %659 = vmatprep.subr.mxu0 0.0
    %660 = vmatpush2.msra.mxu0 0.0
    %661 = vmatprep.mubr.f32.mxu0 0.0
    %662 = vmatmul.mubr.f32.gmra.mxu0 %v592
    %v663 = vpop.f32.mrf.mxu0
    %v664 = vadd.f32 0.0, %v663
    %v665 = vpop.f32.mrf.mxu0
    %666 = vmatprep.mubr.f32.mxu0 0.0
    %667 = vmatmul.mubr.f32.gmra.mxu0 %v595
    %v668 = vpop.f32.mrf.mxu0
    %v669 = vadd.f32 0.0, %v668
    %v670 = vpop.f32.mrf.mxu0
    %671 = vdwg.mxu0
    %v672 = vlaneseq
    %v673 = vshrl.u32 %v672, 7
    %v674 = vsub.s32 1, %v673
    %v675 = vrot.slane %v461, %v674
    %v677 = vsel %vm470, %v664, 0
    %v680 = vsel %vm470, %v669, 0
    %682 = vmatprep.subr.mxu0 0.0
    %683 = vmatpush1.msra.mxu0 0.0
    %684 = vmatprep.subr.mxu0 0.0
    %685 = vmatpush1.msra.mxu0 0.0
    %686 = vmatprep.subr.mxu0 0.0
    %687 = vmatpush1.msra.mxu0 0.0
    %688 = vmatprep.subr.mxu0 0.0
    %689 = vmatpush1.msra.mxu0 0.0
    %690 = vmatprep.subr.mxu0 0.0
    %691 = vmatpush1.msra.mxu0 0.0
    %692 = vmatprep.subr.mxu0 0.0
    %693 = vmatpush1.msra.mxu0 0.0
    %694 = vmatprep.subr.mxu0 0.0
    %695 = vmatpush1.msra.mxu0 0.0
    %696 = vmatprep.subr.mxu0 0.0
    %697 = vmatpush1.msra.mxu0 0.0
    %698 = vmatprep.subr.mxu0 0.0
    %699 = vmatpush1.msra.mxu0 0.0
    %700 = vmatprep.subr.mxu0 0.0
    %701 = vmatpush1.msra.mxu0 0.0
    %702 = vmatprep.subr.mxu0 0.0
    %703 = vmatpush1.msra.mxu0 0.0
    %704 = vmatprep.subr.mxu0 0.0
    %705 = vmatpush1.msra.mxu0 0.0
    %706 = vmatprep.subr.mxu0 0.0
    %707 = vmatpush1.msra.mxu0 %v428
    %708 = vmatprep.subr.mxu0 0.0
    %709 = vmatpush1.msra.mxu0 %v427
    %710 = vmatprep.subr.mxu0 0.0
    %711 = vmatpush1.msra.mxu0 %v426
    %712 = vmatprep.subr.mxu0 0.0
    %713 = vmatpush1.msra.mxu0 %v425
    %714 = vmatprep.subr.mxu0 0.0
    %715 = vmatpush2.msra.mxu0 0.0
    %716 = vmatprep.subr.mxu0 0.0
    %717 = vmatpush2.msra.mxu0 0.0
    %718 = vmatprep.subr.mxu0 0.0
    %719 = vmatpush2.msra.mxu0 0.0
    %720 = vmatprep.subr.mxu0 0.0
    %721 = vmatpush2.msra.mxu0 0.0
    %722 = vmatprep.subr.mxu0 0.0
    %723 = vmatpush2.msra.mxu0 0.0
    %724 = vmatprep.subr.mxu0 0.0
    %725 = vmatpush2.msra.mxu0 0.0
    %726 = vmatprep.subr.mxu0 0.0
    %727 = vmatpush2.msra.mxu0 0.0
    %728 = vmatprep.subr.mxu0 0.0
    %729 = vmatpush2.msra.mxu0 0.0
    %730 = vmatprep.subr.mxu0 0.0
    %731 = vmatpush2.msra.mxu0 0.0
    %732 = vmatprep.subr.mxu0 0.0
    %733 = vmatpush2.msra.mxu0 0.0
    %734 = vmatprep.subr.mxu0 0.0
    %735 = vmatpush2.msra.mxu0 0.0
    %736 = vmatprep.subr.mxu0 0.0
    %737 = vmatpush2.msra.mxu0 0.0
    %738 = vmatprep.subr.mxu0 0.0
    %739 = vmatpush2.msra.mxu0 0.0
    %740 = vmatprep.subr.mxu0 0.0
    %741 = vmatpush2.msra.mxu0 0.0
    %742 = vmatprep.subr.mxu0 0.0
    %743 = vmatpush2.msra.mxu0 0.0
    %744 = vmatprep.subr.mxu0 0.0
    %745 = vmatpush2.msra.mxu0 0.0
    %746 = vmatprep.mubr.f32.mxu0 0.0
    %747 = vmatmul.mubr.f32.gmra.mxu0 %v677
    %v748 = vpop.f32.mrf.mxu0
    %v749 = vadd.f32 %v675, %v748
    %v750 = vpop.f32.mrf.mxu0
    %751 = vmatprep.mubr.f32.mxu0 0.0
    %752 = vmatmul.mubr.f32.gmra.mxu0 %v680
    %v753 = vpop.f32.mrf.mxu0
    %v754 = vadd.f32 %v675, %v753
    %v755 = vpop.f32.mrf.mxu0
    %756 = vdwg.mxu0
    %v757 = vsel %vm470, %v749, 0.0
    %vm758 = vcmask 257024
    %v759 = vsel %vm758, %v754, 0.0
    %v760 = vadd.f32 %v757, %v759
    %v761 = vrot.slane %v760, 4
    %v762 = vadd.f32 %v760, %v761
    %v763 = vrot.slane %v762, 2
    %v764 = vadd.f32 %v762, %v763
    %v765 = vrot.slane %v764, 1
    %v766 = vadd.f32 %v764, %v765
    %v767 = vmul.f32 %v766, 0.083333336
    %v768 = vmul.f32 %v749, %v749
    %v769 = vmul.f32 %v754, %v754
    %v770 = vsel %vm470, %v768, 0.0
    %v771 = vsel %vm758, %v769, 0.0
    %v772 = vadd.f32 %v770, %v771
    %v773 = vrot.slane %v772, 4
    %v774 = vadd.f32 %v772, %v773
    %v775 = vrot.slane %v774, 2
    %v776 = vadd.f32 %v774, %v775
    %v777 = vrot.slane %v776, 1
    %v778 = vadd.f32 %v776, %v777
    %v779 = vmul.f32 %v778, 0.083333336
    %v780 = vmul.f32 %v767, %v767
    %v781 = vsub.f32 %v779, %v780
    %v782 = vmax.f32 %v781, 0.0
    %v783 = vsub.f32 %v749, %v767
    %v784 = vsub.f32 %v754, %v767
    %v785 = vadd.f32 %v782, 1e-05
    %v786 = vrsqrt.pop %v785
    %v787 = vmul.f32 %v783, %v786
    %v788 = vmul.f32 %v784, %v786
    %vm789 = vcmp.ge.f32.partialorder %v787, 0.0
    %vm790 = vcmp.ge.f32.partialorder %v788, 0.0
    %v791 = vlaneseq
    %v792 = vshrl.u32 %v791, 7
    %v793 = vsub.s32 1, %v792
    %v794 = vrot.slane %v463, %v793
    %v795 = vmul.f32 %v794, %v787
    %v796 = vmul.f32 %v794, %v788
    %v797 = vsel %vm789, %v787, %v795
    %v798 = vsel %vm790, %v788, %v796
    %v799 = vlaneseq
    %v800 = vshrl.u32 %v799, 7
    %v801 = vsub.s32 2, %v800
    %v802 = vrot.slane %v461, %v801
    %v804 = vsel %vm470, %v797, 0
    %v807 = vsel %vm470, %v798, 0
    %809 = vmatprep.subr.mxu0 0.0
    %810 = vmatpush1.msra.mxu0 0.0
    %811 = vmatprep.subr.mxu0 0.0
    %812 = vmatpush1.msra.mxu0 0.0
    %813 = vmatprep.subr.mxu0 0.0
    %814 = vmatpush1.msra.mxu0 0.0
    %815 = vmatprep.subr.mxu0 0.0
    %816 = vmatpush1.msra.mxu0 0.0
    %817 = vmatprep.subr.mxu0 0.0
    %818 = vmatpush1.msra.mxu0 0.0
    %819 = vmatprep.subr.mxu0 0.0
    %820 = vmatpush1.msra.mxu0 0.0
    %821 = vmatprep.subr.mxu0 0.0
    %822 = vmatpush1.msra.mxu0 0.0
    %823 = vmatprep.subr.mxu0 0.0
    %824 = vmatpush1.msra.mxu0 0.0
    %825 = vmatprep.subr.mxu0 0.0
    %826 = vmatpush1.msra.mxu0 0.0
    %827 = vmatprep.subr.mxu0 0.0
    %828 = vmatpush1.msra.mxu0 0.0
    %829 = vmatprep.subr.mxu0 0.0
    %830 = vmatpush1.msra.mxu0 0.0
    %831 = vmatprep.subr.mxu0 0.0
    %832 = vmatpush1.msra.mxu0 0.0
    %833 = vmatprep.subr.mxu0 0.0
    %834 = vmatpush1.msra.mxu0 %v432
    %835 = vmatprep.subr.mxu0 0.0
    %836 = vmatpush1.msra.mxu0 %v431
    %837 = vmatprep.subr.mxu0 0.0
    %838 = vmatpush1.msra.mxu0 %v430
    %839 = vmatprep.subr.mxu0 0.0
    %840 = vmatpush1.msra.mxu0 %v429
    %841 = vmatprep.subr.mxu0 0.0
    %842 = vmatpush2.msra.mxu0 0.0
    %843 = vmatprep.subr.mxu0 0.0
    %844 = vmatpush2.msra.mxu0 0.0
    %845 = vmatprep.subr.mxu0 0.0
    %846 = vmatpush2.msra.mxu0 0.0
    %847 = vmatprep.subr.mxu0 0.0
    %848 = vmatpush2.msra.mxu0 0.0
    %849 = vmatprep.subr.mxu0 0.0
    %850 = vmatpush2.msra.mxu0 0.0
    %851 = vmatprep.subr.mxu0 0.0
    %852 = vmatpush2.msra.mxu0 0.0
    %853 = vmatprep.subr.mxu0 0.0
    %854 = vmatpush2.msra.mxu0 0.0
    %855 = vmatprep.subr.mxu0 0.0
    %856 = vmatpush2.msra.mxu0 0.0
    %857 = vmatprep.subr.mxu0 0.0
    %858 = vmatpush2.msra.mxu0 0.0
    %859 = vmatprep.subr.mxu0 0.0
    %860 = vmatpush2.msra.mxu0 0.0
    %861 = vmatprep.subr.mxu0 0.0
    %862 = vmatpush2.msra.mxu0 0.0
    %863 = vmatprep.subr.mxu0 0.0
    %864 = vmatpush2.msra.mxu0 0.0
    %865 = vmatprep.subr.mxu0 0.0
    %866 = vmatpush2.msra.mxu0 0.0
    %867 = vmatprep.subr.mxu0 0.0
    %868 = vmatpush2.msra.mxu0 0.0
    %869 = vmatprep.subr.mxu0 0.0
    %870 = vmatpush2.msra.mxu0 0.0
    %871 = vmatprep.subr.mxu0 0.0
    %872 = vmatpush2.msra.mxu0 0.0
    %873 = vmatprep.mubr.f32.mxu0 0.0
    %874 = vmatmul.mubr.f32.gmra.mxu0 %v804
    %v875 = vpop.f32.mrf.mxu0
    %v876 = vadd.f32 %v802, %v875
    %v877 = vpop.f32.mrf.mxu0
    %878 = vmatprep.mubr.f32.mxu0 0.0
    %879 = vmatmul.mubr.f32.gmra.mxu0 %v807
    %v880 = vpop.f32.mrf.mxu0
    %v881 = vadd.f32 %v802, %v880
    %v882 = vpop.f32.mrf.mxu0
    %883 = vdwg.mxu0
    %v884 = vsel %vm470, %v876, 0.0
    %v885 = vsel %vm758, %v881, 0.0
    %v886 = vadd.f32 %v884, %v885
    %v887 = vrot.slane %v886, 4
    %v888 = vadd.f32 %v886, %v887
    %v889 = vrot.slane %v888, 2
    %v890 = vadd.f32 %v888, %v889
    %v891 = vrot.slane %v890, 1
    %v892 = vadd.f32 %v890, %v891
    %v893 = vmul.f32 %v892, 0.083333336
    %v894 = vmul.f32 %v876, %v876
    %v895 = vmul.f32 %v881, %v881
    %v896 = vsel %vm470, %v894, 0.0
    %v897 = vsel %vm758, %v895, 0.0
    %v898 = vadd.f32 %v896, %v897
    %v899 = vrot.slane %v898, 4
    %v900 = vadd.f32 %v898, %v899
    %v901 = vrot.slane %v900, 2
    %v902 = vadd.f32 %v900, %v901
    %v903 = vrot.slane %v902, 1
    %v904 = vadd.f32 %v902, %v903
    %v905 = vmul.f32 %v904, 0.083333336
    %v906 = vmul.f32 %v893, %v893
    %v907 = vsub.f32 %v905, %v906
    %v908 = vmax.f32 %v907, 0.0
    %v909 = vsub.f32 %v876, %v893
    %v910 = vsub.f32 %v881, %v893
    %v911 = vadd.f32 %v908, 1e-05
    %v912 = vrsqrt.pop %v911
    %v913 = vmul.f32 %v909, %v912
    %v914 = vmul.f32 %v910, %v912
    %vm915 = vcmp.ge.f32.partialorder %v913, 0.0
    %vm916 = vcmp.ge.f32.partialorder %v914, 0.0
    %v917 = vlaneseq
    %v918 = vshrl.u32 %v917, 7
    %v919 = vsub.s32 2, %v918
    %v920 = vrot.slane %v463, %v919
    %v921 = vmul.f32 %v920, %v913
    %v922 = vmul.f32 %v920, %v914
    %v923 = vsel %vm915, %v913, %v921
    %v924 = vsel %vm916, %v914, %v922
    %v926 = vsel %vm330, %v414, 0
    %v929 = vsel %vm330, %v415, 0
    %v932 = vsel %vm141, %v924, 0
    %934 = vmatprep.subr.mxu0 0.0
    %935 = vmatpush1.msra.mxu0 0.0
    %936 = vmatprep.subr.mxu0 0.0
    %937 = vmatpush1.msra.mxu0 0.0
    %938 = vmatprep.subr.mxu0 0.0
    %939 = vmatpush1.msra.mxu0 0.0
    %940 = vmatprep.subr.mxu0 0.0
    %941 = vmatpush1.msra.mxu0 0.0
    %942 = vmatprep.subr.mxu0 0.0
    %943 = vmatpush1.msra.mxu0 0.0
    %944 = vmatprep.subr.mxu0 0.0
    %945 = vmatpush1.msra.mxu0 0.0
    %946 = vmatprep.subr.mxu0 0.0
    %947 = vmatpush1.msra.mxu0 0.0
    %948 = vmatprep.subr.mxu0 0.0
    %949 = vmatpush1.msra.mxu0 0.0
    %950 = vmatprep.subr.mxu0 0.0
    %951 = vmatpush1.msra.mxu0 0.0
    %952 = vmatprep.subr.mxu0 0.0
    %953 = vmatpush1.msra.mxu0 0.0
    %954 = vmatprep.subr.mxu0 0.0
    %955 = vmatpush1.msra.mxu0 0.0
    %956 = vmatprep.subr.mxu0 0.0
    %957 = vmatpush1.msra.mxu0 0.0
    %958 = vmatprep.subr.mxu0 0.0
    %959 = vmatpush1.msra.mxu0 0.0
    %960 = vmatprep.subr.mxu0 0.0
    %961 = vmatpush1.msra.mxu0 0.0
    %962 = vmatprep.subr.mxu0 0.0
    %963 = vmatpush1.msra.mxu0 %v932
    %964 = vmatprep.subr.mxu0 0.0
    %965 = vmatpush1.msra.mxu0 %v923
    %966 = vmatprep.subr.mxu0 0.0
    %967 = vmatpush2.msra.mxu0 0.0
    %968 = vmatprep.subr.mxu0 0.0
    %969 = vmatpush2.msra.mxu0 0.0
    %970 = vmatprep.subr.mxu0 0.0
    %971 = vmatpush2.msra.mxu0 0.0
    %972 = vmatprep.subr.mxu0 0.0
    %973 = vmatpush2.msra.mxu0 0.0
    %974 = vmatprep.subr.mxu0 0.0
    %975 = vmatpush2.msra.mxu0 0.0
    %976 = vmatprep.subr.mxu0 0.0
    %977 = vmatpush2.msra.mxu0 0.0
    %978 = vmatprep.subr.mxu0 0.0
    %979 = vmatpush2.msra.mxu0 0.0
    %980 = vmatprep.subr.mxu0 0.0
    %981 = vmatpush2.msra.mxu0 0.0
    %982 = vmatprep.subr.mxu0 0.0
    %983 = vmatpush2.msra.mxu0 0.0
    %984 = vmatprep.subr.mxu0 0.0
    %985 = vmatpush2.msra.mxu0 0.0
    %986 = vmatprep.subr.mxu0 0.0
    %987 = vmatpush2.msra.mxu0 0.0
    %988 = vmatprep.subr.mxu0 0.0
    %989 = vmatpush2.msra.mxu0 0.0
    %990 = vmatprep.subr.mxu0 0.0
    %991 = vmatpush2.msra.mxu0 0.0
    %992 = vmatprep.subr.mxu0 0.0
    %993 = vmatpush2.msra.mxu0 0.0
    %994 = vmatprep.subr.mxu0 0.0
    %995 = vmatpush2.msra.mxu0 0.0
    %996 = vmatprep.subr.mxu0 0.0
    %997 = vmatpush2.msra.mxu0 0.0
    %998 = vmatprep.mubr.f32.mxu0 0.0
    %999 = vmatmul.mubr.f32.gmra.mxu0 %v926
    %v1000 = vpop.f32.mrf.mxu0
    %v1001 = vadd.f32 0.0, %v1000
    %v1002 = vpop.f32.mrf.mxu0
    %1003 = vmatprep.mubr.f32.mxu0 0.0
    %1004 = vmatmul.mubr.f32.gmra.mxu0 %v929
    %v1005 = vpop.f32.mrf.mxu0
    %v1006 = vadd.f32 0.0, %v1005
    %v1007 = vpop.f32.mrf.mxu0
    %1008 = vdwg.mxu0
    %v1009 = vlaneseq
    %v1010 = vshrl.u32 %v1009, 7
    %v1011 = vsub.s32 3, %v1010
    %v1012 = vrot.slane %v461, %v1011
    %v1014 = vsel %vm470, %v1001, 0
    %v1017 = vsel %vm470, %v1006, 0
    %1019 = vmatprep.subr.mxu0 0.0
    %1020 = vmatpush1.msra.mxu0 0.0
    %1021 = vmatprep.subr.mxu0 0.0
    %1022 = vmatpush1.msra.mxu0 0.0
    %1023 = vmatprep.subr.mxu0 0.0
    %1024 = vmatpush1.msra.mxu0 0.0
    %1025 = vmatprep.subr.mxu0 0.0
    %1026 = vmatpush1.msra.mxu0 0.0
    %1027 = vmatprep.subr.mxu0 0.0
    %1028 = vmatpush1.msra.mxu0 0.0
    %1029 = vmatprep.subr.mxu0 0.0
    %1030 = vmatpush1.msra.mxu0 0.0
    %1031 = vmatprep.subr.mxu0 0.0
    %1032 = vmatpush1.msra.mxu0 0.0
    %1033 = vmatprep.subr.mxu0 0.0
    %1034 = vmatpush1.msra.mxu0 0.0
    %1035 = vmatprep.subr.mxu0 0.0
    %1036 = vmatpush1.msra.mxu0 0.0
    %1037 = vmatprep.subr.mxu0 0.0
    %1038 = vmatpush1.msra.mxu0 0.0
    %1039 = vmatprep.subr.mxu0 0.0
    %1040 = vmatpush1.msra.mxu0 0.0
    %1041 = vmatprep.subr.mxu0 0.0
    %1042 = vmatpush1.msra.mxu0 0.0
    %1043 = vmatprep.subr.mxu0 0.0
    %1044 = vmatpush1.msra.mxu0 %v436
    %1045 = vmatprep.subr.mxu0 0.0
    %1046 = vmatpush1.msra.mxu0 %v435
    %1047 = vmatprep.subr.mxu0 0.0
    %1048 = vmatpush1.msra.mxu0 %v434
    %1049 = vmatprep.subr.mxu0 0.0
    %1050 = vmatpush1.msra.mxu0 %v433
    %1051 = vmatprep.subr.mxu0 0.0
    %1052 = vmatpush2.msra.mxu0 0.0
    %1053 = vmatprep.subr.mxu0 0.0
    %1054 = vmatpush2.msra.mxu0 0.0
    %1055 = vmatprep.subr.mxu0 0.0
    %1056 = vmatpush2.msra.mxu0 0.0
    %1057 = vmatprep.subr.mxu0 0.0
    %1058 = vmatpush2.msra.mxu0 0.0
    %1059 = vmatprep.subr.mxu0 0.0
    %1060 = vmatpush2.msra.mxu0 0.0
    %1061 = vmatprep.subr.mxu0 0.0
    %1062 = vmatpush2.msra.mxu0 0.0
    %1063 = vmatprep.subr.mxu0 0.0
    %1064 = vmatpush2.msra.mxu0 0.0
    %1065 = vmatprep.subr.mxu0 0.0
    %1066 = vmatpush2.msra.mxu0 0.0
    %1067 = vmatprep.subr.mxu0 0.0
    %1068 = vmatpush2.msra.mxu0 0.0
    %1069 = vmatprep.subr.mxu0 0.0
    %1070 = vmatpush2.msra.mxu0 0.0
    %1071 = vmatprep.subr.mxu0 0.0
    %1072 = vmatpush2.msra.mxu0 0.0
    %1073 = vmatprep.subr.mxu0 0.0
    %1074 = vmatpush2.msra.mxu0 0.0
    %1075 = vmatprep.subr.mxu0 0.0
    %1076 = vmatpush2.msra.mxu0 0.0
    %1077 = vmatprep.subr.mxu0 0.0
    %1078 = vmatpush2.msra.mxu0 0.0
    %1079 = vmatprep.subr.mxu0 0.0
    %1080 = vmatpush2.msra.mxu0 0.0
    %1081 = vmatprep.subr.mxu0 0.0
    %1082 = vmatpush2.msra.mxu0 0.0
    %1083 = vmatprep.mubr.f32.mxu0 0.0
    %1084 = vmatmul.mubr.f32.gmra.mxu0 %v1014
    %v1085 = vpop.f32.mrf.mxu0
    %v1086 = vadd.f32 %v1012, %v1085
    %v1087 = vpop.f32.mrf.mxu0
    %1088 = vmatprep.mubr.f32.mxu0 0.0
    %1089 = vmatmul.mubr.f32.gmra.mxu0 %v1017
    %v1090 = vpop.f32.mrf.mxu0
    %v1091 = vadd.f32 %v1012, %v1090
    %v1092 = vpop.f32.mrf.mxu0
    %1093 = vdwg.mxu0
    %v1094 = vsel %vm470, %v1086, 0.0
    %v1095 = vsel %vm470, %v1091, 0.0
    %v1096 = vadd.f32 %v1094, %v1095
    %v1097 = vrot.slane %v1096, 4
    %v1098 = vadd.f32 %v1096, %v1097
    %v1099 = vrot.slane %v1098, 2
    %v1100 = vadd.f32 %v1098, %v1099
    %v1101 = vrot.slane %v1100, 1
    %v1102 = vadd.f32 %v1100, %v1101
    %v1103 = vmul.f32 %v1102, 0.0625
    %v1104 = vmul.f32 %v1086, %v1086
    %v1105 = vmul.f32 %v1091, %v1091
    %v1106 = vsel %vm470, %v1104, 0.0
    %v1107 = vsel %vm470, %v1105, 0.0
    %v1108 = vadd.f32 %v1106, %v1107
    %v1109 = vrot.slane %v1108, 4
    %v1110 = vadd.f32 %v1108, %v1109
    %v1111 = vrot.slane %v1110, 2
    %v1112 = vadd.f32 %v1110, %v1111
    %v1113 = vrot.slane %v1112, 1
    %v1114 = vadd.f32 %v1112, %v1113
    %v1115 = vmul.f32 %v1114, 0.0625
    %v1116 = vmul.f32 %v1103, %v1103
    %v1117 = vsub.f32 %v1115, %v1116
    %v1118 = vmax.f32 %v1117, 0.0
    %v1119 = vsub.f32 %v1086, %v1103
    %v1120 = vsub.f32 %v1091, %v1103
    %v1121 = vadd.f32 %v1118, 1e-05
    %v1122 = vrsqrt.pop %v1121
    %v1123 = vmul.f32 %v1119, %v1122
    %v1124 = vmul.f32 %v1120, %v1122
    %vm1125 = vcmp.ge.f32.partialorder %v1123, 0.0
    %vm1126 = vcmp.ge.f32.partialorder %v1124, 0.0
    %v1127 = vlaneseq
    %v1128 = vshrl.u32 %v1127, 7
    %v1129 = vsub.s32 3, %v1128
    %v1130 = vrot.slane %v463, %v1129
    %v1131 = vmul.f32 %v1130, %v1123
    %v1132 = vmul.f32 %v1130, %v1124
    %v1133 = vsel %vm1125, %v1123, %v1131
    %v1134 = vsel %vm1126, %v1124, %v1132
    %1137 = vrot.lane.b32.xlu0 %v589, 96
    %v1138 = vpop.permute.xlu0 %1137
    %1139 = vrot.lane.b32.xlu0 %v590, 96
    %v1140 = vpop.permute.xlu0 %1139
    %v1144 = vsel %vm234, %v422, 0
    %v1147 = vsel %vm234, %v423, 0
    %1149 = vmatprep.subr.mxu0 0.0
    %1150 = vmatpush1.msra.mxu0 0.0
    %1151 = vmatprep.subr.mxu0 0.0
    %1152 = vmatpush1.msra.mxu0 0.0
    %1153 = vmatprep.subr.mxu0 0.0
    %1154 = vmatpush1.msra.mxu0 0.0
    %1155 = vmatprep.subr.mxu0 0.0
    %1156 = vmatpush1.msra.mxu0 0.0
    %1157 = vmatprep.subr.mxu0 0.0
    %1158 = vmatpush1.msra.mxu0 0.0
    %1159 = vmatprep.subr.mxu0 0.0
    %1160 = vmatpush1.msra.mxu0 0.0
    %1161 = vmatprep.subr.mxu0 0.0
    %1162 = vmatpush1.msra.mxu0 0.0
    %1163 = vmatprep.subr.mxu0 0.0
    %1164 = vmatpush1.msra.mxu0 0.0
    %1165 = vmatprep.subr.mxu0 0.0
    %1166 = vmatpush1.msra.mxu0 0.0
    %1167 = vmatprep.subr.mxu0 0.0
    %1168 = vmatpush1.msra.mxu0 0.0
    %1169 = vmatprep.subr.mxu0 0.0
    %1170 = vmatpush1.msra.mxu0 0.0
    %1171 = vmatprep.subr.mxu0 0.0
    %1172 = vmatpush1.msra.mxu0 0.0
    %1173 = vmatprep.subr.mxu0 0.0
    %1174 = vmatpush1.msra.mxu0 0.0
    %1175 = vmatprep.subr.mxu0 0.0
    %1176 = vmatpush1.msra.mxu0 0.0
    %1177 = vmatprep.subr.mxu0 0.0
    %1178 = vmatpush1.msra.mxu0 %v1140
    %1179 = vmatprep.subr.mxu0 0.0
    %1180 = vmatpush1.msra.mxu0 %v1138
    %1181 = vmatprep.subr.mxu0 0.0
    %1182 = vmatpush2.msra.mxu0 0.0
    %1183 = vmatprep.subr.mxu0 0.0
    %1184 = vmatpush2.msra.mxu0 0.0
    %1185 = vmatprep.subr.mxu0 0.0
    %1186 = vmatpush2.msra.mxu0 0.0
    %1187 = vmatprep.subr.mxu0 0.0
    %1188 = vmatpush2.msra.mxu0 0.0
    %1189 = vmatprep.subr.mxu0 0.0
    %1190 = vmatpush2.msra.mxu0 0.0
    %1191 = vmatprep.subr.mxu0 0.0
    %1192 = vmatpush2.msra.mxu0 0.0
    %1193 = vmatprep.subr.mxu0 0.0
    %1194 = vmatpush2.msra.mxu0 0.0
    %1195 = vmatprep.subr.mxu0 0.0
    %1196 = vmatpush2.msra.mxu0 0.0
    %1197 = vmatprep.subr.mxu0 0.0
    %1198 = vmatpush2.msra.mxu0 0.0
    %1199 = vmatprep.subr.mxu0 0.0
    %1200 = vmatpush2.msra.mxu0 0.0
    %1201 = vmatprep.subr.mxu0 0.0
    %1202 = vmatpush2.msra.mxu0 0.0
    %1203 = vmatprep.subr.mxu0 0.0
    %1204 = vmatpush2.msra.mxu0 0.0
    %1205 = vmatprep.subr.mxu0 0.0
    %1206 = vmatpush2.msra.mxu0 0.0
    %1207 = vmatprep.subr.mxu0 0.0
    %1208 = vmatpush2.msra.mxu0 0.0
    %1209 = vmatprep.subr.mxu0 0.0
    %1210 = vmatpush2.msra.mxu0 0.0
    %1211 = vmatprep.subr.mxu0 0.0
    %1212 = vmatpush2.msra.mxu0 0.0
    %1213 = vmatprep.mubr.f32.mxu0 0.0
    %1214 = vmatmul.mubr.f32.gmra.mxu0 %v1144
    %v1215 = vpop.f32.mrf.mxu0
    %v1216 = vadd.f32 0.0, %v1215
    %v1217 = vpop.f32.mrf.mxu0
    %1218 = vmatprep.mubr.f32.mxu0 0.0
    %1219 = vmatmul.mubr.f32.gmra.mxu0 %v1147
    %v1220 = vpop.f32.mrf.mxu0
    %v1221 = vadd.f32 0.0, %v1220
    %v1222 = vpop.f32.mrf.mxu0
    %1223 = vdwg.mxu0
    %v1224 = vlaneseq
    %v1225 = vshrl.u32 %v1224, 7
    %v1226 = vsub.s32 5, %v1225
    %v1227 = vrot.slane %v461, %v1226
    %v1229 = vsel %vm470, %v1216, 0
    %v1232 = vsel %vm470, %v1221, 0
    %1234 = vmatprep.subr.mxu0 0.0
    %1235 = vmatpush1.msra.mxu0 0.0
    %1236 = vmatprep.subr.mxu0 0.0
    %1237 = vmatpush1.msra.mxu0 0.0
    %1238 = vmatprep.subr.mxu0 0.0
    %1239 = vmatpush1.msra.mxu0 0.0
    %1240 = vmatprep.subr.mxu0 0.0
    %1241 = vmatpush1.msra.mxu0 0.0
    %1242 = vmatprep.subr.mxu0 0.0
    %1243 = vmatpush1.msra.mxu0 0.0
    %1244 = vmatprep.subr.mxu0 0.0
    %1245 = vmatpush1.msra.mxu0 0.0
    %1246 = vmatprep.subr.mxu0 0.0
    %1247 = vmatpush1.msra.mxu0 0.0
    %1248 = vmatprep.subr.mxu0 0.0
    %1249 = vmatpush1.msra.mxu0 0.0
    %1250 = vmatprep.subr.mxu0 0.0
    %1251 = vmatpush1.msra.mxu0 0.0
    %1252 = vmatprep.subr.mxu0 0.0
    %1253 = vmatpush1.msra.mxu0 0.0
    %1254 = vmatprep.subr.mxu0 0.0
    %1255 = vmatpush1.msra.mxu0 0.0
    %1256 = vmatprep.subr.mxu0 0.0
    %1257 = vmatpush1.msra.mxu0 0.0
    %1258 = vmatprep.subr.mxu0 0.0
    %1259 = vmatpush1.msra.mxu0 %v440
    %1260 = vmatprep.subr.mxu0 0.0
    %1261 = vmatpush1.msra.mxu0 %v439
    %1262 = vmatprep.subr.mxu0 0.0
    %1263 = vmatpush1.msra.mxu0 %v438
    %1264 = vmatprep.subr.mxu0 0.0
    %1265 = vmatpush1.msra.mxu0 %v437
    %1266 = vmatprep.subr.mxu0 0.0
    %1267 = vmatpush2.msra.mxu0 0.0
    %1268 = vmatprep.subr.mxu0 0.0
    %1269 = vmatpush2.msra.mxu0 0.0
    %1270 = vmatprep.subr.mxu0 0.0
    %1271 = vmatpush2.msra.mxu0 0.0
    %1272 = vmatprep.subr.mxu0 0.0
    %1273 = vmatpush2.msra.mxu0 0.0
    %1274 = vmatprep.subr.mxu0 0.0
    %1275 = vmatpush2.msra.mxu0 0.0
    %1276 = vmatprep.subr.mxu0 0.0
    %1277 = vmatpush2.msra.mxu0 0.0
    %1278 = vmatprep.subr.mxu0 0.0
    %1279 = vmatpush2.msra.mxu0 0.0
    %1280 = vmatprep.subr.mxu0 0.0
    %1281 = vmatpush2.msra.mxu0 0.0
    %1282 = vmatprep.subr.mxu0 0.0
    %1283 = vmatpush2.msra.mxu0 0.0
    %1284 = vmatprep.subr.mxu0 0.0
    %1285 = vmatpush2.msra.mxu0 0.0
    %1286 = vmatprep.subr.mxu0 0.0
    %1287 = vmatpush2.msra.mxu0 0.0
    %1288 = vmatprep.subr.mxu0 0.0
    %1289 = vmatpush2.msra.mxu0 0.0
    %1290 = vmatprep.subr.mxu0 0.0
    %1291 = vmatpush2.msra.mxu0 0.0
    %1292 = vmatprep.subr.mxu0 0.0
    %1293 = vmatpush2.msra.mxu0 0.0
    %1294 = vmatprep.subr.mxu0 0.0
    %1295 = vmatpush2.msra.mxu0 0.0
    %1296 = vmatprep.subr.mxu0 0.0
    %1297 = vmatpush2.msra.mxu0 0.0
    %1298 = vmatprep.mubr.f32.mxu0 0.0
    %1299 = vmatmul.mubr.f32.gmra.mxu0 %v1229
    %v1300 = vpop.f32.mrf.mxu0
    %v1301 = vadd.f32 %v1227, %v1300
    %v1302 = vpop.f32.mrf.mxu0
    %1303 = vmatprep.mubr.f32.mxu0 0.0
    %1304 = vmatmul.mubr.f32.gmra.mxu0 %v1232
    %v1305 = vpop.f32.mrf.mxu0
    %v1306 = vadd.f32 %v1227, %v1305
    %v1307 = vpop.f32.mrf.mxu0
    %1308 = vdwg.mxu0
    %v1309 = vsel %vm470, %v1301, 0.0
    %vm1310 = vcmask 254976
    %v1311 = vsel %vm1310, %v1306, 0.0
    %v1312 = vadd.f32 %v1309, %v1311
    %v1313 = vrot.slane %v1312, 4
    %v1314 = vadd.f32 %v1312, %v1313
    %v1315 = vrot.slane %v1314, 2
    %v1316 = vadd.f32 %v1314, %v1315
    %v1317 = vrot.slane %v1316, 1
    %v1318 = vadd.f32 %v1316, %v1317
    %v1319 = vmul.f32 %v1318, 0.1
    %v1320 = vmul.f32 %v1301, %v1301
    %v1321 = vmul.f32 %v1306, %v1306
    %v1322 = vsel %vm470, %v1320, 0.0
    %v1323 = vsel %vm1310, %v1321, 0.0
    %v1324 = vadd.f32 %v1322, %v1323
    %v1325 = vrot.slane %v1324, 4
    %v1326 = vadd.f32 %v1324, %v1325
    %v1327 = vrot.slane %v1326, 2
    %v1328 = vadd.f32 %v1326, %v1327
    %v1329 = vrot.slane %v1328, 1
    %v1330 = vadd.f32 %v1328, %v1329
    %v1331 = vmul.f32 %v1330, 0.1
    %v1332 = vmul.f32 %v1319, %v1319
    %v1333 = vsub.f32 %v1331, %v1332
    %v1334 = vmax.f32 %v1333, 0.0
    %v1335 = vsub.f32 %v1301, %v1319
    %v1336 = vsub.f32 %v1306, %v1319
    %v1337 = vadd.f32 %v1334, 1e-05
    %v1338 = vrsqrt.pop %v1337
    %v1339 = vmul.f32 %v1335, %v1338
    %v1340 = vmul.f32 %v1336, %v1338
    %vm1341 = vcmp.ge.f32.partialorder %v1339, 0.0
    %vm1342 = vcmp.ge.f32.partialorder %v1340, 0.0
    %v1343 = vlaneseq
    %v1344 = vshrl.u32 %v1343, 7
    %v1345 = vsub.s32 5, %v1344
    %v1346 = vrot.slane %v463, %v1345
    %v1347 = vmul.f32 %v1346, %v1339
    %v1348 = vmul.f32 %v1346, %v1340
    %v1349 = vsel %vm1341, %v1339, %v1347
    %v1350 = vsel %vm1342, %v1340, %v1348
    %v1351 = vlaneseq
    %v1352 = vshrl.u32 %v1351, 7
    %v1353 = vsub.s32 6, %v1352
    %v1354 = vrot.slane %v461, %v1353
    %v1356 = vsel %vm470, %v1349, 0
    %v1359 = vsel %vm470, %v1350, 0
    %1361 = vmatprep.subr.mxu0 0.0
    %1362 = vmatpush1.msra.mxu0 0.0
    %1363 = vmatprep.subr.mxu0 0.0
    %1364 = vmatpush1.msra.mxu0 0.0
    %1365 = vmatprep.subr.mxu0 0.0
    %1366 = vmatpush1.msra.mxu0 0.0
    %1367 = vmatprep.subr.mxu0 0.0
    %1368 = vmatpush1.msra.mxu0 0.0
    %1369 = vmatprep.subr.mxu0 0.0
    %1370 = vmatpush1.msra.mxu0 0.0
    %1371 = vmatprep.subr.mxu0 0.0
    %1372 = vmatpush1.msra.mxu0 0.0
    %1373 = vmatprep.subr.mxu0 0.0
    %1374 = vmatpush1.msra.mxu0 0.0
    %1375 = vmatprep.subr.mxu0 0.0
    %1376 = vmatpush1.msra.mxu0 0.0
    %1377 = vmatprep.subr.mxu0 0.0
    %1378 = vmatpush1.msra.mxu0 0.0
    %1379 = vmatprep.subr.mxu0 0.0
    %1380 = vmatpush1.msra.mxu0 0.0
    %1381 = vmatprep.subr.mxu0 0.0
    %1382 = vmatpush1.msra.mxu0 0.0
    %1383 = vmatprep.subr.mxu0 0.0
    %1384 = vmatpush1.msra.mxu0 0.0
    %1385 = vmatprep.subr.mxu0 0.0
    %1386 = vmatpush1.msra.mxu0 %v444
    %1387 = vmatprep.subr.mxu0 0.0
    %1388 = vmatpush1.msra.mxu0 %v443
    %1389 = vmatprep.subr.mxu0 0.0
    %1390 = vmatpush1.msra.mxu0 %v442
    %1391 = vmatprep.subr.mxu0 0.0
    %1392 = vmatpush1.msra.mxu0 %v441
    %1393 = vmatprep.subr.mxu0 0.0
    %1394 = vmatpush2.msra.mxu0 0.0
    %1395 = vmatprep.subr.mxu0 0.0
    %1396 = vmatpush2.msra.mxu0 0.0
    %1397 = vmatprep.subr.mxu0 0.0
    %1398 = vmatpush2.msra.mxu0 0.0
    %1399 = vmatprep.subr.mxu0 0.0
    %1400 = vmatpush2.msra.mxu0 0.0
    %1401 = vmatprep.subr.mxu0 0.0
    %1402 = vmatpush2.msra.mxu0 0.0
    %1403 = vmatprep.subr.mxu0 0.0
    %1404 = vmatpush2.msra.mxu0 0.0
    %1405 = vmatprep.subr.mxu0 0.0
    %1406 = vmatpush2.msra.mxu0 0.0
    %1407 = vmatprep.subr.mxu0 0.0
    %1408 = vmatpush2.msra.mxu0 0.0
    %1409 = vmatprep.subr.mxu0 0.0
    %1410 = vmatpush2.msra.mxu0 0.0
    %1411 = vmatprep.subr.mxu0 0.0
    %1412 = vmatpush2.msra.mxu0 0.0
    %1413 = vmatprep.subr.mxu0 0.0
    %1414 = vmatpush2.msra.mxu0 0.0
    %1415 = vmatprep.subr.mxu0 0.0
    %1416 = vmatpush2.msra.mxu0 0.0
    %1417 = vmatprep.subr.mxu0 0.0
    %1418 = vmatpush2.msra.mxu0 0.0
    %1419 = vmatprep.subr.mxu0 0.0
    %1420 = vmatpush2.msra.mxu0 0.0
    %1421 = vmatprep.subr.mxu0 0.0
    %1422 = vmatpush2.msra.mxu0 0.0
    %1423 = vmatprep.subr.mxu0 0.0
    %1424 = vmatpush2.msra.mxu0 0.0
    %1425 = vmatprep.mubr.f32.mxu0 0.0
    %1426 = vmatmul.mubr.f32.gmra.mxu0 %v1356
    %v1427 = vpop.f32.mrf.mxu0
    %v1428 = vadd.f32 %v1354, %v1427
    %v1429 = vpop.f32.mrf.mxu0
    %1430 = vmatprep.mubr.f32.mxu0 0.0
    %1431 = vmatmul.mubr.f32.gmra.mxu0 %v1359
    %v1432 = vpop.f32.mrf.mxu0
    %v1433 = vadd.f32 %v1354, %v1432
    %v1434 = vpop.f32.mrf.mxu0
    %1435 = vdwg.mxu0
    %v1436 = vsel %vm470, %v1428, 0.0
    %v1437 = vsel %vm1310, %v1433, 0.0
    %v1438 = vadd.f32 %v1436, %v1437
    %v1439 = vrot.slane %v1438, 4
    %v1440 = vadd.f32 %v1438, %v1439
    %v1441 = vrot.slane %v1440, 2
    %v1442 = vadd.f32 %v1440, %v1441
    %v1443 = vrot.slane %v1442, 1
    %v1444 = vadd.f32 %v1442, %v1443
    %v1445 = vmul.f32 %v1444, 0.1
    %v1446 = vmul.f32 %v1428, %v1428
    %v1447 = vmul.f32 %v1433, %v1433
    %v1448 = vsel %vm470, %v1446, 0.0
    %v1449 = vsel %vm1310, %v1447, 0.0
    %v1450 = vadd.f32 %v1448, %v1449
    %v1451 = vrot.slane %v1450, 4
    %v1452 = vadd.f32 %v1450, %v1451
    %v1453 = vrot.slane %v1452, 2
    %v1454 = vadd.f32 %v1452, %v1453
    %v1455 = vrot.slane %v1454, 1
    %v1456 = vadd.f32 %v1454, %v1455
    %v1457 = vmul.f32 %v1456, 0.1
    %v1458 = vmul.f32 %v1445, %v1445
    %v1459 = vsub.f32 %v1457, %v1458
    %v1460 = vmax.f32 %v1459, 0.0
    %v1461 = vsub.f32 %v1428, %v1445
    %v1462 = vsub.f32 %v1433, %v1445
    %v1463 = vadd.f32 %v1460, 1e-05
    %v1464 = vrsqrt.pop %v1463
    %v1465 = vmul.f32 %v1461, %v1464
    %v1466 = vmul.f32 %v1462, %v1464
    %vm1467 = vcmp.ge.f32.partialorder %v1465, 0.0
    %vm1468 = vcmp.ge.f32.partialorder %v1466, 0.0
    %v1469 = vlaneseq
    %v1470 = vshrl.u32 %v1469, 7
    %v1471 = vsub.s32 6, %v1470
    %v1472 = vrot.slane %v463, %v1471
    %v1473 = vmul.f32 %v1472, %v1465
    %v1474 = vmul.f32 %v1472, %v1466
    %v1475 = vsel %vm1467, %v1465, %v1473
    %v1476 = vsel %vm1468, %v1466, %v1474
    %vm1477 = vcmask 80896
    %v1479 = vsel %vm1477, %v416, 0
    %v1482 = vsel %vm1477, %v417, 0
    %vm1484 = vcmask 1041408
    %v1486 = vsel %vm1484, %v1476, 0
    %1488 = vmatprep.subr.mxu0 0.0
    %1489 = vmatpush1.msra.mxu0 0.0
    %1490 = vmatprep.subr.mxu0 0.0
    %1491 = vmatpush1.msra.mxu0 0.0
    %1492 = vmatprep.subr.mxu0 0.0
    %1493 = vmatpush1.msra.mxu0 0.0
    %1494 = vmatprep.subr.mxu0 0.0
    %1495 = vmatpush1.msra.mxu0 0.0
    %1496 = vmatprep.subr.mxu0 0.0
    %1497 = vmatpush1.msra.mxu0 0.0
    %1498 = vmatprep.subr.mxu0 0.0
    %1499 = vmatpush1.msra.mxu0 0.0
    %1500 = vmatprep.subr.mxu0 0.0
    %1501 = vmatpush1.msra.mxu0 0.0
    %1502 = vmatprep.subr.mxu0 0.0
    %1503 = vmatpush1.msra.mxu0 0.0
    %1504 = vmatprep.subr.mxu0 0.0
    %1505 = vmatpush1.msra.mxu0 0.0
    %1506 = vmatprep.subr.mxu0 0.0
    %1507 = vmatpush1.msra.mxu0 0.0
    %1508 = vmatprep.subr.mxu0 0.0
    %1509 = vmatpush1.msra.mxu0 0.0
    %1510 = vmatprep.subr.mxu0 0.0
    %1511 = vmatpush1.msra.mxu0 0.0
    %1512 = vmatprep.subr.mxu0 0.0
    %1513 = vmatpush1.msra.mxu0 0.0
    %1514 = vmatprep.subr.mxu0 0.0
    %1515 = vmatpush1.msra.mxu0 0.0
    %1516 = vmatprep.subr.mxu0 0.0
    %1517 = vmatpush1.msra.mxu0 %v1486
    %1518 = vmatprep.subr.mxu0 0.0
    %1519 = vmatpush1.msra.mxu0 %v1475
    %1520 = vmatprep.subr.mxu0 0.0
    %1521 = vmatpush2.msra.mxu0 0.0
    %1522 = vmatprep.subr.mxu0 0.0
    %1523 = vmatpush2.msra.mxu0 0.0
    %1524 = vmatprep.subr.mxu0 0.0
    %1525 = vmatpush2.msra.mxu0 0.0
    %1526 = vmatprep.subr.mxu0 0.0
    %1527 = vmatpush2.msra.mxu0 0.0
    %1528 = vmatprep.subr.mxu0 0.0
    %1529 = vmatpush2.msra.mxu0 0.0
    %1530 = vmatprep.subr.mxu0 0.0
    %1531 = vmatpush2.msra.mxu0 0.0
    %1532 = vmatprep.subr.mxu0 0.0
    %1533 = vmatpush2.msra.mxu0 0.0
    %1534 = vmatprep.subr.mxu0 0.0
    %1535 = vmatpush2.msra.mxu0 0.0
    %1536 = vmatprep.subr.mxu0 0.0
    %1537 = vmatpush2.msra.mxu0 0.0
    %1538 = vmatprep.subr.mxu0 0.0
    %1539 = vmatpush2.msra.mxu0 0.0
    %1540 = vmatprep.subr.mxu0 0.0
    %1541 = vmatpush2.msra.mxu0 0.0
    %1542 = vmatprep.subr.mxu0 0.0
    %1543 = vmatpush2.msra.mxu0 0.0
    %1544 = vmatprep.subr.mxu0 0.0
    %1545 = vmatpush2.msra.mxu0 0.0
    %1546 = vmatprep.subr.mxu0 0.0
    %1547 = vmatpush2.msra.mxu0 0.0
    %1548 = vmatprep.subr.mxu0 0.0
    %1549 = vmatpush2.msra.mxu0 0.0
    %1550 = vmatprep.subr.mxu0 0.0
    %1551 = vmatpush2.msra.mxu0 0.0
    %1552 = vmatprep.mubr.f32.mxu0 0.0
    %1553 = vmatmul.mubr.f32.gmra.mxu0 %v1479
    %v1554 = vpop.f32.mrf.mxu0
    %v1555 = vadd.f32 0.0, %v1554
    %v1556 = vpop.f32.mrf.mxu0
    %1557 = vmatprep.mubr.f32.mxu0 0.0
    %1558 = vmatmul.mubr.f32.gmra.mxu0 %v1482
    %v1559 = vpop.f32.mrf.mxu0
    %v1560 = vadd.f32 0.0, %v1559
    %v1561 = vpop.f32.mrf.mxu0
    %1562 = vdwg.mxu0
    %v1563 = vlaneseq
    %v1564 = vshrl.u32 %v1563, 7
    %v1565 = vsub.s32 7, %v1564
    %v1566 = vrot.slane %v461, %v1565
    %v1568 = vsel %vm470, %v1555, 0
    %v1571 = vsel %vm470, %v1560, 0
    %1573 = vmatprep.subr.mxu0 0.0
    %1574 = vmatpush1.msra.mxu0 0.0
    %1575 = vmatprep.subr.mxu0 0.0
    %1576 = vmatpush1.msra.mxu0 0.0
    %1577 = vmatprep.subr.mxu0 0.0
    %1578 = vmatpush1.msra.mxu0 0.0
    %1579 = vmatprep.subr.mxu0 0.0
    %1580 = vmatpush1.msra.mxu0 0.0
    %1581 = vmatprep.subr.mxu0 0.0
    %1582 = vmatpush1.msra.mxu0 0.0
    %1583 = vmatprep.subr.mxu0 0.0
    %1584 = vmatpush1.msra.mxu0 0.0
    %1585 = vmatprep.subr.mxu0 0.0
    %1586 = vmatpush1.msra.mxu0 0.0
    %1587 = vmatprep.subr.mxu0 0.0
    %1588 = vmatpush1.msra.mxu0 0.0
    %1589 = vmatprep.subr.mxu0 0.0
    %1590 = vmatpush1.msra.mxu0 0.0
    %1591 = vmatprep.subr.mxu0 0.0
    %1592 = vmatpush1.msra.mxu0 0.0
    %1593 = vmatprep.subr.mxu0 0.0
    %1594 = vmatpush1.msra.mxu0 0.0
    %1595 = vmatprep.subr.mxu0 0.0
    %1596 = vmatpush1.msra.mxu0 0.0
    %1597 = vmatprep.subr.mxu0 0.0
    %1598 = vmatpush1.msra.mxu0 %v448
    %1599 = vmatprep.subr.mxu0 0.0
    %1600 = vmatpush1.msra.mxu0 %v447
    %1601 = vmatprep.subr.mxu0 0.0
    %1602 = vmatpush1.msra.mxu0 %v446
    %1603 = vmatprep.subr.mxu0 0.0
    %1604 = vmatpush1.msra.mxu0 %v445
    %1605 = vmatprep.subr.mxu0 0.0
    %1606 = vmatpush2.msra.mxu0 0.0
    %1607 = vmatprep.subr.mxu0 0.0
    %1608 = vmatpush2.msra.mxu0 0.0
    %1609 = vmatprep.subr.mxu0 0.0
    %1610 = vmatpush2.msra.mxu0 0.0
    %1611 = vmatprep.subr.mxu0 0.0
    %1612 = vmatpush2.msra.mxu0 0.0
    %1613 = vmatprep.subr.mxu0 0.0
    %1614 = vmatpush2.msra.mxu0 0.0
    %1615 = vmatprep.subr.mxu0 0.0
    %1616 = vmatpush2.msra.mxu0 0.0
    %1617 = vmatprep.subr.mxu0 0.0
    %1618 = vmatpush2.msra.mxu0 0.0
    %1619 = vmatprep.subr.mxu0 0.0
    %1620 = vmatpush2.msra.mxu0 0.0
    %1621 = vmatprep.subr.mxu0 0.0
    %1622 = vmatpush2.msra.mxu0 0.0
    %1623 = vmatprep.subr.mxu0 0.0
    %1624 = vmatpush2.msra.mxu0 0.0
    %1625 = vmatprep.subr.mxu0 0.0
    %1626 = vmatpush2.msra.mxu0 0.0
    %1627 = vmatprep.subr.mxu0 0.0
    %1628 = vmatpush2.msra.mxu0 0.0
    %1629 = vmatprep.subr.mxu0 0.0
    %1630 = vmatpush2.msra.mxu0 0.0
    %1631 = vmatprep.subr.mxu0 0.0
    %1632 = vmatpush2.msra.mxu0 0.0
    %1633 = vmatprep.subr.mxu0 0.0
    %1634 = vmatpush2.msra.mxu0 0.0
    %1635 = vmatprep.subr.mxu0 0.0
    %1636 = vmatpush2.msra.mxu0 0.0
    %1637 = vmatprep.mubr.f32.mxu0 0.0
    %1638 = vmatmul.mubr.f32.gmra.mxu0 %v1568
    %v1639 = vpop.f32.mrf.mxu0
    %v1640 = vadd.f32 %v1566, %v1639
    %v1641 = vpop.f32.mrf.mxu0
    %1642 = vmatprep.mubr.f32.mxu0 0.0
    %1643 = vmatmul.mubr.f32.gmra.mxu0 %v1571
    %v1644 = vpop.f32.mrf.mxu0
    %v1645 = vadd.f32 %v1566, %v1644
    %v1646 = vpop.f32.mrf.mxu0
    %1647 = vdwg.mxu0
    %v1648 = vsel %vm470, %v1640, 0.0
    %v1649 = vsel %vm470, %v1645, 0.0
    %v1650 = vadd.f32 %v1648, %v1649
    %v1651 = vrot.slane %v1650, 4
    %v1652 = vadd.f32 %v1650, %v1651
    %v1653 = vrot.slane %v1652, 2
    %v1654 = vadd.f32 %v1652, %v1653
    %v1655 = vrot.slane %v1654, 1
    %v1656 = vadd.f32 %v1654, %v1655
    %v1657 = vmul.f32 %v1656, 0.0625
    %v1658 = vmul.f32 %v1640, %v1640
    %v1659 = vmul.f32 %v1645, %v1645
    %v1660 = vsel %vm470, %v1658, 0.0
    %v1661 = vsel %vm470, %v1659, 0.0
    %v1662 = vadd.f32 %v1660, %v1661
    %v1663 = vrot.slane %v1662, 4
    %v1664 = vadd.f32 %v1662, %v1663
    %v1665 = vrot.slane %v1664, 2
    %v1666 = vadd.f32 %v1664, %v1665
    %v1667 = vrot.slane %v1666, 1
    %v1668 = vadd.f32 %v1666, %v1667
    %v1669 = vmul.f32 %v1668, 0.0625
    %v1670 = vmul.f32 %v1657, %v1657
    %v1671 = vsub.f32 %v1669, %v1670
    %v1672 = vmax.f32 %v1671, 0.0
    %v1673 = vsub.f32 %v1640, %v1657
    %v1674 = vsub.f32 %v1645, %v1657
    %v1675 = vadd.f32 %v1672, 1e-05
    %v1676 = vrsqrt.pop %v1675
    %v1677 = vmul.f32 %v1673, %v1676
    %v1678 = vmul.f32 %v1674, %v1676
    %vm1679 = vcmp.ge.f32.partialorder %v1677, 0.0
    %vm1680 = vcmp.ge.f32.partialorder %v1678, 0.0
    %v1681 = vlaneseq
    %v1682 = vshrl.u32 %v1681, 7
    %v1683 = vsub.s32 7, %v1682
    %v1684 = vrot.slane %v463, %v1683
    %v1685 = vmul.f32 %v1684, %v1677
    %v1686 = vmul.f32 %v1684, %v1678
    %v1687 = vsel %vm1679, %v1677, %v1685
    %v1688 = vsel %vm1680, %v1678, %v1686
    %1689 = vrot.lane.b32.xlu0 %v589, 64
    %v1690 = vpop.permute.xlu0 %1689
    %1691 = vrot.lane.b32.xlu0 %v590, 64
    %v1692 = vpop.permute.xlu0 %1691
    %v1696 = vsel %vm234, %v424, 0
    %1698 = vmatprep.subr.mxu0 0.0
    %1699 = vmatpush1.msra.mxu0 0.0
    %1700 = vmatprep.subr.mxu0 0.0
    %1701 = vmatpush1.msra.mxu0 0.0
    %1702 = vmatprep.subr.mxu0 0.0
    %1703 = vmatpush1.msra.mxu0 0.0
    %1704 = vmatprep.subr.mxu0 0.0
    %1705 = vmatpush1.msra.mxu0 0.0
    %1706 = vmatprep.subr.mxu0 0.0
    %1707 = vmatpush1.msra.mxu0 0.0
    %1708 = vmatprep.subr.mxu0 0.0
    %1709 = vmatpush1.msra.mxu0 0.0
    %1710 = vmatprep.subr.mxu0 0.0
    %1711 = vmatpush1.msra.mxu0 0.0
    %1712 = vmatprep.subr.mxu0 0.0
    %1713 = vmatpush1.msra.mxu0 0.0
    %1714 = vmatprep.subr.mxu0 0.0
    %1715 = vmatpush1.msra.mxu0 0.0
    %1716 = vmatprep.subr.mxu0 0.0
    %1717 = vmatpush1.msra.mxu0 0.0
    %1718 = vmatprep.subr.mxu0 0.0
    %1719 = vmatpush1.msra.mxu0 0.0
    %1720 = vmatprep.subr.mxu0 0.0
    %1721 = vmatpush1.msra.mxu0 0.0
    %1722 = vmatprep.subr.mxu0 0.0
    %1723 = vmatpush1.msra.mxu0 0.0
    %1724 = vmatprep.subr.mxu0 0.0
    %1725 = vmatpush1.msra.mxu0 0.0
    %1726 = vmatprep.subr.mxu0 0.0
    %1727 = vmatpush1.msra.mxu0 %v1692
    %1728 = vmatprep.subr.mxu0 0.0
    %1729 = vmatpush1.msra.mxu0 %v1690
    %1730 = vmatprep.subr.mxu0 0.0
    %1731 = vmatpush2.msra.mxu0 0.0
    %1732 = vmatprep.subr.mxu0 0.0
    %1733 = vmatpush2.msra.mxu0 0.0
    %1734 = vmatprep.subr.mxu0 0.0
    %1735 = vmatpush2.msra.mxu0 0.0
    %1736 = vmatprep.subr.mxu0 0.0
    %1737 = vmatpush2.msra.mxu0 0.0
    %1738 = vmatprep.subr.mxu0 0.0
    %1739 = vmatpush2.msra.mxu0 0.0
    %1740 = vmatprep.subr.mxu0 0.0
    %1741 = vmatpush2.msra.mxu0 0.0
    %1742 = vmatprep.subr.mxu0 0.0
    %1743 = vmatpush2.msra.mxu0 0.0
    %1744 = vmatprep.subr.mxu0 0.0
    %1745 = vmatpush2.msra.mxu0 0.0
    %1746 = vmatprep.subr.mxu0 0.0
    %1747 = vmatpush2.msra.mxu0 0.0
    %1748 = vmatprep.subr.mxu0 0.0
    %1749 = vmatpush2.msra.mxu0 0.0
    %1750 = vmatprep.subr.mxu0 0.0
    %1751 = vmatpush2.msra.mxu0 0.0
    %1752 = vmatprep.subr.mxu0 0.0
    %1753 = vmatpush2.msra.mxu0 0.0
    %1754 = vmatprep.subr.mxu0 0.0
    %1755 = vmatpush2.msra.mxu0 0.0
    %1756 = vmatprep.subr.mxu0 0.0
    %1757 = vmatpush2.msra.mxu0 0.0
    %1758 = vmatprep.subr.mxu0 0.0
    %1759 = vmatpush2.msra.mxu0 0.0
    %1760 = vmatprep.subr.mxu0 0.0
    %1761 = vmatpush2.msra.mxu0 0.0
    %1762 = vmatprep.mubr.f32.mxu0 0.0
    %1763 = vmatmul.mubr.f32.gmra.mxu0 %v1696
    %v1764 = vpop.f32.mrf.mxu0
    %v1765 = vadd.f32 0.0, %v1764
    %v1766 = vpop.f32.mrf.mxu0
    %1767 = vdwg.mxu0
    %v1768 = vlaneseq
    %v1769 = vshrl.u32 %v1768, 7
    %v1770 = vsub.s32 1, %v1769
    %v1771 = vrot.slane %v462, %v1770
    %v1773 = vsel %vm470, %v1765, 0
    %1775 = vmatprep.subr.mxu0 0.0
    %1776 = vmatpush1.msra.mxu0 0.0
    %1777 = vmatprep.subr.mxu0 0.0
    %1778 = vmatpush1.msra.mxu0 0.0
    %1779 = vmatprep.subr.mxu0 0.0
    %1780 = vmatpush1.msra.mxu0 0.0
    %1781 = vmatprep.subr.mxu0 0.0
    %1782 = vmatpush1.msra.mxu0 0.0
    %1783 = vmatprep.subr.mxu0 0.0
    %1784 = vmatpush1.msra.mxu0 0.0
    %1785 = vmatprep.subr.mxu0 0.0
    %1786 = vmatpush1.msra.mxu0 0.0
    %1787 = vmatprep.subr.mxu0 0.0
    %1788 = vmatpush1.msra.mxu0 0.0
    %1789 = vmatprep.subr.mxu0 0.0
    %1790 = vmatpush1.msra.mxu0 0.0
    %1791 = vmatprep.subr.mxu0 0.0
    %1792 = vmatpush1.msra.mxu0 0.0
    %1793 = vmatprep.subr.mxu0 0.0
    %1794 = vmatpush1.msra.mxu0 0.0
    %1795 = vmatprep.subr.mxu0 0.0
    %1796 = vmatpush1.msra.mxu0 0.0
    %1797 = vmatprep.subr.mxu0 0.0
    %1798 = vmatpush1.msra.mxu0 0.0
    %1799 = vmatprep.subr.mxu0 0.0
    %1800 = vmatpush1.msra.mxu0 %v452
    %1801 = vmatprep.subr.mxu0 0.0
    %1802 = vmatpush1.msra.mxu0 %v451
    %1803 = vmatprep.subr.mxu0 0.0
    %1804 = vmatpush1.msra.mxu0 %v450
    %1805 = vmatprep.subr.mxu0 0.0
    %1806 = vmatpush1.msra.mxu0 %v449
    %1807 = vmatprep.subr.mxu0 0.0
    %1808 = vmatpush2.msra.mxu0 0.0
    %1809 = vmatprep.subr.mxu0 0.0
    %1810 = vmatpush2.msra.mxu0 0.0
    %1811 = vmatprep.subr.mxu0 0.0
    %1812 = vmatpush2.msra.mxu0 0.0
    %1813 = vmatprep.subr.mxu0 0.0
    %1814 = vmatpush2.msra.mxu0 0.0
    %1815 = vmatprep.subr.mxu0 0.0
    %1816 = vmatpush2.msra.mxu0 0.0
    %1817 = vmatprep.subr.mxu0 0.0
    %1818 = vmatpush2.msra.mxu0 0.0
    %1819 = vmatprep.subr.mxu0 0.0
    %1820 = vmatpush2.msra.mxu0 0.0
    %1821 = vmatprep.subr.mxu0 0.0
    %1822 = vmatpush2.msra.mxu0 0.0
    %1823 = vmatprep.subr.mxu0 0.0
    %1824 = vmatpush2.msra.mxu0 0.0
    %1825 = vmatprep.subr.mxu0 0.0
    %1826 = vmatpush2.msra.mxu0 0.0
    %1827 = vmatprep.subr.mxu0 0.0
    %1828 = vmatpush2.msra.mxu0 0.0
    %1829 = vmatprep.subr.mxu0 0.0
    %1830 = vmatpush2.msra.mxu0 0.0
    %1831 = vmatprep.subr.mxu0 0.0
    %1832 = vmatpush2.msra.mxu0 0.0
    %1833 = vmatprep.subr.mxu0 0.0
    %1834 = vmatpush2.msra.mxu0 0.0
    %1835 = vmatprep.subr.mxu0 0.0
    %1836 = vmatpush2.msra.mxu0 0.0
    %1837 = vmatprep.subr.mxu0 0.0
    %1838 = vmatpush2.msra.mxu0 0.0
    %1839 = vmatprep.mubr.f32.mxu0 0.0
    %1840 = vmatmul.mubr.f32.gmra.mxu0 %v1773
    %v1841 = vpop.f32.mrf.mxu0
    %v1842 = vadd.f32 %v1771, %v1841
    %v1843 = vpop.f32.mrf.mxu0
    %1844 = vdwg.mxu0
    %vm1845 = vcmask 259072
    %v1846 = vsel %vm1845, %v1842, 0.0
    %v1847 = vrot.slane %v1846, 4
    %v1848 = vadd.f32 %v1846, %v1847
    %v1849 = vrot.slane %v1848, 2
    %v1850 = vadd.f32 %v1848, %v1849
    %v1851 = vrot.slane %v1850, 1
    %v1852 = vadd.f32 %v1850, %v1851
    %v1853 = vmul.f32 %v1852, 0.16666667
    %v1854 = vmul.f32 %v1842, %v1842
    %v1855 = vsel %vm1845, %v1854, 0.0
    %v1856 = vrot.slane %v1855, 4
    %v1857 = vadd.f32 %v1855, %v1856
    %v1858 = vrot.slane %v1857, 2
    %v1859 = vadd.f32 %v1857, %v1858
    %v1860 = vrot.slane %v1859, 1
    %v1861 = vadd.f32 %v1859, %v1860
    %v1862 = vmul.f32 %v1861, 0.16666667
    %v1863 = vmul.f32 %v1853, %v1853
    %v1864 = vsub.f32 %v1862, %v1863
    %v1865 = vmax.f32 %v1864, 0.0
    %v1866 = vsub.f32 %v1842, %v1853
    %v1867 = vadd.f32 %v1865, 1e-05
    %v1868 = vrsqrt.pop %v1867
    %v1869 = vmul.f32 %v1866, %v1868
    %vm1870 = vcmp.ge.f32.partialorder %v1869, 0.0
    %v1871 = vlaneseq
    %v1872 = vshrl.u32 %v1871, 7
    %v1873 = vsub.s32 1, %v1872
    %v1874 = vrot.slane %v464, %v1873
    %v1875 = vmul.f32 %v1874, %v1869
    %v1876 = vsel %vm1870, %v1869, %v1875
    %v1877 = vlaneseq
    %v1878 = vshrl.u32 %v1877, 7
    %v1879 = vsub.s32 2, %v1878
    %v1880 = vrot.slane %v462, %v1879
    %v1882 = vsel %vm470, %v1876, 0
    %1884 = vmatprep.subr.mxu0 0.0
    %1885 = vmatpush1.msra.mxu0 0.0
    %1886 = vmatprep.subr.mxu0 0.0
    %1887 = vmatpush1.msra.mxu0 0.0
    %1888 = vmatprep.subr.mxu0 0.0
    %1889 = vmatpush1.msra.mxu0 0.0
    %1890 = vmatprep.subr.mxu0 0.0
    %1891 = vmatpush1.msra.mxu0 0.0
    %1892 = vmatprep.subr.mxu0 0.0
    %1893 = vmatpush1.msra.mxu0 0.0
    %1894 = vmatprep.subr.mxu0 0.0
    %1895 = vmatpush1.msra.mxu0 0.0
    %1896 = vmatprep.subr.mxu0 0.0
    %1897 = vmatpush1.msra.mxu0 0.0
    %1898 = vmatprep.subr.mxu0 0.0
    %1899 = vmatpush1.msra.mxu0 0.0
    %1900 = vmatprep.subr.mxu0 0.0
    %1901 = vmatpush1.msra.mxu0 0.0
    %1902 = vmatprep.subr.mxu0 0.0
    %1903 = vmatpush1.msra.mxu0 0.0
    %1904 = vmatprep.subr.mxu0 0.0
    %1905 = vmatpush1.msra.mxu0 0.0
    %1906 = vmatprep.subr.mxu0 0.0
    %1907 = vmatpush1.msra.mxu0 0.0
    %1908 = vmatprep.subr.mxu0 0.0
    %1909 = vmatpush1.msra.mxu0 %v456
    %1910 = vmatprep.subr.mxu0 0.0
    %1911 = vmatpush1.msra.mxu0 %v455
    %1912 = vmatprep.subr.mxu0 0.0
    %1913 = vmatpush1.msra.mxu0 %v454
    %1914 = vmatprep.subr.mxu0 0.0
    %1915 = vmatpush1.msra.mxu0 %v453
    %1916 = vmatprep.subr.mxu0 0.0
    %1917 = vmatpush2.msra.mxu0 0.0
    %1918 = vmatprep.subr.mxu0 0.0
    %1919 = vmatpush2.msra.mxu0 0.0
    %1920 = vmatprep.subr.mxu0 0.0
    %1921 = vmatpush2.msra.mxu0 0.0
    %1922 = vmatprep.subr.mxu0 0.0
    %1923 = vmatpush2.msra.mxu0 0.0
    %1924 = vmatprep.subr.mxu0 0.0
    %1925 = vmatpush2.msra.mxu0 0.0
    %1926 = vmatprep.subr.mxu0 0.0
    %1927 = vmatpush2.msra.mxu0 0.0
    %1928 = vmatprep.subr.mxu0 0.0
    %1929 = vmatpush2.msra.mxu0 0.0
    %1930 = vmatprep.subr.mxu0 0.0
    %1931 = vmatpush2.msra.mxu0 0.0
    %1932 = vmatprep.subr.mxu0 0.0
    %1933 = vmatpush2.msra.mxu0 0.0
    %1934 = vmatprep.subr.mxu0 0.0
    %1935 = vmatpush2.msra.mxu0 0.0
    %1936 = vmatprep.subr.mxu0 0.0
    %1937 = vmatpush2.msra.mxu0 0.0
    %1938 = vmatprep.subr.mxu0 0.0
    %1939 = vmatpush2.msra.mxu0 0.0
    %1940 = vmatprep.subr.mxu0 0.0
    %1941 = vmatpush2.msra.mxu0 0.0
    %1942 = vmatprep.subr.mxu0 0.0
    %1943 = vmatpush2.msra.mxu0 0.0
    %1944 = vmatprep.subr.mxu0 0.0
    %1945 = vmatpush2.msra.mxu0 0.0
    %1946 = vmatprep.subr.mxu0 0.0
    %1947 = vmatpush2.msra.mxu0 0.0
    %1948 = vmatprep.mubr.f32.mxu0 0.0
    %1949 = vmatmul.mubr.f32.gmra.mxu0 %v1882
    %v1950 = vpop.f32.mrf.mxu0
    %v1951 = vadd.f32 %v1880, %v1950
    %v1952 = vpop.f32.mrf.mxu0
    %1953 = vdwg.mxu0
    %v1954 = vsel %vm1845, %v1951, 0.0
    %v1955 = vrot.slane %v1954, 4
    %v1956 = vadd.f32 %v1954, %v1955
    %v1957 = vrot.slane %v1956, 2
    %v1958 = vadd.f32 %v1956, %v1957
    %v1959 = vrot.slane %v1958, 1
    %v1960 = vadd.f32 %v1958, %v1959
    %v1961 = vmul.f32 %v1960, 0.16666667
    %v1962 = vmul.f32 %v1951, %v1951
    %v1963 = vsel %vm1845, %v1962, 0.0
    %v1964 = vrot.slane %v1963, 4
    %v1965 = vadd.f32 %v1963, %v1964
    %v1966 = vrot.slane %v1965, 2
    %v1967 = vadd.f32 %v1965, %v1966
    %v1968 = vrot.slane %v1967, 1
    %v1969 = vadd.f32 %v1967, %v1968
    %v1970 = vmul.f32 %v1969, 0.16666667
    %v1971 = vmul.f32 %v1961, %v1961
    %v1972 = vsub.f32 %v1970, %v1971
    %v1973 = vmax.f32 %v1972, 0.0
    %v1974 = vsub.f32 %v1951, %v1961
    %v1975 = vadd.f32 %v1973, 1e-05
    %v1976 = vrsqrt.pop %v1975
    %v1977 = vmul.f32 %v1974, %v1976
    %vm1978 = vcmp.ge.f32.partialorder %v1977, 0.0
    %v1979 = vlaneseq
    %v1980 = vshrl.u32 %v1979, 7
    %v1981 = vsub.s32 2, %v1980
    %v1982 = vrot.slane %v464, %v1981
    %v1983 = vmul.f32 %v1982, %v1977
    %v1984 = vsel %vm1978, %v1977, %v1983
    %vm1985 = vcmask 48128
    %v1987 = vsel %vm1985, %v418, 0
    %v1990 = vsel %vm1985, %v419, 0
    %vm1992 = vcmask 1045504
    %v1994 = vsel %vm1992, %v1984, 0
    %1996 = vmatprep.subr.mxu0 0.0
    %1997 = vmatpush1.msra.mxu0 0.0
    %1998 = vmatprep.subr.mxu0 0.0
    %1999 = vmatpush1.msra.mxu0 0.0
    %2000 = vmatprep.subr.mxu0 0.0
    %2001 = vmatpush1.msra.mxu0 0.0
    %2002 = vmatprep.subr.mxu0 0.0
    %2003 = vmatpush1.msra.mxu0 0.0
    %2004 = vmatprep.subr.mxu0 0.0
    %2005 = vmatpush1.msra.mxu0 0.0
    %2006 = vmatprep.subr.mxu0 0.0
    %2007 = vmatpush1.msra.mxu0 0.0
    %2008 = vmatprep.subr.mxu0 0.0
    %2009 = vmatpush1.msra.mxu0 0.0
    %2010 = vmatprep.subr.mxu0 0.0
    %2011 = vmatpush1.msra.mxu0 0.0
    %2012 = vmatprep.subr.mxu0 0.0
    %2013 = vmatpush1.msra.mxu0 0.0
    %2014 = vmatprep.subr.mxu0 0.0
    %2015 = vmatpush1.msra.mxu0 0.0
    %2016 = vmatprep.subr.mxu0 0.0
    %2017 = vmatpush1.msra.mxu0 0.0
    %2018 = vmatprep.subr.mxu0 0.0
    %2019 = vmatpush1.msra.mxu0 0.0
    %2020 = vmatprep.subr.mxu0 0.0
    %2021 = vmatpush1.msra.mxu0 0.0
    %2022 = vmatprep.subr.mxu0 0.0
    %2023 = vmatpush1.msra.mxu0 0.0
    %2024 = vmatprep.subr.mxu0 0.0
    %2025 = vmatpush1.msra.mxu0 0.0
    %2026 = vmatprep.subr.mxu0 0.0
    %2027 = vmatpush1.msra.mxu0 %v1994
    %2028 = vmatprep.subr.mxu0 0.0
    %2029 = vmatpush2.msra.mxu0 0.0
    %2030 = vmatprep.subr.mxu0 0.0
    %2031 = vmatpush2.msra.mxu0 0.0
    %2032 = vmatprep.subr.mxu0 0.0
    %2033 = vmatpush2.msra.mxu0 0.0
    %2034 = vmatprep.subr.mxu0 0.0
    %2035 = vmatpush2.msra.mxu0 0.0
    %2036 = vmatprep.subr.mxu0 0.0
    %2037 = vmatpush2.msra.mxu0 0.0
    %2038 = vmatprep.subr.mxu0 0.0
    %2039 = vmatpush2.msra.mxu0 0.0
    %2040 = vmatprep.subr.mxu0 0.0
    %2041 = vmatpush2.msra.mxu0 0.0
    %2042 = vmatprep.subr.mxu0 0.0
    %2043 = vmatpush2.msra.mxu0 0.0
    %2044 = vmatprep.subr.mxu0 0.0
    %2045 = vmatpush2.msra.mxu0 0.0
    %2046 = vmatprep.subr.mxu0 0.0
    %2047 = vmatpush2.msra.mxu0 0.0
    %2048 = vmatprep.subr.mxu0 0.0
    %2049 = vmatpush2.msra.mxu0 0.0
    %2050 = vmatprep.subr.mxu0 0.0
    %2051 = vmatpush2.msra.mxu0 0.0
    %2052 = vmatprep.subr.mxu0 0.0
    %2053 = vmatpush2.msra.mxu0 0.0
    %2054 = vmatprep.subr.mxu0 0.0
    %2055 = vmatpush2.msra.mxu0 0.0
    %2056 = vmatprep.subr.mxu0 0.0
    %2057 = vmatpush2.msra.mxu0 0.0
    %2058 = vmatprep.subr.mxu0 0.0
    %2059 = vmatpush2.msra.mxu0 0.0
    %2060 = vmatprep.mubr.f32.mxu0 0.0
    %2061 = vmatmul.mubr.f32.gmra.mxu0 %v1987
    %v2062 = vpop.f32.mrf.mxu0
    %v2063 = vadd.f32 0.0, %v2062
    %v2064 = vpop.f32.mrf.mxu0
    %2065 = vmatprep.mubr.f32.mxu0 0.0
    %2066 = vmatmul.mubr.f32.gmra.mxu0 %v1990
    %v2067 = vpop.f32.mrf.mxu0
    %v2068 = vadd.f32 0.0, %v2067
    %v2069 = vpop.f32.mrf.mxu0
    %2070 = vdwg.mxu0
    %v2071 = vlaneseq
    %v2072 = vshrl.u32 %v2071, 7
    %v2073 = vsub.s32 3, %v2072
    %v2074 = vrot.slane %v462, %v2073
    %v2076 = vsel %vm470, %v2063, 0
    %v2079 = vsel %vm470, %v2068, 0
    %2081 = vmatprep.subr.mxu0 0.0
    %2082 = vmatpush1.msra.mxu0 0.0
    %2083 = vmatprep.subr.mxu0 0.0
    %2084 = vmatpush1.msra.mxu0 0.0
    %2085 = vmatprep.subr.mxu0 0.0
    %2086 = vmatpush1.msra.mxu0 0.0
    %2087 = vmatprep.subr.mxu0 0.0
    %2088 = vmatpush1.msra.mxu0 0.0
    %2089 = vmatprep.subr.mxu0 0.0
    %2090 = vmatpush1.msra.mxu0 0.0
    %2091 = vmatprep.subr.mxu0 0.0
    %2092 = vmatpush1.msra.mxu0 0.0
    %2093 = vmatprep.subr.mxu0 0.0
    %2094 = vmatpush1.msra.mxu0 0.0
    %2095 = vmatprep.subr.mxu0 0.0
    %2096 = vmatpush1.msra.mxu0 0.0
    %2097 = vmatprep.subr.mxu0 0.0
    %2098 = vmatpush1.msra.mxu0 0.0
    %2099 = vmatprep.subr.mxu0 0.0
    %2100 = vmatpush1.msra.mxu0 0.0
    %2101 = vmatprep.subr.mxu0 0.0
    %2102 = vmatpush1.msra.mxu0 0.0
    %2103 = vmatprep.subr.mxu0 0.0
    %2104 = vmatpush1.msra.mxu0 0.0
    %2105 = vmatprep.subr.mxu0 0.0
    %2106 = vmatpush1.msra.mxu0 %v460
    %2107 = vmatprep.subr.mxu0 0.0
    %2108 = vmatpush1.msra.mxu0 %v459
    %2109 = vmatprep.subr.mxu0 0.0
    %2110 = vmatpush1.msra.mxu0 %v458
    %2111 = vmatprep.subr.mxu0 0.0
    %2112 = vmatpush1.msra.mxu0 %v457
    %2113 = vmatprep.subr.mxu0 0.0
    %2114 = vmatpush2.msra.mxu0 0.0
    %2115 = vmatprep.subr.mxu0 0.0
    %2116 = vmatpush2.msra.mxu0 0.0
    %2117 = vmatprep.subr.mxu0 0.0
    %2118 = vmatpush2.msra.mxu0 0.0
    %2119 = vmatprep.subr.mxu0 0.0
    %2120 = vmatpush2.msra.mxu0 0.0
    %2121 = vmatprep.subr.mxu0 0.0
    %2122 = vmatpush2.msra.mxu0 0.0
    %2123 = vmatprep.subr.mxu0 0.0
    %2124 = vmatpush2.msra.mxu0 0.0
    %2125 = vmatprep.subr.mxu0 0.0
    %2126 = vmatpush2.msra.mxu0 0.0
    %2127 = vmatprep.subr.mxu0 0.0
    %2128 = vmatpush2.msra.mxu0 0.0
    %2129 = vmatprep.subr.mxu0 0.0
    %2130 = vmatpush2.msra.mxu0 0.0
    %2131 = vmatprep.subr.mxu0 0.0
    %2132 = vmatpush2.msra.mxu0 0.0
    %2133 = vmatprep.subr.mxu0 0.0
    %2134 = vmatpush2.msra.mxu0 0.0
    %2135 = vmatprep.subr.mxu0 0.0
    %2136 = vmatpush2.msra.mxu0 0.0
    %2137 = vmatprep.subr.mxu0 0.0
    %2138 = vmatpush2.msra.mxu0 0.0
    %2139 = vmatprep.subr.mxu0 0.0
    %2140 = vmatpush2.msra.mxu0 0.0
    %2141 = vmatprep.subr.mxu0 0.0
    %2142 = vmatpush2.msra.mxu0 0.0
    %2143 = vmatprep.subr.mxu0 0.0
    %2144 = vmatpush2.msra.mxu0 0.0
    %2145 = vmatprep.mubr.f32.mxu0 0.0
    %2146 = vmatmul.mubr.f32.gmra.mxu0 %v2076
    %v2147 = vpop.f32.mrf.mxu0
    %v2148 = vadd.f32 %v2074, %v2147
    %v2149 = vpop.f32.mrf.mxu0
    %2150 = vmatprep.mubr.f32.mxu0 0.0
    %2151 = vmatmul.mubr.f32.gmra.mxu0 %v2079
    %v2152 = vpop.f32.mrf.mxu0
    %v2153 = vadd.f32 %v2074, %v2152
    %v2154 = vpop.f32.mrf.mxu0
    %2155 = vdwg.mxu0
    %v2156 = vsel %vm470, %v2148, 0.0
    %v2157 = vsel %vm470, %v2153, 0.0
    %v2158 = vadd.f32 %v2156, %v2157
    %v2159 = vrot.slane %v2158, 4
    %v2160 = vadd.f32 %v2158, %v2159
    %v2161 = vrot.slane %v2160, 2
    %v2162 = vadd.f32 %v2160, %v2161
    %v2163 = vrot.slane %v2162, 1
    %v2164 = vadd.f32 %v2162, %v2163
    %v2165 = vmul.f32 %v2164, 0.0625
    %v2166 = vmul.f32 %v2148, %v2148
    %v2167 = vmul.f32 %v2153, %v2153
    %v2168 = vsel %vm470, %v2166, 0.0
    %v2169 = vsel %vm470, %v2167, 0.0
    %v2170 = vadd.f32 %v2168, %v2169
    %v2171 = vrot.slane %v2170, 4
    %v2172 = vadd.f32 %v2170, %v2171
    %v2173 = vrot.slane %v2172, 2
    %v2174 = vadd.f32 %v2172, %v2173
    %v2175 = vrot.slane %v2174, 1
    %v2176 = vadd.f32 %v2174, %v2175
    %v2177 = vmul.f32 %v2176, 0.0625
    %v2178 = vmul.f32 %v2165, %v2165
    %v2179 = vsub.f32 %v2177, %v2178
    %v2180 = vmax.f32 %v2179, 0.0
    %v2181 = vsub.f32 %v2148, %v2165
    %v2182 = vsub.f32 %v2153, %v2165
    %v2183 = vadd.f32 %v2180, 1e-05
    %v2184 = vrsqrt.pop %v2183
    %v2185 = vmul.f32 %v2181, %v2184
    %v2186 = vmul.f32 %v2182, %v2184
    %vm2187 = vcmp.ge.f32.partialorder %v2185, 0.0
    %vm2188 = vcmp.ge.f32.partialorder %v2186, 0.0
    %v2189 = vlaneseq
    %v2190 = vshrl.u32 %v2189, 7
    %v2191 = vsub.s32 3, %v2190
    %v2192 = vrot.slane %v464, %v2191
    %v2193 = vmul.f32 %v2192, %v2185
    %v2194 = vmul.f32 %v2192, %v2186
    %v2195 = vsel %vm2187, %v2185, %v2193
    %v2196 = vsel %vm2188, %v2186, %v2194
    %v2197 = vld [vmem:[%s1 + $0x220] sm:$0xff]
    %v2198 = vld [vmem:[%s1 + $0x228] sm:$0xff]
    %v2199 = vld [vmem:[%s1 + $0x230] sm:$0xff]
    %v2200 = vld [vmem:[%s1 + $0x238] sm:$0xff]
    %v2201 = vld [vmem:[%s1 + $0x240] sm:$0xff]
    %v2202 = vld [vmem:[%s1 + $0x248] sm:$0xff]
    %v2203 = vld [vmem:[%s1 + $0x250] sm:$0xff]
    %v2204 = vld [vmem:[%s1 + $0x258] sm:$0xff]
    %v2205 = vld [vmem:[%s1 + $0x260] sm:$0x3]
    %v2206 = vld [vmem:[%s1 + $0x268] sm:$0x3]
    %v2207 = vlaneseq
    %v2208 = vshrl.u32 %v2207, 7
    %v2209 = vsub.s32 0, %v2208
    %v2210 = vrot.slane %v2205, %v2209
    %v2212 = vsel %vm470, %v1133, 0
    %v2215 = vsel %vm470, %v1134, 0
    %v2218 = vsel %vm470, %v1687, 0
    %v2221 = vsel %vm470, %v1688, 0
    %v2224 = vsel %vm470, %v2195, 0
    %v2227 = vsel %vm470, %v2196, 0
    %2229 = vmatprep.subr.mxu0 0.0
    %2230 = vmatpush1.msra.mxu0 0.0
    %2231 = vmatprep.subr.mxu0 0.0
    %2232 = vmatpush1.msra.mxu0 0.0
    %2233 = vmatprep.subr.mxu0 0.0
    %2234 = vmatpush1.msra.mxu0 0.0
    %2235 = vmatprep.subr.mxu0 0.0
    %2236 = vmatpush1.msra.mxu0 0.0
    %2237 = vmatprep.subr.mxu0 0.0
    %2238 = vmatpush1.msra.mxu0 0.0
    %2239 = vmatprep.subr.mxu0 0.0
    %2240 = vmatpush1.msra.mxu0 0.0
    %2241 = vmatprep.subr.mxu0 0.0
    %2242 = vmatpush1.msra.mxu0 0.0
    %2243 = vmatprep.subr.mxu0 0.0
    %2244 = vmatpush1.msra.mxu0 0.0
    %2245 = vmatprep.subr.mxu0 0.0
    %2246 = vmatpush1.msra.mxu0 0.0
    %2247 = vmatprep.subr.mxu0 0.0
    %2248 = vmatpush1.msra.mxu0 0.0
    %2249 = vmatprep.subr.mxu0 0.0
    %2250 = vmatpush1.msra.mxu0 0.0
    %2251 = vmatprep.subr.mxu0 0.0
    %2252 = vmatpush1.msra.mxu0 0.0
    %2253 = vmatprep.subr.mxu0 0.0
    %2254 = vmatpush1.msra.mxu0 %v2200
    %2255 = vmatprep.subr.mxu0 0.0
    %2256 = vmatpush1.msra.mxu0 %v2199
    %2257 = vmatprep.subr.mxu0 0.0
    %2258 = vmatpush1.msra.mxu0 %v2198
    %2259 = vmatprep.subr.mxu0 0.0
    %2260 = vmatpush1.msra.mxu0 %v2197
    %2261 = vmatprep.subr.mxu0 0.0
    %2262 = vmatpush2.msra.mxu0 0.0
    %2263 = vmatprep.subr.mxu0 0.0
    %2264 = vmatpush2.msra.mxu0 0.0
    %2265 = vmatprep.subr.mxu0 0.0
    %2266 = vmatpush2.msra.mxu0 0.0
    %2267 = vmatprep.subr.mxu0 0.0
    %2268 = vmatpush2.msra.mxu0 0.0
    %2269 = vmatprep.subr.mxu0 0.0
    %2270 = vmatpush2.msra.mxu0 0.0
    %2271 = vmatprep.subr.mxu0 0.0
    %2272 = vmatpush2.msra.mxu0 0.0
    %2273 = vmatprep.subr.mxu0 0.0
    %2274 = vmatpush2.msra.mxu0 0.0
    %2275 = vmatprep.subr.mxu0 0.0
    %2276 = vmatpush2.msra.mxu0 0.0
    %2277 = vmatprep.subr.mxu0 0.0
    %2278 = vmatpush2.msra.mxu0 0.0
    %2279 = vmatprep.subr.mxu0 0.0
    %2280 = vmatpush2.msra.mxu0 0.0
    %2281 = vmatprep.subr.mxu0 0.0
    %2282 = vmatpush2.msra.mxu0 0.0
    %2283 = vmatprep.subr.mxu0 0.0
    %2284 = vmatpush2.msra.mxu0 0.0
    %2285 = vmatprep.subr.mxu0 0.0
    %2286 = vmatpush2.msra.mxu0 0.0
    %2287 = vmatprep.subr.mxu0 0.0
    %2288 = vmatpush2.msra.mxu0 0.0
    %2289 = vmatprep.subr.mxu0 0.0
    %2290 = vmatpush2.msra.mxu0 0.0
    %2291 = vmatprep.subr.mxu0 0.0
    %2292 = vmatpush2.msra.mxu0 0.0
    %2293 = vmatprep.mubr.f32.mxu0 0.0
    %2294 = vmatmul.mubr.f32.gmra.mxu0 %v2212
    %v2295 = vpop.f32.mrf.mxu0
    %v2296 = vadd.f32 %v2210, %v2295
    %v2297 = vpop.f32.mrf.mxu0
    %2298 = vmatprep.mubr.f32.mxu0 0.0
    %2299 = vmatmul.mubr.f32.gmra.mxu0 %v2215
    %v2300 = vpop.f32.mrf.mxu0
    %v2301 = vadd.f32 %v2210, %v2300
    %v2302 = vpop.f32.mrf.mxu0
    %2303 = vmatprep.mubr.f32.mxu0 0.0
    %2304 = vmatmul.mubr.f32.gmra.mxu0 %v2218
    %v2305 = vpop.f32.mrf.mxu0
    %v2306 = vadd.f32 %v2210, %v2305
    %v2307 = vpop.f32.mrf.mxu0
    %2308 = vmatprep.mubr.f32.mxu0 0.0
    %2309 = vmatmul.mubr.f32.gmra.mxu0 %v2221
    %v2310 = vpop.f32.mrf.mxu0
    %v2311 = vadd.f32 %v2210, %v2310
    %v2312 = vpop.f32.mrf.mxu0
    %2313 = vmatprep.mubr.f32.mxu0 0.0
    %2314 = vmatmul.mubr.f32.gmra.mxu0 %v2224
    %v2315 = vpop.f32.mrf.mxu0
    %v2316 = vadd.f32 %v2210, %v2315
    %v2317 = vpop.f32.mrf.mxu0
    %2318 = vmatprep.mubr.f32.mxu0 0.0
    %2319 = vmatmul.mubr.f32.gmra.mxu0 %v2227
    %v2320 = vpop.f32.mrf.mxu0
    %v2321 = vadd.f32 %v2210, %v2320
    %v2322 = vpop.f32.mrf.mxu0
    %2323 = vdwg.mxu0
    %v2324 = vtanh.pop %v2296
    %v2325 = vtanh.pop %v2301
    %v2326 = vtanh.pop %v2306
    %v2327 = vtanh.pop %v2311
    %v2328 = vtanh.pop %v2316
    %v2329 = vtanh.pop %v2321
    %v2330 = vsel %vm470, %v2324, 0.0
    %v2331 = vsel %vm470, %v2325, 0.0
    %v2332 = vadd.f32 %v2330, %v2331
    %v2333 = vrot.slane %v2332, 4
    %v2334 = vadd.f32 %v2332, %v2333
    %v2335 = vrot.slane %v2334, 2
    %v2336 = vadd.f32 %v2334, %v2335
    %v2337 = vrot.slane %v2336, 1
    %v2338 = vadd.f32 %v2336, %v2337
    %v2339 = vrcp.pop 16.0
    %v2340 = vmul.f32 %v2338, %v2339
    %v2341 = vsel %vm470, %v2326, 0.0
    %v2342 = vsel %vm470, %v2327, 0.0
    %v2343 = vadd.f32 %v2341, %v2342
    %v2344 = vrot.slane %v2343, 4
    %v2345 = vadd.f32 %v2343, %v2344
    %v2346 = vrot.slane %v2345, 2
    %v2347 = vadd.f32 %v2345, %v2346
    %v2348 = vrot.slane %v2347, 1
    %v2349 = vadd.f32 %v2347, %v2348
    %v2350 = vmul.f32 %v2349, %v2339
    %v2351 = vsel %vm470, %v2328, 0.0
    %v2352 = vsel %vm470, %v2329, 0.0
    %v2353 = vadd.f32 %v2351, %v2352
    %v2354 = vrot.slane %v2353, 4
    %v2355 = vadd.f32 %v2353, %v2354
    %v2356 = vrot.slane %v2355, 2
    %v2357 = vadd.f32 %v2355, %v2356
    %v2358 = vrot.slane %v2357, 1
    %v2359 = vadd.f32 %v2357, %v2358
    %v2360 = vmul.f32 %v2359, %v2339
    %vm2361 = vcmask 1040384
    %v2362 = vsel %vm2361, %v2340, %v2350
    %v2363 = vsel %vm1484, %v2362, %v2360
    %v2364 = vlaneseq
    %v2365 = vshrl.u32 %v2364, 7
    %v2366 = vsub.s32 0, %v2365
    %v2367 = vrot.slane %v2206, %v2366
    %v2368 = vmul.f32 %v2363, %v2367
    %vm2369 = vcmask 256000
    %v2370 = vsel %vm2369, %v2368, 0.0
    %2371 = vadd.xlane.f32.xlu0 %v2370
    %v2372 = vpop.xlane.xlu0 %2371
    %vm2373 = vcmask 1042432
    %v2374 = vsel %vm2373, %v2372, -inf
    %v2375 = vrot.slane %v2374, 4
    %v2376 = vmax.f32 %v2374, %v2375
    %v2377 = vrot.slane %v2376, 2
    %v2378 = vmax.f32 %v2376, %v2377
    %v2379 = vrot.slane %v2378, 1
    %v2380 = vmax.f32 %v2378, %v2379
    %v2381 = vsub.f32 %v2372, %v2380
    %v2382 = vmul.f32 %v2381, 1.442695
    %v2383 = vpow.pop %v2382
    %v2384 = vsel %vm2373, %v2383, 0.0
    %v2385 = vrot.slane %v2384, 4
    %v2386 = vadd.f32 %v2384, %v2385
    %v2387 = vrot.slane %v2386, 2
    %v2388 = vadd.f32 %v2386, %v2387
    %v2389 = vrot.slane %v2388, 1
    %v2390 = vadd.f32 %v2388, %v2389
    %v2391 = vrcp.pop %v2390
    %v2392 = vmul.f32 %v2383, %v2391
    %v2393 = vlaneseq
    %v2394 = vshrl.u32 %v2393, 7
    %v2395 = vsub.s32 0, %v2394
    %v2396 = vrot.slane %v2392, %v2395
    %v2397 = vmul.f32 %v2396, %v1133
    %v2398 = vmul.f32 %v2396, %v1134
    %v2399 = vlaneseq
    %v2400 = vshrl.u32 %v2399, 7
    %v2401 = vsub.s32 1, %v2400
    %v2402 = vrot.slane %v2392, %v2401
    %v2403 = vmul.f32 %v2402, %v1687
    %v2404 = vmul.f32 %v2402, %v1688
    %v2405 = vadd.f32 %v2397, %v2403
    %v2406 = vadd.f32 %v2398, %v2404
    %v2407 = vlaneseq
    %v2408 = vshrl.u32 %v2407, 7
    %v2409 = vsub.s32 2, %v2408
    %v2410 = vrot.slane %v2392, %v2409
    %v2411 = vmul.f32 %v2410, %v2195
    %v2412 = vmul.f32 %v2410, %v2196
    %v2413 = vadd.f32 %v2405, %v2411
    %v2414 = vadd.f32 %v2406, %v2412
    %v2415 = vld [vmem:[%s1 + $0x60] sm:$0x7]
    %v2416 = vld [vmem:[%s1 + $0x68] sm:$0x7]
    %v2417 = vld [vmem:[%s1 + $0x70] sm:$0x7]
    %v2418 = vld [vmem:[%s1 + $0x78] sm:$0x7]
    %v2420 = vsel %vm470, %v2416, 0
    %2422 = vmatprep.subr.mxu0 0.0
    %2423 = vmatpush1.xpose.msra.mxu0 0.0
    %2424 = vmatprep.subr.mxu0 0.0
    %2425 = vmatpush1.xpose.msra.mxu0 0.0
    %2426 = vmatprep.subr.mxu0 0.0
    %2427 = vmatpush1.xpose.msra.mxu0 0.0
    %2428 = vmatprep.subr.mxu0 0.0
    %2429 = vmatpush1.xpose.msra.mxu0 0.0
    %2430 = vmatprep.subr.mxu0 0.0
    %2431 = vmatpush1.xpose.msra.mxu0 0.0
    %2432 = vmatprep.subr.mxu0 0.0
    %2433 = vmatpush1.xpose.msra.mxu0 0.0
    %2434 = vmatprep.subr.mxu0 0.0
    %2435 = vmatpush1.xpose.msra.mxu0 0.0
    %2436 = vmatprep.subr.mxu0 0.0
    %2437 = vmatpush1.xpose.msra.mxu0 0.0
    %2438 = vmatprep.subr.mxu0 0.0
    %2439 = vmatpush1.xpose.msra.mxu0 0.0
    %2440 = vmatprep.subr.mxu0 0.0
    %2441 = vmatpush1.xpose.msra.mxu0 0.0
    %2442 = vmatprep.subr.mxu0 0.0
    %2443 = vmatpush1.xpose.msra.mxu0 0.0
    %2444 = vmatprep.subr.mxu0 0.0
    %2445 = vmatpush1.xpose.msra.mxu0 0.0
    %2446 = vmatprep.subr.mxu0 0.0
    %2447 = vmatpush1.xpose.msra.mxu0 0.0
    %2448 = vmatprep.subr.mxu0 0.0
    %2449 = vmatpush1.xpose.msra.mxu0 0.0
    %2450 = vmatprep.subr.mxu0 0.0
    %2451 = vmatpush1.xpose.msra.mxu0 0.0
    %2452 = vmatprep.subr.mxu0 0.0
    %2453 = vmatpush1.xpose.msra.mxu0 %v2420
    %2454 = vmatprep.subr.mxu0 0.0
    %2455 = vmatpush2.xpose.msra.mxu0 0.0
    %2456 = vmatprep.subr.mxu0 0.0
    %2457 = vmatpush2.xpose.msra.mxu0 0.0
    %2458 = vmatprep.subr.mxu0 0.0
    %2459 = vmatpush2.xpose.msra.mxu0 0.0
    %2460 = vmatprep.subr.mxu0 0.0
    %2461 = vmatpush2.xpose.msra.mxu0 0.0
    %2462 = vmatprep.subr.mxu0 0.0
    %2463 = vmatpush2.xpose.msra.mxu0 0.0
    %2464 = vmatprep.subr.mxu0 0.0
    %2465 = vmatpush2.xpose.msra.mxu0 0.0
    %2466 = vmatprep.subr.mxu0 0.0
    %2467 = vmatpush2.xpose.msra.mxu0 0.0
    %2468 = vmatprep.subr.mxu0 0.0
    %2469 = vmatpush2.xpose.msra.mxu0 0.0
    %2470 = vmatprep.subr.mxu0 0.0
    %2471 = vmatpush2.xpose.msra.mxu0 0.0
    %2472 = vmatprep.subr.mxu0 0.0
    %2473 = vmatpush2.xpose.msra.mxu0 0.0
    %2474 = vmatprep.subr.mxu0 0.0
    %2475 = vmatpush2.xpose.msra.mxu0 0.0
    %2476 = vmatprep.subr.mxu0 0.0
    %2477 = vmatpush2.xpose.msra.mxu0 0.0
    %2478 = vmatprep.subr.mxu0 0.0
    %2479 = vmatpush2.xpose.msra.mxu0 0.0
    %2480 = vmatprep.subr.mxu0 0.0
    %2481 = vmatpush2.xpose.msra.mxu0 0.0
    %2482 = vmatprep.subr.mxu0 0.0
    %2483 = vmatpush2.xpose.msra.mxu0 0.0
    %2484 = vmatprep.subr.mxu0 0.0
    %2485 = vmatpush2.xpose.msra.mxu0 0.0
    %2486 = vmatprep.mubr.f32.mxu0 0.0
    %2487 = vmatmul.mubr.f32.gmra.mxu0 %v472
    %v2488 = vpop.f32.mrf.mxu0
    %v2489 = vadd.f32 0.0, %v2488
    %v2490 = vpop.f32.mrf.mxu0
    %2491 = vmatprep.mubr.f32.mxu0 0.0
    %2492 = vmatmul.mubr.f32.gmra.mxu0 %v475
    %v2493 = vpop.f32.mrf.mxu0
    %v2494 = vadd.f32 0.0, %v2493
    %v2495 = vpop.f32.mrf.mxu0
    %2496 = vdwg.mxu0
    %v2498 = vsel %vm470, %v2415, 0
    %v2501 = vsel %vm470, %v228, 0
    %v2504 = vsel %vm470, %v229, 0
    %2506 = vmatprep.subr.mxu0 0.0
    %2507 = vmatpush1.xpose.msra.mxu0 0.0
    %2508 = vmatprep.subr.mxu0 0.0
    %2509 = vmatpush1.xpose.msra.mxu0 0.0
    %2510 = vmatprep.subr.mxu0 0.0
    %2511 = vmatpush1.xpose.msra.mxu0 0.0
    %2512 = vmatprep.subr.mxu0 0.0
    %2513 = vmatpush1.xpose.msra.mxu0 0.0
    %2514 = vmatprep.subr.mxu0 0.0
    %2515 = vmatpush1.xpose.msra.mxu0 0.0
    %2516 = vmatprep.subr.mxu0 0.0
    %2517 = vmatpush1.xpose.msra.mxu0 0.0
    %2518 = vmatprep.subr.mxu0 0.0
    %2519 = vmatpush1.xpose.msra.mxu0 0.0
    %2520 = vmatprep.subr.mxu0 0.0
    %2521 = vmatpush1.xpose.msra.mxu0 0.0
    %2522 = vmatprep.subr.mxu0 0.0
    %2523 = vmatpush1.xpose.msra.mxu0 0.0
    %2524 = vmatprep.subr.mxu0 0.0
    %2525 = vmatpush1.xpose.msra.mxu0 0.0
    %2526 = vmatprep.subr.mxu0 0.0
    %2527 = vmatpush1.xpose.msra.mxu0 0.0
    %2528 = vmatprep.subr.mxu0 0.0
    %2529 = vmatpush1.xpose.msra.mxu0 0.0
    %2530 = vmatprep.subr.mxu0 0.0
    %2531 = vmatpush1.xpose.msra.mxu0 0.0
    %2532 = vmatprep.subr.mxu0 0.0
    %2533 = vmatpush1.xpose.msra.mxu0 0.0
    %2534 = vmatprep.subr.mxu0 0.0
    %2535 = vmatpush1.xpose.msra.mxu0 %v2504
    %2536 = vmatprep.subr.mxu0 0.0
    %2537 = vmatpush1.xpose.msra.mxu0 %v2501
    %2538 = vmatprep.subr.mxu0 0.0
    %2539 = vmatpush2.xpose.msra.mxu0 0.0
    %2540 = vmatprep.subr.mxu0 0.0
    %2541 = vmatpush2.xpose.msra.mxu0 0.0
    %2542 = vmatprep.subr.mxu0 0.0
    %2543 = vmatpush2.xpose.msra.mxu0 0.0
    %2544 = vmatprep.subr.mxu0 0.0
    %2545 = vmatpush2.xpose.msra.mxu0 0.0
    %2546 = vmatprep.subr.mxu0 0.0
    %2547 = vmatpush2.xpose.msra.mxu0 0.0
    %2548 = vmatprep.subr.mxu0 0.0
    %2549 = vmatpush2.xpose.msra.mxu0 0.0
    %2550 = vmatprep.subr.mxu0 0.0
    %2551 = vmatpush2.xpose.msra.mxu0 0.0
    %2552 = vmatprep.subr.mxu0 0.0
    %2553 = vmatpush2.xpose.msra.mxu0 0.0
    %2554 = vmatprep.subr.mxu0 0.0
    %2555 = vmatpush2.xpose.msra.mxu0 0.0
    %2556 = vmatprep.subr.mxu0 0.0
    %2557 = vmatpush2.xpose.msra.mxu0 0.0
    %2558 = vmatprep.subr.mxu0 0.0
    %2559 = vmatpush2.xpose.msra.mxu0 0.0
    %2560 = vmatprep.subr.mxu0 0.0
    %2561 = vmatpush2.xpose.msra.mxu0 0.0
    %2562 = vmatprep.subr.mxu0 0.0
    %2563 = vmatpush2.xpose.msra.mxu0 0.0
    %2564 = vmatprep.subr.mxu0 0.0
    %2565 = vmatpush2.xpose.msra.mxu0 0.0
    %2566 = vmatprep.subr.mxu0 0.0
    %2567 = vmatpush2.xpose.msra.mxu0 0.0
    %2568 = vmatprep.subr.mxu0 0.0
    %2569 = vmatpush2.xpose.msra.mxu0 0.0
    %2570 = vmatprep.mubr.f32.mxu0 0.0
    %2571 = vmatmul.mubr.f32.gmra.mxu0 %v2498
    %v2572 = vpop.f32.mrf.mxu0
    %v2573 = vadd.f32 0.0, %v2572
    %v2574 = vpop.f32.mrf.mxu0
    %2575 = vdwg.mxu0
    %2577 = vset.pattern.permute.xlu0 0
    %2578 = vperm.xlu0 %2577, %v2489
    %v2579 = vpop.permute.xlu0 %2578
    %2582 = vset.pattern.permute.xlu0 0
    %2583 = vperm.xlu0 %2582, %v2494
    %v2584 = vpop.permute.xlu0 %2583
    %v2586 = vlaneseq
    %v2587 = vshrl.u32 %v2586, 7
    %v2588 = vsub.s32 0, %v2587
    %v2589 = vrot.slane %v2573, %v2588
    %v2590 = vadd.f32 %v2579, %v2589
    %v2591 = vadd.f32 %v2584, %v2589
    %vm2592 = vcmp.ge.f32.partialorder %v2590, 0.0
    %vm2593 = vcmp.ge.f32.partialorder %v2591, 0.0
    %v2594 = vmul.f32 %v2590, 0.01
    %v2595 = vmul.f32 %v2591, 0.01
    %v2596 = vsel %vm2592, %v2590, %v2594
    %v2597 = vsel %vm2593, %v2591, %v2595
    %vm2598 = vcmp.gt.f32.partialorder %v414, 0.0
    %vm2599 = vcmp.gt.f32.partialorder %v415, 0.0
    %v2600 = vsel %vm2598, %v2596, -1e+30
    %v2601 = vsel %vm2599, %v2597, -1e+30
    %v2602 = vsel %vm330, %v2600, -inf
    %2603 = vmax.xlane.f32.xlu0 %v2602
    %v2604 = vpop.xlane.xlu0 %2603
    %v2605 = vsel %vm330, %v2601, -inf
    %2606 = vmax.xlane.f32.xlu0 %v2605
    %v2607 = vpop.xlane.xlu0 %2606
    %v2608 = vsub.f32 %v2600, %v2604
    %v2609 = vsub.f32 %v2601, %v2607
    %v2610 = vmul.f32 %v2608, 1.442695
    %v2611 = vpow.pop %v2610
    %v2612 = vmul.f32 %v2609, 1.442695
    %v2613 = vpow.pop %v2612
    %v2614 = vsel %vm2598, %v2611, 0.0
    %v2615 = vsel %vm2599, %v2613, 0.0
    %v2616 = vsel %vm330, %v2614, 0.0
    %2617 = vadd.xlane.f32.xlu0 %v2616
    %v2618 = vpop.xlane.xlu0 %2617
    %v2619 = vsel %vm330, %v2615, 0.0
    %2620 = vadd.xlane.f32.xlu0 %v2619
    %v2621 = vpop.xlane.xlu0 %2620
    %vm2622 = vcmp.gt.f32.partialorder %v2618, 0.0
    %vm2623 = vcmp.gt.f32.partialorder %v2621, 0.0
    %v2624 = vsel %vm2622, %v2618, 1.0
    %v2625 = vsel %vm2623, %v2621, 1.0
    %v2626 = vrcp.pop %v2624
    %v2627 = vmul.f32 %v2614, %v2626
    %v2628 = vrcp.pop %v2625
    %v2629 = vmul.f32 %v2615, %v2628
    %v2630 = vlaneseq
    %v2631 = vshrl.u32 %v2630, 7
    %v2632 = vsub.s32 0, %v2631
    %v2633 = vrot.slane %v2417, %v2632
    %v2635 = vsel %vm330, %v2627, 0
    %v2638 = vsel %vm330, %v2629, 0
    %v2640 = vsel %vm141, %v229, 0
    %2642 = vmatprep.subr.mxu0 0.0
    %2643 = vmatpush1.msra.mxu0 0.0
    %2644 = vmatprep.subr.mxu0 0.0
    %2645 = vmatpush1.msra.mxu0 0.0
    %2646 = vmatprep.subr.mxu0 0.0
    %2647 = vmatpush1.msra.mxu0 0.0
    %2648 = vmatprep.subr.mxu0 0.0
    %2649 = vmatpush1.msra.mxu0 0.0
    %2650 = vmatprep.subr.mxu0 0.0
    %2651 = vmatpush1.msra.mxu0 0.0
    %2652 = vmatprep.subr.mxu0 0.0
    %2653 = vmatpush1.msra.mxu0 0.0
    %2654 = vmatprep.subr.mxu0 0.0
    %2655 = vmatpush1.msra.mxu0 0.0
    %2656 = vmatprep.subr.mxu0 0.0
    %2657 = vmatpush1.msra.mxu0 0.0
    %2658 = vmatprep.subr.mxu0 0.0
    %2659 = vmatpush1.msra.mxu0 0.0
    %2660 = vmatprep.subr.mxu0 0.0
    %2661 = vmatpush1.msra.mxu0 0.0
    %2662 = vmatprep.subr.mxu0 0.0
    %2663 = vmatpush1.msra.mxu0 0.0
    %2664 = vmatprep.subr.mxu0 0.0
    %2665 = vmatpush1.msra.mxu0 0.0
    %2666 = vmatprep.subr.mxu0 0.0
    %2667 = vmatpush1.msra.mxu0 0.0
    %2668 = vmatprep.subr.mxu0 0.0
    %2669 = vmatpush1.msra.mxu0 0.0
    %2670 = vmatprep.subr.mxu0 0.0
    %2671 = vmatpush1.msra.mxu0 %v2640
    %2672 = vmatprep.subr.mxu0 0.0
    %2673 = vmatpush1.msra.mxu0 %v228
    %2674 = vmatprep.subr.mxu0 0.0
    %2675 = vmatpush2.msra.mxu0 0.0
    %2676 = vmatprep.subr.mxu0 0.0
    %2677 = vmatpush2.msra.mxu0 0.0
    %2678 = vmatprep.subr.mxu0 0.0
    %2679 = vmatpush2.msra.mxu0 0.0
    %2680 = vmatprep.subr.mxu0 0.0
    %2681 = vmatpush2.msra.mxu0 0.0
    %2682 = vmatprep.subr.mxu0 0.0
    %2683 = vmatpush2.msra.mxu0 0.0
    %2684 = vmatprep.subr.mxu0 0.0
    %2685 = vmatpush2.msra.mxu0 0.0
    %2686 = vmatprep.subr.mxu0 0.0
    %2687 = vmatpush2.msra.mxu0 0.0
    %2688 = vmatprep.subr.mxu0 0.0
    %2689 = vmatpush2.msra.mxu0 0.0
    %2690 = vmatprep.subr.mxu0 0.0
    %2691 = vmatpush2.msra.mxu0 0.0
    %2692 = vmatprep.subr.mxu0 0.0
    %2693 = vmatpush2.msra.mxu0 0.0
    %2694 = vmatprep.subr.mxu0 0.0
    %2695 = vmatpush2.msra.mxu0 0.0
    %2696 = vmatprep.subr.mxu0 0.0
    %2697 = vmatpush2.msra.mxu0 0.0
    %2698 = vmatprep.subr.mxu0 0.0
    %2699 = vmatpush2.msra.mxu0 0.0
    %2700 = vmatprep.subr.mxu0 0.0
    %2701 = vmatpush2.msra.mxu0 0.0
    %2702 = vmatprep.subr.mxu0 0.0
    %2703 = vmatpush2.msra.mxu0 0.0
    %2704 = vmatprep.subr.mxu0 0.0
    %2705 = vmatpush2.msra.mxu0 0.0
    %2706 = vmatprep.mubr.f32.mxu0 0.0
    %2707 = vmatmul.mubr.f32.gmra.mxu0 %v2635
    %v2708 = vpop.f32.mrf.mxu0
    %v2709 = vadd.f32 %v2633, %v2708
    %v2710 = vpop.f32.mrf.mxu0
    %2711 = vmatprep.mubr.f32.mxu0 0.0
    %2712 = vmatmul.mubr.f32.gmra.mxu0 %v2638
    %v2713 = vpop.f32.mrf.mxu0
    %v2714 = vadd.f32 %v2633, %v2713
    %v2715 = vpop.f32.mrf.mxu0
    %2716 = vdwg.mxu0
    %v2717 = vsel %vm470, %v2709, 0.0
    %v2718 = vsel %vm470, %v2714, 0.0
    %v2719 = vadd.f32 %v2717, %v2718
    %v2720 = vrot.slane %v2719, 4
    %v2721 = vadd.f32 %v2719, %v2720
    %v2722 = vrot.slane %v2721, 2
    %v2723 = vadd.f32 %v2721, %v2722
    %v2724 = vrot.slane %v2723, 1
    %v2725 = vadd.f32 %v2723, %v2724
    %v2726 = vmul.f32 %v2725, 0.0625
    %v2727 = vmul.f32 %v2709, %v2709
    %v2728 = vmul.f32 %v2714, %v2714
    %v2729 = vsel %vm470, %v2727, 0.0
    %v2730 = vsel %vm470, %v2728, 0.0
    %v2731 = vadd.f32 %v2729, %v2730
    %v2732 = vrot.slane %v2731, 4
    %v2733 = vadd.f32 %v2731, %v2732
    %v2734 = vrot.slane %v2733, 2
    %v2735 = vadd.f32 %v2733, %v2734
    %v2736 = vrot.slane %v2735, 1
    %v2737 = vadd.f32 %v2735, %v2736
    %v2738 = vmul.f32 %v2737, 0.0625
    %v2739 = vmul.f32 %v2726, %v2726
    %v2740 = vsub.f32 %v2738, %v2739
    %v2741 = vmax.f32 %v2740, 0.0
    %v2742 = vsub.f32 %v2709, %v2726
    %v2743 = vsub.f32 %v2714, %v2726
    %v2744 = vadd.f32 %v2741, 1e-05
    %v2745 = vrsqrt.pop %v2744
    %v2746 = vmul.f32 %v2742, %v2745
    %v2747 = vmul.f32 %v2743, %v2745
    %vm2748 = vcmp.ge.f32.partialorder %v2746, 0.0
    %vm2749 = vcmp.ge.f32.partialorder %v2747, 0.0
    %v2750 = vlaneseq
    %v2751 = vshrl.u32 %v2750, 7
    %v2752 = vsub.s32 0, %v2751
    %v2753 = vrot.slane %v2418, %v2752
    %v2754 = vmul.f32 %v2753, %v2746
    %v2755 = vmul.f32 %v2753, %v2747
    %v2756 = vsel %vm2748, %v2746, %v2754
    %v2757 = vsel %vm2749, %v2747, %v2755
    %v2758 = vrot.slane %v2415, 1
    %v2759 = vsel %vm470, %v2758, 0
    %v2762 = vsel %vm470, %v324, 0
    %v2765 = vsel %vm470, %v325, 0
    %2767 = vmatprep.subr.mxu0 0.0
    %2768 = vmatpush1.xpose.msra.mxu0 0.0
    %2769 = vmatprep.subr.mxu0 0.0
    %2770 = vmatpush1.xpose.msra.mxu0 0.0
    %2771 = vmatprep.subr.mxu0 0.0
    %2772 = vmatpush1.xpose.msra.mxu0 0.0
    %2773 = vmatprep.subr.mxu0 0.0
    %2774 = vmatpush1.xpose.msra.mxu0 0.0
    %2775 = vmatprep.subr.mxu0 0.0
    %2776 = vmatpush1.xpose.msra.mxu0 0.0
    %2777 = vmatprep.subr.mxu0 0.0
    %2778 = vmatpush1.xpose.msra.mxu0 0.0
    %2779 = vmatprep.subr.mxu0 0.0
    %2780 = vmatpush1.xpose.msra.mxu0 0.0
    %2781 = vmatprep.subr.mxu0 0.0
    %2782 = vmatpush1.xpose.msra.mxu0 0.0
    %2783 = vmatprep.subr.mxu0 0.0
    %2784 = vmatpush1.xpose.msra.mxu0 0.0
    %2785 = vmatprep.subr.mxu0 0.0
    %2786 = vmatpush1.xpose.msra.mxu0 0.0
    %2787 = vmatprep.subr.mxu0 0.0
    %2788 = vmatpush1.xpose.msra.mxu0 0.0
    %2789 = vmatprep.subr.mxu0 0.0
    %2790 = vmatpush1.xpose.msra.mxu0 0.0
    %2791 = vmatprep.subr.mxu0 0.0
    %2792 = vmatpush1.xpose.msra.mxu0 0.0
    %2793 = vmatprep.subr.mxu0 0.0
    %2794 = vmatpush1.xpose.msra.mxu0 0.0
    %2795 = vmatprep.subr.mxu0 0.0
    %2796 = vmatpush1.xpose.msra.mxu0 %v2765
    %2797 = vmatprep.subr.mxu0 0.0
    %2798 = vmatpush1.xpose.msra.mxu0 %v2762
    %2799 = vmatprep.subr.mxu0 0.0
    %2800 = vmatpush2.xpose.msra.mxu0 0.0
    %2801 = vmatprep.subr.mxu0 0.0
    %2802 = vmatpush2.xpose.msra.mxu0 0.0
    %2803 = vmatprep.subr.mxu0 0.0
    %2804 = vmatpush2.xpose.msra.mxu0 0.0
    %2805 = vmatprep.subr.mxu0 0.0
    %2806 = vmatpush2.xpose.msra.mxu0 0.0
    %2807 = vmatprep.subr.mxu0 0.0
    %2808 = vmatpush2.xpose.msra.mxu0 0.0
    %2809 = vmatprep.subr.mxu0 0.0
    %2810 = vmatpush2.xpose.msra.mxu0 0.0
    %2811 = vmatprep.subr.mxu0 0.0
    %2812 = vmatpush2.xpose.msra.mxu0 0.0
    %2813 = vmatprep.subr.mxu0 0.0
    %2814 = vmatpush2.xpose.msra.mxu0 0.0
    %2815 = vmatprep.subr.mxu0 0.0
    %2816 = vmatpush2.xpose.msra.mxu0 0.0
    %2817 = vmatprep.subr.mxu0 0.0
    %2818 = vmatpush2.xpose.msra.mxu0 0.0
    %2819 = vmatprep.subr.mxu0 0.0
    %2820 = vmatpush2.xpose.msra.mxu0 0.0
    %2821 = vmatprep.subr.mxu0 0.0
    %2822 = vmatpush2.xpose.msra.mxu0 0.0
    %2823 = vmatprep.subr.mxu0 0.0
    %2824 = vmatpush2.xpose.msra.mxu0 0.0
    %2825 = vmatprep.subr.mxu0 0.0
    %2826 = vmatpush2.xpose.msra.mxu0 0.0
    %2827 = vmatprep.subr.mxu0 0.0
    %2828 = vmatpush2.xpose.msra.mxu0 0.0
    %2829 = vmatprep.subr.mxu0 0.0
    %2830 = vmatpush2.xpose.msra.mxu0 0.0
    %2831 = vmatprep.mubr.f32.mxu0 0.0
    %2832 = vmatmul.mubr.f32.gmra.mxu0 %v2759
    %v2833 = vpop.f32.mrf.mxu0
    %v2834 = vadd.f32 0.0, %v2833
    %v2835 = vpop.f32.mrf.mxu0
    %2836 = vdwg.mxu0
    %2837 = vset.pattern.permute.xlu0 1
    %2838 = vperm.xlu0 %2837, %v2489
    %v2839 = vpop.permute.xlu0 %2838
    %2841 = vset.pattern.permute.xlu0 1
    %2842 = vperm.xlu0 %2841, %v2494
    %v2843 = vpop.permute.xlu0 %2842
    %v2845 = vlaneseq
    %v2846 = vshrl.u32 %v2845, 7
    %v2847 = vsub.s32 0, %v2846
    %v2848 = vrot.slane %v2834, %v2847
    %v2849 = vadd.f32 %v2839, %v2848
    %v2850 = vadd.f32 %v2843, %v2848
    %vm2851 = vcmp.ge.f32.partialorder %v2849, 0.0
    %vm2852 = vcmp.ge.f32.partialorder %v2850, 0.0
    %v2853 = vmul.f32 %v2849, 0.01
    %v2854 = vmul.f32 %v2850, 0.01
    %v2855 = vsel %vm2851, %v2849, %v2853
    %v2856 = vsel %vm2852, %v2850, %v2854
    %vm2857 = vcmp.gt.f32.partialorder %v416, 0.0
    %vm2858 = vcmp.gt.f32.partialorder %v417, 0.0
    %v2859 = vsel %vm2857, %v2855, -1e+30
    %v2860 = vsel %vm2858, %v2856, -1e+30
    %v2861 = vsel %vm1477, %v2859, -inf
    %2862 = vmax.xlane.f32.xlu0 %v2861
    %v2863 = vpop.xlane.xlu0 %2862
    %v2864 = vsel %vm1477, %v2860, -inf
    %2865 = vmax.xlane.f32.xlu0 %v2864
    %v2866 = vpop.xlane.xlu0 %2865
    %v2867 = vsub.f32 %v2859, %v2863
    %v2868 = vsub.f32 %v2860, %v2866
    %v2869 = vmul.f32 %v2867, 1.442695
    %v2870 = vpow.pop %v2869
    %v2871 = vmul.f32 %v2868, 1.442695
    %v2872 = vpow.pop %v2871
    %v2873 = vsel %vm2857, %v2870, 0.0
    %v2874 = vsel %vm2858, %v2872, 0.0
    %v2875 = vsel %vm1477, %v2873, 0.0
    %2876 = vadd.xlane.f32.xlu0 %v2875
    %v2877 = vpop.xlane.xlu0 %2876
    %v2878 = vsel %vm1477, %v2874, 0.0
    %2879 = vadd.xlane.f32.xlu0 %v2878
    %v2880 = vpop.xlane.xlu0 %2879
    %vm2881 = vcmp.gt.f32.partialorder %v2877, 0.0
    %vm2882 = vcmp.gt.f32.partialorder %v2880, 0.0
    %v2883 = vsel %vm2881, %v2877, 1.0
    %v2884 = vsel %vm2882, %v2880, 1.0
    %v2885 = vrcp.pop %v2883
    %v2886 = vmul.f32 %v2873, %v2885
    %v2887 = vrcp.pop %v2884
    %v2888 = vmul.f32 %v2874, %v2887
    %v2889 = vlaneseq
    %v2890 = vshrl.u32 %v2889, 7
    %v2891 = vsub.s32 1, %v2890
    %v2892 = vrot.slane %v2417, %v2891
    %v2894 = vsel %vm1477, %v2886, 0
    %v2897 = vsel %vm1477, %v2888, 0
    %v2899 = vsel %vm1484, %v325, 0
    %2901 = vmatprep.subr.mxu0 0.0
    %2902 = vmatpush1.msra.mxu0 0.0
    %2903 = vmatprep.subr.mxu0 0.0
    %2904 = vmatpush1.msra.mxu0 0.0
    %2905 = vmatprep.subr.mxu0 0.0
    %2906 = vmatpush1.msra.mxu0 0.0
    %2907 = vmatprep.subr.mxu0 0.0
    %2908 = vmatpush1.msra.mxu0 0.0
    %2909 = vmatprep.subr.mxu0 0.0
    %2910 = vmatpush1.msra.mxu0 0.0
    %2911 = vmatprep.subr.mxu0 0.0
    %2912 = vmatpush1.msra.mxu0 0.0
    %2913 = vmatprep.subr.mxu0 0.0
    %2914 = vmatpush1.msra.mxu0 0.0
    %2915 = vmatprep.subr.mxu0 0.0
    %2916 = vmatpush1.msra.mxu0 0.0
    %2917 = vmatprep.subr.mxu0 0.0
    %2918 = vmatpush1.msra.mxu0 0.0
    %2919 = vmatprep.subr.mxu0 0.0
    %2920 = vmatpush1.msra.mxu0 0.0
    %2921 = vmatprep.subr.mxu0 0.0
    %2922 = vmatpush1.msra.mxu0 0.0
    %2923 = vmatprep.subr.mxu0 0.0
    %2924 = vmatpush1.msra.mxu0 0.0
    %2925 = vmatprep.subr.mxu0 0.0
    %2926 = vmatpush1.msra.mxu0 0.0
    %2927 = vmatprep.subr.mxu0 0.0
    %2928 = vmatpush1.msra.mxu0 0.0
    %2929 = vmatprep.subr.mxu0 0.0
    %2930 = vmatpush1.msra.mxu0 %v2899
    %2931 = vmatprep.subr.mxu0 0.0
    %2932 = vmatpush1.msra.mxu0 %v324
    %2933 = vmatprep.subr.mxu0 0.0
    %2934 = vmatpush2.msra.mxu0 0.0
    %2935 = vmatprep.subr.mxu0 0.0
    %2936 = vmatpush2.msra.mxu0 0.0
    %2937 = vmatprep.subr.mxu0 0.0
    %2938 = vmatpush2.msra.mxu0 0.0
    %2939 = vmatprep.subr.mxu0 0.0
    %2940 = vmatpush2.msra.mxu0 0.0
    %2941 = vmatprep.subr.mxu0 0.0
    %2942 = vmatpush2.msra.mxu0 0.0
    %2943 = vmatprep.subr.mxu0 0.0
    %2944 = vmatpush2.msra.mxu0 0.0
    %2945 = vmatprep.subr.mxu0 0.0
    %2946 = vmatpush2.msra.mxu0 0.0
    %2947 = vmatprep.subr.mxu0 0.0
    %2948 = vmatpush2.msra.mxu0 0.0
    %2949 = vmatprep.subr.mxu0 0.0
    %2950 = vmatpush2.msra.mxu0 0.0
    %2951 = vmatprep.subr.mxu0 0.0
    %2952 = vmatpush2.msra.mxu0 0.0
    %2953 = vmatprep.subr.mxu0 0.0
    %2954 = vmatpush2.msra.mxu0 0.0
    %2955 = vmatprep.subr.mxu0 0.0
    %2956 = vmatpush2.msra.mxu0 0.0
    %2957 = vmatprep.subr.mxu0 0.0
    %2958 = vmatpush2.msra.mxu0 0.0
    %2959 = vmatprep.subr.mxu0 0.0
    %2960 = vmatpush2.msra.mxu0 0.0
    %2961 = vmatprep.subr.mxu0 0.0
    %2962 = vmatpush2.msra.mxu0 0.0
    %2963 = vmatprep.subr.mxu0 0.0
    %2964 = vmatpush2.msra.mxu0 0.0
    %2965 = vmatprep.mubr.f32.mxu0 0.0
    %2966 = vmatmul.mubr.f32.gmra.mxu0 %v2894
    %v2967 = vpop.f32.mrf.mxu0
    %v2968 = vadd.f32 %v2892, %v2967
    %v2969 = vpop.f32.mrf.mxu0
    %2970 = vmatprep.mubr.f32.mxu0 0.0
    %2971 = vmatmul.mubr.f32.gmra.mxu0 %v2897
    %v2972 = vpop.f32.mrf.mxu0
    %v2973 = vadd.f32 %v2892, %v2972
    %v2974 = vpop.f32.mrf.mxu0
    %2975 = vdwg.mxu0
    %v2976 = vsel %vm470, %v2968, 0.0
    %v2977 = vsel %vm470, %v2973, 0.0
    %v2978 = vadd.f32 %v2976, %v2977
    %v2979 = vrot.slane %v2978, 4
    %v2980 = vadd.f32 %v2978, %v2979
    %v2981 = vrot.slane %v2980, 2
    %v2982 = vadd.f32 %v2980, %v2981
    %v2983 = vrot.slane %v2982, 1
    %v2984 = vadd.f32 %v2982, %v2983
    %v2985 = vmul.f32 %v2984, 0.0625
    %v2986 = vmul.f32 %v2968, %v2968
    %v2987 = vmul.f32 %v2973, %v2973
    %v2988 = vsel %vm470, %v2986, 0.0
    %v2989 = vsel %vm470, %v2987, 0.0
    %v2990 = vadd.f32 %v2988, %v2989
    %v2991 = vrot.slane %v2990, 4
    %v2992 = vadd.f32 %v2990, %v2991
    %v2993 = vrot.slane %v2992, 2
    %v2994 = vadd.f32 %v2992, %v2993
    %v2995 = vrot.slane %v2994, 1
    %v2996 = vadd.f32 %v2994, %v2995
    %v2997 = vmul.f32 %v2996, 0.0625
    %v2998 = vmul.f32 %v2985, %v2985
    %v2999 = vsub.f32 %v2997, %v2998
    %v3000 = vmax.f32 %v2999, 0.0
    %v3001 = vsub.f32 %v2968, %v2985
    %v3002 = vsub.f32 %v2973, %v2985
    %v3003 = vadd.f32 %v3000, 1e-05
    %v3004 = vrsqrt.pop %v3003
    %v3005 = vmul.f32 %v3001, %v3004
    %v3006 = vmul.f32 %v3002, %v3004
    %vm3007 = vcmp.ge.f32.partialorder %v3005, 0.0
    %vm3008 = vcmp.ge.f32.partialorder %v3006, 0.0
    %v3009 = vlaneseq
    %v3010 = vshrl.u32 %v3009, 7
    %v3011 = vsub.s32 1, %v3010
    %v3012 = vrot.slane %v2418, %v3011
    %v3013 = vmul.f32 %v3012, %v3005
    %v3014 = vmul.f32 %v3012, %v3006
    %v3015 = vsel %vm3007, %v3005, %v3013
    %v3016 = vsel %vm3008, %v3006, %v3014
    %v3017 = vrot.slane %v2415, 2
    %v3018 = vsel %vm470, %v3017, 0
    %v3021 = vsel %vm470, %v413, 0
    %3023 = vmatprep.subr.mxu0 0.0
    %3024 = vmatpush1.xpose.msra.mxu0 0.0
    %3025 = vmatprep.subr.mxu0 0.0
    %3026 = vmatpush1.xpose.msra.mxu0 0.0
    %3027 = vmatprep.subr.mxu0 0.0
    %3028 = vmatpush1.xpose.msra.mxu0 0.0
    %3029 = vmatprep.subr.mxu0 0.0
    %3030 = vmatpush1.xpose.msra.mxu0 0.0
    %3031 = vmatprep.subr.mxu0 0.0
    %3032 = vmatpush1.xpose.msra.mxu0 0.0
    %3033 = vmatprep.subr.mxu0 0.0
    %3034 = vmatpush1.xpose.msra.mxu0 0.0
    %3035 = vmatprep.subr.mxu0 0.0
    %3036 = vmatpush1.xpose.msra.mxu0 0.0
    %3037 = vmatprep.subr.mxu0 0.0
    %3038 = vmatpush1.xpose.msra.mxu0 0.0
    %3039 = vmatprep.subr.mxu0 0.0
    %3040 = vmatpush1.xpose.msra.mxu0 0.0
    %3041 = vmatprep.subr.mxu0 0.0
    %3042 = vmatpush1.xpose.msra.mxu0 0.0
    %3043 = vmatprep.subr.mxu0 0.0
    %3044 = vmatpush1.xpose.msra.mxu0 0.0
    %3045 = vmatprep.subr.mxu0 0.0
    %3046 = vmatpush1.xpose.msra.mxu0 0.0
    %3047 = vmatprep.subr.mxu0 0.0
    %3048 = vmatpush1.xpose.msra.mxu0 0.0
    %3049 = vmatprep.subr.mxu0 0.0
    %3050 = vmatpush1.xpose.msra.mxu0 0.0
    %3051 = vmatprep.subr.mxu0 0.0
    %3052 = vmatpush1.xpose.msra.mxu0 0.0
    %3053 = vmatprep.subr.mxu0 0.0
    %3054 = vmatpush1.xpose.msra.mxu0 %v3021
    %3055 = vmatprep.subr.mxu0 0.0
    %3056 = vmatpush2.xpose.msra.mxu0 0.0
    %3057 = vmatprep.subr.mxu0 0.0
    %3058 = vmatpush2.xpose.msra.mxu0 0.0
    %3059 = vmatprep.subr.mxu0 0.0
    %3060 = vmatpush2.xpose.msra.mxu0 0.0
    %3061 = vmatprep.subr.mxu0 0.0
    %3062 = vmatpush2.xpose.msra.mxu0 0.0
    %3063 = vmatprep.subr.mxu0 0.0
    %3064 = vmatpush2.xpose.msra.mxu0 0.0
    %3065 = vmatprep.subr.mxu0 0.0
    %3066 = vmatpush2.xpose.msra.mxu0 0.0
    %3067 = vmatprep.subr.mxu0 0.0
    %3068 = vmatpush2.xpose.msra.mxu0 0.0
    %3069 = vmatprep.subr.mxu0 0.0
    %3070 = vmatpush2.xpose.msra.mxu0 0.0
    %3071 = vmatprep.subr.mxu0 0.0
    %3072 = vmatpush2.xpose.msra.mxu0 0.0
    %3073 = vmatprep.subr.mxu0 0.0
    %3074 = vmatpush2.xpose.msra.mxu0 0.0
    %3075 = vmatprep.subr.mxu0 0.0
    %3076 = vmatpush2.xpose.msra.mxu0 0.0
    %3077 = vmatprep.subr.mxu0 0.0
    %3078 = vmatpush2.xpose.msra.mxu0 0.0
    %3079 = vmatprep.subr.mxu0 0.0
    %3080 = vmatpush2.xpose.msra.mxu0 0.0
    %3081 = vmatprep.subr.mxu0 0.0
    %3082 = vmatpush2.xpose.msra.mxu0 0.0
    %3083 = vmatprep.subr.mxu0 0.0
    %3084 = vmatpush2.xpose.msra.mxu0 0.0
    %3085 = vmatprep.subr.mxu0 0.0
    %3086 = vmatpush2.xpose.msra.mxu0 0.0
    %3087 = vmatprep.mubr.f32.mxu0 0.0
    %3088 = vmatmul.mubr.f32.gmra.mxu0 %v3018
    %v3089 = vpop.f32.mrf.mxu0
    %v3090 = vadd.f32 0.0, %v3089
    %v3091 = vpop.f32.mrf.mxu0
    %3092 = vdwg.mxu0
    %3093 = vset.pattern.permute.xlu0 2
    %3094 = vperm.xlu0 %3093, %v2489
    %v3095 = vpop.permute.xlu0 %3094
    %3097 = vset.pattern.permute.xlu0 2
    %3098 = vperm.xlu0 %3097, %v2494
    %v3099 = vpop.permute.xlu0 %3098
    %v3101 = vlaneseq
    %v3102 = vshrl.u32 %v3101, 7
    %v3103 = vsub.s32 0, %v3102
    %v3104 = vrot.slane %v3090, %v3103
    %v3105 = vadd.f32 %v3095, %v3104
    %v3106 = vadd.f32 %v3099, %v3104
    %vm3107 = vcmp.ge.f32.partialorder %v3105, 0.0
    %vm3108 = vcmp.ge.f32.partialorder %v3106, 0.0
    %v3109 = vmul.f32 %v3105, 0.01
    %v3110 = vmul.f32 %v3106, 0.01
    %v3111 = vsel %vm3107, %v3105, %v3109
    %v3112 = vsel %vm3108, %v3106, %v3110
    %vm3113 = vcmp.gt.f32.partialorder %v418, 0.0
    %vm3114 = vcmp.gt.f32.partialorder %v419, 0.0
    %v3115 = vsel %vm3113, %v3111, -1e+30
    %v3116 = vsel %vm3114, %v3112, -1e+30
    %v3117 = vsel %vm1985, %v3115, -inf
    %3118 = vmax.xlane.f32.xlu0 %v3117
    %v3119 = vpop.xlane.xlu0 %3118
    %v3120 = vsel %vm1985, %v3116, -inf
    %3121 = vmax.xlane.f32.xlu0 %v3120
    %v3122 = vpop.xlane.xlu0 %3121
    %v3123 = vsub.f32 %v3115, %v3119
    %v3124 = vsub.f32 %v3116, %v3122
    %v3125 = vmul.f32 %v3123, 1.442695
    %v3126 = vpow.pop %v3125
    %v3127 = vmul.f32 %v3124, 1.442695
    %v3128 = vpow.pop %v3127
    %v3129 = vsel %vm3113, %v3126, 0.0
    %v3130 = vsel %vm3114, %v3128, 0.0
    %v3131 = vsel %vm1985, %v3129, 0.0
    %3132 = vadd.xlane.f32.xlu0 %v3131
    %v3133 = vpop.xlane.xlu0 %3132
    %v3134 = vsel %vm1985, %v3130, 0.0
    %3135 = vadd.xlane.f32.xlu0 %v3134
    %v3136 = vpop.xlane.xlu0 %3135
    %vm3137 = vcmp.gt.f32.partialorder %v3133, 0.0
    %vm3138 = vcmp.gt.f32.partialorder %v3136, 0.0
    %v3139 = vsel %vm3137, %v3133, 1.0
    %v3140 = vsel %vm3138, %v3136, 1.0
    %v3141 = vrcp.pop %v3139
    %v3142 = vmul.f32 %v3129, %v3141
    %v3143 = vrcp.pop %v3140
    %v3144 = vmul.f32 %v3130, %v3143
    %v3145 = vlaneseq
    %v3146 = vshrl.u32 %v3145, 7
    %v3147 = vsub.s32 2, %v3146
    %v3148 = vrot.slane %v2417, %v3147
    %v3150 = vsel %vm1985, %v3142, 0
    %v3153 = vsel %vm1985, %v3144, 0
    %v3155 = vsel %vm1992, %v413, 0
    %3157 = vmatprep.subr.mxu0 0.0
    %3158 = vmatpush1.msra.mxu0 0.0
    %3159 = vmatprep.subr.mxu0 0.0
    %3160 = vmatpush1.msra.mxu0 0.0
    %3161 = vmatprep.subr.mxu0 0.0
    %3162 = vmatpush1.msra.mxu0 0.0
    %3163 = vmatprep.subr.mxu0 0.0
    %3164 = vmatpush1.msra.mxu0 0.0
    %3165 = vmatprep.subr.mxu0 0.0
    %3166 = vmatpush1.msra.mxu0 0.0
    %3167 = vmatprep.subr.mxu0 0.0
    %3168 = vmatpush1.msra.mxu0 0.0
    %3169 = vmatprep.subr.mxu0 0.0
    %3170 = vmatpush1.msra.mxu0 0.0
    %3171 = vmatprep.subr.mxu0 0.0
    %3172 = vmatpush1.msra.mxu0 0.0
    %3173 = vmatprep.subr.mxu0 0.0
    %3174 = vmatpush1.msra.mxu0 0.0
    %3175 = vmatprep.subr.mxu0 0.0
    %3176 = vmatpush1.msra.mxu0 0.0
    %3177 = vmatprep.subr.mxu0 0.0
    %3178 = vmatpush1.msra.mxu0 0.0
    %3179 = vmatprep.subr.mxu0 0.0
    %3180 = vmatpush1.msra.mxu0 0.0
    %3181 = vmatprep.subr.mxu0 0.0
    %3182 = vmatpush1.msra.mxu0 0.0
    %3183 = vmatprep.subr.mxu0 0.0
    %3184 = vmatpush1.msra.mxu0 0.0
    %3185 = vmatprep.subr.mxu0 0.0
    %3186 = vmatpush1.msra.mxu0 0.0
    %3187 = vmatprep.subr.mxu0 0.0
    %3188 = vmatpush1.msra.mxu0 %v3155
    %3189 = vmatprep.subr.mxu0 0.0
    %3190 = vmatpush2.msra.mxu0 0.0
    %3191 = vmatprep.subr.mxu0 0.0
    %3192 = vmatpush2.msra.mxu0 0.0
    %3193 = vmatprep.subr.mxu0 0.0
    %3194 = vmatpush2.msra.mxu0 0.0
    %3195 = vmatprep.subr.mxu0 0.0
    %3196 = vmatpush2.msra.mxu0 0.0
    %3197 = vmatprep.subr.mxu0 0.0
    %3198 = vmatpush2.msra.mxu0 0.0
    %3199 = vmatprep.subr.mxu0 0.0
    %3200 = vmatpush2.msra.mxu0 0.0
    %3201 = vmatprep.subr.mxu0 0.0
    %3202 = vmatpush2.msra.mxu0 0.0
    %3203 = vmatprep.subr.mxu0 0.0
    %3204 = vmatpush2.msra.mxu0 0.0
    %3205 = vmatprep.subr.mxu0 0.0
    %3206 = vmatpush2.msra.mxu0 0.0
    %3207 = vmatprep.subr.mxu0 0.0
    %3208 = vmatpush2.msra.mxu0 0.0
    %3209 = vmatprep.subr.mxu0 0.0
    %3210 = vmatpush2.msra.mxu0 0.0
    %3211 = vmatprep.subr.mxu0 0.0
    %3212 = vmatpush2.msra.mxu0 0.0
    %3213 = vmatprep.subr.mxu0 0.0
    %3214 = vmatpush2.msra.mxu0 0.0
    %3215 = vmatprep.subr.mxu0 0.0
    %3216 = vmatpush2.msra.mxu0 0.0
    %3217 = vmatprep.subr.mxu0 0.0
    %3218 = vmatpush2.msra.mxu0 0.0
    %3219 = vmatprep.subr.mxu0 0.0
    %3220 = vmatpush2.msra.mxu0 0.0
    %3221 = vmatprep.mubr.f32.mxu0 0.0
    %3222 = vmatmul.mubr.f32.gmra.mxu0 %v3150
    %v3223 = vpop.f32.mrf.mxu0
    %v3224 = vadd.f32 %v3148, %v3223
    %v3225 = vpop.f32.mrf.mxu0
    %3226 = vmatprep.mubr.f32.mxu0 0.0
    %3227 = vmatmul.mubr.f32.gmra.mxu0 %v3153
    %v3228 = vpop.f32.mrf.mxu0
    %v3229 = vadd.f32 %v3148, %v3228
    %v3230 = vpop.f32.mrf.mxu0
    %3231 = vdwg.mxu0
    %v3232 = vsel %vm470, %v3224, 0.0
    %v3233 = vsel %vm470, %v3229, 0.0
    %v3234 = vadd.f32 %v3232, %v3233
    %v3235 = vrot.slane %v3234, 4
    %v3236 = vadd.f32 %v3234, %v3235
    %v3237 = vrot.slane %v3236, 2
    %v3238 = vadd.f32 %v3236, %v3237
    %v3239 = vrot.slane %v3238, 1
    %v3240 = vadd.f32 %v3238, %v3239
    %v3241 = vmul.f32 %v3240, 0.0625
    %v3242 = vmul.f32 %v3224, %v3224
    %v3243 = vmul.f32 %v3229, %v3229
    %v3244 = vsel %vm470, %v3242, 0.0
    %v3245 = vsel %vm470, %v3243, 0.0
    %v3246 = vadd.f32 %v3244, %v3245
    %v3247 = vrot.slane %v3246, 4
    %v3248 = vadd.f32 %v3246, %v3247
    %v3249 = vrot.slane %v3248, 2
    %v3250 = vadd.f32 %v3248, %v3249
    %v3251 = vrot.slane %v3250, 1
    %v3252 = vadd.f32 %v3250, %v3251
    %v3253 = vmul.f32 %v3252, 0.0625
    %v3254 = vmul.f32 %v3241, %v3241
    %v3255 = vsub.f32 %v3253, %v3254
    %v3256 = vmax.f32 %v3255, 0.0
    %v3257 = vsub.f32 %v3224, %v3241
    %v3258 = vsub.f32 %v3229, %v3241
    %v3259 = vadd.f32 %v3256, 1e-05
    %v3260 = vrsqrt.pop %v3259
    %v3261 = vmul.f32 %v3257, %v3260
    %v3262 = vmul.f32 %v3258, %v3260
    %vm3263 = vcmp.ge.f32.partialorder %v3261, 0.0
    %vm3264 = vcmp.ge.f32.partialorder %v3262, 0.0
    %v3265 = vlaneseq
    %v3266 = vshrl.u32 %v3265, 7
    %v3267 = vsub.s32 2, %v3266
    %v3268 = vrot.slane %v2418, %v3267
    %v3269 = vmul.f32 %v3268, %v3261
    %v3270 = vmul.f32 %v3268, %v3262
    %v3271 = vsel %vm3263, %v3261, %v3269
    %v3272 = vsel %vm3264, %v3262, %v3270
    %v3273 = vlaneseq
    %v3274 = vshrl.u32 %v3273, 7
    %v3275 = vsub.s32 1, %v3274
    %v3276 = vrot.slane %v2205, %v3275
    %v3278 = vsel %vm470, %v2756, 0
    %v3281 = vsel %vm470, %v2757, 0
    %v3284 = vsel %vm470, %v3015, 0
    %v3287 = vsel %vm470, %v3016, 0
    %v3290 = vsel %vm470, %v3271, 0
    %v3293 = vsel %vm470, %v3272, 0
    %3295 = vmatprep.subr.mxu0 0.0
    %3296 = vmatpush1.msra.mxu0 0.0
    %3297 = vmatprep.subr.mxu0 0.0
    %3298 = vmatpush1.msra.mxu0 0.0
    %3299 = vmatprep.subr.mxu0 0.0
    %3300 = vmatpush1.msra.mxu0 0.0
    %3301 = vmatprep.subr.mxu0 0.0
    %3302 = vmatpush1.msra.mxu0 0.0
    %3303 = vmatprep.subr.mxu0 0.0
    %3304 = vmatpush1.msra.mxu0 0.0
    %3305 = vmatprep.subr.mxu0 0.0
    %3306 = vmatpush1.msra.mxu0 0.0
    %3307 = vmatprep.subr.mxu0 0.0
    %3308 = vmatpush1.msra.mxu0 0.0
    %3309 = vmatprep.subr.mxu0 0.0
    %3310 = vmatpush1.msra.mxu0 0.0
    %3311 = vmatprep.subr.mxu0 0.0
    %3312 = vmatpush1.msra.mxu0 0.0
    %3313 = vmatprep.subr.mxu0 0.0
    %3314 = vmatpush1.msra.mxu0 0.0
    %3315 = vmatprep.subr.mxu0 0.0
    %3316 = vmatpush1.msra.mxu0 0.0
    %3317 = vmatprep.subr.mxu0 0.0
    %3318 = vmatpush1.msra.mxu0 0.0
    %3319 = vmatprep.subr.mxu0 0.0
    %3320 = vmatpush1.msra.mxu0 %v2204
    %3321 = vmatprep.subr.mxu0 0.0
    %3322 = vmatpush1.msra.mxu0 %v2203
    %3323 = vmatprep.subr.mxu0 0.0
    %3324 = vmatpush1.msra.mxu0 %v2202
    %3325 = vmatprep.subr.mxu0 0.0
    %3326 = vmatpush1.msra.mxu0 %v2201
    %3327 = vmatprep.subr.mxu0 0.0
    %3328 = vmatpush2.msra.mxu0 0.0
    %3329 = vmatprep.subr.mxu0 0.0
    %3330 = vmatpush2.msra.mxu0 0.0
    %3331 = vmatprep.subr.mxu0 0.0
    %3332 = vmatpush2.msra.mxu0 0.0
    %3333 = vmatprep.subr.mxu0 0.0
    %3334 = vmatpush2.msra.mxu0 0.0
    %3335 = vmatprep.subr.mxu0 0.0
    %3336 = vmatpush2.msra.mxu0 0.0
    %3337 = vmatprep.subr.mxu0 0.0
    %3338 = vmatpush2.msra.mxu0 0.0
    %3339 = vmatprep.subr.mxu0 0.0
    %3340 = vmatpush2.msra.mxu0 0.0
    %3341 = vmatprep.subr.mxu0 0.0
    %3342 = vmatpush2.msra.mxu0 0.0
    %3343 = vmatprep.subr.mxu0 0.0
    %3344 = vmatpush2.msra.mxu0 0.0
    %3345 = vmatprep.subr.mxu0 0.0
    %3346 = vmatpush2.msra.mxu0 0.0
    %3347 = vmatprep.subr.mxu0 0.0
    %3348 = vmatpush2.msra.mxu0 0.0
    %3349 = vmatprep.subr.mxu0 0.0
    %3350 = vmatpush2.msra.mxu0 0.0
    %3351 = vmatprep.subr.mxu0 0.0
    %3352 = vmatpush2.msra.mxu0 0.0
    %3353 = vmatprep.subr.mxu0 0.0
    %3354 = vmatpush2.msra.mxu0 0.0
    %3355 = vmatprep.subr.mxu0 0.0
    %3356 = vmatpush2.msra.mxu0 0.0
    %3357 = vmatprep.subr.mxu0 0.0
    %3358 = vmatpush2.msra.mxu0 0.0
    %3359 = vmatprep.mubr.f32.mxu0 0.0
    %3360 = vmatmul.mubr.f32.gmra.mxu0 %v3278
    %v3361 = vpop.f32.mrf.mxu0
    %v3362 = vadd.f32 %v3276, %v3361
    %v3363 = vpop.f32.mrf.mxu0
    %3364 = vmatprep.mubr.f32.mxu0 0.0
    %3365 = vmatmul.mubr.f32.gmra.mxu0 %v3281
    %v3366 = vpop.f32.mrf.mxu0
    %v3367 = vadd.f32 %v3276, %v3366
    %v3368 = vpop.f32.mrf.mxu0
    %3369 = vmatprep.mubr.f32.mxu0 0.0
    %3370 = vmatmul.mubr.f32.gmra.mxu0 %v3284
    %v3371 = vpop.f32.mrf.mxu0
    %v3372 = vadd.f32 %v3276, %v3371
    %v3373 = vpop.f32.mrf.mxu0
    %3374 = vmatprep.mubr.f32.mxu0 0.0
    %3375 = vmatmul.mubr.f32.gmra.mxu0 %v3287
    %v3376 = vpop.f32.mrf.mxu0
    %v3377 = vadd.f32 %v3276, %v3376
    %v3378 = vpop.f32.mrf.mxu0
    %3379 = vmatprep.mubr.f32.mxu0 0.0
    %3380 = vmatmul.mubr.f32.gmra.mxu0 %v3290
    %v3381 = vpop.f32.mrf.mxu0
    %v3382 = vadd.f32 %v3276, %v3381
    %v3383 = vpop.f32.mrf.mxu0
    %3384 = vmatprep.mubr.f32.mxu0 0.0
    %3385 = vmatmul.mubr.f32.gmra.mxu0 %v3293
    %v3386 = vpop.f32.mrf.mxu0
    %v3387 = vadd.f32 %v3276, %v3386
    %v3388 = vpop.f32.mrf.mxu0
    %3389 = vdwg.mxu0
    %v3390 = vtanh.pop %v3362
    %v3391 = vtanh.pop %v3367
    %v3392 = vtanh.pop %v3372
    %v3393 = vtanh.pop %v3377
    %v3394 = vtanh.pop %v3382
    %v3395 = vtanh.pop %v3387
    %v3396 = vsel %vm470, %v3390, 0.0
    %v3397 = vsel %vm470, %v3391, 0.0
    %v3398 = vadd.f32 %v3396, %v3397
    %v3399 = vrot.slane %v3398, 4
    %v3400 = vadd.f32 %v3398, %v3399
    %v3401 = vrot.slane %v3400, 2
    %v3402 = vadd.f32 %v3400, %v3401
    %v3403 = vrot.slane %v3402, 1
    %v3404 = vadd.f32 %v3402, %v3403
    %v3405 = vmul.f32 %v3404, %v2339
    %v3406 = vsel %vm470, %v3392, 0.0
    %v3407 = vsel %vm470, %v3393, 0.0
    %v3408 = vadd.f32 %v3406, %v3407
    %v3409 = vrot.slane %v3408, 4
    %v3410 = vadd.f32 %v3408, %v3409
    %v3411 = vrot.slane %v3410, 2
    %v3412 = vadd.f32 %v3410, %v3411
    %v3413 = vrot.slane %v3412, 1
    %v3414 = vadd.f32 %v3412, %v3413
    %v3415 = vmul.f32 %v3414, %v2339
    %v3416 = vsel %vm470, %v3394, 0.0
    %v3417 = vsel %vm470, %v3395, 0.0
    %v3418 = vadd.f32 %v3416, %v3417
    %v3419 = vrot.slane %v3418, 4
    %v3420 = vadd.f32 %v3418, %v3419
    %v3421 = vrot.slane %v3420, 2
    %v3422 = vadd.f32 %v3420, %v3421
    %v3423 = vrot.slane %v3422, 1
    %v3424 = vadd.f32 %v3422, %v3423
    %v3425 = vmul.f32 %v3424, %v2339
    %v3426 = vsel %vm2361, %v3405, %v3415
    %v3427 = vsel %vm1484, %v3426, %v3425
    %v3428 = vlaneseq
    %v3429 = vshrl.u32 %v3428, 7
    %v3430 = vsub.s32 1, %v3429
    %v3431 = vrot.slane %v2206, %v3430
    %v3432 = vmul.f32 %v3427, %v3431
    %v3433 = vsel %vm2369, %v3432, 0.0
    %3434 = vadd.xlane.f32.xlu0 %v3433
    %v3435 = vpop.xlane.xlu0 %3434
    %v3436 = vsel %vm2373, %v3435, -inf
    %v3437 = vrot.slane %v3436, 4
    %v3438 = vmax.f32 %v3436, %v3437
    %v3439 = vrot.slane %v3438, 2
    %v3440 = vmax.f32 %v3438, %v3439
    %v3441 = vrot.slane %v3440, 1
    %v3442 = vmax.f32 %v3440, %v3441
    %v3443 = vsub.f32 %v3435, %v3442
    %v3444 = vmul.f32 %v3443, 1.442695
    %v3445 = vpow.pop %v3444
    %v3446 = vsel %vm2373, %v3445, 0.0
    %v3447 = vrot.slane %v3446, 4
    %v3448 = vadd.f32 %v3446, %v3447
    %v3449 = vrot.slane %v3448, 2
    %v3450 = vadd.f32 %v3448, %v3449
    %v3451 = vrot.slane %v3450, 1
    %v3452 = vadd.f32 %v3450, %v3451
    %v3453 = vrcp.pop %v3452
    %v3454 = vmul.f32 %v3445, %v3453
    %v3455 = vlaneseq
    %v3456 = vshrl.u32 %v3455, 7
    %v3457 = vsub.s32 0, %v3456
    %v3458 = vrot.slane %v3454, %v3457
    %v3459 = vmul.f32 %v3458, %v2756
    %v3460 = vmul.f32 %v3458, %v2757
    %v3461 = vlaneseq
    %v3462 = vshrl.u32 %v3461, 7
    %v3463 = vsub.s32 1, %v3462
    %v3464 = vrot.slane %v3454, %v3463
    %v3465 = vmul.f32 %v3464, %v3015
    %v3466 = vmul.f32 %v3464, %v3016
    %v3467 = vadd.f32 %v3459, %v3465
    %v3468 = vadd.f32 %v3460, %v3466
    %v3469 = vlaneseq
    %v3470 = vshrl.u32 %v3469, 7
    %v3471 = vsub.s32 2, %v3470
    %v3472 = vrot.slane %v3454, %v3471
    %v3473 = vmul.f32 %v3472, %v3271
    %v3474 = vmul.f32 %v3472, %v3272
    %v3475 = vadd.f32 %v3467, %v3473
    %v3476 = vadd.f32 %v3468, %v3474
    %v3477 = vld [vmem:[%s2] sm:$0xff]
    %v3478 = vld [vmem:[%s2 + $0x8] sm:$0xff]
    %v3479 = vld [vmem:[%s2 + $0x10] sm:$0xff]
    %v3480 = vld [vmem:[%s2 + $0x18] sm:$0xff]
    %v3481 = vld [vmem:[%s2 + $0x20] sm:$0xff]
    %v3482 = vld [vmem:[%s2 + $0x28] sm:$0xff]
    %v3483 = vld [vmem:[%s2 + $0x30] sm:$0xff]
    %v3484 = vld [vmem:[%s2 + $0x38] sm:$0xff]
    %v3485 = vld [vmem:[%s2 + $0x40] sm:$0xff]
    %v3486 = vld [vmem:[%s2 + $0x48] sm:$0xff]
    %v3487 = vld [vmem:[%s2 + $0x50] sm:$0xff]
    %v3488 = vld [vmem:[%s2 + $0x58] sm:$0xff]
    %v3489 = vld [vmem:[%s2 + $0x60] sm:$0xff]
    %v3490 = vld [vmem:[%s2 + $0x68] sm:$0xff]
    %v3491 = vld [vmem:[%s2 + $0x70] sm:$0xff]
    %v3492 = vld [vmem:[%s2 + $0x78] sm:$0xff]
    %v3493 = vld [vmem:[%s2 + $0x80] sm:$0xff]
    %v3494 = vld [vmem:[%s2 + $0x88] sm:$0xff]
    %v3495 = vld [vmem:[%s2 + $0x90] sm:$0xff]
    %v3496 = vld [vmem:[%s2 + $0x98] sm:$0xff]
    %v3497 = vld [vmem:[%s2 + $0xa0] sm:$0xff]
    %v3498 = vld [vmem:[%s2 + $0xa8] sm:$0xff]
    %v3499 = vld [vmem:[%s2 + $0xb0] sm:$0xff]
    %v3500 = vld [vmem:[%s2 + $0xb8] sm:$0xff]
    %v3501 = vld [vmem:[%s2 + $0xc0] sm:$0xff]
    %v3502 = vld [vmem:[%s2 + $0xc8] sm:$0xff]
    %v3503 = vld [vmem:[%s2 + $0xd0] sm:$0xff]
    %v3504 = vld [vmem:[%s2 + $0xd8] sm:$0xff]
    %v3505 = vld [vmem:[%s2 + $0xe0] sm:$0xff]
    %v3506 = vld [vmem:[%s2 + $0xe8] sm:$0xff]
    %v3507 = vld [vmem:[%s2 + $0xf0] sm:$0xff]
    %v3508 = vld [vmem:[%s2 + $0xf8] sm:$0xff]
    %s3509 = scalar_lea.vmem %s2, 256
    %v3510 = vld [vmem:[%s3509] ss:$8 sm:$0xf]
    %v3511 = vld [vmem:[%s3509] ss:$8 sm:$0xf0]
    %v3512 = vor.u32 %v3510, %v3511
    %v3514 = vlaneseq
    %v3515 = vshrl.u32 %v3514, 7
    %v3516 = vsub.s32 0, %v3515
    %v3517 = vrot.slane %v3512, %v3516
    %v3518 = vlaneseq
    %v3519 = vshrl.u32 %v3518, 7
    %v3520 = vsub.s32 1, %v3519
    %v3521 = vrot.slane %v3512, %v3520
    %v3522 = vlaneseq
    %v3523 = vshrl.u32 %v3522, 7
    %v3524 = vsub.s32 2, %v3523
    %v3525 = vrot.slane %v3512, %v3524
    %v3526 = vlaneseq
    %v3527 = vshrl.u32 %v3526, 7
    %v3528 = vsub.s32 3, %v3527
    %v3529 = vrot.slane %v3512, %v3528
    %v3530 = vlaneseq
    %v3531 = vshrl.u32 %v3530, 7
    %v3532 = vsub.s32 4, %v3531
    %v3533 = vrot.slane %v3512, %v3532
    %v3534 = vlaneseq
    %v3535 = vshrl.u32 %v3534, 7
    %v3536 = vsub.s32 5, %v3535
    %v3537 = vrot.slane %v3512, %v3536
    %v3538 = vlaneseq
    %v3539 = vshrl.u32 %v3538, 7
    %v3540 = vsub.s32 6, %v3539
    %v3541 = vrot.slane %v3512, %v3540
    %v3542 = vlaneseq
    %v3543 = vshrl.u32 %v3542, 7
    %v3544 = vsub.s32 7, %v3543
    %v3545 = vrot.slane %v3512, %v3544
    %v3555 = vsel %vm470, %v3475, 0
    %v3558 = vsel %vm470, %v3476, 0
    %v3561 = vsel %vm470, %v2413, 0
    %v3564 = vsel %vm470, %v2414, 0
    %3566 = vmatprep.subr.mxu0 0.0
    %3567 = vmatpush1.msra.mxu0 0.0
    %3568 = vmatprep.subr.mxu0 0.0
    %3569 = vmatpush1.msra.mxu0 0.0
    %3570 = vmatprep.subr.mxu0 0.0
    %3571 = vmatpush1.msra.mxu0 0.0
    %3572 = vmatprep.subr.mxu0 0.0
    %3573 = vmatpush1.msra.mxu0 0.0
    %3574 = vmatprep.subr.mxu0 0.0
    %3575 = vmatpush1.msra.mxu0 0.0
    %3576 = vmatprep.subr.mxu0 0.0
    %3577 = vmatpush1.msra.mxu0 0.0
    %3578 = vmatprep.subr.mxu0 0.0
    %3579 = vmatpush1.msra.mxu0 0.0
    %3580 = vmatprep.subr.mxu0 0.0
    %3581 = vmatpush1.msra.mxu0 0.0
    %3582 = vmatprep.subr.mxu0 0.0
    %3583 = vmatpush1.msra.mxu0 0.0
    %3584 = vmatprep.subr.mxu0 0.0
    %3585 = vmatpush1.msra.mxu0 0.0
    %3586 = vmatprep.subr.mxu0 0.0
    %3587 = vmatpush1.msra.mxu0 0.0
    %3588 = vmatprep.subr.mxu0 0.0
    %3589 = vmatpush1.msra.mxu0 0.0
    %3590 = vmatprep.subr.mxu0 %v3502
    %3591 = vmatpush1.msra.mxu0 %v3501
    %3592 = vmatprep.subr.mxu0 %v3494
    %3593 = vmatpush1.msra.mxu0 %v3493
    %3594 = vmatprep.subr.mxu0 %v3486
    %3595 = vmatpush1.msra.mxu0 %v3485
    %3596 = vmatprep.subr.mxu0 %v3478
    %3597 = vmatpush1.msra.mxu0 %v3477
    %3598 = vmatprep.subr.mxu0 0.0
    %3599 = vmatpush2.msra.mxu0 0.0
    %3600 = vmatprep.subr.mxu0 0.0
    %3601 = vmatpush2.msra.mxu0 0.0
    %3602 = vmatprep.subr.mxu0 0.0
    %3603 = vmatpush2.msra.mxu0 0.0
    %3604 = vmatprep.subr.mxu0 0.0
    %3605 = vmatpush2.msra.mxu0 0.0
    %3606 = vmatprep.subr.mxu0 0.0
    %3607 = vmatpush2.msra.mxu0 0.0
    %3608 = vmatprep.subr.mxu0 0.0
    %3609 = vmatpush2.msra.mxu0 0.0
    %3610 = vmatprep.subr.mxu0 0.0
    %3611 = vmatpush2.msra.mxu0 0.0
    %3612 = vmatprep.subr.mxu0 0.0
    %3613 = vmatpush2.msra.mxu0 0.0
    %3614 = vmatprep.subr.mxu0 0.0
    %3615 = vmatpush2.msra.mxu0 0.0
    %3616 = vmatprep.subr.mxu0 0.0
    %3617 = vmatpush2.msra.mxu0 0.0
    %3618 = vmatprep.subr.mxu0 0.0
    %3619 = vmatpush2.msra.mxu0 0.0
    %3620 = vmatprep.subr.mxu0 0.0
    %3621 = vmatpush2.msra.mxu0 0.0
    %3622 = vmatprep.subr.mxu0 0.0
    %3623 = vmatpush2.msra.mxu0 0.0
    %3624 = vmatprep.subr.mxu0 0.0
    %3625 = vmatpush2.msra.mxu0 0.0
    %3626 = vmatprep.subr.mxu0 0.0
    %3627 = vmatpush2.msra.mxu0 0.0
    %3628 = vmatprep.subr.mxu0 0.0
    %3629 = vmatpush2.msra.mxu0 0.0
    %3630 = vmatprep.mubr.f32.mxu0 0.0
    %3631 = vmatmul.mubr.f32.gmra.mxu0 %v3555
    %v3632 = vpop.f32.mrf.mxu0
    %v3633 = vadd.f32 %v3517, %v3632
    %v3634 = vpop.f32.mrf.mxu0
    %v3635 = vadd.f32 %v3521, %v3634
    %3636 = vmatprep.mubr.f32.mxu0 0.0
    %3637 = vmatmul.mubr.f32.gmra.mxu0 %v3558
    %v3638 = vpop.f32.mrf.mxu0
    %v3639 = vadd.f32 %v3517, %v3638
    %v3640 = vpop.f32.mrf.mxu0
    %v3641 = vadd.f32 %v3521, %v3640
    %3642 = vmatprep.mubr.f32.mxu0 0.0
    %3643 = vmatmul.mubr.f32.gmra.mxu0 %v3561
    %v3644 = vpop.f32.mrf.mxu0
    %v3645 = vadd.f32 %v3517, %v3644
    %v3646 = vpop.f32.mrf.mxu0
    %v3647 = vadd.f32 %v3521, %v3646
    %3648 = vmatprep.mubr.f32.mxu0 0.0
    %3649 = vmatmul.mubr.f32.gmra.mxu0 %v3564
    %v3650 = vpop.f32.mrf.mxu0
    %v3651 = vadd.f32 %v3517, %v3650
    %v3652 = vpop.f32.mrf.mxu0
    %v3653 = vadd.f32 %v3521, %v3652
    %3654 = vmatprep.mubr.f32.mxu0 0.0
    %3655 = vmatmul.mubr.f32.gmra.mxu0 %v3284
    %v3656 = vpop.f32.mrf.mxu0
    %v3657 = vpop.f32.mrf.mxu0
    %3658 = vmatprep.mubr.f32.mxu0 0.0
    %3659 = vmatmul.mubr.f32.gmra.mxu0 %v3287
    %v3660 = vpop.f32.mrf.mxu0
    %v3661 = vpop.f32.mrf.mxu0
    %3662 = vmatprep.mubr.f32.mxu0 0.0
    %3663 = vmatmul.mubr.f32.gmra.mxu0 %v3278
    %v3664 = vpop.f32.mrf.mxu0
    %v3665 = vpop.f32.mrf.mxu0
    %3666 = vmatprep.mubr.f32.mxu0 0.0
    %3667 = vmatmul.mubr.f32.gmra.mxu0 %v3281
    %v3668 = vpop.f32.mrf.mxu0
    %v3669 = vpop.f32.mrf.mxu0
    %3670 = vmatprep.mubr.f32.mxu0 0.0
    %3671 = vmatmul.mubr.f32.gmra.mxu0 %v3290
    %v3672 = vpop.f32.mrf.mxu0
    %v3673 = vpop.f32.mrf.mxu0
    %3674 = vmatprep.mubr.f32.mxu0 0.0
    %3675 = vmatmul.mubr.f32.gmra.mxu0 %v3293
    %v3676 = vpop.f32.mrf.mxu0
    %v3677 = vpop.f32.mrf.mxu0
    %3678 = vdwg.mxu0
    %3679 = vmatprep.subr.mxu0 0.0
    %3680 = vmatpush1.msra.mxu0 0.0
    %3681 = vmatprep.subr.mxu0 0.0
    %3682 = vmatpush1.msra.mxu0 0.0
    %3683 = vmatprep.subr.mxu0 0.0
    %3684 = vmatpush1.msra.mxu0 0.0
    %3685 = vmatprep.subr.mxu0 0.0
    %3686 = vmatpush1.msra.mxu0 0.0
    %3687 = vmatprep.subr.mxu0 0.0
    %3688 = vmatpush1.msra.mxu0 0.0
    %3689 = vmatprep.subr.mxu0 0.0
    %3690 = vmatpush1.msra.mxu0 0.0
    %3691 = vmatprep.subr.mxu0 0.0
    %3692 = vmatpush1.msra.mxu0 0.0
    %3693 = vmatprep.subr.mxu0 0.0
    %3694 = vmatpush1.msra.mxu0 0.0
    %3695 = vmatprep.subr.mxu0 0.0
    %3696 = vmatpush1.msra.mxu0 0.0
    %3697 = vmatprep.subr.mxu0 0.0
    %3698 = vmatpush1.msra.mxu0 0.0
    %3699 = vmatprep.subr.mxu0 0.0
    %3700 = vmatpush1.msra.mxu0 0.0
    %3701 = vmatprep.subr.mxu0 0.0
    %3702 = vmatpush1.msra.mxu0 0.0
    %3703 = vmatprep.subr.mxu0 %v3504
    %3704 = vmatpush1.msra.mxu0 %v3503
    %3705 = vmatprep.subr.mxu0 %v3496
    %3706 = vmatpush1.msra.mxu0 %v3495
    %3707 = vmatprep.subr.mxu0 %v3488
    %3708 = vmatpush1.msra.mxu0 %v3487
    %3709 = vmatprep.subr.mxu0 %v3480
    %3710 = vmatpush1.msra.mxu0 %v3479
    %3711 = vmatprep.subr.mxu0 0.0
    %3712 = vmatpush2.msra.mxu0 0.0
    %3713 = vmatprep.subr.mxu0 0.0
    %3714 = vmatpush2.msra.mxu0 0.0
    %3715 = vmatprep.subr.mxu0 0.0
    %3716 = vmatpush2.msra.mxu0 0.0
    %3717 = vmatprep.subr.mxu0 0.0
    %3718 = vmatpush2.msra.mxu0 0.0
    %3719 = vmatprep.subr.mxu0 0.0
    %3720 = vmatpush2.msra.mxu0 0.0
    %3721 = vmatprep.subr.mxu0 0.0
    %3722 = vmatpush2.msra.mxu0 0.0
    %3723 = vmatprep.subr.mxu0 0.0
    %3724 = vmatpush2.msra.mxu0 0.0
    %3725 = vmatprep.subr.mxu0 0.0
    %3726 = vmatpush2.msra.mxu0 0.0
    %3727 = vmatprep.subr.mxu0 0.0
    %3728 = vmatpush2.msra.mxu0 0.0
    %3729 = vmatprep.subr.mxu0 0.0
    %3730 = vmatpush2.msra.mxu0 0.0
    %3731 = vmatprep.subr.mxu0 0.0
    %3732 = vmatpush2.msra.mxu0 0.0
    %3733 = vmatprep.subr.mxu0 0.0
    %3734 = vmatpush2.msra.mxu0 0.0
    %3735 = vmatprep.subr.mxu0 0.0
    %3736 = vmatpush2.msra.mxu0 0.0
    %3737 = vmatprep.subr.mxu0 0.0
    %3738 = vmatpush2.msra.mxu0 0.0
    %3739 = vmatprep.subr.mxu0 0.0
    %3740 = vmatpush2.msra.mxu0 0.0
    %3741 = vmatprep.subr.mxu0 0.0
    %3742 = vmatpush2.msra.mxu0 0.0
    %3743 = vmatprep.mubr.f32.mxu0 0.0
    %3744 = vmatmul.mubr.f32.gmra.mxu0 %v3555
    %v3745 = vpop.f32.mrf.mxu0
    %v3746 = vpop.f32.mrf.mxu0
    %3747 = vmatprep.mubr.f32.mxu0 0.0
    %3748 = vmatmul.mubr.f32.gmra.mxu0 %v3558
    %v3749 = vpop.f32.mrf.mxu0
    %v3750 = vpop.f32.mrf.mxu0
    %3751 = vmatprep.mubr.f32.mxu0 0.0
    %3752 = vmatmul.mubr.f32.gmra.mxu0 %v3561
    %v3753 = vpop.f32.mrf.mxu0
    %v3754 = vpop.f32.mrf.mxu0
    %3755 = vmatprep.mubr.f32.mxu0 0.0
    %3756 = vmatmul.mubr.f32.gmra.mxu0 %v3564
    %v3757 = vpop.f32.mrf.mxu0
    %v3758 = vpop.f32.mrf.mxu0
    %3759 = vmatprep.mubr.f32.mxu0 0.0
    %3760 = vmatmul.mubr.f32.gmra.mxu0 %v3284
    %v3761 = vpop.f32.mrf.mxu0
    %v3762 = vadd.f32 %v3525, %v3761
    %v3763 = vpop.f32.mrf.mxu0
    %v3764 = vadd.f32 %v3529, %v3763
    %3765 = vmatprep.mubr.f32.mxu0 0.0
    %3766 = vmatmul.mubr.f32.gmra.mxu0 %v3287
    %v3767 = vpop.f32.mrf.mxu0
    %v3768 = vadd.f32 %v3525, %v3767
    %v3769 = vpop.f32.mrf.mxu0
    %v3770 = vadd.f32 %v3529, %v3769
    %3771 = vmatprep.mubr.f32.mxu0 0.0
    %3772 = vmatmul.mubr.f32.gmra.mxu0 %v3278
    %v3773 = vpop.f32.mrf.mxu0
    %v3774 = vpop.f32.mrf.mxu0
    %3775 = vmatprep.mubr.f32.mxu0 0.0
    %3776 = vmatmul.mubr.f32.gmra.mxu0 %v3281
    %v3777 = vpop.f32.mrf.mxu0
    %v3778 = vpop.f32.mrf.mxu0
    %3779 = vmatprep.mubr.f32.mxu0 0.0
    %3780 = vmatmul.mubr.f32.gmra.mxu0 %v3290
    %v3781 = vpop.f32.mrf.mxu0
    %v3782 = vpop.f32.mrf.mxu0
    %3783 = vmatprep.mubr.f32.mxu0 0.0
    %3784 = vmatmul.mubr.f32.gmra.mxu0 %v3293
    %v3785 = vpop.f32.mrf.mxu0
    %v3786 = vpop.f32.mrf.mxu0
    %3787 = vdwg.mxu0
    %3788 = vmatprep.subr.mxu0 0.0
    %3789 = vmatpush1.msra.mxu0 0.0
    %3790 = vmatprep.subr.mxu0 0.0
    %3791 = vmatpush1.msra.mxu0 0.0
    %3792 = vmatprep.subr.mxu0 0.0
    %3793 = vmatpush1.msra.mxu0 0.0
    %3794 = vmatprep.subr.mxu0 0.0
    %3795 = vmatpush1.msra.mxu0 0.0
    %3796 = vmatprep.subr.mxu0 0.0
    %3797 = vmatpush1.msra.mxu0 0.0
    %3798 = vmatprep.subr.mxu0 0.0
    %3799 = vmatpush1.msra.mxu0 0.0
    %3800 = vmatprep.subr.mxu0 0.0
    %3801 = vmatpush1.msra.mxu0 0.0
    %3802 = vmatprep.subr.mxu0 0.0
    %3803 = vmatpush1.msra.mxu0 0.0
    %3804 = vmatprep.subr.mxu0 0.0
    %3805 = vmatpush1.msra.mxu0 0.0
    %3806 = vmatprep.subr.mxu0 0.0
    %3807 = vmatpush1.msra.mxu0 0.0
    %3808 = vmatprep.subr.mxu0 0.0
    %3809 = vmatpush1.msra.mxu0 0.0
    %3810 = vmatprep.subr.mxu0 0.0
    %3811 = vmatpush1.msra.mxu0 0.0
    %3812 = vmatprep.subr.mxu0 %v3506
    %3813 = vmatpush1.msra.mxu0 %v3505
    %3814 = vmatprep.subr.mxu0 %v3498
    %3815 = vmatpush1.msra.mxu0 %v3497
    %3816 = vmatprep.subr.mxu0 %v3490
    %3817 = vmatpush1.msra.mxu0 %v3489
    %3818 = vmatprep.subr.mxu0 %v3482
    %3819 = vmatpush1.msra.mxu0 %v3481
    %3820 = vmatprep.subr.mxu0 0.0
    %3821 = vmatpush2.msra.mxu0 0.0
    %3822 = vmatprep.subr.mxu0 0.0
    %3823 = vmatpush2.msra.mxu0 0.0
    %3824 = vmatprep.subr.mxu0 0.0
    %3825 = vmatpush2.msra.mxu0 0.0
    %3826 = vmatprep.subr.mxu0 0.0
    %3827 = vmatpush2.msra.mxu0 0.0
    %3828 = vmatprep.subr.mxu0 0.0
    %3829 = vmatpush2.msra.mxu0 0.0
    %3830 = vmatprep.subr.mxu0 0.0
    %3831 = vmatpush2.msra.mxu0 0.0
    %3832 = vmatprep.subr.mxu0 0.0
    %3833 = vmatpush2.msra.mxu0 0.0
    %3834 = vmatprep.subr.mxu0 0.0
    %3835 = vmatpush2.msra.mxu0 0.0
    %3836 = vmatprep.subr.mxu0 0.0
    %3837 = vmatpush2.msra.mxu0 0.0
    %3838 = vmatprep.subr.mxu0 0.0
    %3839 = vmatpush2.msra.mxu0 0.0
    %3840 = vmatprep.subr.mxu0 0.0
    %3841 = vmatpush2.msra.mxu0 0.0
    %3842 = vmatprep.subr.mxu0 0.0
    %3843 = vmatpush2.msra.mxu0 0.0
    %3844 = vmatprep.subr.mxu0 0.0
    %3845 = vmatpush2.msra.mxu0 0.0
    %3846 = vmatprep.subr.mxu0 0.0
    %3847 = vmatpush2.msra.mxu0 0.0
    %3848 = vmatprep.subr.mxu0 0.0
    %3849 = vmatpush2.msra.mxu0 0.0
    %3850 = vmatprep.subr.mxu0 0.0
    %3851 = vmatpush2.msra.mxu0 0.0
    %3852 = vmatprep.mubr.f32.mxu0 0.0
    %3853 = vmatmul.mubr.f32.gmra.mxu0 %v3555
    %v3854 = vpop.f32.mrf.mxu0
    %v3855 = vpop.f32.mrf.mxu0
    %3856 = vmatprep.mubr.f32.mxu0 0.0
    %3857 = vmatmul.mubr.f32.gmra.mxu0 %v3558
    %v3858 = vpop.f32.mrf.mxu0
    %v3859 = vpop.f32.mrf.mxu0
    %3860 = vmatprep.mubr.f32.mxu0 0.0
    %3861 = vmatmul.mubr.f32.gmra.mxu0 %v3561
    %v3862 = vpop.f32.mrf.mxu0
    %v3863 = vpop.f32.mrf.mxu0
    %3864 = vmatprep.mubr.f32.mxu0 0.0
    %3865 = vmatmul.mubr.f32.gmra.mxu0 %v3564
    %v3866 = vpop.f32.mrf.mxu0
    %v3867 = vpop.f32.mrf.mxu0
    %3868 = vmatprep.mubr.f32.mxu0 0.0
    %3869 = vmatmul.mubr.f32.gmra.mxu0 %v3284
    %v3870 = vpop.f32.mrf.mxu0
    %v3871 = vpop.f32.mrf.mxu0
    %3872 = vmatprep.mubr.f32.mxu0 0.0
    %3873 = vmatmul.mubr.f32.gmra.mxu0 %v3287
    %v3874 = vpop.f32.mrf.mxu0
    %v3875 = vpop.f32.mrf.mxu0
    %3876 = vmatprep.mubr.f32.mxu0 0.0
    %3877 = vmatmul.mubr.f32.gmra.mxu0 %v3278
    %v3878 = vpop.f32.mrf.mxu0
    %v3879 = vadd.f32 %v3533, %v3878
    %v3880 = vpop.f32.mrf.mxu0
    %v3881 = vadd.f32 %v3537, %v3880
    %3882 = vmatprep.mubr.f32.mxu0 0.0
    %3883 = vmatmul.mubr.f32.gmra.mxu0 %v3281
    %v3884 = vpop.f32.mrf.mxu0
    %v3885 = vadd.f32 %v3533, %v3884
    %v3886 = vpop.f32.mrf.mxu0
    %v3887 = vadd.f32 %v3537, %v3886
    %3888 = vmatprep.mubr.f32.mxu0 0.0
    %3889 = vmatmul.mubr.f32.gmra.mxu0 %v3290
    %v3890 = vpop.f32.mrf.mxu0
    %v3891 = vpop.f32.mrf.mxu0
    %3892 = vmatprep.mubr.f32.mxu0 0.0
    %3893 = vmatmul.mubr.f32.gmra.mxu0 %v3293
    %v3894 = vpop.f32.mrf.mxu0
    %v3895 = vpop.f32.mrf.mxu0
    %3896 = vdwg.mxu0
    %3897 = vmatprep.subr.mxu0 0.0
    %3898 = vmatpush1.msra.mxu0 0.0
    %3899 = vmatprep.subr.mxu0 0.0
    %3900 = vmatpush1.msra.mxu0 0.0
    %3901 = vmatprep.subr.mxu0 0.0
    %3902 = vmatpush1.msra.mxu0 0.0
    %3903 = vmatprep.subr.mxu0 0.0
    %3904 = vmatpush1.msra.mxu0 0.0
    %3905 = vmatprep.subr.mxu0 0.0
    %3906 = vmatpush1.msra.mxu0 0.0
    %3907 = vmatprep.subr.mxu0 0.0
    %3908 = vmatpush1.msra.mxu0 0.0
    %3909 = vmatprep.subr.mxu0 0.0
    %3910 = vmatpush1.msra.mxu0 0.0
    %3911 = vmatprep.subr.mxu0 0.0
    %3912 = vmatpush1.msra.mxu0 0.0
    %3913 = vmatprep.subr.mxu0 0.0
    %3914 = vmatpush1.msra.mxu0 0.0
    %3915 = vmatprep.subr.mxu0 0.0
    %3916 = vmatpush1.msra.mxu0 0.0
    %3917 = vmatprep.subr.mxu0 0.0
    %3918 = vmatpush1.msra.mxu0 0.0
    %3919 = vmatprep.subr.mxu0 0.0
    %3920 = vmatpush1.msra.mxu0 0.0
    %3921 = vmatprep.subr.mxu0 %v3508
    %3922 = vmatpush1.msra.mxu0 %v3507
    %3923 = vmatprep.subr.mxu0 %v3500
    %3924 = vmatpush1.msra.mxu0 %v3499
    %3925 = vmatprep.subr.mxu0 %v3492
    %3926 = vmatpush1.msra.mxu0 %v3491
    %3927 = vmatprep.subr.mxu0 %v3484
    %3928 = vmatpush1.msra.mxu0 %v3483
    %3929 = vmatprep.subr.mxu0 0.0
    %3930 = vmatpush2.msra.mxu0 0.0
    %3931 = vmatprep.subr.mxu0 0.0
    %3932 = vmatpush2.msra.mxu0 0.0
    %3933 = vmatprep.subr.mxu0 0.0
    %3934 = vmatpush2.msra.mxu0 0.0
    %3935 = vmatprep.subr.mxu0 0.0
    %3936 = vmatpush2.msra.mxu0 0.0
    %3937 = vmatprep.subr.mxu0 0.0
    %3938 = vmatpush2.msra.mxu0 0.0
    %3939 = vmatprep.subr.mxu0 0.0
    %3940 = vmatpush2.msra.mxu0 0.0
    %3941 = vmatprep.subr.mxu0 0.0
    %3942 = vmatpush2.msra.mxu0 0.0
    %3943 = vmatprep.subr.mxu0 0.0
    %3944 = vmatpush2.msra.mxu0 0.0
    %3945 = vmatprep.subr.mxu0 0.0
    %3946 = vmatpush2.msra.mxu0 0.0
    %3947 = vmatprep.subr.mxu0 0.0
    %3948 = vmatpush2.msra.mxu0 0.0
    %3949 = vmatprep.subr.mxu0 0.0
    %3950 = vmatpush2.msra.mxu0 0.0
    %3951 = vmatprep.subr.mxu0 0.0
    %3952 = vmatpush2.msra.mxu0 0.0
    %3953 = vmatprep.subr.mxu0 0.0
    %3954 = vmatpush2.msra.mxu0 0.0
    %3955 = vmatprep.subr.mxu0 0.0
    %3956 = vmatpush2.msra.mxu0 0.0
    %3957 = vmatprep.subr.mxu0 0.0
    %3958 = vmatpush2.msra.mxu0 0.0
    %3959 = vmatprep.subr.mxu0 0.0
    %3960 = vmatpush2.msra.mxu0 0.0
    %3961 = vmatprep.mubr.f32.mxu0 0.0
    %3962 = vmatmul.mubr.f32.gmra.mxu0 %v3555
    %v3963 = vpop.f32.mrf.mxu0
    %v3964 = vpop.f32.mrf.mxu0
    %3965 = vmatprep.mubr.f32.mxu0 0.0
    %3966 = vmatmul.mubr.f32.gmra.mxu0 %v3558
    %v3967 = vpop.f32.mrf.mxu0
    %v3968 = vpop.f32.mrf.mxu0
    %3969 = vmatprep.mubr.f32.mxu0 0.0
    %3970 = vmatmul.mubr.f32.gmra.mxu0 %v3561
    %v3971 = vpop.f32.mrf.mxu0
    %v3972 = vpop.f32.mrf.mxu0
    %3973 = vmatprep.mubr.f32.mxu0 0.0
    %3974 = vmatmul.mubr.f32.gmra.mxu0 %v3564
    %v3975 = vpop.f32.mrf.mxu0
    %v3976 = vpop.f32.mrf.mxu0
    %3977 = vmatprep.mubr.f32.mxu0 0.0
    %3978 = vmatmul.mubr.f32.gmra.mxu0 %v3284
    %v3979 = vpop.f32.mrf.mxu0
    %v3980 = vpop.f32.mrf.mxu0
    %3981 = vmatprep.mubr.f32.mxu0 0.0
    %3982 = vmatmul.mubr.f32.gmra.mxu0 %v3287
    %v3983 = vpop.f32.mrf.mxu0
    %v3984 = vpop.f32.mrf.mxu0
    %3985 = vmatprep.mubr.f32.mxu0 0.0
    %3986 = vmatmul.mubr.f32.gmra.mxu0 %v3278
    %v3987 = vpop.f32.mrf.mxu0
    %v3988 = vpop.f32.mrf.mxu0
    %3989 = vmatprep.mubr.f32.mxu0 0.0
    %3990 = vmatmul.mubr.f32.gmra.mxu0 %v3281
    %v3991 = vpop.f32.mrf.mxu0
    %v3992 = vpop.f32.mrf.mxu0
    %3993 = vmatprep.mubr.f32.mxu0 0.0
    %3994 = vmatmul.mubr.f32.gmra.mxu0 %v3290
    %v3995 = vpop.f32.mrf.mxu0
    %v3996 = vadd.f32 %v3541, %v3995
    %v3997 = vpop.f32.mrf.mxu0
    %v3998 = vadd.f32 %v3545, %v3997
    %3999 = vmatprep.mubr.f32.mxu0 0.0
    %4000 = vmatmul.mubr.f32.gmra.mxu0 %v3293
    %v4001 = vpop.f32.mrf.mxu0
    %v4002 = vadd.f32 %v3541, %v4001
    %v4003 = vpop.f32.mrf.mxu0
    %v4004 = vadd.f32 %v3545, %v4003
    %4005 = vdwg.mxu0
    %v4006 = vld [vmem:[%s1 + $0x270] sm:$0xff]
    %v4007 = vld [vmem:[%s1 + $0x278] sm:$0xff]
    %v4008 = vld [vmem:[%s1 + $0x280] sm:$0xff]
    %v4009 = vld [vmem:[%s1 + $0x288] sm:$0xff]
    %v4010 = vld [vmem:[%s1 + $0x290] sm:$0xff]
    %v4011 = vld [vmem:[%s1 + $0x298] sm:$0xff]
    %v4012 = vld [vmem:[%s1 + $0x2a0] sm:$0xff]
    %v4013 = vld [vmem:[%s1 + $0x2a8] sm:$0xff]
    %v4014 = vld [vmem:[%s1 + $0x2b0] sm:$0xff]
    %v4015 = vld [vmem:[%s1 + $0x2b8] sm:$0xff]
    %v4016 = vld [vmem:[%s1 + $0x2c0] sm:$0xff]
    %v4017 = vld [vmem:[%s1 + $0x2c8] sm:$0xff]
    %v4018 = vld [vmem:[%s1 + $0x2d0] sm:$0xff]
    %v4019 = vld [vmem:[%s1 + $0x2d8] sm:$0xff]
    %v4020 = vld [vmem:[%s1 + $0x2e0] sm:$0xff]
    %v4021 = vld [vmem:[%s1 + $0x2e8] sm:$0xff]
    %v4022 = vld [vmem:[%s1 + $0x2f0] sm:$0xff]
    %v4023 = vld [vmem:[%s1 + $0x2f8] sm:$0xff]
    %v4024 = vld [vmem:[%s1 + $0x300] sm:$0xff]
    %v4025 = vld [vmem:[%s1 + $0x308] sm:$0xff]
    %v4026 = vld [vmem:[%s1 + $0x310] sm:$0xff]
    %v4027 = vld [vmem:[%s1 + $0x318] sm:$0xff]
    %v4028 = vld [vmem:[%s1 + $0x320] sm:$0xff]
    %v4029 = vld [vmem:[%s1 + $0x328] sm:$0xff]
    %v4030 = vld [vmem:[%s1 + $0x330] sm:$0xff]
    %v4031 = vld [vmem:[%s1 + $0x338] sm:$0xff]
    %v4032 = vld [vmem:[%s1 + $0x340] sm:$0xff]
    %v4033 = vld [vmem:[%s1 + $0x348] sm:$0xff]
    %v4034 = vld [vmem:[%s1 + $0x350] sm:$0xff]
    %v4035 = vld [vmem:[%s1 + $0x358] sm:$0xff]
    %v4036 = vld [vmem:[%s1 + $0x360] sm:$0xff]
    %v4037 = vld [vmem:[%s1 + $0x368] sm:$0xff]
    %v4038 = vld [vmem:[%s1 + $0x370] sm:$0xff]
    %v4039 = vld [vmem:[%s1 + $0x378] sm:$0xff]
    %v4040 = vld [vmem:[%s1 + $0x380] sm:$0xff]
    %v4041 = vld [vmem:[%s1 + $0x388] sm:$0xff]
    %v4042 = vld [vmem:[%s1 + $0x390] sm:$0xff]
    %v4043 = vld [vmem:[%s1 + $0x398] sm:$0xff]
    %v4044 = vld [vmem:[%s1 + $0x3a0] sm:$0xff]
    %v4045 = vld [vmem:[%s1 + $0x3a8] sm:$0xff]
    %v4046 = vld [vmem:[%s1 + $0x3b0] sm:$0xff]
    %v4047 = vld [vmem:[%s1 + $0x3b8] sm:$0xff]
    %v4048 = vld [vmem:[%s1 + $0x3c0] sm:$0xff]
    %v4049 = vld [vmem:[%s1 + $0x3c8] sm:$0xff]
    %v4050 = vld [vmem:[%s1 + $0x3d0] sm:$0xff]
    %v4051 = vld [vmem:[%s1 + $0x3d8] sm:$0xff]
    %v4052 = vld [vmem:[%s1 + $0x3e0] sm:$0xff]
    %v4053 = vld [vmem:[%s1 + $0x3e8] sm:$0xff]
    %v4054 = vld [vmem:[%s1 + $0x3f0] sm:$0xff]
    %v4055 = vld [vmem:[%s1 + $0x3f8] sm:$0xff]
    %v4056 = vld [vmem:[%s1 + $0x400] sm:$0xff]
    %v4057 = vld [vmem:[%s1 + $0x408] sm:$0xff]
    %v4058 = vld [vmem:[%s1 + $0x410] sm:$0xff]
    %v4059 = vld [vmem:[%s1 + $0x418] sm:$0xff]
    %v4060 = vld [vmem:[%s1 + $0x420] sm:$0xff]
    %v4061 = vld [vmem:[%s1 + $0x428] sm:$0xff]
    %v4062 = vld [vmem:[%s1 + $0x430] sm:$0xff]
    %v4063 = vld [vmem:[%s1 + $0x438] sm:$0xff]
    %v4064 = vld [vmem:[%s1 + $0x440] sm:$0xff]
    %v4065 = vld [vmem:[%s1 + $0x448] sm:$0xff]
    %v4066 = vld [vmem:[%s1 + $0x450] sm:$0xff]
    %v4067 = vld [vmem:[%s1 + $0x458] sm:$0xff]
    %v4068 = vld [vmem:[%s1 + $0x460] sm:$0xff]
    %v4069 = vld [vmem:[%s1 + $0x468] sm:$0xff]
    %v4070 = vld [vmem:[%s1 + $0x470] sm:$0xff]
    %v4071 = vld [vmem:[%s1 + $0x478] sm:$0xff]
    %v4072 = vld [vmem:[%s1 + $0x480] sm:$0xff]
    %v4073 = vld [vmem:[%s1 + $0x488] sm:$0xff]
    %v4074 = vld [vmem:[%s1 + $0x490] sm:$0xff]
    %v4075 = vld [vmem:[%s1 + $0x498] sm:$0xff]
    %v4076 = vld [vmem:[%s1 + $0x4a0] sm:$0xff]
    %v4077 = vld [vmem:[%s1 + $0x4a8] sm:$0xff]
    %v4078 = vld [vmem:[%s1 + $0x4b0] sm:$0xff]
    %v4079 = vld [vmem:[%s1 + $0x4b8] sm:$0xff]
    %v4080 = vld [vmem:[%s1 + $0x4c0] sm:$0xff]
    %v4081 = vld [vmem:[%s1 + $0x4c8] sm:$0xff]
    %v4082 = vld [vmem:[%s1 + $0x4d0] sm:$0xff]
    %v4083 = vld [vmem:[%s1 + $0x4d8] sm:$0xff]
    %v4084 = vld [vmem:[%s1 + $0x4e0] sm:$0xff]
    %v4085 = vld [vmem:[%s1 + $0x4e8] sm:$0xff]
    %v4086 = vld [vmem:[%s1 + $0x4f0] sm:$0xff]
    %v4087 = vld [vmem:[%s1 + $0x4f8] sm:$0xff]
    %v4088 = vld [vmem:[%s1 + $0x500] sm:$0xff]
    %v4089 = vld [vmem:[%s1 + $0x508] sm:$0xff]
    %v4090 = vld [vmem:[%s1 + $0x510] sm:$0xff]
    %v4091 = vld [vmem:[%s1 + $0x518] sm:$0xff]
    %v4092 = vld [vmem:[%s1 + $0x520] sm:$0xff]
    %v4093 = vld [vmem:[%s1 + $0x528] sm:$0xff]
    %v4094 = vld [vmem:[%s1 + $0x530] sm:$0xff]
    %v4095 = vld [vmem:[%s1 + $0x538] sm:$0xff]
    %v4096 = vld [vmem:[%s1 + $0x540] sm:$0xff]
    %v4097 = vld [vmem:[%s1 + $0x548] sm:$0xff]
    %v4098 = vld [vmem:[%s1 + $0x550] sm:$0xff]
    %v4099 = vld [vmem:[%s1 + $0x558] sm:$0xff]
    %v4100 = vld [vmem:[%s1 + $0x560] sm:$0xff]
    %v4101 = vld [vmem:[%s1 + $0x568] sm:$0xff]
    %v4102 = vld [vmem:[%s1 + $0x570] sm:$0xff]
    %v4103 = vld [vmem:[%s1 + $0x578] sm:$0xff]
    %v4104 = vld [vmem:[%s1 + $0x580] sm:$0xff]
    %v4105 = vld [vmem:[%s1 + $0x588] sm:$0xff]
    %v4106 = vld [vmem:[%s1 + $0x590] sm:$0xff]
    %v4107 = vld [vmem:[%s1 + $0x598] sm:$0xff]
    %v4108 = vld [vmem:[%s1 + $0x5a0] sm:$0xff]
    %v4109 = vld [vmem:[%s1 + $0x5a8] sm:$0xff]
    %v4110 = vld [vmem:[%s1 + $0x5b0] sm:$0xff]
    %v4111 = vld [vmem:[%s1 + $0x5b8] sm:$0xff]
    %v4112 = vld [vmem:[%s1 + $0x5c0] sm:$0xff]
    %v4113 = vld [vmem:[%s1 + $0x5c8] sm:$0xff]
    %v4114 = vld [vmem:[%s1 + $0x5d0] sm:$0xff]
    %v4115 = vld [vmem:[%s1 + $0x5d8] sm:$0xff]
    %v4116 = vld [vmem:[%s1 + $0x5e0] sm:$0xff]
    %v4117 = vld [vmem:[%s1 + $0x5e8] sm:$0xff]
    %v4118 = vld [vmem:[%s1 + $0x5f0] sm:$0xff]
    %v4119 = vld [vmem:[%s1 + $0x5f8] sm:$0xff]
    %v4120 = vld [vmem:[%s1 + $0x600] sm:$0xff]
    %v4121 = vld [vmem:[%s1 + $0x608] sm:$0xff]
    %v4122 = vld [vmem:[%s1 + $0x610] sm:$0xff]
    %v4123 = vld [vmem:[%s1 + $0x618] sm:$0xff]
    %v4124 = vld [vmem:[%s1 + $0x620] sm:$0xff]
    %v4125 = vld [vmem:[%s1 + $0x628] sm:$0xff]
    %v4126 = vld [vmem:[%s1 + $0x630] sm:$0xff]
    %v4127 = vld [vmem:[%s1 + $0x638] sm:$0xff]
    %v4128 = vld [vmem:[%s1 + $0x640] sm:$0xff]
    %v4129 = vld [vmem:[%s1 + $0x648] sm:$0xff]
    %v4130 = vld [vmem:[%s1 + $0x650] sm:$0xff]
    %v4131 = vld [vmem:[%s1 + $0x658] sm:$0xff]
    %v4132 = vld [vmem:[%s1 + $0x660] sm:$0xff]
    %v4133 = vld [vmem:[%s1 + $0x668] sm:$0xff]
    %v4134 = vld [vmem:[%s1 + $0x670] sm:$0xf]
    %v4135 = vadd.f32 %v3633, %v3639
    %v4136 = vrot.slane %v4135, 4
    %v4137 = vadd.f32 %v4135, %v4136
    %v4138 = vrot.slane %v4137, 2
    %v4139 = vadd.f32 %v4137, %v4138
    %v4140 = vrot.slane %v4139, 1
    %v4141 = vadd.f32 %v4139, %v4140
    %v4142 = vadd.f32 %v3635, %v3641
    %v4143 = vrot.slane %v4142, 4
    %v4144 = vadd.f32 %v4142, %v4143
    %v4145 = vrot.slane %v4144, 2
    %v4146 = vadd.f32 %v4144, %v4145
    %v4147 = vrot.slane %v4146, 1
    %v4148 = vadd.f32 %v4146, %v4147
    %v4149 = vmul.f32 %v4141, 0.0625
    %v4150 = vmul.f32 %v4148, 0.0625
    %v4151 = vmul.f32 %v3633, %v3633
    %v4152 = vmul.f32 %v3635, %v3635
    %v4153 = vmul.f32 %v3639, %v3639
    %v4154 = vmul.f32 %v3641, %v3641
    %v4155 = vadd.f32 %v4151, %v4153
    %v4156 = vrot.slane %v4155, 4
    %v4157 = vadd.f32 %v4155, %v4156
    %v4158 = vrot.slane %v4157, 2
    %v4159 = vadd.f32 %v4157, %v4158
    %v4160 = vrot.slane %v4159, 1
    %v4161 = vadd.f32 %v4159, %v4160
    %v4162 = vadd.f32 %v4152, %v4154
    %v4163 = vrot.slane %v4162, 4
    %v4164 = vadd.f32 %v4162, %v4163
    %v4165 = vrot.slane %v4164, 2
    %v4166 = vadd.f32 %v4164, %v4165
    %v4167 = vrot.slane %v4166, 1
    %v4168 = vadd.f32 %v4166, %v4167
    %v4169 = vmul.f32 %v4161, 0.0625
    %v4170 = vmul.f32 %v4168, 0.0625
    %v4171 = vmul.f32 %v4149, %v4149
    %v4172 = vmul.f32 %v4150, %v4150
    %v4173 = vsub.f32 %v4169, %v4171
    %v4174 = vsub.f32 %v4170, %v4172
    %v4175 = vmax.f32 %v4173, 0.0
    %v4176 = vmax.f32 %v4174, 0.0
    %v4177 = vsub.f32 %v3633, %v4149
    %v4178 = vsub.f32 %v3635, %v4150
    %v4179 = vsub.f32 %v3639, %v4149
    %v4180 = vsub.f32 %v3641, %v4150
    %v4181 = vadd.f32 %v4175, 1e-05
    %v4182 = vadd.f32 %v4176, 1e-05
    %v4183 = vrsqrt.pop %v4181
    %v4184 = vrsqrt.pop %v4182
    %v4185 = vmul.f32 %v4177, %v4183
    %v4186 = vmul.f32 %v4178, %v4184
    %v4187 = vmul.f32 %v4179, %v4183
    %v4188 = vmul.f32 %v4180, %v4184
    %v4189 = vmax.f32 %v4185, 0.0
    %v4190 = vmax.f32 %v4186, 0.0
    %v4191 = vmax.f32 %v4187, 0.0
    %v4192 = vmax.f32 %v4188, 0.0
    %v4193 = vadd.f32 %v3645, %v3651
    %v4194 = vrot.slane %v4193, 4
    %v4195 = vadd.f32 %v4193, %v4194
    %v4196 = vrot.slane %v4195, 2
    %v4197 = vadd.f32 %v4195, %v4196
    %v4198 = vrot.slane %v4197, 1
    %v4199 = vadd.f32 %v4197, %v4198
    %v4200 = vadd.f32 %v3647, %v3653
    %v4201 = vrot.slane %v4200, 4
    %v4202 = vadd.f32 %v4200, %v4201
    %v4203 = vrot.slane %v4202, 2
    %v4204 = vadd.f32 %v4202, %v4203
    %v4205 = vrot.slane %v4204, 1
    %v4206 = vadd.f32 %v4204, %v4205
    %v4207 = vmul.f32 %v4199, 0.0625
    %v4208 = vmul.f32 %v4206, 0.0625
    %v4209 = vmul.f32 %v3645, %v3645
    %v4210 = vmul.f32 %v3647, %v3647
    %v4211 = vmul.f32 %v3651, %v3651
    %v4212 = vmul.f32 %v3653, %v3653
    %v4213 = vadd.f32 %v4209, %v4211
    %v4214 = vrot.slane %v4213, 4
    %v4215 = vadd.f32 %v4213, %v4214
    %v4216 = vrot.slane %v4215, 2
    %v4217 = vadd.f32 %v4215, %v4216
    %v4218 = vrot.slane %v4217, 1
    %v4219 = vadd.f32 %v4217, %v4218
    %v4220 = vadd.f32 %v4210, %v4212
    %v4221 = vrot.slane %v4220, 4
    %v4222 = vadd.f32 %v4220, %v4221
    %v4223 = vrot.slane %v4222, 2
    %v4224 = vadd.f32 %v4222, %v4223
    %v4225 = vrot.slane %v4224, 1
    %v4226 = vadd.f32 %v4224, %v4225
    %v4227 = vmul.f32 %v4219, 0.0625
    %v4228 = vmul.f32 %v4226, 0.0625
    %v4229 = vmul.f32 %v4207, %v4207
    %v4230 = vmul.f32 %v4208, %v4208
    %v4231 = vsub.f32 %v4227, %v4229
    %v4232 = vsub.f32 %v4228, %v4230
    %v4233 = vmax.f32 %v4231, 0.0
    %v4234 = vmax.f32 %v4232, 0.0
    %v4235 = vsub.f32 %v3645, %v4207
    %v4236 = vsub.f32 %v3647, %v4208
    %v4237 = vsub.f32 %v3651, %v4207
    %v4238 = vsub.f32 %v3653, %v4208
    %v4239 = vadd.f32 %v4233, 1e-05
    %v4240 = vadd.f32 %v4234, 1e-05
    %v4241 = vrsqrt.pop %v4239
    %v4242 = vrsqrt.pop %v4240
    %v4243 = vmul.f32 %v4235, %v4241
    %v4244 = vmul.f32 %v4236, %v4242
    %v4245 = vmul.f32 %v4237, %v4241
    %v4246 = vmul.f32 %v4238, %v4242
    %v4247 = vmax.f32 %v4243, 0.0
    %v4248 = vmax.f32 %v4244, 0.0
    %v4249 = vmax.f32 %v4245, 0.0
    %v4250 = vmax.f32 %v4246, 0.0
    %v4251 = vlaneseq
    %v4252 = vshrl.u32 %v4251, 7
    %v4253 = vsub.s32 0, %v4252
    %v4254 = vrot.slane %v4134, %v4253
    %4255 = vmatprep.subr.mxu0 0.0
    %4256 = vmatpush1.msra.mxu0 %v4021
    %4257 = vmatprep.subr.mxu0 0.0
    %4258 = vmatpush1.msra.mxu0 %v4020
    %4259 = vmatprep.subr.mxu0 0.0
    %4260 = vmatpush1.msra.mxu0 %v4019
    %4261 = vmatprep.subr.mxu0 0.0
    %4262 = vmatpush1.msra.mxu0 %v4018
    %4263 = vmatprep.subr.mxu0 0.0
    %4264 = vmatpush1.msra.mxu0 %v4017
    %4265 = vmatprep.subr.mxu0 0.0
    %4266 = vmatpush1.msra.mxu0 %v4016
    %4267 = vmatprep.subr.mxu0 0.0
    %4268 = vmatpush1.msra.mxu0 %v4015
    %4269 = vmatprep.subr.mxu0 0.0
    %4270 = vmatpush1.msra.mxu0 %v4014
    %4271 = vmatprep.subr.mxu0 0.0
    %4272 = vmatpush1.msra.mxu0 %v4013
    %4273 = vmatprep.subr.mxu0 0.0
    %4274 = vmatpush1.msra.mxu0 %v4012
    %4275 = vmatprep.subr.mxu0 0.0
    %4276 = vmatpush1.msra.mxu0 %v4011
    %4277 = vmatprep.subr.mxu0 0.0
    %4278 = vmatpush1.msra.mxu0 %v4010
    %4279 = vmatprep.subr.mxu0 0.0
    %4280 = vmatpush1.msra.mxu0 %v4009
    %4281 = vmatprep.subr.mxu0 0.0
    %4282 = vmatpush1.msra.mxu0 %v4008
    %4283 = vmatprep.subr.mxu0 0.0
    %4284 = vmatpush1.msra.mxu0 %v4007
    %4285 = vmatprep.subr.mxu0 0.0
    %4286 = vmatpush1.msra.mxu0 %v4006
    %4287 = vmatprep.subr.mxu0 0.0
    %4288 = vmatpush2.msra.mxu0 %v4037
    %4289 = vmatprep.subr.mxu0 0.0
    %4290 = vmatpush2.msra.mxu0 %v4036
    %4291 = vmatprep.subr.mxu0 0.0
    %4292 = vmatpush2.msra.mxu0 %v4035
    %4293 = vmatprep.subr.mxu0 0.0
    %4294 = vmatpush2.msra.mxu0 %v4034
    %4295 = vmatprep.subr.mxu0 0.0
    %4296 = vmatpush2.msra.mxu0 %v4033
    %4297 = vmatprep.subr.mxu0 0.0
    %4298 = vmatpush2.msra.mxu0 %v4032
    %4299 = vmatprep.subr.mxu0 0.0
    %4300 = vmatpush2.msra.mxu0 %v4031
    %4301 = vmatprep.subr.mxu0 0.0
    %4302 = vmatpush2.msra.mxu0 %v4030
    %4303 = vmatprep.subr.mxu0 0.0
    %4304 = vmatpush2.msra.mxu0 %v4029
    %4305 = vmatprep.subr.mxu0 0.0
    %4306 = vmatpush2.msra.mxu0 %v4028
    %4307 = vmatprep.subr.mxu0 0.0
    %4308 = vmatpush2.msra.mxu0 %v4027
    %4309 = vmatprep.subr.mxu0 0.0
    %4310 = vmatpush2.msra.mxu0 %v4026
    %4311 = vmatprep.subr.mxu0 0.0
    %4312 = vmatpush2.msra.mxu0 %v4025
    %4313 = vmatprep.subr.mxu0 0.0
    %4314 = vmatpush2.msra.mxu0 %v4024
    %4315 = vmatprep.subr.mxu0 0.0
    %4316 = vmatpush2.msra.mxu0 %v4023
    %4317 = vmatprep.subr.mxu0 0.0
    %4318 = vmatpush2.msra.mxu0 %v4022
    %4319 = vmatprep.mubr.f32.mxu0 %v4190
    %4320 = vmatmul.mubr.f32.gmra.mxu0 %v4189
    %v4321 = vpop.f32.mrf.mxu0
    %v4322 = vadd.f32 %v4254, %v4321
    %v4323 = vpop.f32.mrf.mxu0
    %4324 = vmatprep.mubr.f32.mxu0 %v4192
    %4325 = vmatmul.mubr.f32.gmra.mxu0 %v4191
    %v4326 = vpop.f32.mrf.mxu0
    %v4327 = vadd.f32 %v4254, %v4326
    %v4328 = vpop.f32.mrf.mxu0
    %4329 = vmatprep.mubr.f32.mxu0 %v4248
    %4330 = vmatmul.mubr.f32.gmra.mxu0 %v4247
    %v4331 = vpop.f32.mrf.mxu0
    %v4332 = vadd.f32 %v4254, %v4331
    %v4333 = vpop.f32.mrf.mxu0
    %4334 = vmatprep.mubr.f32.mxu0 %v4250
    %4335 = vmatmul.mubr.f32.gmra.mxu0 %v4249
    %v4336 = vpop.f32.mrf.mxu0
    %v4337 = vadd.f32 %v4254, %v4336
    %v4338 = vpop.f32.mrf.mxu0
    %4339 = vdwg.mxu0
    %v4340 = vadd.f32 %v3762, %v3768
    %v4341 = vrot.slane %v4340, 4
    %v4342 = vadd.f32 %v4340, %v4341
    %v4343 = vrot.slane %v4342, 2
    %v4344 = vadd.f32 %v4342, %v4343
    %v4345 = vrot.slane %v4344, 1
    %v4346 = vadd.f32 %v4344, %v4345
    %v4347 = vadd.f32 %v3764, %v3770
    %v4348 = vrot.slane %v4347, 4
    %v4349 = vadd.f32 %v4347, %v4348
    %v4350 = vrot.slane %v4349, 2
    %v4351 = vadd.f32 %v4349, %v4350
    %v4352 = vrot.slane %v4351, 1
    %v4353 = vadd.f32 %v4351, %v4352
    %v4354 = vmul.f32 %v4346, 0.0625
    %v4355 = vmul.f32 %v4353, 0.0625
    %v4356 = vmul.f32 %v3762, %v3762
    %v4357 = vmul.f32 %v3764, %v3764
    %v4358 = vmul.f32 %v3768, %v3768
    %v4359 = vmul.f32 %v3770, %v3770
    %v4360 = vadd.f32 %v4356, %v4358
    %v4361 = vrot.slane %v4360, 4
    %v4362 = vadd.f32 %v4360, %v4361
    %v4363 = vrot.slane %v4362, 2
    %v4364 = vadd.f32 %v4362, %v4363
    %v4365 = vrot.slane %v4364, 1
    %v4366 = vadd.f32 %v4364, %v4365
    %v4367 = vadd.f32 %v4357, %v4359
    %v4368 = vrot.slane %v4367, 4
    %v4369 = vadd.f32 %v4367, %v4368
    %v4370 = vrot.slane %v4369, 2
    %v4371 = vadd.f32 %v4369, %v4370
    %v4372 = vrot.slane %v4371, 1
    %v4373 = vadd.f32 %v4371, %v4372
    %v4374 = vmul.f32 %v4366, 0.0625
    %v4375 = vmul.f32 %v4373, 0.0625
    %v4376 = vmul.f32 %v4354, %v4354
    %v4377 = vmul.f32 %v4355, %v4355
    %v4378 = vsub.f32 %v4374, %v4376
    %v4379 = vsub.f32 %v4375, %v4377
    %v4380 = vmax.f32 %v4378, 0.0
    %v4381 = vmax.f32 %v4379, 0.0
    %v4382 = vsub.f32 %v3762, %v4354
    %v4383 = vsub.f32 %v3764, %v4355
    %v4384 = vsub.f32 %v3768, %v4354
    %v4385 = vsub.f32 %v3770, %v4355
    %v4386 = vadd.f32 %v4380, 1e-05
    %v4387 = vadd.f32 %v4381, 1e-05
    %v4388 = vrsqrt.pop %v4386
    %v4389 = vrsqrt.pop %v4387
    %v4390 = vmul.f32 %v4382, %v4388
    %v4391 = vmul.f32 %v4383, %v4389
    %v4392 = vmul.f32 %v4384, %v4388
    %v4393 = vmul.f32 %v4385, %v4389
    %v4394 = vmax.f32 %v4390, 0.0
    %v4395 = vmax.f32 %v4391, 0.0
    %v4396 = vmax.f32 %v4392, 0.0
    %v4397 = vmax.f32 %v4393, 0.0
    %v4398 = vlaneseq
    %v4399 = vshrl.u32 %v4398, 7
    %v4400 = vsub.s32 1, %v4399
    %v4401 = vrot.slane %v4134, %v4400
    %4402 = vmatprep.subr.mxu0 0.0
    %4403 = vmatpush1.msra.mxu0 %v4053
    %4404 = vmatprep.subr.mxu0 0.0
    %4405 = vmatpush1.msra.mxu0 %v4052
    %4406 = vmatprep.subr.mxu0 0.0
    %4407 = vmatpush1.msra.mxu0 %v4051
    %4408 = vmatprep.subr.mxu0 0.0
    %4409 = vmatpush1.msra.mxu0 %v4050
    %4410 = vmatprep.subr.mxu0 0.0
    %4411 = vmatpush1.msra.mxu0 %v4049
    %4412 = vmatprep.subr.mxu0 0.0
    %4413 = vmatpush1.msra.mxu0 %v4048
    %4414 = vmatprep.subr.mxu0 0.0
    %4415 = vmatpush1.msra.mxu0 %v4047
    %4416 = vmatprep.subr.mxu0 0.0
    %4417 = vmatpush1.msra.mxu0 %v4046
    %4418 = vmatprep.subr.mxu0 0.0
    %4419 = vmatpush1.msra.mxu0 %v4045
    %4420 = vmatprep.subr.mxu0 0.0
    %4421 = vmatpush1.msra.mxu0 %v4044
    %4422 = vmatprep.subr.mxu0 0.0
    %4423 = vmatpush1.msra.mxu0 %v4043
    %4424 = vmatprep.subr.mxu0 0.0
    %4425 = vmatpush1.msra.mxu0 %v4042
    %4426 = vmatprep.subr.mxu0 0.0
    %4427 = vmatpush1.msra.mxu0 %v4041
    %4428 = vmatprep.subr.mxu0 0.0
    %4429 = vmatpush1.msra.mxu0 %v4040
    %4430 = vmatprep.subr.mxu0 0.0
    %4431 = vmatpush1.msra.mxu0 %v4039
    %4432 = vmatprep.subr.mxu0 0.0
    %4433 = vmatpush1.msra.mxu0 %v4038
    %4434 = vmatprep.subr.mxu0 0.0
    %4435 = vmatpush2.msra.mxu0 %v4069
    %4436 = vmatprep.subr.mxu0 0.0
    %4437 = vmatpush2.msra.mxu0 %v4068
    %4438 = vmatprep.subr.mxu0 0.0
    %4439 = vmatpush2.msra.mxu0 %v4067
    %4440 = vmatprep.subr.mxu0 0.0
    %4441 = vmatpush2.msra.mxu0 %v4066
    %4442 = vmatprep.subr.mxu0 0.0
    %4443 = vmatpush2.msra.mxu0 %v4065
    %4444 = vmatprep.subr.mxu0 0.0
    %4445 = vmatpush2.msra.mxu0 %v4064
    %4446 = vmatprep.subr.mxu0 0.0
    %4447 = vmatpush2.msra.mxu0 %v4063
    %4448 = vmatprep.subr.mxu0 0.0
    %4449 = vmatpush2.msra.mxu0 %v4062
    %4450 = vmatprep.subr.mxu0 0.0
    %4451 = vmatpush2.msra.mxu0 %v4061
    %4452 = vmatprep.subr.mxu0 0.0
    %4453 = vmatpush2.msra.mxu0 %v4060
    %4454 = vmatprep.subr.mxu0 0.0
    %4455 = vmatpush2.msra.mxu0 %v4059
    %4456 = vmatprep.subr.mxu0 0.0
    %4457 = vmatpush2.msra.mxu0 %v4058
    %4458 = vmatprep.subr.mxu0 0.0
    %4459 = vmatpush2.msra.mxu0 %v4057
    %4460 = vmatprep.subr.mxu0 0.0
    %4461 = vmatpush2.msra.mxu0 %v4056
    %4462 = vmatprep.subr.mxu0 0.0
    %4463 = vmatpush2.msra.mxu0 %v4055
    %4464 = vmatprep.subr.mxu0 0.0
    %4465 = vmatpush2.msra.mxu0 %v4054
    %4466 = vmatprep.mubr.f32.mxu0 %v4395
    %4467 = vmatmul.mubr.f32.gmra.mxu0 %v4394
    %v4468 = vpop.f32.mrf.mxu0
    %v4469 = vadd.f32 %v4401, %v4468
    %v4470 = vpop.f32.mrf.mxu0
    %4471 = vmatprep.mubr.f32.mxu0 %v4397
    %4472 = vmatmul.mubr.f32.gmra.mxu0 %v4396
    %v4473 = vpop.f32.mrf.mxu0
    %v4474 = vadd.f32 %v4401, %v4473
    %v4475 = vpop.f32.mrf.mxu0
    %4476 = vdwg.mxu0
    %v4477 = vadd.f32 %v3879, %v3885
    %v4478 = vrot.slane %v4477, 4
    %v4479 = vadd.f32 %v4477, %v4478
    %v4480 = vrot.slane %v4479, 2
    %v4481 = vadd.f32 %v4479, %v4480
    %v4482 = vrot.slane %v4481, 1
    %v4483 = vadd.f32 %v4481, %v4482
    %v4484 = vadd.f32 %v3881, %v3887
    %v4485 = vrot.slane %v4484, 4
    %v4486 = vadd.f32 %v4484, %v4485
    %v4487 = vrot.slane %v4486, 2
    %v4488 = vadd.f32 %v4486, %v4487
    %v4489 = vrot.slane %v4488, 1
    %v4490 = vadd.f32 %v4488, %v4489
    %v4491 = vmul.f32 %v4483, 0.0625
    %v4492 = vmul.f32 %v4490, 0.0625
    %v4493 = vmul.f32 %v3879, %v3879
    %v4494 = vmul.f32 %v3881, %v3881
    %v4495 = vmul.f32 %v3885, %v3885
    %v4496 = vmul.f32 %v3887, %v3887
    %v4497 = vadd.f32 %v4493, %v4495
    %v4498 = vrot.slane %v4497, 4
    %v4499 = vadd.f32 %v4497, %v4498
    %v4500 = vrot.slane %v4499, 2
    %v4501 = vadd.f32 %v4499, %v4500
    %v4502 = vrot.slane %v4501, 1
    %v4503 = vadd.f32 %v4501, %v4502
    %v4504 = vadd.f32 %v4494, %v4496
    %v4505 = vrot.slane %v4504, 4
    %v4506 = vadd.f32 %v4504, %v4505
    %v4507 = vrot.slane %v4506, 2
    %v4508 = vadd.f32 %v4506, %v4507
    %v4509 = vrot.slane %v4508, 1
    %v4510 = vadd.f32 %v4508, %v4509
    %v4511 = vmul.f32 %v4503, 0.0625
    %v4512 = vmul.f32 %v4510, 0.0625
    %v4513 = vmul.f32 %v4491, %v4491
    %v4514 = vmul.f32 %v4492, %v4492
    %v4515 = vsub.f32 %v4511, %v4513
    %v4516 = vsub.f32 %v4512, %v4514
    %v4517 = vmax.f32 %v4515, 0.0
    %v4518 = vmax.f32 %v4516, 0.0
    %v4519 = vsub.f32 %v3879, %v4491
    %v4520 = vsub.f32 %v3881, %v4492
    %v4521 = vsub.f32 %v3885, %v4491
    %v4522 = vsub.f32 %v3887, %v4492
    %v4523 = vadd.f32 %v4517, 1e-05
    %v4524 = vadd.f32 %v4518, 1e-05
    %v4525 = vrsqrt.pop %v4523
    %v4526 = vrsqrt.pop %v4524
    %v4527 = vmul.f32 %v4519, %v4525
    %v4528 = vmul.f32 %v4520, %v4526
    %v4529 = vmul.f32 %v4521, %v4525
    %v4530 = vmul.f32 %v4522, %v4526
    %v4531 = vmax.f32 %v4527, 0.0
    %v4532 = vmax.f32 %v4528, 0.0
    %v4533 = vmax.f32 %v4529, 0.0
    %v4534 = vmax.f32 %v4530, 0.0
    %v4535 = vlaneseq
    %v4536 = vshrl.u32 %v4535, 7
    %v4537 = vsub.s32 2, %v4536
    %v4538 = vrot.slane %v4134, %v4537
    %4539 = vmatprep.subr.mxu0 0.0
    %4540 = vmatpush1.msra.mxu0 %v4085
    %4541 = vmatprep.subr.mxu0 0.0
    %4542 = vmatpush1.msra.mxu0 %v4084
    %4543 = vmatprep.subr.mxu0 0.0
    %4544 = vmatpush1.msra.mxu0 %v4083
    %4545 = vmatprep.subr.mxu0 0.0
    %4546 = vmatpush1.msra.mxu0 %v4082
    %4547 = vmatprep.subr.mxu0 0.0
    %4548 = vmatpush1.msra.mxu0 %v4081
    %4549 = vmatprep.subr.mxu0 0.0
    %4550 = vmatpush1.msra.mxu0 %v4080
    %4551 = vmatprep.subr.mxu0 0.0
    %4552 = vmatpush1.msra.mxu0 %v4079
    %4553 = vmatprep.subr.mxu0 0.0
    %4554 = vmatpush1.msra.mxu0 %v4078
    %4555 = vmatprep.subr.mxu0 0.0
    %4556 = vmatpush1.msra.mxu0 %v4077
    %4557 = vmatprep.subr.mxu0 0.0
    %4558 = vmatpush1.msra.mxu0 %v4076
    %4559 = vmatprep.subr.mxu0 0.0
    %4560 = vmatpush1.msra.mxu0 %v4075
    %4561 = vmatprep.subr.mxu0 0.0
    %4562 = vmatpush1.msra.mxu0 %v4074
    %4563 = vmatprep.subr.mxu0 0.0
    %4564 = vmatpush1.msra.mxu0 %v4073
    %4565 = vmatprep.subr.mxu0 0.0
    %4566 = vmatpush1.msra.mxu0 %v4072
    %4567 = vmatprep.subr.mxu0 0.0
    %4568 = vmatpush1.msra.mxu0 %v4071
    %4569 = vmatprep.subr.mxu0 0.0
    %4570 = vmatpush1.msra.mxu0 %v4070
    %4571 = vmatprep.subr.mxu0 0.0
    %4572 = vmatpush2.msra.mxu0 %v4101
    %4573 = vmatprep.subr.mxu0 0.0
    %4574 = vmatpush2.msra.mxu0 %v4100
    %4575 = vmatprep.subr.mxu0 0.0
    %4576 = vmatpush2.msra.mxu0 %v4099
    %4577 = vmatprep.subr.mxu0 0.0
    %4578 = vmatpush2.msra.mxu0 %v4098
    %4579 = vmatprep.subr.mxu0 0.0
    %4580 = vmatpush2.msra.mxu0 %v4097
    %4581 = vmatprep.subr.mxu0 0.0
    %4582 = vmatpush2.msra.mxu0 %v4096
    %4583 = vmatprep.subr.mxu0 0.0
    %4584 = vmatpush2.msra.mxu0 %v4095
    %4585 = vmatprep.subr.mxu0 0.0
    %4586 = vmatpush2.msra.mxu0 %v4094
    %4587 = vmatprep.subr.mxu0 0.0
    %4588 = vmatpush2.msra.mxu0 %v4093
    %4589 = vmatprep.subr.mxu0 0.0
    %4590 = vmatpush2.msra.mxu0 %v4092
    %4591 = vmatprep.subr.mxu0 0.0
    %4592 = vmatpush2.msra.mxu0 %v4091
    %4593 = vmatprep.subr.mxu0 0.0
    %4594 = vmatpush2.msra.mxu0 %v4090
    %4595 = vmatprep.subr.mxu0 0.0
    %4596 = vmatpush2.msra.mxu0 %v4089
    %4597 = vmatprep.subr.mxu0 0.0
    %4598 = vmatpush2.msra.mxu0 %v4088
    %4599 = vmatprep.subr.mxu0 0.0
    %4600 = vmatpush2.msra.mxu0 %v4087
    %4601 = vmatprep.subr.mxu0 0.0
    %4602 = vmatpush2.msra.mxu0 %v4086
    %4603 = vmatprep.mubr.f32.mxu0 %v4532
    %4604 = vmatmul.mubr.f32.gmra.mxu0 %v4531
    %v4605 = vpop.f32.mrf.mxu0
    %v4606 = vadd.f32 %v4538, %v4605
    %v4607 = vpop.f32.mrf.mxu0
    %4608 = vmatprep.mubr.f32.mxu0 %v4534
    %4609 = vmatmul.mubr.f32.gmra.mxu0 %v4533
    %v4610 = vpop.f32.mrf.mxu0
    %v4611 = vadd.f32 %v4538, %v4610
    %v4612 = vpop.f32.mrf.mxu0
    %4613 = vdwg.mxu0
    %v4614 = vadd.f32 %v3996, %v4002
    %v4615 = vrot.slane %v4614, 4
    %v4616 = vadd.f32 %v4614, %v4615
    %v4617 = vrot.slane %v4616, 2
    %v4618 = vadd.f32 %v4616, %v4617
    %v4619 = vrot.slane %v4618, 1
    %v4620 = vadd.f32 %v4618, %v4619
    %v4621 = vadd.f32 %v3998, %v4004
    %v4622 = vrot.slane %v4621, 4
    %v4623 = vadd.f32 %v4621, %v4622
    %v4624 = vrot.slane %v4623, 2
    %v4625 = vadd.f32 %v4623, %v4624
    %v4626 = vrot.slane %v4625, 1
    %v4627 = vadd.f32 %v4625, %v4626
    %v4628 = vmul.f32 %v4620, 0.0625
    %v4629 = vmul.f32 %v4627, 0.0625
    %v4630 = vmul.f32 %v3996, %v3996
    %v4631 = vmul.f32 %v3998, %v3998
    %v4632 = vmul.f32 %v4002, %v4002
    %v4633 = vmul.f32 %v4004, %v4004
    %v4634 = vadd.f32 %v4630, %v4632
    %v4635 = vrot.slane %v4634, 4
    %v4636 = vadd.f32 %v4634, %v4635
    %v4637 = vrot.slane %v4636, 2
    %v4638 = vadd.f32 %v4636, %v4637
    %v4639 = vrot.slane %v4638, 1
    %v4640 = vadd.f32 %v4638, %v4639
    %v4641 = vadd.f32 %v4631, %v4633
    %v4642 = vrot.slane %v4641, 4
    %v4643 = vadd.f32 %v4641, %v4642
    %v4644 = vrot.slane %v4643, 2
    %v4645 = vadd.f32 %v4643, %v4644
    %v4646 = vrot.slane %v4645, 1
    %v4647 = vadd.f32 %v4645, %v4646
    %v4648 = vmul.f32 %v4640, 0.0625
    %v4649 = vmul.f32 %v4647, 0.0625
    %v4650 = vmul.f32 %v4628, %v4628
    %v4651 = vmul.f32 %v4629, %v4629
    %v4652 = vsub.f32 %v4648, %v4650
    %v4653 = vsub.f32 %v4649, %v4651
    %v4654 = vmax.f32 %v4652, 0.0
    %v4655 = vmax.f32 %v4653, 0.0
    %v4656 = vsub.f32 %v3996, %v4628
    %v4657 = vsub.f32 %v3998, %v4629
    %v4658 = vsub.f32 %v4002, %v4628
    %v4659 = vsub.f32 %v4004, %v4629
    %v4660 = vadd.f32 %v4654, 1e-05
    %v4661 = vadd.f32 %v4655, 1e-05
    %v4662 = vrsqrt.pop %v4660
    %v4663 = vrsqrt.pop %v4661
    %v4664 = vmul.f32 %v4656, %v4662
    %v4665 = vmul.f32 %v4657, %v4663
    %v4666 = vmul.f32 %v4658, %v4662
    %v4667 = vmul.f32 %v4659, %v4663
    %v4668 = vmax.f32 %v4664, 0.0
    %v4669 = vmax.f32 %v4665, 0.0
    %v4670 = vmax.f32 %v4666, 0.0
    %v4671 = vmax.f32 %v4667, 0.0
    %v4672 = vlaneseq
    %v4673 = vshrl.u32 %v4672, 7
    %v4674 = vsub.s32 3, %v4673
    %v4675 = vrot.slane %v4134, %v4674
    %4676 = vmatprep.subr.mxu0 0.0
    %4677 = vmatpush1.msra.mxu0 %v4117
    %4678 = vmatprep.subr.mxu0 0.0
    %4679 = vmatpush1.msra.mxu0 %v4116
    %4680 = vmatprep.subr.mxu0 0.0
    %4681 = vmatpush1.msra.mxu0 %v4115
    %4682 = vmatprep.subr.mxu0 0.0
    %4683 = vmatpush1.msra.mxu0 %v4114
    %4684 = vmatprep.subr.mxu0 0.0
    %4685 = vmatpush1.msra.mxu0 %v4113
    %4686 = vmatprep.subr.mxu0 0.0
    %4687 = vmatpush1.msra.mxu0 %v4112
    %4688 = vmatprep.subr.mxu0 0.0
    %4689 = vmatpush1.msra.mxu0 %v4111
    %4690 = vmatprep.subr.mxu0 0.0
    %4691 = vmatpush1.msra.mxu0 %v4110
    %4692 = vmatprep.subr.mxu0 0.0
    %4693 = vmatpush1.msra.mxu0 %v4109
    %4694 = vmatprep.subr.mxu0 0.0
    %4695 = vmatpush1.msra.mxu0 %v4108
    %4696 = vmatprep.subr.mxu0 0.0
    %4697 = vmatpush1.msra.mxu0 %v4107
    %4698 = vmatprep.subr.mxu0 0.0
    %4699 = vmatpush1.msra.mxu0 %v4106
    %4700 = vmatprep.subr.mxu0 0.0
    %4701 = vmatpush1.msra.mxu0 %v4105
    %4702 = vmatprep.subr.mxu0 0.0
    %4703 = vmatpush1.msra.mxu0 %v4104
    %4704 = vmatprep.subr.mxu0 0.0
    %4705 = vmatpush1.msra.mxu0 %v4103
    %4706 = vmatprep.subr.mxu0 0.0
    %4707 = vmatpush1.msra.mxu0 %v4102
    %4708 = vmatprep.subr.mxu0 0.0
    %4709 = vmatpush2.msra.mxu0 %v4133
    %4710 = vmatprep.subr.mxu0 0.0
    %4711 = vmatpush2.msra.mxu0 %v4132
    %4712 = vmatprep.subr.mxu0 0.0
    %4713 = vmatpush2.msra.mxu0 %v4131
    %4714 = vmatprep.subr.mxu0 0.0
    %4715 = vmatpush2.msra.mxu0 %v4130
    %4716 = vmatprep.subr.mxu0 0.0
    %4717 = vmatpush2.msra.mxu0 %v4129
    %4718 = vmatprep.subr.mxu0 0.0
    %4719 = vmatpush2.msra.mxu0 %v4128
    %4720 = vmatprep.subr.mxu0 0.0
    %4721 = vmatpush2.msra.mxu0 %v4127
    %4722 = vmatprep.subr.mxu0 0.0
    %4723 = vmatpush2.msra.mxu0 %v4126
    %4724 = vmatprep.subr.mxu0 0.0
    %4725 = vmatpush2.msra.mxu0 %v4125
    %4726 = vmatprep.subr.mxu0 0.0
    %4727 = vmatpush2.msra.mxu0 %v4124
    %4728 = vmatprep.subr.mxu0 0.0
    %4729 = vmatpush2.msra.mxu0 %v4123
    %4730 = vmatprep.subr.mxu0 0.0
    %4731 = vmatpush2.msra.mxu0 %v4122
    %4732 = vmatprep.subr.mxu0 0.0
    %4733 = vmatpush2.msra.mxu0 %v4121
    %4734 = vmatprep.subr.mxu0 0.0
    %4735 = vmatpush2.msra.mxu0 %v4120
    %4736 = vmatprep.subr.mxu0 0.0
    %4737 = vmatpush2.msra.mxu0 %v4119
    %4738 = vmatprep.subr.mxu0 0.0
    %4739 = vmatpush2.msra.mxu0 %v4118
    %4740 = vmatprep.mubr.f32.mxu0 %v4669
    %4741 = vmatmul.mubr.f32.gmra.mxu0 %v4668
    %v4742 = vpop.f32.mrf.mxu0
    %v4743 = vadd.f32 %v4675, %v4742
    %v4744 = vpop.f32.mrf.mxu0
    %4745 = vmatprep.mubr.f32.mxu0 %v4671
    %4746 = vmatmul.mubr.f32.gmra.mxu0 %v4670
    %v4747 = vpop.f32.mrf.mxu0
    %v4748 = vadd.f32 %v4675, %v4747
    %v4749 = vpop.f32.mrf.mxu0
    %4750 = vdwg.mxu0
    %v4751 = vmul.f32 %v4322, %v4322
    %v4752 = vmul.f32 %v4327, %v4327
    %v4753 = vsel %vm470, %v4751, 0.0
    %4754 = vadd.xlane.f32.xlu0 %v4753
    %v4755 = vpop.xlane.xlu0 %4754
    %v4756 = vsel %vm470, %v4752, 0.0
    %4757 = vadd.xlane.f32.xlu0 %v4756
    %v4758 = vpop.xlane.xlu0 %4757
    %v4759 = vmax.f32 %v4755, 1e-24
    %v4760 = vmax.f32 %v4758, 1e-24
    %v4761 = vrsqrt.pop %v4759
    %v4762 = vrsqrt.pop %v4760
    %v4763 = vmul.f32 %v4322, %v4761
    %v4764 = vmul.f32 %v4327, %v4762
    %v4765 = vmul.f32 %v2413, %v2413
    %v4766 = vmul.f32 %v2414, %v2414
    %v4767 = vsel %vm470, %v4765, 0.0
    %4768 = vadd.xlane.f32.xlu0 %v4767
    %v4769 = vpop.xlane.xlu0 %4768
    %v4770 = vsel %vm470, %v4766, 0.0
    %4771 = vadd.xlane.f32.xlu0 %v4770
    %v4772 = vpop.xlane.xlu0 %4771
    %v4773 = vmax.f32 %v4769, 1e-24
    %v4774 = vmax.f32 %v4772, 1e-24
    %v4775 = vrsqrt.pop %v4773
    %v4776 = vrsqrt.pop %v4774
    %v4777 = vmul.f32 %v2413, %v4775
    %v4778 = vmul.f32 %v2414, %v4776
    %v4779 = vmul.f32 %v4763, %v4777
    %v4780 = vmul.f32 %v4764, %v4778
    %v4781 = vsel %vm470, %v4779, 0.0
    %4782 = vadd.xlane.f32.xlu0 %v4781
    %v4783 = vpop.xlane.xlu0 %4782
    %v4784 = vsel %vm470, %v4780, 0.0
    %4785 = vadd.xlane.f32.xlu0 %v4784
    %v4786 = vpop.xlane.xlu0 %4785
    %v4787 = vsub.f32 1.0, %v4783
    %v4788 = vsub.f32 1.0, %v4786
    %v4789 = vadd.f32 %v4787, %v4788
    %v4790 = vrot.slane %v4789, 4
    %v4791 = vadd.f32 %v4789, %v4790
    %v4792 = vrot.slane %v4791, 2
    %v4793 = vadd.f32 %v4791, %v4792
    %v4794 = vrot.slane %v4793, 1
    %v4795 = vadd.f32 %v4793, %v4794
    %v4796 = vmul.f32 %v4795, 0.0625
    %v4797 = vmul.f32 %v4332, %v4332
    %v4798 = vmul.f32 %v4337, %v4337
    %v4799 = vsel %vm470, %v4797, 0.0
    %4800 = vadd.xlane.f32.xlu0 %v4799
    %v4801 = vpop.xlane.xlu0 %4800
    %v4802 = vsel %vm470, %v4798, 0.0
    %4803 = vadd.xlane.f32.xlu0 %v4802
    %v4804 = vpop.xlane.xlu0 %4803
    %v4805 = vmax.f32 %v4801, 1e-24
    %v4806 = vmax.f32 %v4804, 1e-24
    %v4807 = vrsqrt.pop %v4805
    %v4808 = vrsqrt.pop %v4806
    %v4809 = vmul.f32 %v4332, %v4807
    %v4810 = vmul.f32 %v4337, %v4808
    %v4811 = vmul.f32 %v3475, %v3475
    %v4812 = vmul.f32 %v3476, %v3476
    %v4813 = vsel %vm470, %v4811, 0.0
    %4814 = vadd.xlane.f32.xlu0 %v4813
    %v4815 = vpop.xlane.xlu0 %4814
    %v4816 = vsel %vm470, %v4812, 0.0
    %4817 = vadd.xlane.f32.xlu0 %v4816
    %v4818 = vpop.xlane.xlu0 %4817
    %v4819 = vmax.f32 %v4815, 1e-24
    %v4820 = vmax.f32 %v4818, 1e-24
    %v4821 = vrsqrt.pop %v4819
    %v4822 = vrsqrt.pop %v4820
    %v4823 = vmul.f32 %v3475, %v4821
    %v4824 = vmul.f32 %v3476, %v4822
    %v4825 = vmul.f32 %v4809, %v4823
    %v4826 = vmul.f32 %v4810, %v4824
    %v4827 = vsel %vm470, %v4825, 0.0
    %4828 = vadd.xlane.f32.xlu0 %v4827
    %v4829 = vpop.xlane.xlu0 %4828
    %v4830 = vsel %vm470, %v4826, 0.0
    %4831 = vadd.xlane.f32.xlu0 %v4830
    %v4832 = vpop.xlane.xlu0 %4831
    %v4833 = vsub.f32 1.0, %v4829
    %v4834 = vsub.f32 1.0, %v4832
    %v4835 = vadd.f32 %v4833, %v4834
    %v4836 = vrot.slane %v4835, 4
    %v4837 = vadd.f32 %v4835, %v4836
    %v4838 = vrot.slane %v4837, 2
    %v4839 = vadd.f32 %v4837, %v4838
    %v4840 = vrot.slane %v4839, 1
    %v4841 = vadd.f32 %v4839, %v4840
    %v4842 = vmul.f32 %v4841, 0.0625
    %v4843 = vadd.f32 %v2756, %v3271
    %v4844 = vadd.f32 %v2757, %v3272
    %v4845 = vmul.f32 %v4469, %v4469
    %v4846 = vmul.f32 %v4474, %v4474
    %v4847 = vsel %vm470, %v4845, 0.0
    %4848 = vadd.xlane.f32.xlu0 %v4847
    %v4849 = vpop.xlane.xlu0 %4848
    %v4850 = vsel %vm470, %v4846, 0.0
    %4851 = vadd.xlane.f32.xlu0 %v4850
    %v4852 = vpop.xlane.xlu0 %4851
    %v4853 = vmax.f32 %v4849, 1e-24
    %v4854 = vmax.f32 %v4852, 1e-24
    %v4855 = vrsqrt.pop %v4853
    %v4856 = vrsqrt.pop %v4854
    %v4857 = vmul.f32 %v4469, %v4855
    %v4858 = vmul.f32 %v4474, %v4856
    %v4859 = vmul.f32 %v4843, %v4843
    %v4860 = vmul.f32 %v4844, %v4844
    %v4861 = vsel %vm470, %v4859, 0.0
    %4862 = vadd.xlane.f32.xlu0 %v4861
    %v4863 = vpop.xlane.xlu0 %4862
    %v4864 = vsel %vm470, %v4860, 0.0
    %4865 = vadd.xlane.f32.xlu0 %v4864
    %v4866 = vpop.xlane.xlu0 %4865
    %v4867 = vmax.f32 %v4863, 1e-24
    %v4868 = vmax.f32 %v4866, 1e-24
    %v4869 = vrsqrt.pop %v4867
    %v4870 = vrsqrt.pop %v4868
    %v4871 = vmul.f32 %v4843, %v4869
    %v4872 = vmul.f32 %v4844, %v4870
    %v4873 = vmul.f32 %v4857, %v4871
    %v4874 = vmul.f32 %v4858, %v4872
    %v4875 = vsel %vm470, %v4873, 0.0
    %4876 = vadd.xlane.f32.xlu0 %v4875
    %v4877 = vpop.xlane.xlu0 %4876
    %v4878 = vsel %vm470, %v4874, 0.0
    %4879 = vadd.xlane.f32.xlu0 %v4878
    %v4880 = vpop.xlane.xlu0 %4879
    %v4881 = vsub.f32 1.0, %v4877
    %v4882 = vsub.f32 1.0, %v4880
    %v4883 = vadd.f32 %v4881, %v4882
    %v4884 = vrot.slane %v4883, 4
    %v4885 = vadd.f32 %v4883, %v4884
    %v4886 = vrot.slane %v4885, 2
    %v4887 = vadd.f32 %v4885, %v4886
    %v4888 = vrot.slane %v4887, 1
    %v4889 = vadd.f32 %v4887, %v4888
    %v4890 = vmul.f32 %v4889, 0.0625
    %v4891 = vadd.f32 %v3015, %v3271
    %v4892 = vadd.f32 %v3016, %v3272
    %v4893 = vmul.f32 %v4606, %v4606
    %v4894 = vmul.f32 %v4611, %v4611
    %v4895 = vsel %vm470, %v4893, 0.0
    %4896 = vadd.xlane.f32.xlu0 %v4895
    %v4897 = vpop.xlane.xlu0 %4896
    %v4898 = vsel %vm470, %v4894, 0.0
    %4899 = vadd.xlane.f32.xlu0 %v4898
    %v4900 = vpop.xlane.xlu0 %4899
    %v4901 = vmax.f32 %v4897, 1e-24
    %v4902 = vmax.f32 %v4900, 1e-24
    %v4903 = vrsqrt.pop %v4901
    %v4904 = vrsqrt.pop %v4902
    %v4905 = vmul.f32 %v4606, %v4903
    %v4906 = vmul.f32 %v4611, %v4904
    %v4907 = vmul.f32 %v4891, %v4891
    %v4908 = vmul.f32 %v4892, %v4892
    %v4909 = vsel %vm470, %v4907, 0.0
    %4910 = vadd.xlane.f32.xlu0 %v4909
    %v4911 = vpop.xlane.xlu0 %4910
    %v4912 = vsel %vm470, %v4908, 0.0
    %4913 = vadd.xlane.f32.xlu0 %v4912
    %v4914 = vpop.xlane.xlu0 %4913
    %v4915 = vmax.f32 %v4911, 1e-24
    %v4916 = vmax.f32 %v4914, 1e-24
    %v4917 = vrsqrt.pop %v4915
    %v4918 = vrsqrt.pop %v4916
    %v4919 = vmul.f32 %v4891, %v4917
    %v4920 = vmul.f32 %v4892, %v4918
    %v4921 = vmul.f32 %v4905, %v4919
    %v4922 = vmul.f32 %v4906, %v4920
    %v4923 = vsel %vm470, %v4921, 0.0
    %4924 = vadd.xlane.f32.xlu0 %v4923
    %v4925 = vpop.xlane.xlu0 %4924
    %v4926 = vsel %vm470, %v4922, 0.0
    %4927 = vadd.xlane.f32.xlu0 %v4926
    %v4928 = vpop.xlane.xlu0 %4927
    %v4929 = vsub.f32 1.0, %v4925
    %v4930 = vsub.f32 1.0, %v4928
    %v4931 = vadd.f32 %v4929, %v4930
    %v4932 = vrot.slane %v4931, 4
    %v4933 = vadd.f32 %v4931, %v4932
    %v4934 = vrot.slane %v4933, 2
    %v4935 = vadd.f32 %v4933, %v4934
    %v4936 = vrot.slane %v4935, 1
    %v4937 = vadd.f32 %v4935, %v4936
    %v4938 = vmul.f32 %v4937, 0.0625
    %v4939 = vadd.f32 %v2756, %v3015
    %v4940 = vadd.f32 %v2757, %v3016
    %v4941 = vmul.f32 %v4743, %v4743
    %v4942 = vmul.f32 %v4748, %v4748
    %v4943 = vsel %vm470, %v4941, 0.0
    %4944 = vadd.xlane.f32.xlu0 %v4943
    %v4945 = vpop.xlane.xlu0 %4944
    %v4946 = vsel %vm470, %v4942, 0.0
    %4947 = vadd.xlane.f32.xlu0 %v4946
    %v4948 = vpop.xlane.xlu0 %4947
    %v4949 = vmax.f32 %v4945, 1e-24
    %v4950 = vmax.f32 %v4948, 1e-24
    %v4951 = vrsqrt.pop %v4949
    %v4952 = vrsqrt.pop %v4950
    %v4953 = vmul.f32 %v4743, %v4951
    %v4954 = vmul.f32 %v4748, %v4952
    %v4955 = vmul.f32 %v4939, %v4939
    %v4956 = vmul.f32 %v4940, %v4940
    %v4957 = vsel %vm470, %v4955, 0.0
    %4958 = vadd.xlane.f32.xlu0 %v4957
    %v4959 = vpop.xlane.xlu0 %4958
    %v4960 = vsel %vm470, %v4956, 0.0
    %4961 = vadd.xlane.f32.xlu0 %v4960
    %v4962 = vpop.xlane.xlu0 %4961
    %v4963 = vmax.f32 %v4959, 1e-24
    %v4964 = vmax.f32 %v4962, 1e-24
    %v4965 = vrsqrt.pop %v4963
    %v4966 = vrsqrt.pop %v4964
    %v4967 = vmul.f32 %v4939, %v4965
    %v4968 = vmul.f32 %v4940, %v4966
    %v4969 = vmul.f32 %v4953, %v4967
    %v4970 = vmul.f32 %v4954, %v4968
    %v4971 = vsel %vm470, %v4969, 0.0
    %4972 = vadd.xlane.f32.xlu0 %v4971
    %v4973 = vpop.xlane.xlu0 %4972
    %v4974 = vsel %vm470, %v4970, 0.0
    %4975 = vadd.xlane.f32.xlu0 %v4974
    %v4976 = vpop.xlane.xlu0 %4975
    %v4977 = vsub.f32 1.0, %v4973
    %v4978 = vsub.f32 1.0, %v4976
    %v4979 = vadd.f32 %v4977, %v4978
    %v4980 = vrot.slane %v4979, 4
    %v4981 = vadd.f32 %v4979, %v4980
    %v4982 = vrot.slane %v4981, 2
    %v4983 = vadd.f32 %v4981, %v4982
    %v4984 = vrot.slane %v4983, 1
    %v4985 = vadd.f32 %v4983, %v4984
    %v4986 = vmul.f32 %v4985, 0.0625
    %v4987 = vadd.f32 %v4890, %v4938
    %v4988 = vadd.f32 %v4987, %v4986
    %v4989 = vmul.f32 %v4988, 0.5
    %v4990 = vadd.f32 %v4796, %v4989
    %v4991 = vadd.f32 %v4990, %v4842
    %vm4992 = vcmask 0
    %4993 = vst.msk [vmem:[#allocation2] sm:$0x1] %vm4992, %v4991
    // Predicated region
    $region14: #{cg_forward.1} parent=1 // pred_check
      _
    $region15: #{cg_forward.1} parent=1 // pred_check_branch
      %4995 = sbr.rel (0) target = $region17
    $region16: #{cg_forward.1} parent=1 // pred_region
      %s4997 = ssub.s32 16, 16
      %4998 = vsyncadd [#allocation3], %s4997
      %s5000 = sshll.u32 [#allocation2], 4
      %s5001 = int_to_ptr.vmem [resolvable:$true] %s5000
      %5003 = dma.vmem_to_hbm [thread:$0]  %s5001, 16, %s3, [#allocation3]
    $region17: #{cg_forward.1} parent=1 // pred_fallthru
      _
    // Predicated region
    $region18: #{cg_forward.1} parent=1 // pred_check
      _
    $region19: #{cg_forward.1} parent=1 // pred_check_branch
      %5005 = sbr.rel (0) target = $region21
    $region20: #{cg_forward.1} parent=1 // pred_region
      %5006 = dma.done [#allocation3], 16
    $region21: #{cg_forward.1} parent=1 // pred_fallthru
      _
    %5007 = vsyncpa [#allocation3], 1

</llo_original>
